<compile_context>
chip_gen: v6e
topology: v6e:2x2x1
jax: 0.10.0
libtpu: 0.0.40
codegen_flags: <defaults>
</compile_context>

<pallas_src>
import functools

import jax
import jax.numpy as jnp
from jax import lax
from jax.experimental import pallas as pl
from jax.experimental.pallas import tpu as pltpu


# --------------------------------------------------------------------------
# Per-generation budgets & tiling helper
# --------------------------------------------------------------------------
def _chip_budgets():
    """Returns (vmem_limit_bytes, per-tile byte target) for the local TPU."""
    kind = ""
    try:
        kind = jax.devices()[0].device_kind.lower()
    except Exception:
        pass
    if "v7" in kind:                      # 64 MiB physical VMEM
        return 48 * 1024 * 1024, 2 * 1024 * 1024
    if "v5" in kind or "v6" in kind:      # 128 MiB physical VMEM
        return 64 * 1024 * 1024, 4 * 1024 * 1024
    return 32 * 1024 * 1024, 2 * 1024 * 1024


def _pick_block(total, max_elems, quantum):
    """Largest divisor of `total` <= max_elems that is a multiple of `quantum`.

    Falls back to `total` (full dimension, always a legal block) if none exists.
    """
    if total <= max_elems:
        return total
    best = None
    d = 1
    while d * d <= total:
        if total % d == 0:
            for cand in (d, total // d):
                if cand <= max_elems and cand % quantum == 0:
                    if best is None or cand > best:
                        best = cand
        d += 1
    return best if best is not None else total


# --------------------------------------------------------------------------
# Kernel 1: composite image + hole/valid L1 partials + total-variation partials
# --------------------------------------------------------------------------
def _comp_kernel(inp_ref, mask_ref, out_ref, gt_ref, tvm_ref,
                 comp_ref, sums_ref, *, H, W):
    hw = H * W
    m = mask_ref[...]
    x = inp_ref[...]
    o = out_ref[...]
    g = gt_ref[...]
    one_m = 1.0 - m
    comp = m * x + one_m * o                       # f32 composite (TV uses f32)
    comp_ref[...] = comp.astype(comp_ref.dtype)    # bf16 store (downstream is bf16)

    diff = o - g
    sums_ref[0, 0] = jnp.sum(jnp.abs(one_m * diff))    # hole partial
    sums_ref[0, 1] = jnp.sum(jnp.abs(m * diff))        # valid partial

    # TV neighbours via lane-aligned XLU rolls (positive shifts == -1 / -W mod hw).
    nxt = pltpu.roll(comp, shift=hw - 1, axis=1)       # comp[p + 1]
    dwn = pltpu.roll(comp, shift=hw - W, axis=1)       # comp[p + W]
    sums_ref[0, 2] = jnp.sum(jnp.abs(comp - nxt) * tvm_ref[0:1, :])
    sums_ref[0, 3] = jnp.sum(jnp.abs(comp - dwn) * tvm_ref[1:2, :])


def composite_and_losses(inp, mask, output, gt, *, vmem_limit, tile_target):
    n, c, h, w = inp.shape
    hw = h * w
    nc = n * c

    inp2 = inp.reshape(nc, hw)
    mask2 = mask.reshape(nc, hw)
    out2 = output.reshape(nc, hw)
    gt2 = gt.reshape(nc, hw)

    # (2, hw) validity masks for the two TV directions (tiny, loaded once).
    pos = jnp.arange(hw)
    tvmask = jnp.stack([(pos % w != w - 1).astype(jnp.float32),
                        (pos < (h - 1) * w).astype(jnp.float32)], axis=0)

    # ~18 bytes per row-lane: 4 f32 inputs + 1 bf16 output.
    # TODO(synk): for very large images also tile hw (needs a W-element halo
    #             for the vertical TV term).
    max_rows = max(16, tile_target // max(1, hw * 18))
    bc = _pick_block(nc, max_rows, 16)
    grid_n = nc // bc

    row_spec = pl.BlockSpec((bc, hw), lambda i: (i, 0))
    comp2, partials = pl.pallas_call(
        functools.partial(_comp_kernel, H=h, W=w),
        grid=(grid_n,),
        out_shape=(jax.ShapeDtypeStruct((nc, hw), jnp.bfloat16),
                   jax.ShapeDtypeStruct((grid_n, 4), jnp.float32)),
        in_specs=[row_spec, row_spec, row_spec, row_spec,
                  pl.BlockSpec((2, hw), lambda i: (0, 0))],
        out_specs=(row_spec,
                   pl.BlockSpec((1, 4), lambda i: (i, 0),
                                memory_space=pltpu.MemorySpace.SMEM)),
        compiler_params=pltpu.CompilerParams(
            dimension_semantics=("parallel",),
            vmem_limit_bytes=vmem_limit),
    )(inp2, mask2, out2, gt2, tvmask)

    s = jnp.sum(partials, axis=0)       # tiny XLA reduction of per-block partials
    comp = comp2.reshape(n, c, h, w)
    numel = n * c * h * w
    hole = s[0] / numel
    valid = s[1] / numel
    tv = s[2] / (n * c * h * (w - 1)) + s[3] / (n * c * (h - 1) * w)
    return comp, hole, valid, tv


# --------------------------------------------------------------------------
# Kernel 2: 3x3 conv (padding=1) + bias + ReLU, no HBM im2col, bf16 output
# --------------------------------------------------------------------------
def _conv3x3_kernel(xp_ref, w_ref, b_ref, o_ref, *, W, C, CHUNK):
    # xp_ref: (1, C, Lpad)        bf16, padded image flattened over (H+2, W+2) (+2 tail)
    # w_ref : (9, Cout, C)        bf16, leading-axis tap index (no lane slicing)
    # b_ref : (Cout, 1)           f32
    # o_ref : (1, Cout, H*(W+2))  bf16 (2 garbage cols per row, dropped by the wrapper)
    wp = W + 2
    cout = o_ref.shape[1]
    lout = o_ref.shape[2]
    # Chunk the spatial axis so the f32 accumulator stays register-resident.
    # TODO(synk): merge the nine K=C matmuls into one K=9C matmul via an
    #             in-VMEM im2col slab for deeper MXU fill.
    for base in range(0, lout, CHUNK):            # CHUNK divides lout
        acc = jnp.zeros((cout, CHUNK), jnp.float32)
        for k in range(9):
            di, dj = divmod(k, 3)
            s = di * wp + dj + base
            xs = xp_ref[0, :, s:s + CHUNK]        # (C, CHUNK) bf16, static shifted view
            acc = acc + jnp.dot(w_ref[k], xs, preferred_element_type=jnp.float32)
        y = jnp.maximum(acc + b_ref[...], 0.0)
        o_ref[0, :, base:base + CHUNK] = y.astype(o_ref.dtype)


def conv3x3_relu(x, weight, bias, *, vmem_limit):
    # x: (N, C, H, W) f32/bf16; weight: (Cout, C, 3, 3) f32; bias: (Cout,) f32
    n, c, h, w = x.shape
    cout = weight.shape[0]
    wp = w + 2
    lout = h * wp
    lpad = (h + 2) * wp + 2

    xp = jnp.pad(x.astype(jnp.bfloat16), ((0, 0), (0, 0), (1, 1), (1, 1)))
    xflat = xp.reshape(n, c, (h + 2) * wp)
    xflat = jnp.pad(xflat, ((0, 0), (0, 0), (0, 2)))
    w9 = weight.transpose(2, 3, 0, 1).reshape(9, cout, c).astype(jnp.bfloat16)
    b2d = bias.reshape(cout, 1).astype(jnp.float32)

    # Keep the (Cout, CHUNK) f32 accumulator <= ~64 KiB.
    chunk = _pick_block(lout, max(128, (64 * 1024) // max(1, cout * 4)), 128)

    out_flat = pl.pallas_call(
        functools.partial(_conv3x3_kernel, W=w, C=c, CHUNK=chunk),
        grid=(n,),
        out_shape=jax.ShapeDtypeStruct((n, cout, lout), jnp.bfloat16),
        in_specs=[pl.BlockSpec((1, c, lpad), lambda i: (i, 0, 0)),
                  pl.BlockSpec((9, cout, c), lambda i: (0, 0, 0)),
                  pl.BlockSpec((cout, 1), lambda i: (0, 0))],
        out_specs=pl.BlockSpec((1, cout, lout), lambda i: (i, 0, 0)),
        compiler_params=pltpu.CompilerParams(
            dimension_semantics=("parallel",),
            vmem_limit_bytes=vmem_limit),
    )(xflat, w9, b2d)

    out = out_flat.reshape(n, cout, h, wp)[:, :, :, :w]   # drop garbage columns
    return out


def avg_pool2(x):
    # TODO(synk): fuse pooling + the column drop into the conv epilogue.
    n, c, h, w = x.shape
    return x.reshape(n, c, h // 2, 2, w // 2, 2).mean(axis=(3, 5))


# --------------------------------------------------------------------------
# Kernel 3: fused perceptual + style loss for one feature level
# --------------------------------------------------------------------------
def _feature_loss_kernel(fo_ref, fc_ref, fg_ref, sums_ref,
                         acc_sc, go_sc, gc_sc, gg_sc):
    j = pl.program_id(0)

    @pl.when(j == 0)
    def _():
        acc_sc[0] = 0.0
        acc_sc[1] = 0.0
        go_sc[...] = jnp.zeros_like(go_sc)
        gc_sc[...] = jnp.zeros_like(gc_sc)
        gg_sc[...] = jnp.zeros_like(gg_sc)

    fo16 = fo_ref[...]        # (n_im, C, hw_blk) bf16
    fc16 = fc_ref[...]
    fg16 = fg_ref[...]
    fo = fo16.astype(jnp.float32)
    fc = fc16.astype(jnp.float32)
    fg = fg16.astype(jnp.float32)

    # perceptual-loss partial sums (VPU, f32)
    acc_sc[0] += jnp.sum(jnp.abs(fo - fg))
    acc_sc[1] += jnp.sum(jnp.abs(fc - fg))

    # un-normalised batched grams (MXU, bf16 operands, f32 accumulation);
    # contract the shared hw axis so no transpose is materialised.
    dn = (((2,), (2,)), ((0,), (0,)))
    go_sc[...] += lax.dot_general(fo16, fo16, dn, preferred_element_type=jnp.float32)
    gc_sc[...] += lax.dot_general(fc16, fc16, dn, preferred_element_type=jnp.float32)
    gg_sc[...] += lax.dot_general(fg16, fg16, dn, preferred_element_type=jnp.float32)

    @pl.when(j == pl.num_programs(0) - 1)
    def _():
        sums_ref[0, 0] = acc_sc[0]
        sums_ref[0, 1] = acc_sc[1]
        sums_ref[0, 2] = jnp.sum(jnp.abs(go_sc[...] - gg_sc[...]))
        sums_ref[0, 3] = jnp.sum(jnp.abs(gc_sc[...] - gg_sc[...]))


def feature_losses(f_level, n_im, *, vmem_limit, tile_target):
    """Fused prc + style contribution for one feature level.

    f_level: (3*n_im, C, h, w) = concat([feat_out, feat_comp, feat_gt], axis=0).
    """
    b3, c, h, w = f_level.shape
    hw = h * w
    f3 = f_level.reshape(b3, c, hw)

    bytes_per_lane = 3 * n_im * c * f3.dtype.itemsize
    hw_blk = _pick_block(hw, max(128, tile_target // max(1, bytes_per_lane)), 128)
    n_hw = hw // hw_blk

    def spec(v):
        # variant v (0=out, 1=comp, 2=gt) lives at batch offset v * n_im
        return pl.BlockSpec((n_im, c, hw_blk), lambda j, v=v: (v, 0, j))

    sums = pl.pallas_call(
        _feature_loss_kernel,
        grid=(n_hw,),
        out_shape=jax.ShapeDtypeStruct((1, 4), jnp.float32),
        in_specs=[spec(0), spec(1), spec(2)],
        out_specs=pl.BlockSpec((1, 4), lambda j: (0, 0),
                               memory_space=pltpu.MemorySpace.SMEM),
        scratch_shapes=[pltpu.SMEM((2,), jnp.float32),
                        pltpu.VMEM((n_im, c, c), jnp.float32),
                        pltpu.VMEM((n_im, c, c), jnp.float32),
                        pltpu.VMEM((n_im, c, c), jnp.float32)],
        compiler_params=pltpu.CompilerParams(
            dimension_semantics=("arbitrary",),
            vmem_limit_bytes=vmem_limit),
    )(f3, f3, f3)

    feat_numel = n_im * c * hw
    prc = (sums[0, 0] + sums[0, 1]) / feat_numel
    gram_scale = float(c * hw) * float(n_im * c * c)   # gram norm * L1 mean
    style = (sums[0, 2] + sums[0, 3]) / gram_scale
    return prc, style


# --------------------------------------------------------------------------
# Synthetic deterministic feature extractor (stands in for VGG extractor)
# --------------------------------------------------------------------------
def make_extractor_params(key):
    dims = [(3, 8), (8, 16), (16, 32)]
    params = []
    for i, (cin, cout) in enumerate(dims):
        kw, kb = jax.random.split(jax.random.fold_in(key, i))
        w = jax.random.normal(kw, (cout, cin, 3, 3), jnp.float32) * 0.1
        b = jax.random.normal(kb, (cout,), jnp.float32) * 0.01
        params.append((w, b))
    return params


def extractor(x, params, *, vmem_limit):
    feats = []
    h = x
    for w, b in params:
        h = conv3x3_relu(h, w, b, vmem_limit=vmem_limit)
        h = avg_pool2(h)          # bf16, cheap layout shuffle, left to XLA
        feats.append(h)
    return feats


# --------------------------------------------------------------------------
# InpaintingLoss forward
# --------------------------------------------------------------------------
def inpainting_loss(inp, mask, output, gt, params):
    vmem_limit, tile_target = _chip_budgets()

    comp, hole, valid, tv = composite_and_losses(
        inp, mask, output, gt, vmem_limit=vmem_limit, tile_target=tile_target)

    n_im = output.shape[0]
    nch = output.shape[1]
    to16 = lambda t: t.astype(jnp.bfloat16)
    if nch == 3:
        srcs = [to16(output), comp, to16(gt)]
    elif nch == 1:
        rep = lambda t: jnp.concatenate([t, t, t], axis=1)
        srcs = [rep(to16(output)), rep(comp), rep(to16(gt))]
    else:
        raise ValueError('only gray an')

    # One extractor pass over [output ; comp ; gt] stacked on the batch axis.
    f_all = extractor(jnp.concatenate(srcs, axis=0), params, vmem_limit=vmem_limit)

    prc = jnp.float32(0.0)
    style = jnp.float32(0.0)
    for i in range(3):
        p_i, s_i = feature_losses(f_all[i], n_im,
                                  vmem_limit=vmem_limit, tile_target=tile_target)
        prc = prc + p_i
        style = style + s_i

    return {'hole': hole, 'valid': valid, 'prc': prc, 'style': style, 'tv': tv}


if __name__ == "__main__":
    key = jax.random.PRNGKey(0)
    k_in, k_mask, k_out, k_gt, k_par = jax.random.split(key, 5)

    N, C, H, W = 2, 3, 16, 16
    inp = jax.random.normal(k_in, (N, C, H, W), jnp.float32)
    mask = (jax.random.uniform(k_mask, (N, C, H, W)) > 0.5).astype(jnp.float32)
    output = jax.random.normal(k_out, (N, C, H, W), jnp.float32)
    gt = jax.random.normal(k_gt, (N, C, H, W), jnp.float32)

    params = make_extractor_params(k_par)

    loss_fn = jax.jit(inpainting_loss)
    losses = loss_fn(inp, mask, output, gt, params)
    losses = jax.tree_util.tree_map(jax.block_until_ready, losses)
    print("KERNEL_OK")
</pallas_src>

<mosaic_0001>
module attributes {stable_mosaic.version = 11 : i64} {
  func.func @_comp_kernel(%arg0: i32, %arg1: memref<6x256xf32, #tpu.memory_space<vmem>>, %arg2: memref<6x256xf32, #tpu.memory_space<vmem>>, %arg3: memref<6x256xf32, #tpu.memory_space<vmem>>, %arg4: memref<6x256xf32, #tpu.memory_space<vmem>>, %arg5: memref<2x256xf32, #tpu.memory_space<vmem>>, %arg6: memref<6x256xbf16, #tpu.memory_space<vmem>>, %arg7: memref<1x4xf32, #tpu.memory_space<smem>>) attributes {dimension_semantics = [#tpu.dimension_semantics<parallel>], iteration_bounds = array<i64: 1>, scalar_prefetch = 0 : i64, scratch_operands = 0 : i64, tpu.core_type = #tpu.core_type<tc>, window_params = [{transform_indices = @transform_0, window_bounds = array<i64: 6, 256>}, {transform_indices = @transform_1, window_bounds = array<i64: 6, 256>}, {transform_indices = @transform_2, window_bounds = array<i64: 6, 256>}, {transform_indices = @transform_3, window_bounds = array<i64: 6, 256>}, {pipeline_mode = #tpu.pipeline_mode<synchronous>, transform_indices = @transform_4, window_bounds = array<i64: 2, 256>}, {transform_indices = @transform_5, window_bounds = array<i64: 6, 256>}, {transform_indices = @transform_6, window_bounds = array<i64: 1, 4>}]} {
    %c0 = arith.constant 0 : index
    %c0_0 = arith.constant 0 : index
    %0 = vector.load %arg2[%c0, %c0_0] : memref<6x256xf32, #tpu.memory_space<vmem>>, vector<6x256xf32>
    %c0_1 = arith.constant 0 : index
    %c0_2 = arith.constant 0 : index
    %1 = vector.load %arg1[%c0_1, %c0_2] : memref<6x256xf32, #tpu.memory_space<vmem>>, vector<6x256xf32>
    %c0_3 = arith.constant 0 : index
    %c0_4 = arith.constant 0 : index
    %2 = vector.load %arg3[%c0_3, %c0_4] : memref<6x256xf32, #tpu.memory_space<vmem>>, vector<6x256xf32>
    %c0_5 = arith.constant 0 : index
    %c0_6 = arith.constant 0 : index
    %3 = vector.load %arg4[%c0_5, %c0_6] : memref<6x256xf32, #tpu.memory_space<vmem>>, vector<6x256xf32>
    %cst = arith.constant 1.000000e+00 : f32
    %4 = vector.broadcast %cst : f32 to vector<6x256xf32>
    %5 = arith.subf %4, %0 : vector<6x256xf32>
    %6 = arith.mulf %0, %1 : vector<6x256xf32>
    %7 = arith.mulf %5, %2 : vector<6x256xf32>
    %8 = arith.addf %6, %7 : vector<6x256xf32>
    %9 = arith.truncf %8 : vector<6x256xf32> to vector<6x256xbf16>
    %c0_7 = arith.constant 0 : index
    %c0_8 = arith.constant 0 : index
    %10 = vector.load %arg6[%c0_7, %c0_8] : memref<6x256xbf16, #tpu.memory_space<vmem>>, vector<6x256xbf16>
    tpu.vector_store %arg6[%c0_7, %c0_8], %9 {strides = array<i32>} : memref<6x256xbf16, #tpu.memory_space<vmem>>, vector<6x256xbf16>,
    %11 = arith.subf %2, %3 : vector<6x256xf32>
    %12 = arith.mulf %5, %11 : vector<6x256xf32>
    %13 = math.absf %12 : vector<6x256xf32>
    %14 = vector.shape_cast %13 : vector<6x256xf32> to vector<1x6x256xf32>
    %cst_9 = arith.constant dense<0.000000e+00> : vector<1xf32>
    %15 = vector.multi_reduction <add>, %14, %cst_9 [1, 2] : vector<1x6x256xf32> to vector<1xf32>
    %16 = vector.shape_cast %15 : vector<1xf32> to vector<1x1x1xf32>
    %17 = vector.extract %16[0, 0, 0] : f32 from vector<1x1x1xf32>
    %c0_10 = arith.constant 0 : index
    %c0_11 = arith.constant 0 : index
    %18 = memref.load %arg7[%c0_10, %c0_11] : memref<1x4xf32, #tpu.memory_space<smem>>
    memref.store %17, %arg7[%c0_10, %c0_11] : memref<1x4xf32, #tpu.memory_space<smem>>
    %19 = arith.mulf %0, %11 : vector<6x256xf32>
    %20 = math.absf %19 : vector<6x256xf32>
    %21 = vector.shape_cast %20 : vector<6x256xf32> to vector<1x6x256xf32>
    %cst_12 = arith.constant dense<0.000000e+00> : vector<1xf32>
    %22 = vector.multi_reduction <add>, %21, %cst_12 [1, 2] : vector<1x6x256xf32> to vector<1xf32>
    %23 = vector.shape_cast %22 : vector<1xf32> to vector<1x1x1xf32>
    %24 = vector.extract %23[0, 0, 0] : f32 from vector<1x1x1xf32>
    %c0_13 = arith.constant 0 : index
    %c1 = arith.constant 1 : index
    %25 = memref.load %arg7[%c0_13, %c1] : memref<1x4xf32, #tpu.memory_space<smem>>
    memref.store %24, %arg7[%c0_13, %c1] : memref<1x4xf32, #tpu.memory_space<smem>>
    %c255_i32 = arith.constant 255 : i32
    %26 = tpu.dynamic_rotate %8 by %c255_i32 dim 1 : vector<6x256xf32>, i32 -> vector<6x256xf32>
    %c240_i32 = arith.constant 240 : i32
    %27 = tpu.dynamic_rotate %8 by %c240_i32 dim 1 : vector<6x256xf32>, i32 -> vector<6x256xf32>
    %28 = arith.subf %8, %26 : vector<6x256xf32>
    %29 = math.absf %28 : vector<6x256xf32>
    %c0_14 = arith.constant 0 : index
    %c0_15 = arith.constant 0 : index
    %30 = vector.load %arg5[%c0_14, %c0_15] : memref<2x256xf32, #tpu.memory_space<vmem>>, vector<1x256xf32>
    %31 = vector.broadcast %30 : vector<1x256xf32> to vector<6x256xf32>
    %32 = arith.mulf %29, %31 : vector<6x256xf32>
    %33 = vector.shape_cast %32 : vector<6x256xf32> to vector<1x6x256xf32>
    %cst_16 = arith.constant dense<0.000000e+00> : vector<1xf32>
    %34 = vector.multi_reduction <add>, %33, %cst_16 [1, 2] : vector<1x6x256xf32> to vector<1xf32>
    %35 = vector.shape_cast %34 : vector<1xf32> to vector<1x1x1xf32>
    %36 = vector.extract %35[0, 0, 0] : f32 from vector<1x1x1xf32>
    %c0_17 = arith.constant 0 : index
    %c2 = arith.constant 2 : index
    %37 = memref.load %arg7[%c0_17, %c2] : memref<1x4xf32, #tpu.memory_space<smem>>
    memref.store %36, %arg7[%c0_17, %c2] : memref<1x4xf32, #tpu.memory_space<smem>>
    %38 = arith.subf %8, %27 : vector<6x256xf32>
    %39 = math.absf %38 : vector<6x256xf32>
    %c1_18 = arith.constant 1 : index
    %c0_19 = arith.constant 0 : index
    %40 = vector.load %arg5[%c1_18, %c0_19] : memref<2x256xf32, #tpu.memory_space<vmem>>, vector<1x256xf32>
    %41 = vector.broadcast %40 : vector<1x256xf32> to vector<6x256xf32>
    %42 = arith.mulf %39, %41 : vector<6x256xf32>
    %43 = vector.shape_cast %42 : vector<6x256xf32> to vector<1x6x256xf32>
    %cst_20 = arith.constant dense<0.000000e+00> : vector<1xf32>
    %44 = vector.multi_reduction <add>, %43, %cst_20 [1, 2] : vector<1x6x256xf32> to vector<1xf32>
    %45 = vector.shape_cast %44 : vector<1xf32> to vector<1x1x1xf32>
    %46 = vector.extract %45[0, 0, 0] : f32 from vector<1x1x1xf32>
    %c0_21 = arith.constant 0 : index
    %c3 = arith.constant 3 : index
    %47 = memref.load %arg7[%c0_21, %c3] : memref<1x4xf32, #tpu.memory_space<smem>>
    memref.store %46, %arg7[%c0_21, %c3] : memref<1x4xf32, #tpu.memory_space<smem>>
    return
  }
  func.func @transform_0(%arg0: i32) -> (i32, i32) {
    %c0_i32 = arith.constant 0 : i32
    %c0_i32_0 = arith.constant 0 : i32
    return %arg0, %c0_i32 : i32, i32
  }
  func.func @transform_1(%arg0: i32) -> (i32, i32) {
    %c0_i32 = arith.constant 0 : i32
    %c0_i32_0 = arith.constant 0 : i32
    return %arg0, %c0_i32 : i32, i32
  }
  func.func @transform_2(%arg0: i32) -> (i32, i32) {
    %c0_i32 = arith.constant 0 : i32
    %c0_i32_0 = arith.constant 0 : i32
    return %arg0, %c0_i32 : i32, i32
  }
  func.func @transform_3(%arg0: i32) -> (i32, i32) {
    %c0_i32 = arith.constant 0 : i32
    %c0_i32_0 = arith.constant 0 : i32
    return %arg0, %c0_i32 : i32, i32
  }
  func.func @transform_4(%arg0: i32) -> (i32, i32) {
    %c0_i32 = arith.constant 0 : i32
    %c0_i32_0 = arith.constant 0 : i32
    %c0_i32_1 = arith.constant 0 : i32
    return %c0_i32, %c0_i32_0 : i32, i32
  }
  func.func @transform_5(%arg0: i32) -> (i32, i32) {
    %c0_i32 = arith.constant 0 : i32
    %c0_i32_0 = arith.constant 0 : i32
    return %arg0, %c0_i32 : i32, i32
  }
  func.func @transform_6(%arg0: i32) -> (i32, i32) {
    %c0_i32 = arith.constant 0 : i32
    %c0_i32_0 = arith.constant 0 : i32
    return %arg0, %c0_i32 : i32, i32
  }
}

module attributes {stable_mosaic.version = 11 : i64} {
  func.func @_conv3x3_kernel(%arg0: i32, %arg1: memref<1x3x326xbf16, #tpu.memory_space<vmem>>, %arg2: memref<9x8x3xbf16, #tpu.memory_space<vmem>>, %arg3: memref<8x1xf32, #tpu.memory_space<vmem>>, %arg4: memref<1x8x288xbf16, #tpu.memory_space<vmem>>) attributes {dimension_semantics = [#tpu.dimension_semantics<parallel>], iteration_bounds = array<i64: 6>, scalar_prefetch = 0 : i64, scratch_operands = 0 : i64, tpu.core_type = #tpu.core_type<tc>, window_params = [{transform_indices = @transform_0, window_bounds = array<i64: 1, 3, 326>}, {pipeline_mode = #tpu.pipeline_mode<synchronous>, transform_indices = @transform_1, window_bounds = array<i64: 9, 8, 3>}, {pipeline_mode = #tpu.pipeline_mode<synchronous>, transform_indices = @transform_2, window_bounds = array<i64: 8, 1>}, {transform_indices = @transform_3, window_bounds = array<i64: 1, 8, 288>}]} {
    %cst = arith.constant 0.000000e+00 : f32
    %0 = vector.broadcast %cst : f32 to vector<8x288xf32>
    %c0 = arith.constant 0 : index
    %c0_0 = arith.constant 0 : index
    %c0_1 = arith.constant 0 : index
    %1 = vector.load %arg1[%c0, %c0_0, %c0_1] : memref<1x3x326xbf16, #tpu.memory_space<vmem>>, vector<1x3x288xbf16>
    %2 = vector.shape_cast %1 : vector<1x3x288xbf16> to vector<3x288xbf16>
    %c0_2 = arith.constant 0 : index
    %c0_3 = arith.constant 0 : index
    %c0_4 = arith.constant 0 : index
    %3 = vector.load %arg2[%c0_2, %c0_3, %c0_4] : memref<9x8x3xbf16, #tpu.memory_space<vmem>>, vector<1x8x3xbf16>
    %4 = vector.shape_cast %3 : vector<1x8x3xbf16> to vector<8x3xbf16>
    %cst_5 = arith.constant dense<0.000000e+00> : vector<8x288xf32>
    %5 = tpu.matmul %4, %2, %cst_5 {dimension_numbers = #tpu.dot_dimension_numbers<[1], [0], [0], [1], [0, 0, 1, 1], [], []>} : vector<8x3xbf16>, vector<3x288xbf16>, vector<8x288xf32> -> vector<8x288xf32>
    %6 = arith.addf %0, %5 : vector<8x288xf32>
    %c0_6 = arith.constant 0 : index
    %c0_7 = arith.constant 0 : index
    %c1 = arith.constant 1 : index
    %7 = vector.load %arg1[%c0_6, %c0_7, %c1] : memref<1x3x326xbf16, #tpu.memory_space<vmem>>, vector<1x3x288xbf16>
    %8 = vector.shape_cast %7 : vector<1x3x288xbf16> to vector<3x288xbf16>
    %c1_8 = arith.constant 1 : index
    %c0_9 = arith.constant 0 : index
    %c0_10 = arith.constant 0 : index
    %9 = vector.load %arg2[%c1_8, %c0_9, %c0_10] : memref<9x8x3xbf16, #tpu.memory_space<vmem>>, vector<1x8x3xbf16>
    %10 = vector.shape_cast %9 : vector<1x8x3xbf16> to vector<8x3xbf16>
    %cst_11 = arith.constant dense<0.000000e+00> : vector<8x288xf32>
    %11 = tpu.matmul %10, %8, %cst_11 {dimension_numbers = #tpu.dot_dimension_numbers<[1], [0], [0], [1], [0, 0, 1, 1], [], []>} : vector<8x3xbf16>, vector<3x288xbf16>, vector<8x288xf32> -> vector<8x288xf32>
    %12 = arith.addf %6, %11 : vector<8x288xf32>
    %c0_12 = arith.constant 0 : index
    %c0_13 = arith.constant 0 : index
    %c2 = arith.constant 2 : index
    %13 = vector.load %arg1[%c0_12, %c0_13, %c2] : memref<1x3x326xbf16, #tpu.memory_space<vmem>>, vector<1x3x288xbf16>
    %14 = vector.shape_cast %13 : vector<1x3x288xbf16> to vector<3x288xbf16>
    %c2_14 = arith.constant 2 : index
    %c0_15 = arith.constant 0 : index
    %c0_16 = arith.constant 0 : index
    %15 = vector.load %arg2[%c2_14, %c0_15, %c0_16] : memref<9x8x3xbf16, #tpu.memory_space<vmem>>, vector<1x8x3xbf16>
    %16 = vector.shape_cast %15 : vector<1x8x3xbf16> to vector<8x3xbf16>
    %cst_17 = arith.constant dense<0.000000e+00> : vector<8x288xf32>
    %17 = tpu.matmul %16, %14, %cst_17 {dimension_numbers = #tpu.dot_dimension_numbers<[1], [0], [0], [1], [0, 0, 1, 1], [], []>} : vector<8x3xbf16>, vector<3x288xbf16>, vector<8x288xf32> -> vector<8x288xf32>
    %18 = arith.addf %12, %17 : vector<8x288xf32>
    %c0_18 = arith.constant 0 : index
    %c0_19 = arith.constant 0 : index
    %c18 = arith.constant 18 : index
    %19 = vector.load %arg1[%c0_18, %c0_19, %c18] : memref<1x3x326xbf16, #tpu.memory_space<vmem>>, vector<1x3x288xbf16>
    %20 = vector.shape_cast %19 : vector<1x3x288xbf16> to vector<3x288xbf16>
    %c3 = arith.constant 3 : index
    %c0_20 = arith.constant 0 : index
    %c0_21 = arith.constant 0 : index
    %21 = vector.load %arg2[%c3, %c0_20, %c0_21] : memref<9x8x3xbf16, #tpu.memory_space<vmem>>, vector<1x8x3xbf16>
    %22 = vector.shape_cast %21 : vector<1x8x3xbf16> to vector<8x3xbf16>
    %cst_22 = arith.constant dense<0.000000e+00> : vector<8x288xf32>
    %23 = tpu.matmul %22, %20, %cst_22 {dimension_numbers = #tpu.dot_dimension_numbers<[1], [0], [0], [1], [0, 0, 1, 1], [], []>} : vector<8x3xbf16>, vector<3x288xbf16>, vector<8x288xf32> -> vector<8x288xf32>
    %24 = arith.addf %18, %23 : vector<8x288xf32>
    %c0_23 = arith.constant 0 : index
    %c0_24 = arith.constant 0 : index
    %c19 = arith.constant 19 : index
    %25 = vector.load %arg1[%c0_23, %c0_24, %c19] : memref<1x3x326xbf16, #tpu.memory_space<vmem>>, vector<1x3x288xbf16>
    %26 = vector.shape_cast %25 : vector<1x3x288xbf16> to vector<3x288xbf16>
    %c4 = arith.constant 4 : index
    %c0_25 = arith.constant 0 : index
    %c0_26 = arith.constant 0 : index
    %27 = vector.load %arg2[%c4, %c0_25, %c0_26] : memref<9x8x3xbf16, #tpu.memory_space<vmem>>, vector<1x8x3xbf16>
    %28 = vector.shape_cast %27 : vector<1x8x3xbf16> to vector<8x3xbf16>
    %cst_27 = arith.constant dense<0.000000e+00> : vector<8x288xf32>
    %29 = tpu.matmul %28, %26, %cst_27 {dimension_numbers = #tpu.dot_dimension_numbers<[1], [0], [0], [1], [0, 0, 1, 1], [], []>} : vector<8x3xbf16>, vector<3x288xbf16>, vector<8x288xf32> -> vector<8x288xf32>
    %30 = arith.addf %24, %29 : vector<8x288xf32>
    %c0_28 = arith.constant 0 : index
    %c0_29 = arith.constant 0 : index
    %c20 = arith.constant 20 : index
    %31 = vector.load %arg1[%c0_28, %c0_29, %c20] : memref<1x3x326xbf16, #tpu.memory_space<vmem>>, vector<1x3x288xbf16>
    %32 = vector.shape_cast %31 : vector<1x3x288xbf16> to vector<3x288xbf16>
    %c5 = arith.constant 5 : index
    %c0_30 = arith.constant 0 : index
    %c0_31 = arith.constant 0 : index
    %33 = vector.load %arg2[%c5, %c0_30, %c0_31] : memref<9x8x3xbf16, #tpu.memory_space<vmem>>, vector<1x8x3xbf16>
    %34 = vector.shape_cast %33 : vector<1x8x3xbf16> to vector<8x3xbf16>
    %cst_32 = arith.constant dense<0.000000e+00> : vector<8x288xf32>
    %35 = tpu.matmul %34, %32, %cst_32 {dimension_numbers = #tpu.dot_dimension_numbers<[1], [0], [0], [1], [0, 0, 1, 1], [], []>} : vector<8x3xbf16>, vector<3x288xbf16>, vector<8x288xf32> -> vector<8x288xf32>
    %36 = arith.addf %30, %35 : vector<8x288xf32>
    %c0_33 = arith.constant 0 : index
    %c0_34 = arith.constant 0 : index
    %c36 = arith.constant 36 : index
    %37 = vector.load %arg1[%c0_33, %c0_34, %c36] : memref<1x3x326xbf16, #tpu.memory_space<vmem>>, vector<1x3x288xbf16>
    %38 = vector.shape_cast %37 : vector<1x3x288xbf16> to vector<3x288xbf16>
    %c6 = arith.constant 6 : index
    %c0_35 = arith.constant 0 : index
    %c0_36 = arith.constant 0 : index
    %39 = vector.load %arg2[%c6, %c0_35, %c0_36] : memref<9x8x3xbf16, #tpu.memory_space<vmem>>, vector<1x8x3xbf16>
    %40 = vector.shape_cast %39 : vector<1x8x3xbf16> to vector<8x3xbf16>
    %cst_37 = arith.constant dense<0.000000e+00> : vector<8x288xf32>
    %41 = tpu.matmul %40, %38, %cst_37 {dimension_numbers = #tpu.dot_dimension_numbers<[1], [0], [0], [1], [0, 0, 1, 1], [], []>} : vector<8x3xbf16>, vector<3x288xbf16>, vector<8x288xf32> -> vector<8x288xf32>
    %42 = arith.addf %36, %41 : vector<8x288xf32>
    %c0_38 = arith.constant 0 : index
    %c0_39 = arith.constant 0 : index
    %c37 = arith.constant 37 : index
    %43 = vector.load %arg1[%c0_38, %c0_39, %c37] : memref<1x3x326xbf16, #tpu.memory_space<vmem>>, vector<1x3x288xbf16>
    %44 = vector.shape_cast %43 : vector<1x3x288xbf16> to vector<3x288xbf16>
    %c7 = arith.constant 7 : index
    %c0_40 = arith.constant 0 : index
    %c0_41 = arith.constant 0 : index
    %45 = vector.load %arg2[%c7, %c0_40, %c0_41] : memref<9x8x3xbf16, #tpu.memory_space<vmem>>, vector<1x8x3xbf16>
    %46 = vector.shape_cast %45 : vector<1x8x3xbf16> to vector<8x3xbf16>
    %cst_42 = arith.constant dense<0.000000e+00> : vector<8x288xf32>
    %47 = tpu.matmul %46, %44, %cst_42 {dimension_numbers = #tpu.dot_dimension_numbers<[1], [0], [0], [1], [0, 0, 1, 1], [], []>} : vector<8x3xbf16>, vector<3x288xbf16>, vector<8x288xf32> -> vector<8x288xf32>
    %48 = arith.addf %42, %47 : vector<8x288xf32>
    %c0_43 = arith.constant 0 : index
    %c0_44 = arith.constant 0 : index
    %c38 = arith.constant 38 : index
    %49 = vector.load %arg1[%c0_43, %c0_44, %c38] : memref<1x3x326xbf16, #tpu.memory_space<vmem>>, vector<1x3x288xbf16>
    %50 = vector.shape_cast %49 : vector<1x3x288xbf16> to vector<3x288xbf16>
    %c8 = arith.constant 8 : index
    %c0_45 = arith.constant 0 : index
    %c0_46 = arith.constant 0 : index
    %51 = vector.load %arg2[%c8, %c0_45, %c0_46] : memref<9x8x3xbf16, #tpu.memory_space<vmem>>, vector<1x8x3xbf16>
    %52 = vector.shape_cast %51 : vector<1x8x3xbf16> to vector<8x3xbf16>
    %cst_47 = arith.constant dense<0.000000e+00> : vector<8x288xf32>
    %53 = tpu.matmul %52, %50, %cst_47 {dimension_numbers = #tpu.dot_dimension_numbers<[1], [0], [0], [1], [0, 0, 1, 1], [], []>} : vector<8x3xbf16>, vector<3x288xbf16>, vector<8x288xf32> -> vector<8x288xf32>
    %54 = arith.addf %48, %53 : vector<8x288xf32>
    %c0_48 = arith.constant 0 : index
    %c0_49 = arith.constant 0 : index
    %55 = vector.load %arg3[%c0_48, %c0_49] : memref<8x1xf32, #tpu.memory_space<vmem>>, vector<8x1xf32>
    %56 = vector.broadcast %55 : vector<8x1xf32> to vector<8x288xf32>
    %57 = arith.addf %54, %56 : vector<8x288xf32>
    %cst_50 = arith.constant 0.000000e+00 : f32
    %58 = vector.broadcast %cst_50 : f32 to vector<8x288xf32>
    %59 = arith.maximumf %57, %58 : vector<8x288xf32>
    %60 = arith.truncf %59 : vector<8x288xf32> to vector<8x288xbf16>
    %c0_51 = arith.constant 0 : index
    %c0_52 = arith.constant 0 : index
    %c0_53 = arith.constant 0 : index
    %61 = vector.load %arg4[%c0_51, %c0_52, %c0_53] : memref<1x8x288xbf16, #tpu.memory_space<vmem>>, vector<1x8x288xbf16>
    %62 = vector.shape_cast %61 : vector<1x8x288xbf16> to vector<8x288xbf16>
    %63 = vector.shape_cast %60 : vector<8x288xbf16> to vector<1x8x288xbf16>
    tpu.vector_store %arg4[%c0_51, %c0_52, %c0_53], %63 {strides = array<i32>} : memref<1x8x288xbf16, #tpu.memory_space<vmem>>, vector<1x8x288xbf16>,
    return
  }
  func.func @transform_0(%arg0: i32) -> (i32, i32, i32) {
    %c0_i32 = arith.constant 0 : i32
    %c0_i32_0 = arith.constant 0 : i32
    %c0_i32_1 = arith.constant 0 : i32
    return %arg0, %c0_i32, %c0_i32_0 : i32, i32, i32
  }
  func.func @transform_1(%arg0: i32) -> (i32, i32, i32) {
    %c0_i32 = arith.constant 0 : i32
    %c0_i32_0 = arith.constant 0 : i32
    %c0_i32_1 = arith.constant 0 : i32
    %c0_i32_2 = arith.constant 0 : i32
    return %c0_i32, %c0_i32_0, %c0_i32_1 : i32, i32, i32
  }
  func.func @transform_2(%arg0: i32) -> (i32, i32) {
    %c0_i32 = arith.constant 0 : i32
    %c0_i32_0 = arith.constant 0 : i32
    %c0_i32_1 = arith.constant 0 : i32
    return %c0_i32, %c0_i32_0 : i32, i32
  }
  func.func @transform_3(%arg0: i32) -> (i32, i32, i32) {
    %c0_i32 = arith.constant 0 : i32
    %c0_i32_0 = arith.constant 0 : i32
    %c0_i32_1 = arith.constant 0 : i32
    return %arg0, %c0_i32, %c0_i32_0 : i32, i32, i32
  }
}

module attributes {stable_mosaic.version = 11 : i64} {
  func.func @_conv3x3_kernel(%arg0: i32, %arg1: memref<1x8x102xbf16, #tpu.memory_space<vmem>>, %arg2: memref<9x16x8xbf16, #tpu.memory_space<vmem>>, %arg3: memref<16x1xf32, #tpu.memory_space<vmem>>, %arg4: memref<1x16x80xbf16, #tpu.memory_space<vmem>>) attributes {dimension_semantics = [#tpu.dimension_semantics<parallel>], iteration_bounds = array<i64: 6>, scalar_prefetch = 0 : i64, scratch_operands = 0 : i64, tpu.core_type = #tpu.core_type<tc>, window_params = [{transform_indices = @transform_0, window_bounds = array<i64: 1, 8, 102>}, {pipeline_mode = #tpu.pipeline_mode<synchronous>, transform_indices = @transform_1, window_bounds = array<i64: 9, 16, 8>}, {pipeline_mode = #tpu.pipeline_mode<synchronous>, transform_indices = @transform_2, window_bounds = array<i64: 16, 1>}, {transform_indices = @transform_3, window_bounds = array<i64: 1, 16, 80>}]} {
    %cst = arith.constant 0.000000e+00 : f32
    %0 = vector.broadcast %cst : f32 to vector<16x80xf32>
    %c0 = arith.constant 0 : index
    %c0_0 = arith.constant 0 : index
    %c0_1 = arith.constant 0 : index
    %1 = vector.load %arg1[%c0, %c0_0, %c0_1] : memref<1x8x102xbf16, #tpu.memory_space<vmem>>, vector<1x8x80xbf16>
    %2 = vector.shape_cast %1 : vector<1x8x80xbf16> to vector<8x80xbf16>
    %c0_2 = arith.constant 0 : index
    %c0_3 = arith.constant 0 : index
    %c0_4 = arith.constant 0 : index
    %3 = vector.load %arg2[%c0_2, %c0_3, %c0_4] : memref<9x16x8xbf16, #tpu.memory_space<vmem>>, vector<1x16x8xbf16>
    %4 = vector.shape_cast %3 : vector<1x16x8xbf16> to vector<16x8xbf16>
    %cst_5 = arith.constant dense<0.000000e+00> : vector<16x80xf32>
    %5 = tpu.matmul %4, %2, %cst_5 {dimension_numbers = #tpu.dot_dimension_numbers<[1], [0], [0], [1], [0, 0, 1, 1], [], []>} : vector<16x8xbf16>, vector<8x80xbf16>, vector<16x80xf32> -> vector<16x80xf32>
    %6 = arith.addf %0, %5 : vector<16x80xf32>
    %c0_6 = arith.constant 0 : index
    %c0_7 = arith.constant 0 : index
    %c1 = arith.constant 1 : index
    %7 = vector.load %arg1[%c0_6, %c0_7, %c1] : memref<1x8x102xbf16, #tpu.memory_space<vmem>>, vector<1x8x80xbf16>
    %8 = vector.shape_cast %7 : vector<1x8x80xbf16> to vector<8x80xbf16>
    %c1_8 = arith.constant 1 : index
    %c0_9 = arith.constant 0 : index
    %c0_10 = arith.constant 0 : index
    %9 = vector.load %arg2[%c1_8, %c0_9, %c0_10] : memref<9x16x8xbf16, #tpu.memory_space<vmem>>, vector<1x16x8xbf16>
    %10 = vector.shape_cast %9 : vector<1x16x8xbf16> to vector<16x8xbf16>
    %cst_11 = arith.constant dense<0.000000e+00> : vector<16x80xf32>
    %11 = tpu.matmul %10, %8, %cst_11 {dimension_numbers = #tpu.dot_dimension_numbers<[1], [0], [0], [1], [0, 0, 1, 1], [], []>} : vector<16x8xbf16>, vector<8x80xbf16>, vector<16x80xf32> -> vector<16x80xf32>
    %12 = arith.addf %6, %11 : vector<16x80xf32>
    %c0_12 = arith.constant 0 : index
    %c0_13 = arith.constant 0 : index
    %c2 = arith.constant 2 : index
    %13 = vector.load %arg1[%c0_12, %c0_13, %c2] : memref<1x8x102xbf16, #tpu.memory_space<vmem>>, vector<1x8x80xbf16>
    %14 = vector.shape_cast %13 : vector<1x8x80xbf16> to vector<8x80xbf16>
    %c2_14 = arith.constant 2 : index
    %c0_15 = arith.constant 0 : index
    %c0_16 = arith.constant 0 : index
    %15 = vector.load %arg2[%c2_14, %c0_15, %c0_16] : memref<9x16x8xbf16, #tpu.memory_space<vmem>>, vector<1x16x8xbf16>
    %16 = vector.shape_cast %15 : vector<1x16x8xbf16> to vector<16x8xbf16>
    %cst_17 = arith.constant dense<0.000000e+00> : vector<16x80xf32>
    %17 = tpu.matmul %16, %14, %cst_17 {dimension_numbers = #tpu.dot_dimension_numbers<[1], [0], [0], [1], [0, 0, 1, 1], [], []>} : vector<16x8xbf16>, vector<8x80xbf16>, vector<16x80xf32> -> vector<16x80xf32>
    %18 = arith.addf %12, %17 : vector<16x80xf32>
    %c0_18 = arith.constant 0 : index
    %c0_19 = arith.constant 0 : index
    %c10 = arith.constant 10 : index
    %19 = vector.load %arg1[%c0_18, %c0_19, %c10] : memref<1x8x102xbf16, #tpu.memory_space<vmem>>, vector<1x8x80xbf16>
    %20 = vector.shape_cast %19 : vector<1x8x80xbf16> to vector<8x80xbf16>
    %c3 = arith.constant 3 : index
    %c0_20 = arith.constant 0 : index
    %c0_21 = arith.constant 0 : index
    %21 = vector.load %arg2[%c3, %c0_20, %c0_21] : memref<9x16x8xbf16, #tpu.memory_space<vmem>>, vector<1x16x8xbf16>
    %22 = vector.shape_cast %21 : vector<1x16x8xbf16> to vector<16x8xbf16>
    %cst_22 = arith.constant dense<0.000000e+00> : vector<16x80xf32>
    %23 = tpu.matmul %22, %20, %cst_22 {dimension_numbers = #tpu.dot_dimension_numbers<[1], [0], [0], [1], [0, 0, 1, 1], [], []>} : vector<16x8xbf16>, vector<8x80xbf16>, vector<16x80xf32> -> vector<16x80xf32>
    %24 = arith.addf %18, %23 : vector<16x80xf32>
    %c0_23 = arith.constant 0 : index
    %c0_24 = arith.constant 0 : index
    %c11 = arith.constant 11 : index
    %25 = vector.load %arg1[%c0_23, %c0_24, %c11] : memref<1x8x102xbf16, #tpu.memory_space<vmem>>, vector<1x8x80xbf16>
    %26 = vector.shape_cast %25 : vector<1x8x80xbf16> to vector<8x80xbf16>
    %c4 = arith.constant 4 : index
    %c0_25 = arith.constant 0 : index
    %c0_26 = arith.constant 0 : index
    %27 = vector.load %arg2[%c4, %c0_25, %c0_26] : memref<9x16x8xbf16, #tpu.memory_space<vmem>>, vector<1x16x8xbf16>
    %28 = vector.shape_cast %27 : vector<1x16x8xbf16> to vector<16x8xbf16>
    %cst_27 = arith.constant dense<0.000000e+00> : vector<16x80xf32>
    %29 = tpu.matmul %28, %26, %cst_27 {dimension_numbers = #tpu.dot_dimension_numbers<[1], [0], [0], [1], [0, 0, 1, 1], [], []>} : vector<16x8xbf16>, vector<8x80xbf16>, vector<16x80xf32> -> vector<16x80xf32>
    %30 = arith.addf %24, %29 : vector<16x80xf32>
    %c0_28 = arith.constant 0 : index
    %c0_29 = arith.constant 0 : index
    %c12 = arith.constant 12 : index
    %31 = vector.load %arg1[%c0_28, %c0_29, %c12] : memref<1x8x102xbf16, #tpu.memory_space<vmem>>, vector<1x8x80xbf16>
    %32 = vector.shape_cast %31 : vector<1x8x80xbf16> to vector<8x80xbf16>
    %c5 = arith.constant 5 : index
    %c0_30 = arith.constant 0 : index
    %c0_31 = arith.constant 0 : index
    %33 = vector.load %arg2[%c5, %c0_30, %c0_31] : memref<9x16x8xbf16, #tpu.memory_space<vmem>>, vector<1x16x8xbf16>
    %34 = vector.shape_cast %33 : vector<1x16x8xbf16> to vector<16x8xbf16>
    %cst_32 = arith.constant dense<0.000000e+00> : vector<16x80xf32>
    %35 = tpu.matmul %34, %32, %cst_32 {dimension_numbers = #tpu.dot_dimension_numbers<[1], [0], [0], [1], [0, 0, 1, 1], [], []>} : vector<16x8xbf16>, vector<8x80xbf16>, vector<16x80xf32> -> vector<16x80xf32>
    %36 = arith.addf %30, %35 : vector<16x80xf32>
    %c0_33 = arith.constant 0 : index
    %c0_34 = arith.constant 0 : index
    %c20 = arith.constant 20 : index
    %37 = vector.load %arg1[%c0_33, %c0_34, %c20] : memref<1x8x102xbf16, #tpu.memory_space<vmem>>, vector<1x8x80xbf16>
    %38 = vector.shape_cast %37 : vector<1x8x80xbf16> to vector<8x80xbf16>
    %c6 = arith.constant 6 : index
    %c0_35 = arith.constant 0 : index
    %c0_36 = arith.constant 0 : index
    %39 = vector.load %arg2[%c6, %c0_35, %c0_36] : memref<9x16x8xbf16, #tpu.memory_space<vmem>>, vector<1x16x8xbf16>
    %40 = vector.shape_cast %39 : vector<1x16x8xbf16> to vector<16x8xbf16>
    %cst_37 = arith.constant dense<0.000000e+00> : vector<16x80xf32>
    %41 = tpu.matmul %40, %38, %cst_37 {dimension_numbers = #tpu.dot_dimension_numbers<[1], [0], [0], [1], [0, 0, 1, 1], [], []>} : vector<16x8xbf16>, vector<8x80xbf16>, vector<16x80xf32> -> vector<16x80xf32>
    %42 = arith.addf %36, %41 : vector<16x80xf32>
    %c0_38 = arith.constant 0 : index
    %c0_39 = arith.constant 0 : index
    %c21 = arith.constant 21 : index
    %43 = vector.load %arg1[%c0_38, %c0_39, %c21] : memref<1x8x102xbf16, #tpu.memory_space<vmem>>, vector<1x8x80xbf16>
    %44 = vector.shape_cast %43 : vector<1x8x80xbf16> to vector<8x80xbf16>
    %c7 = arith.constant 7 : index
    %c0_40 = arith.constant 0 : index
    %c0_41 = arith.constant 0 : index
    %45 = vector.load %arg2[%c7, %c0_40, %c0_41] : memref<9x16x8xbf16, #tpu.memory_space<vmem>>, vector<1x16x8xbf16>
    %46 = vector.shape_cast %45 : vector<1x16x8xbf16> to vector<16x8xbf16>
    %cst_42 = arith.constant dense<0.000000e+00> : vector<16x80xf32>
    %47 = tpu.matmul %46, %44, %cst_42 {dimension_numbers = #tpu.dot_dimension_numbers<[1], [0], [0], [1], [0, 0, 1, 1], [], []>} : vector<16x8xbf16>, vector<8x80xbf16>, vector<16x80xf32> -> vector<16x80xf32>
    %48 = arith.addf %42, %47 : vector<16x80xf32>
    %c0_43 = arith.constant 0 : index
    %c0_44 = arith.constant 0 : index
    %c22 = arith.constant 22 : index
    %49 = vector.load %arg1[%c0_43, %c0_44, %c22] : memref<1x8x102xbf16, #tpu.memory_space<vmem>>, vector<1x8x80xbf16>
    %50 = vector.shape_cast %49 : vector<1x8x80xbf16> to vector<8x80xbf16>
    %c8 = arith.constant 8 : index
    %c0_45 = arith.constant 0 : index
    %c0_46 = arith.constant 0 : index
    %51 = vector.load %arg2[%c8, %c0_45, %c0_46] : memref<9x16x8xbf16, #tpu.memory_space<vmem>>, vector<1x16x8xbf16>
    %52 = vector.shape_cast %51 : vector<1x16x8xbf16> to vector<16x8xbf16>
    %cst_47 = arith.constant dense<0.000000e+00> : vector<16x80xf32>
    %53 = tpu.matmul %52, %50, %cst_47 {dimension_numbers = #tpu.dot_dimension_numbers<[1], [0], [0], [1], [0, 0, 1, 1], [], []>} : vector<16x8xbf16>, vector<8x80xbf16>, vector<16x80xf32> -> vector<16x80xf32>
    %54 = arith.addf %48, %53 : vector<16x80xf32>
    %c0_48 = arith.constant 0 : index
    %c0_49 = arith.constant 0 : index
    %55 = vector.load %arg3[%c0_48, %c0_49] : memref<16x1xf32, #tpu.memory_space<vmem>>, vector<16x1xf32>
    %56 = vector.broadcast %55 : vector<16x1xf32> to vector<16x80xf32>
    %57 = arith.addf %54, %56 : vector<16x80xf32>
    %cst_50 = arith.constant 0.000000e+00 : f32
    %58 = vector.broadcast %cst_50 : f32 to vector<16x80xf32>
    %59 = arith.maximumf %57, %58 : vector<16x80xf32>
    %60 = arith.truncf %59 : vector<16x80xf32> to vector<16x80xbf16>
    %c0_51 = arith.constant 0 : index
    %c0_52 = arith.constant 0 : index
    %c0_53 = arith.constant 0 : index
    %61 = vector.load %arg4[%c0_51, %c0_52, %c0_53] : memref<1x16x80xbf16, #tpu.memory_space<vmem>>, vector<1x16x80xbf16>
    %62 = vector.shape_cast %61 : vector<1x16x80xbf16> to vector<16x80xbf16>
    %63 = vector.shape_cast %60 : vector<16x80xbf16> to vector<1x16x80xbf16>
    tpu.vector_store %arg4[%c0_51, %c0_52, %c0_53], %63 {strides = array<i32>} : memref<1x16x80xbf16, #tpu.memory_space<vmem>>, vector<1x16x80xbf16>,
    return
  }
  func.func @transform_0(%arg0: i32) -> (i32, i32, i32) {
    %c0_i32 = arith.constant 0 : i32
    %c0_i32_0 = arith.constant 0 : i32
    %c0_i32_1 = arith.constant 0 : i32
    return %arg0, %c0_i32, %c0_i32_0 : i32, i32, i32
  }
  func.func @transform_1(%arg0: i32) -> (i32, i32, i32) {
    %c0_i32 = arith.constant 0 : i32
    %c0_i32_0 = arith.constant 0 : i32
    %c0_i32_1 = arith.constant 0 : i32
    %c0_i32_2 = arith.constant 0 : i32
    return %c0_i32, %c0_i32_0, %c0_i32_1 : i32, i32, i32
  }
  func.func @transform_2(%arg0: i32) -> (i32, i32) {
    %c0_i32 = arith.constant 0 : i32
    %c0_i32_0 = arith.constant 0 : i32
    %c0_i32_1 = arith.constant 0 : i32
    return %c0_i32, %c0_i32_0 : i32, i32
  }
  func.func @transform_3(%arg0: i32) -> (i32, i32, i32) {
    %c0_i32 = arith.constant 0 : i32
    %c0_i32_0 = arith.constant 0 : i32
    %c0_i32_1 = arith.constant 0 : i32
    return %arg0, %c0_i32, %c0_i32_0 : i32, i32, i32
  }
}

module attributes {stable_mosaic.version = 11 : i64} {
  func.func @_feature_loss_kernel(%arg0: i32, %arg1: memref<2x16x16xbf16, #tpu.memory_space<vmem>>, %arg2: memref<2x16x16xbf16, #tpu.memory_space<vmem>>, %arg3: memref<2x16x16xbf16, #tpu.memory_space<vmem>>, %arg4: memref<1x4xf32, #tpu.memory_space<smem>>, %arg5: memref<2xf32, #tpu.memory_space<smem>>, %arg6: memref<2x16x16xf32, #tpu.memory_space<vmem>>, %arg7: memref<2x16x16xf32, #tpu.memory_space<vmem>>, %arg8: memref<2x16x16xf32, #tpu.memory_space<vmem>>) attributes {dimension_semantics = [#tpu.dimension_semantics<arbitrary>], iteration_bounds = array<i64: 1>, scalar_prefetch = 0 : i64, scratch_operands = 4 : i64, tpu.core_type = #tpu.core_type<tc>, window_params = [{transform_indices = @transform_0, window_bounds = array<i64: 2, 16, 16>}, {transform_indices = @transform_1, window_bounds = array<i64: 2, 16, 16>}, {transform_indices = @transform_2, window_bounds = array<i64: 2, 16, 16>}, {transform_indices = @transform_3, window_bounds = array<i64: 1, 4>}]} {
    %c0_i32 = arith.constant 0 : i32
    %0 = arith.cmpi eq, %arg0, %c0_i32 : i32
    %1 = arith.extui %0 : i1 to i32
    %c0_i32_0 = arith.constant 0 : i32
    %2 = arith.cmpi ne, %1, %c0_i32_0 : i32
    scf.if %2 {
      %cst_36 = arith.constant 0.000000e+00 : f32
      %c0_37 = arith.constant 0 : index
      %42 = memref.load %arg5[%c0_37] : memref<2xf32, #tpu.memory_space<smem>>
      memref.store %cst_36, %arg5[%c0_37] : memref<2xf32, #tpu.memory_space<smem>>
      %cst_38 = arith.constant 0.000000e+00 : f32
      %c1_39 = arith.constant 1 : index
      %43 = memref.load %arg5[%c1_39] : memref<2xf32, #tpu.memory_space<smem>>
      memref.store %cst_38, %arg5[%c1_39] : memref<2xf32, #tpu.memory_space<smem>>
      %cst_40 = arith.constant 0.000000e+00 : f32
      %44 = vector.broadcast %cst_40 : f32 to vector<2x16x16xf32>
      %c0_41 = arith.constant 0 : index
      %c0_42 = arith.constant 0 : index
      %c0_43 = arith.constant 0 : index
      %45 = vector.load %arg6[%c0_41, %c0_42, %c0_43] : memref<2x16x16xf32, #tpu.memory_space<vmem>>, vector<2x16x16xf32>
      tpu.vector_store %arg6[%c0_41, %c0_42, %c0_43], %44 {strides = array<i32>} : memref<2x16x16xf32, #tpu.memory_space<vmem>>, vector<2x16x16xf32>,
      %cst_44 = arith.constant 0.000000e+00 : f32
      %46 = vector.broadcast %cst_44 : f32 to vector<2x16x16xf32>
      %c0_45 = arith.constant 0 : index
      %c0_46 = arith.constant 0 : index
      %c0_47 = arith.constant 0 : index
      %47 = vector.load %arg7[%c0_45, %c0_46, %c0_47] : memref<2x16x16xf32, #tpu.memory_space<vmem>>, vector<2x16x16xf32>
      tpu.vector_store %arg7[%c0_45, %c0_46, %c0_47], %46 {strides = array<i32>} : memref<2x16x16xf32, #tpu.memory_space<vmem>>, vector<2x16x16xf32>,
      %cst_48 = arith.constant 0.000000e+00 : f32
      %48 = vector.broadcast %cst_48 : f32 to vector<2x16x16xf32>
      %c0_49 = arith.constant 0 : index
      %c0_50 = arith.constant 0 : index
      %c0_51 = arith.constant 0 : index
      %49 = vector.load %arg8[%c0_49, %c0_50, %c0_51] : memref<2x16x16xf32, #tpu.memory_space<vmem>>, vector<2x16x16xf32>
      tpu.vector_store %arg8[%c0_49, %c0_50, %c0_51], %48 {strides = array<i32>} : memref<2x16x16xf32, #tpu.memory_space<vmem>>, vector<2x16x16xf32>,
    } else {
    }
    %c0 = arith.constant 0 : index
    %c0_1 = arith.constant 0 : index
    %c0_2 = arith.constant 0 : index
    %3 = vector.load %arg1[%c0, %c0_1, %c0_2] : memref<2x16x16xbf16, #tpu.memory_space<vmem>>, vector<2x16x16xbf16>
    %c0_3 = arith.constant 0 : index
    %c0_4 = arith.constant 0 : index
    %c0_5 = arith.constant 0 : index
    %4 = vector.load %arg2[%c0_3, %c0_4, %c0_5] : memref<2x16x16xbf16, #tpu.memory_space<vmem>>, vector<2x16x16xbf16>
    %c0_6 = arith.constant 0 : index
    %c0_7 = arith.constant 0 : index
    %c0_8 = arith.constant 0 : index
    %5 = vector.load %arg3[%c0_6, %c0_7, %c0_8] : memref<2x16x16xbf16, #tpu.memory_space<vmem>>, vector<2x16x16xbf16>
    %6 = arith.extf %3 : vector<2x16x16xbf16> to vector<2x16x16xf32>
    %7 = arith.extf %4 : vector<2x16x16xbf16> to vector<2x16x16xf32>
    %8 = arith.extf %5 : vector<2x16x16xbf16> to vector<2x16x16xf32>
    %c0_9 = arith.constant 0 : index
    %9 = memref.load %arg5[%c0_9] : memref<2xf32, #tpu.memory_space<smem>>
    %10 = arith.subf %6, %8 : vector<2x16x16xf32>
    %11 = math.absf %10 : vector<2x16x16xf32>
    %12 = vector.shape_cast %11 : vector<2x16x16xf32> to vector<1x2x16x16xf32>
    %cst = arith.constant dense<0.000000e+00> : vector<1xf32>
    %13 = vector.multi_reduction <add>, %12, %cst [1, 2, 3] : vector<1x2x16x16xf32> to vector<1xf32>
    %14 = vector.shape_cast %13 : vector<1xf32> to vector<1x1x1x1xf32>
    %15 = vector.extract %14[0, 0, 0, 0] : f32 from vector<1x1x1x1xf32>
    %16 = arith.addf %9, %15 : f32
    %c0_10 = arith.constant 0 : index
    %17 = memref.load %arg5[%c0_10] : memref<2xf32, #tpu.memory_space<smem>>
    memref.store %16, %arg5[%c0_10] : memref<2xf32, #tpu.memory_space<smem>>
    %c1 = arith.constant 1 : index
    %18 = memref.load %arg5[%c1] : memref<2xf32, #tpu.memory_space<smem>>
    %19 = arith.subf %7, %8 : vector<2x16x16xf32>
    %20 = math.absf %19 : vector<2x16x16xf32>
    %21 = vector.shape_cast %20 : vector<2x16x16xf32> to vector<1x2x16x16xf32>
    %cst_11 = arith.constant dense<0.000000e+00> : vector<1xf32>
    %22 = vector.multi_reduction <add>, %21, %cst_11 [1, 2, 3] : vector<1x2x16x16xf32> to vector<1xf32>
    %23 = vector.shape_cast %22 : vector<1xf32> to vector<1x1x1x1xf32>
    %24 = vector.extract %23[0, 0, 0, 0] : f32 from vector<1x1x1x1xf32>
    %25 = arith.addf %18, %24 : f32
    %c1_12 = arith.constant 1 : index
    %26 = memref.load %arg5[%c1_12] : memref<2xf32, #tpu.memory_space<smem>>
    memref.store %25, %arg5[%c1_12] : memref<2xf32, #tpu.memory_space<smem>>
    %c0_13 = arith.constant 0 : index
    %c0_14 = arith.constant 0 : index
    %c0_15 = arith.constant 0 : index
    %27 = vector.load %arg6[%c0_13, %c0_14, %c0_15] : memref<2x16x16xf32, #tpu.memory_space<vmem>>, vector<2x16x16xf32>
    %cst_16 = arith.constant dense<0.000000e+00> : vector<2x16x16xf32>
    %28 = tpu.matmul %3, %3, %cst_16 {dimension_numbers = #tpu.dot_dimension_numbers<[2], [2], [1], [1], [0, 0, 0, 1, 1, 1], [0], [0]>} : vector<2x16x16xbf16>, vector<2x16x16xbf16>, vector<2x16x16xf32> -> vector<2x16x16xf32>
    %29 = arith.addf %27, %28 : vector<2x16x16xf32>
    %c0_17 = arith.constant 0 : index
    %c0_18 = arith.constant 0 : index
    %c0_19 = arith.constant 0 : index
    %30 = vector.load %arg6[%c0_17, %c0_18, %c0_19] : memref<2x16x16xf32, #tpu.memory_space<vmem>>, vector<2x16x16xf32>
    tpu.vector_store %arg6[%c0_17, %c0_18, %c0_19], %29 {strides = array<i32>} : memref<2x16x16xf32, #tpu.memory_space<vmem>>, vector<2x16x16xf32>,
    %c0_20 = arith.constant 0 : index
    %c0_21 = arith.constant 0 : index
    %c0_22 = arith.constant 0 : index
    %31 = vector.load %arg7[%c0_20, %c0_21, %c0_22] : memref<2x16x16xf32, #tpu.memory_space<vmem>>, vector<2x16x16xf32>
    %cst_23 = arith.constant dense<0.000000e+00> : vector<2x16x16xf32>
    %32 = tpu.matmul %4, %4, %cst_23 {dimension_numbers = #tpu.dot_dimension_numbers<[2], [2], [1], [1], [0, 0, 0, 1, 1, 1], [0], [0]>} : vector<2x16x16xbf16>, vector<2x16x16xbf16>, vector<2x16x16xf32> -> vector<2x16x16xf32>
    %33 = arith.addf %31, %32 : vector<2x16x16xf32>
    %c0_24 = arith.constant 0 : index
    %c0_25 = arith.constant 0 : index
    %c0_26 = arith.constant 0 : index
    %34 = vector.load %arg7[%c0_24, %c0_25, %c0_26] : memref<2x16x16xf32, #tpu.memory_space<vmem>>, vector<2x16x16xf32>
    tpu.vector_store %arg7[%c0_24, %c0_25, %c0_26], %33 {strides = array<i32>} : memref<2x16x16xf32, #tpu.memory_space<vmem>>, vector<2x16x16xf32>,
    %c0_27 = arith.constant 0 : index
    %c0_28 = arith.constant 0 : index
    %c0_29 = arith.constant 0 : index
    %35 = vector.load %arg8[%c0_27, %c0_28, %c0_29] : memref<2x16x16xf32, #tpu.memory_space<vmem>>, vector<2x16x16xf32>
    %cst_30 = arith.constant dense<0.000000e+00> : vector<2x16x16xf32>
    %36 = tpu.matmul %5, %5, %cst_30 {dimension_numbers = #tpu.dot_dimension_numbers<[2], [2], [1], [1], [0, 0, 0, 1, 1, 1], [0], [0]>} : vector<2x16x16xbf16>, vector<2x16x16xbf16>, vector<2x16x16xf32> -> vector<2x16x16xf32>
    %37 = arith.addf %35, %36 : vector<2x16x16xf32>
    %c0_31 = arith.constant 0 : index
    %c0_32 = arith.constant 0 : index
    %c0_33 = arith.constant 0 : index
    %38 = vector.load %arg8[%c0_31, %c0_32, %c0_33] : memref<2x16x16xf32, #tpu.memory_space<vmem>>, vector<2x16x16xf32>
    tpu.vector_store %arg8[%c0_31, %c0_32, %c0_33], %37 {strides = array<i32>} : memref<2x16x16xf32, #tpu.memory_space<vmem>>, vector<2x16x16xf32>,
    %c0_i32_34 = arith.constant 0 : i32
    %39 = arith.cmpi eq, %arg0, %c0_i32_34 : i32
    %40 = arith.extui %39 : i1 to i32
    %c0_i32_35 = arith.constant 0 : i32
    %41 = arith.cmpi ne, %40, %c0_i32_35 : i32
    scf.if %41 {
      %c0_36 = arith.constant 0 : index
      %42 = memref.load %arg5[%c0_36] : memref<2xf32, #tpu.memory_space<smem>>
      %c0_37 = arith.constant 0 : index
      %c0_38 = arith.constant 0 : index
      %43 = memref.load %arg4[%c0_37, %c0_38] : memref<1x4xf32, #tpu.memory_space<smem>>
      memref.store %42, %arg4[%c0_37, %c0_38] : memref<1x4xf32, #tpu.memory_space<smem>>
      %c1_39 = arith.constant 1 : index
      %44 = memref.load %arg5[%c1_39] : memref<2xf32, #tpu.memory_space<smem>>
      %c0_40 = arith.constant 0 : index
      %c1_41 = arith.constant 1 : index
      %45 = memref.load %arg4[%c0_40, %c1_41] : memref<1x4xf32, #tpu.memory_space<smem>>
      memref.store %44, %arg4[%c0_40, %c1_41] : memref<1x4xf32, #tpu.memory_space<smem>>
      %c0_42 = arith.constant 0 : index
      %c0_43 = arith.constant 0 : index
      %c0_44 = arith.constant 0 : index
      %46 = vector.load %arg6[%c0_42, %c0_43, %c0_44] : memref<2x16x16xf32, #tpu.memory_space<vmem>>, vector<2x16x16xf32>
      %c0_45 = arith.constant 0 : index
      %c0_46 = arith.constant 0 : index
      %c0_47 = arith.constant 0 : index
      %47 = vector.load %arg8[%c0_45, %c0_46, %c0_47] : memref<2x16x16xf32, #tpu.memory_space<vmem>>, vector<2x16x16xf32>
      %48 = arith.subf %46, %47 : vector<2x16x16xf32>
      %49 = math.absf %48 : vector<2x16x16xf32>
      %50 = vector.shape_cast %49 : vector<2x16x16xf32> to vector<1x2x16x16xf32>
      %cst_48 = arith.constant dense<0.000000e+00> : vector<1xf32>
      %51 = vector.multi_reduction <add>, %50, %cst_48 [1, 2, 3] : vector<1x2x16x16xf32> to vector<1xf32>
      %52 = vector.shape_cast %51 : vector<1xf32> to vector<1x1x1x1xf32>
      %53 = vector.extract %52[0, 0, 0, 0] : f32 from vector<1x1x1x1xf32>
      %c0_49 = arith.constant 0 : index
      %c2 = arith.constant 2 : index
      %54 = memref.load %arg4[%c0_49, %c2] : memref<1x4xf32, #tpu.memory_space<smem>>
      memref.store %53, %arg4[%c0_49, %c2] : memref<1x4xf32, #tpu.memory_space<smem>>
      %c0_50 = arith.constant 0 : index
      %c0_51 = arith.constant 0 : index
      %c0_52 = arith.constant 0 : index
      %55 = vector.load %arg7[%c0_50, %c0_51, %c0_52] : memref<2x16x16xf32, #tpu.memory_space<vmem>>, vector<2x16x16xf32>
      %c0_53 = arith.constant 0 : index
      %c0_54 = arith.constant 0 : index
      %c0_55 = arith.constant 0 : index
      %56 = vector.load %arg8[%c0_53, %c0_54, %c0_55] : memref<2x16x16xf32, #tpu.memory_space<vmem>>, vector<2x16x16xf32>
      %57 = arith.subf %55, %56 : vector<2x16x16xf32>
      %58 = math.absf %57 : vector<2x16x16xf32>
      %59 = vector.shape_cast %58 : vector<2x16x16xf32> to vector<1x2x16x16xf32>
      %cst_56 = arith.constant dense<0.000000e+00> : vector<1xf32>
      %60 = vector.multi_reduction <add>, %59, %cst_56 [1, 2, 3] : vector<1x2x16x16xf32> to vector<1xf32>
      %61 = vector.shape_cast %60 : vector<1xf32> to vector<1x1x1x1xf32>
      %62 = vector.extract %61[0, 0, 0, 0] : f32 from vector<1x1x1x1xf32>
      %c0_57 = arith.constant 0 : index
      %c3 = arith.constant 3 : index
      %63 = memref.load %arg4[%c0_57, %c3] : memref<1x4xf32, #tpu.memory_space<smem>>
      memref.store %62, %arg4[%c0_57, %c3] : memref<1x4xf32, #tpu.memory_space<smem>>
    } else {
    }
    return
  }
  func.func @transform_0(%arg0: i32) -> (i32, i32, i32) {
    %c0_i32 = arith.constant 0 : i32
    %c0_i32_0 = arith.constant 0 : i32
    %c0_i32_1 = arith.constant 0 : i32
    return %c0_i32, %c0_i32_0, %arg0 : i32, i32, i32
  }
  func.func @transform_1(%arg0: i32) -> (i32, i32, i32) {
    %c1_i32 = arith.constant 1 : i32
    %c0_i32 = arith.constant 0 : i32
    %c0_i32_0 = arith.constant 0 : i32
    return %c1_i32, %c0_i32, %arg0 : i32, i32, i32
  }
  func.func @transform_2(%arg0: i32) -> (i32, i32, i32) {
    %c2_i32 = arith.constant 2 : i32
    %c0_i32 = arith.constant 0 : i32
    %c0_i32_0 = arith.constant 0 : i32
    return %c2_i32, %c0_i32, %arg0 : i32, i32, i32
  }
  func.func @transform_3(%arg0: i32) -> (i32, i32) {
    %c0_i32 = arith.constant 0 : i32
    %c0_i32_0 = arith.constant 0 : i32
    %c0_i32_1 = arith.constant 0 : i32
    return %c0_i32, %c0_i32_0 : i32, i32
  }
}

module attributes {stable_mosaic.version = 11 : i64} {
  func.func @_feature_loss_kernel(%arg0: i32, %arg1: memref<2x8x64xbf16, #tpu.memory_space<vmem>>, %arg2: memref<2x8x64xbf16, #tpu.memory_space<vmem>>, %arg3: memref<2x8x64xbf16, #tpu.memory_space<vmem>>, %arg4: memref<1x4xf32, #tpu.memory_space<smem>>, %arg5: memref<2xf32, #tpu.memory_space<smem>>, %arg6: memref<2x8x8xf32, #tpu.memory_space<vmem>>, %arg7: memref<2x8x8xf32, #tpu.memory_space<vmem>>, %arg8: memref<2x8x8xf32, #tpu.memory_space<vmem>>) attributes {dimension_semantics = [#tpu.dimension_semantics<arbitrary>], iteration_bounds = array<i64: 1>, scalar_prefetch = 0 : i64, scratch_operands = 4 : i64, tpu.core_type = #tpu.core_type<tc>, window_params = [{transform_indices = @transform_0, window_bounds = array<i64: 2, 8, 64>}, {transform_indices = @transform_1, window_bounds = array<i64: 2, 8, 64>}, {transform_indices = @transform_2, window_bounds = array<i64: 2, 8, 64>}, {transform_indices = @transform_3, window_bounds = array<i64: 1, 4>}]} {
    %c0_i32 = arith.constant 0 : i32
    %0 = arith.cmpi eq, %arg0, %c0_i32 : i32
    %1 = arith.extui %0 : i1 to i32
    %c0_i32_0 = arith.constant 0 : i32
    %2 = arith.cmpi ne, %1, %c0_i32_0 : i32
    scf.if %2 {
      %cst_36 = arith.constant 0.000000e+00 : f32
      %c0_37 = arith.constant 0 : index
      %42 = memref.load %arg5[%c0_37] : memref<2xf32, #tpu.memory_space<smem>>
      memref.store %cst_36, %arg5[%c0_37] : memref<2xf32, #tpu.memory_space<smem>>
      %cst_38 = arith.constant 0.000000e+00 : f32
      %c1_39 = arith.constant 1 : index
      %43 = memref.load %arg5[%c1_39] : memref<2xf32, #tpu.memory_space<smem>>
      memref.store %cst_38, %arg5[%c1_39] : memref<2xf32, #tpu.memory_space<smem>>
      %cst_40 = arith.constant 0.000000e+00 : f32
      %44 = vector.broadcast %cst_40 : f32 to vector<2x8x8xf32>
      %c0_41 = arith.constant 0 : index
      %c0_42 = arith.constant 0 : index
      %c0_43 = arith.constant 0 : index
      %45 = vector.load %arg6[%c0_41, %c0_42, %c0_43] : memref<2x8x8xf32, #tpu.memory_space<vmem>>, vector<2x8x8xf32>
      tpu.vector_store %arg6[%c0_41, %c0_42, %c0_43], %44 {strides = array<i32>} : memref<2x8x8xf32, #tpu.memory_space<vmem>>, vector<2x8x8xf32>,
      %cst_44 = arith.constant 0.000000e+00 : f32
      %46 = vector.broadcast %cst_44 : f32 to vector<2x8x8xf32>
      %c0_45 = arith.constant 0 : index
      %c0_46 = arith.constant 0 : index
      %c0_47 = arith.constant 0 : index
      %47 = vector.load %arg7[%c0_45, %c0_46, %c0_47] : memref<2x8x8xf32, #tpu.memory_space<vmem>>, vector<2x8x8xf32>
      tpu.vector_store %arg7[%c0_45, %c0_46, %c0_47], %46 {strides = array<i32>} : memref<2x8x8xf32, #tpu.memory_space<vmem>>, vector<2x8x8xf32>,
      %cst_48 = arith.constant 0.000000e+00 : f32
      %48 = vector.broadcast %cst_48 : f32 to vector<2x8x8xf32>
      %c0_49 = arith.constant 0 : index
      %c0_50 = arith.constant 0 : index
      %c0_51 = arith.constant 0 : index
      %49 = vector.load %arg8[%c0_49, %c0_50, %c0_51] : memref<2x8x8xf32, #tpu.memory_space<vmem>>, vector<2x8x8xf32>
      tpu.vector_store %arg8[%c0_49, %c0_50, %c0_51], %48 {strides = array<i32>} : memref<2x8x8xf32, #tpu.memory_space<vmem>>, vector<2x8x8xf32>,
    } else {
    }
    %c0 = arith.constant 0 : index
    %c0_1 = arith.constant 0 : index
    %c0_2 = arith.constant 0 : index
    %3 = vector.load %arg1[%c0, %c0_1, %c0_2] : memref<2x8x64xbf16, #tpu.memory_space<vmem>>, vector<2x8x64xbf16>
    %c0_3 = arith.constant 0 : index
    %c0_4 = arith.constant 0 : index
    %c0_5 = arith.constant 0 : index
    %4 = vector.load %arg2[%c0_3, %c0_4, %c0_5] : memref<2x8x64xbf16, #tpu.memory_space<vmem>>, vector<2x8x64xbf16>
    %c0_6 = arith.constant 0 : index
    %c0_7 = arith.constant 0 : index
    %c0_8 = arith.constant 0 : index
    %5 = vector.load %arg3[%c0_6, %c0_7, %c0_8] : memref<2x8x64xbf16, #tpu.memory_space<vmem>>, vector<2x8x64xbf16>
    %6 = arith.extf %3 : vector<2x8x64xbf16> to vector<2x8x64xf32>
    %7 = arith.extf %4 : vector<2x8x64xbf16> to vector<2x8x64xf32>
    %8 = arith.extf %5 : vector<2x8x64xbf16> to vector<2x8x64xf32>
    %c0_9 = arith.constant 0 : index
    %9 = memref.load %arg5[%c0_9] : memref<2xf32, #tpu.memory_space<smem>>
    %10 = arith.subf %6, %8 : vector<2x8x64xf32>
    %11 = math.absf %10 : vector<2x8x64xf32>
    %12 = vector.shape_cast %11 : vector<2x8x64xf32> to vector<1x2x8x64xf32>
    %cst = arith.constant dense<0.000000e+00> : vector<1xf32>
    %13 = vector.multi_reduction <add>, %12, %cst [1, 2, 3] : vector<1x2x8x64xf32> to vector<1xf32>
    %14 = vector.shape_cast %13 : vector<1xf32> to vector<1x1x1x1xf32>
    %15 = vector.extract %14[0, 0, 0, 0] : f32 from vector<1x1x1x1xf32>
    %16 = arith.addf %9, %15 : f32
    %c0_10 = arith.constant 0 : index
    %17 = memref.load %arg5[%c0_10] : memref<2xf32, #tpu.memory_space<smem>>
    memref.store %16, %arg5[%c0_10] : memref<2xf32, #tpu.memory_space<smem>>
    %c1 = arith.constant 1 : index
    %18 = memref.load %arg5[%c1] : memref<2xf32, #tpu.memory_space<smem>>
    %19 = arith.subf %7, %8 : vector<2x8x64xf32>
    %20 = math.absf %19 : vector<2x8x64xf32>
    %21 = vector.shape_cast %20 : vector<2x8x64xf32> to vector<1x2x8x64xf32>
    %cst_11 = arith.constant dense<0.000000e+00> : vector<1xf32>
    %22 = vector.multi_reduction <add>, %21, %cst_11 [1, 2, 3] : vector<1x2x8x64xf32> to vector<1xf32>
    %23 = vector.shape_cast %22 : vector<1xf32> to vector<1x1x1x1xf32>
    %24 = vector.extract %23[0, 0, 0, 0] : f32 from vector<1x1x1x1xf32>
    %25 = arith.addf %18, %24 : f32
    %c1_12 = arith.constant 1 : index
    %26 = memref.load %arg5[%c1_12] : memref<2xf32, #tpu.memory_space<smem>>
    memref.store %25, %arg5[%c1_12] : memref<2xf32, #tpu.memory_space<smem>>
    %c0_13 = arith.constant 0 : index
    %c0_14 = arith.constant 0 : index
    %c0_15 = arith.constant 0 : index
    %27 = vector.load %arg6[%c0_13, %c0_14, %c0_15] : memref<2x8x8xf32, #tpu.memory_space<vmem>>, vector<2x8x8xf32>
    %cst_16 = arith.constant dense<0.000000e+00> : vector<2x8x8xf32>
    %28 = tpu.matmul %3, %3, %cst_16 {dimension_numbers = #tpu.dot_dimension_numbers<[2], [2], [1], [1], [0, 0, 0, 1, 1, 1], [0], [0]>} : vector<2x8x64xbf16>, vector<2x8x64xbf16>, vector<2x8x8xf32> -> vector<2x8x8xf32>
    %29 = arith.addf %27, %28 : vector<2x8x8xf32>
    %c0_17 = arith.constant 0 : index
    %c0_18 = arith.constant 0 : index
    %c0_19 = arith.constant 0 : index
    %30 = vector.load %arg6[%c0_17, %c0_18, %c0_19] : memref<2x8x8xf32, #tpu.memory_space<vmem>>, vector<2x8x8xf32>
    tpu.vector_store %arg6[%c0_17, %c0_18, %c0_19], %29 {strides = array<i32>} : memref<2x8x8xf32, #tpu.memory_space<vmem>>, vector<2x8x8xf32>,
    %c0_20 = arith.constant 0 : index
    %c0_21 = arith.constant 0 : index
    %c0_22 = arith.constant 0 : index
    %31 = vector.load %arg7[%c0_20, %c0_21, %c0_22] : memref<2x8x8xf32, #tpu.memory_space<vmem>>, vector<2x8x8xf32>
    %cst_23 = arith.constant dense<0.000000e+00> : vector<2x8x8xf32>
    %32 = tpu.matmul %4, %4, %cst_23 {dimension_numbers = #tpu.dot_dimension_numbers<[2], [2], [1], [1], [0, 0, 0, 1, 1, 1], [0], [0]>} : vector<2x8x64xbf16>, vector<2x8x64xbf16>, vector<2x8x8xf32> -> vector<2x8x8xf32>
    %33 = arith.addf %31, %32 : vector<2x8x8xf32>
    %c0_24 = arith.constant 0 : index
    %c0_25 = arith.constant 0 : index
    %c0_26 = arith.constant 0 : index
    %34 = vector.load %arg7[%c0_24, %c0_25, %c0_26] : memref<2x8x8xf32, #tpu.memory_space<vmem>>, vector<2x8x8xf32>
    tpu.vector_store %arg7[%c0_24, %c0_25, %c0_26], %33 {strides = array<i32>} : memref<2x8x8xf32, #tpu.memory_space<vmem>>, vector<2x8x8xf32>,
    %c0_27 = arith.constant 0 : index
    %c0_28 = arith.constant 0 : index
    %c0_29 = arith.constant 0 : index
    %35 = vector.load %arg8[%c0_27, %c0_28, %c0_29] : memref<2x8x8xf32, #tpu.memory_space<vmem>>, vector<2x8x8xf32>
    %cst_30 = arith.constant dense<0.000000e+00> : vector<2x8x8xf32>
    %36 = tpu.matmul %5, %5, %cst_30 {dimension_numbers = #tpu.dot_dimension_numbers<[2], [2], [1], [1], [0, 0, 0, 1, 1, 1], [0], [0]>} : vector<2x8x64xbf16>, vector<2x8x64xbf16>, vector<2x8x8xf32> -> vector<2x8x8xf32>
    %37 = arith.addf %35, %36 : vector<2x8x8xf32>
    %c0_31 = arith.constant 0 : index
    %c0_32 = arith.constant 0 : index
    %c0_33 = arith.constant 0 : index
    %38 = vector.load %arg8[%c0_31, %c0_32, %c0_33] : memref<2x8x8xf32, #tpu.memory_space<vmem>>, vector<2x8x8xf32>
    tpu.vector_store %arg8[%c0_31, %c0_32, %c0_33], %37 {strides = array<i32>} : memref<2x8x8xf32, #tpu.memory_space<vmem>>, vector<2x8x8xf32>,
    %c0_i32_34 = arith.constant 0 : i32
    %39 = arith.cmpi eq, %arg0, %c0_i32_34 : i32
    %40 = arith.extui %39 : i1 to i32
    %c0_i32_35 = arith.constant 0 : i32
    %41 = arith.cmpi ne, %40, %c0_i32_35 : i32
    scf.if %41 {
      %c0_36 = arith.constant 0 : index
      %42 = memref.load %arg5[%c0_36] : memref<2xf32, #tpu.memory_space<smem>>
      %c0_37 = arith.constant 0 : index
      %c0_38 = arith.constant 0 : index
      %43 = memref.load %arg4[%c0_37, %c0_38] : memref<1x4xf32, #tpu.memory_space<smem>>
      memref.store %42, %arg4[%c0_37, %c0_38] : memref<1x4xf32, #tpu.memory_space<smem>>
      %c1_39 = arith.constant 1 : index
      %44 = memref.load %arg5[%c1_39] : memref<2xf32, #tpu.memory_space<smem>>
      %c0_40 = arith.constant 0 : index
      %c1_41 = arith.constant 1 : index
      %45 = memref.load %arg4[%c0_40, %c1_41] : memref<1x4xf32, #tpu.memory_space<smem>>
      memref.store %44, %arg4[%c0_40, %c1_41] : memref<1x4xf32, #tpu.memory_space<smem>>
      %c0_42 = arith.constant 0 : index
      %c0_43 = arith.constant 0 : index
      %c0_44 = arith.constant 0 : index
      %46 = vector.load %arg6[%c0_42, %c0_43, %c0_44] : memref<2x8x8xf32, #tpu.memory_space<vmem>>, vector<2x8x8xf32>
      %c0_45 = arith.constant 0 : index
      %c0_46 = arith.constant 0 : index
      %c0_47 = arith.constant 0 : index
      %47 = vector.load %arg8[%c0_45, %c0_46, %c0_47] : memref<2x8x8xf32, #tpu.memory_space<vmem>>, vector<2x8x8xf32>
      %48 = arith.subf %46, %47 : vector<2x8x8xf32>
      %49 = math.absf %48 : vector<2x8x8xf32>
      %50 = vector.shape_cast %49 : vector<2x8x8xf32> to vector<1x2x8x8xf32>
      %cst_48 = arith.constant dense<0.000000e+00> : vector<1xf32>
      %51 = vector.multi_reduction <add>, %50, %cst_48 [1, 2, 3] : vector<1x2x8x8xf32> to vector<1xf32>
      %52 = vector.shape_cast %51 : vector<1xf32> to vector<1x1x1x1xf32>
      %53 = vector.extract %52[0, 0, 0, 0] : f32 from vector<1x1x1x1xf32>
      %c0_49 = arith.constant 0 : index
      %c2 = arith.constant 2 : index
      %54 = memref.load %arg4[%c0_49, %c2] : memref<1x4xf32, #tpu.memory_space<smem>>
      memref.store %53, %arg4[%c0_49, %c2] : memref<1x4xf32, #tpu.memory_space<smem>>
      %c0_50 = arith.constant 0 : index
      %c0_51 = arith.constant 0 : index
      %c0_52 = arith.constant 0 : index
      %55 = vector.load %arg7[%c0_50, %c0_51, %c0_52] : memref<2x8x8xf32, #tpu.memory_space<vmem>>, vector<2x8x8xf32>
      %c0_53 = arith.constant 0 : index
      %c0_54 = arith.constant 0 : index
      %c0_55 = arith.constant 0 : index
      %56 = vector.load %arg8[%c0_53, %c0_54, %c0_55] : memref<2x8x8xf32, #tpu.memory_space<vmem>>, vector<2x8x8xf32>
      %57 = arith.subf %55, %56 : vector<2x8x8xf32>
      %58 = math.absf %57 : vector<2x8x8xf32>
      %59 = vector.shape_cast %58 : vector<2x8x8xf32> to vector<1x2x8x8xf32>
      %cst_56 = arith.constant dense<0.000000e+00> : vector<1xf32>
      %60 = vector.multi_reduction <add>, %59, %cst_56 [1, 2, 3] : vector<1x2x8x8xf32> to vector<1xf32>
      %61 = vector.shape_cast %60 : vector<1xf32> to vector<1x1x1x1xf32>
      %62 = vector.extract %61[0, 0, 0, 0] : f32 from vector<1x1x1x1xf32>
      %c0_57 = arith.constant 0 : index
      %c3 = arith.constant 3 : index
      %63 = memref.load %arg4[%c0_57, %c3] : memref<1x4xf32, #tpu.memory_space<smem>>
      memref.store %62, %arg4[%c0_57, %c3] : memref<1x4xf32, #tpu.memory_space<smem>>
    } else {
    }
    return
  }
  func.func @transform_0(%arg0: i32) -> (i32, i32, i32) {
    %c0_i32 = arith.constant 0 : i32
    %c0_i32_0 = arith.constant 0 : i32
    %c0_i32_1 = arith.constant 0 : i32
    return %c0_i32, %c0_i32_0, %arg0 : i32, i32, i32
  }
  func.func @transform_1(%arg0: i32) -> (i32, i32, i32) {
    %c1_i32 = arith.constant 1 : i32
    %c0_i32 = arith.constant 0 : i32
    %c0_i32_0 = arith.constant 0 : i32
    return %c1_i32, %c0_i32, %arg0 : i32, i32, i32
  }
  func.func @transform_2(%arg0: i32) -> (i32, i32, i32) {
    %c2_i32 = arith.constant 2 : i32
    %c0_i32 = arith.constant 0 : i32
    %c0_i32_0 = arith.constant 0 : i32
    return %c2_i32, %c0_i32, %arg0 : i32, i32, i32
  }
  func.func @transform_3(%arg0: i32) -> (i32, i32) {
    %c0_i32 = arith.constant 0 : i32
    %c0_i32_0 = arith.constant 0 : i32
    %c0_i32_1 = arith.constant 0 : i32
    return %c0_i32, %c0_i32_0 : i32, i32
  }
}

module attributes {stable_mosaic.version = 11 : i64} {
  func.func @_conv3x3_kernel(%arg0: i32, %arg1: memref<1x16x38xbf16, #tpu.memory_space<vmem>>, %arg2: memref<9x32x16xbf16, #tpu.memory_space<vmem>>, %arg3: memref<32x1xf32, #tpu.memory_space<vmem>>, %arg4: memref<1x32x24xbf16, #tpu.memory_space<vmem>>) attributes {dimension_semantics = [#tpu.dimension_semantics<parallel>], iteration_bounds = array<i64: 6>, scalar_prefetch = 0 : i64, scratch_operands = 0 : i64, tpu.core_type = #tpu.core_type<tc>, window_params = [{transform_indices = @transform_0, window_bounds = array<i64: 1, 16, 38>}, {pipeline_mode = #tpu.pipeline_mode<synchronous>, transform_indices = @transform_1, window_bounds = array<i64: 9, 32, 16>}, {pipeline_mode = #tpu.pipeline_mode<synchronous>, transform_indices = @transform_2, window_bounds = array<i64: 32, 1>}, {transform_indices = @transform_3, window_bounds = array<i64: 1, 32, 24>}]} {
    %cst = arith.constant 0.000000e+00 : f32
    %0 = vector.broadcast %cst : f32 to vector<32x24xf32>
    %c0 = arith.constant 0 : index
    %c0_0 = arith.constant 0 : index
    %c0_1 = arith.constant 0 : index
    %1 = vector.load %arg1[%c0, %c0_0, %c0_1] : memref<1x16x38xbf16, #tpu.memory_space<vmem>>, vector<1x16x24xbf16>
    %2 = vector.shape_cast %1 : vector<1x16x24xbf16> to vector<16x24xbf16>
    %c0_2 = arith.constant 0 : index
    %c0_3 = arith.constant 0 : index
    %c0_4 = arith.constant 0 : index
    %3 = vector.load %arg2[%c0_2, %c0_3, %c0_4] : memref<9x32x16xbf16, #tpu.memory_space<vmem>>, vector<1x32x16xbf16>
    %4 = vector.shape_cast %3 : vector<1x32x16xbf16> to vector<32x16xbf16>
    %cst_5 = arith.constant dense<0.000000e+00> : vector<32x24xf32>
    %5 = tpu.matmul %4, %2, %cst_5 {dimension_numbers = #tpu.dot_dimension_numbers<[1], [0], [0], [1], [0, 0, 1, 1], [], []>} : vector<32x16xbf16>, vector<16x24xbf16>, vector<32x24xf32> -> vector<32x24xf32>
    %6 = arith.addf %0, %5 : vector<32x24xf32>
    %c0_6 = arith.constant 0 : index
    %c0_7 = arith.constant 0 : index
    %c1 = arith.constant 1 : index
    %7 = vector.load %arg1[%c0_6, %c0_7, %c1] : memref<1x16x38xbf16, #tpu.memory_space<vmem>>, vector<1x16x24xbf16>
    %8 = vector.shape_cast %7 : vector<1x16x24xbf16> to vector<16x24xbf16>
    %c1_8 = arith.constant 1 : index
    %c0_9 = arith.constant 0 : index
    %c0_10 = arith.constant 0 : index
    %9 = vector.load %arg2[%c1_8, %c0_9, %c0_10] : memref<9x32x16xbf16, #tpu.memory_space<vmem>>, vector<1x32x16xbf16>
    %10 = vector.shape_cast %9 : vector<1x32x16xbf16> to vector<32x16xbf16>
    %cst_11 = arith.constant dense<0.000000e+00> : vector<32x24xf32>
    %11 = tpu.matmul %10, %8, %cst_11 {dimension_numbers = #tpu.dot_dimension_numbers<[1], [0], [0], [1], [0, 0, 1, 1], [], []>} : vector<32x16xbf16>, vector<16x24xbf16>, vector<32x24xf32> -> vector<32x24xf32>
    %12 = arith.addf %6, %11 : vector<32x24xf32>
    %c0_12 = arith.constant 0 : index
    %c0_13 = arith.constant 0 : index
    %c2 = arith.constant 2 : index
    %13 = vector.load %arg1[%c0_12, %c0_13, %c2] : memref<1x16x38xbf16, #tpu.memory_space<vmem>>, vector<1x16x24xbf16>
    %14 = vector.shape_cast %13 : vector<1x16x24xbf16> to vector<16x24xbf16>
    %c2_14 = arith.constant 2 : index
    %c0_15 = arith.constant 0 : index
    %c0_16 = arith.constant 0 : index
    %15 = vector.load %arg2[%c2_14, %c0_15, %c0_16] : memref<9x32x16xbf16, #tpu.memory_space<vmem>>, vector<1x32x16xbf16>
    %16 = vector.shape_cast %15 : vector<1x32x16xbf16> to vector<32x16xbf16>
    %cst_17 = arith.constant dense<0.000000e+00> : vector<32x24xf32>
    %17 = tpu.matmul %16, %14, %cst_17 {dimension_numbers = #tpu.dot_dimension_numbers<[1], [0], [0], [1], [0, 0, 1, 1], [], []>} : vector<32x16xbf16>, vector<16x24xbf16>, vector<32x24xf32> -> vector<32x24xf32>
    %18 = arith.addf %12, %17 : vector<32x24xf32>
    %c0_18 = arith.constant 0 : index
    %c0_19 = arith.constant 0 : index
    %c6 = arith.constant 6 : index
    %19 = vector.load %arg1[%c0_18, %c0_19, %c6] : memref<1x16x38xbf16, #tpu.memory_space<vmem>>, vector<1x16x24xbf16>
    %20 = vector.shape_cast %19 : vector<1x16x24xbf16> to vector<16x24xbf16>
    %c3 = arith.constant 3 : index
    %c0_20 = arith.constant 0 : index
    %c0_21 = arith.constant 0 : index
    %21 = vector.load %arg2[%c3, %c0_20, %c0_21] : memref<9x32x16xbf16, #tpu.memory_space<vmem>>, vector<1x32x16xbf16>
    %22 = vector.shape_cast %21 : vector<1x32x16xbf16> to vector<32x16xbf16>
    %cst_22 = arith.constant dense<0.000000e+00> : vector<32x24xf32>
    %23 = tpu.matmul %22, %20, %cst_22 {dimension_numbers = #tpu.dot_dimension_numbers<[1], [0], [0], [1], [0, 0, 1, 1], [], []>} : vector<32x16xbf16>, vector<16x24xbf16>, vector<32x24xf32> -> vector<32x24xf32>
    %24 = arith.addf %18, %23 : vector<32x24xf32>
    %c0_23 = arith.constant 0 : index
    %c0_24 = arith.constant 0 : index
    %c7 = arith.constant 7 : index
    %25 = vector.load %arg1[%c0_23, %c0_24, %c7] : memref<1x16x38xbf16, #tpu.memory_space<vmem>>, vector<1x16x24xbf16>
    %26 = vector.shape_cast %25 : vector<1x16x24xbf16> to vector<16x24xbf16>
    %c4 = arith.constant 4 : index
    %c0_25 = arith.constant 0 : index
    %c0_26 = arith.constant 0 : index
    %27 = vector.load %arg2[%c4, %c0_25, %c0_26] : memref<9x32x16xbf16, #tpu.memory_space<vmem>>, vector<1x32x16xbf16>
    %28 = vector.shape_cast %27 : vector<1x32x16xbf16> to vector<32x16xbf16>
    %cst_27 = arith.constant dense<0.000000e+00> : vector<32x24xf32>
    %29 = tpu.matmul %28, %26, %cst_27 {dimension_numbers = #tpu.dot_dimension_numbers<[1], [0], [0], [1], [0, 0, 1, 1], [], []>} : vector<32x16xbf16>, vector<16x24xbf16>, vector<32x24xf32> -> vector<32x24xf32>
    %30 = arith.addf %24, %29 : vector<32x24xf32>
    %c0_28 = arith.constant 0 : index
    %c0_29 = arith.constant 0 : index
    %c8 = arith.constant 8 : index
    %31 = vector.load %arg1[%c0_28, %c0_29, %c8] : memref<1x16x38xbf16, #tpu.memory_space<vmem>>, vector<1x16x24xbf16>
    %32 = vector.shape_cast %31 : vector<1x16x24xbf16> to vector<16x24xbf16>
    %c5 = arith.constant 5 : index
    %c0_30 = arith.constant 0 : index
    %c0_31 = arith.constant 0 : index
    %33 = vector.load %arg2[%c5, %c0_30, %c0_31] : memref<9x32x16xbf16, #tpu.memory_space<vmem>>, vector<1x32x16xbf16>
    %34 = vector.shape_cast %33 : vector<1x32x16xbf16> to vector<32x16xbf16>
    %cst_32 = arith.constant dense<0.000000e+00> : vector<32x24xf32>
    %35 = tpu.matmul %34, %32, %cst_32 {dimension_numbers = #tpu.dot_dimension_numbers<[1], [0], [0], [1], [0, 0, 1, 1], [], []>} : vector<32x16xbf16>, vector<16x24xbf16>, vector<32x24xf32> -> vector<32x24xf32>
    %36 = arith.addf %30, %35 : vector<32x24xf32>
    %c0_33 = arith.constant 0 : index
    %c0_34 = arith.constant 0 : index
    %c12 = arith.constant 12 : index
    %37 = vector.load %arg1[%c0_33, %c0_34, %c12] : memref<1x16x38xbf16, #tpu.memory_space<vmem>>, vector<1x16x24xbf16>
    %38 = vector.shape_cast %37 : vector<1x16x24xbf16> to vector<16x24xbf16>
    %c6_35 = arith.constant 6 : index
    %c0_36 = arith.constant 0 : index
    %c0_37 = arith.constant 0 : index
    %39 = vector.load %arg2[%c6_35, %c0_36, %c0_37] : memref<9x32x16xbf16, #tpu.memory_space<vmem>>, vector<1x32x16xbf16>
    %40 = vector.shape_cast %39 : vector<1x32x16xbf16> to vector<32x16xbf16>
    %cst_38 = arith.constant dense<0.000000e+00> : vector<32x24xf32>
    %41 = tpu.matmul %40, %38, %cst_38 {dimension_numbers = #tpu.dot_dimension_numbers<[1], [0], [0], [1], [0, 0, 1, 1], [], []>} : vector<32x16xbf16>, vector<16x24xbf16>, vector<32x24xf32> -> vector<32x24xf32>
    %42 = arith.addf %36, %41 : vector<32x24xf32>
    %c0_39 = arith.constant 0 : index
    %c0_40 = arith.constant 0 : index
    %c13 = arith.constant 13 : index
    %43 = vector.load %arg1[%c0_39, %c0_40, %c13] : memref<1x16x38xbf16, #tpu.memory_space<vmem>>, vector<1x16x24xbf16>
    %44 = vector.shape_cast %43 : vector<1x16x24xbf16> to vector<16x24xbf16>
    %c7_41 = arith.constant 7 : index
    %c0_42 = arith.constant 0 : index
    %c0_43 = arith.constant 0 : index
    %45 = vector.load %arg2[%c7_41, %c0_42, %c0_43] : memref<9x32x16xbf16, #tpu.memory_space<vmem>>, vector<1x32x16xbf16>
    %46 = vector.shape_cast %45 : vector<1x32x16xbf16> to vector<32x16xbf16>
    %cst_44 = arith.constant dense<0.000000e+00> : vector<32x24xf32>
    %47 = tpu.matmul %46, %44, %cst_44 {dimension_numbers = #tpu.dot_dimension_numbers<[1], [0], [0], [1], [0, 0, 1, 1], [], []>} : vector<32x16xbf16>, vector<16x24xbf16>, vector<32x24xf32> -> vector<32x24xf32>
    %48 = arith.addf %42, %47 : vector<32x24xf32>
    %c0_45 = arith.constant 0 : index
    %c0_46 = arith.constant 0 : index
    %c14 = arith.constant 14 : index
    %49 = vector.load %arg1[%c0_45, %c0_46, %c14] : memref<1x16x38xbf16, #tpu.memory_space<vmem>>, vector<1x16x24xbf16>
    %50 = vector.shape_cast %49 : vector<1x16x24xbf16> to vector<16x24xbf16>
    %c8_47 = arith.constant 8 : index
    %c0_48 = arith.constant 0 : index
    %c0_49 = arith.constant 0 : index
    %51 = vector.load %arg2[%c8_47, %c0_48, %c0_49] : memref<9x32x16xbf16, #tpu.memory_space<vmem>>, vector<1x32x16xbf16>
    %52 = vector.shape_cast %51 : vector<1x32x16xbf16> to vector<32x16xbf16>
    %cst_50 = arith.constant dense<0.000000e+00> : vector<32x24xf32>
    %53 = tpu.matmul %52, %50, %cst_50 {dimension_numbers = #tpu.dot_dimension_numbers<[1], [0], [0], [1], [0, 0, 1, 1], [], []>} : vector<32x16xbf16>, vector<16x24xbf16>, vector<32x24xf32> -> vector<32x24xf32>
    %54 = arith.addf %48, %53 : vector<32x24xf32>
    %c0_51 = arith.constant 0 : index
    %c0_52 = arith.constant 0 : index
    %55 = vector.load %arg3[%c0_51, %c0_52] : memref<32x1xf32, #tpu.memory_space<vmem>>, vector<32x1xf32>
    %56 = vector.broadcast %55 : vector<32x1xf32> to vector<32x24xf32>
    %57 = arith.addf %54, %56 : vector<32x24xf32>
    %cst_53 = arith.constant 0.000000e+00 : f32
    %58 = vector.broadcast %cst_53 : f32 to vector<32x24xf32>
    %59 = arith.maximumf %57, %58 : vector<32x24xf32>
    %60 = arith.truncf %59 : vector<32x24xf32> to vector<32x24xbf16>
    %c0_54 = arith.constant 0 : index
    %c0_55 = arith.constant 0 : index
    %c0_56 = arith.constant 0 : index
    %61 = vector.load %arg4[%c0_54, %c0_55, %c0_56] : memref<1x32x24xbf16, #tpu.memory_space<vmem>>, vector<1x32x24xbf16>
    %62 = vector.shape_cast %61 : vector<1x32x24xbf16> to vector<32x24xbf16>
    %63 = vector.shape_cast %60 : vector<32x24xbf16> to vector<1x32x24xbf16>
    tpu.vector_store %arg4[%c0_54, %c0_55, %c0_56], %63 {strides = array<i32>} : memref<1x32x24xbf16, #tpu.memory_space<vmem>>, vector<1x32x24xbf16>,
    return
  }
  func.func @transform_0(%arg0: i32) -> (i32, i32, i32) {
    %c0_i32 = arith.constant 0 : i32
    %c0_i32_0 = arith.constant 0 : i32
    %c0_i32_1 = arith.constant 0 : i32
    return %arg0, %c0_i32, %c0_i32_0 : i32, i32, i32
  }
  func.func @transform_1(%arg0: i32) -> (i32, i32, i32) {
    %c0_i32 = arith.constant 0 : i32
    %c0_i32_0 = arith.constant 0 : i32
    %c0_i32_1 = arith.constant 0 : i32
    %c0_i32_2 = arith.constant 0 : i32
    return %c0_i32, %c0_i32_0, %c0_i32_1 : i32, i32, i32
  }
  func.func @transform_2(%arg0: i32) -> (i32, i32) {
    %c0_i32 = arith.constant 0 : i32
    %c0_i32_0 = arith.constant 0 : i32
    %c0_i32_1 = arith.constant 0 : i32
    return %c0_i32, %c0_i32_0 : i32, i32
  }
  func.func @transform_3(%arg0: i32) -> (i32, i32, i32) {
    %c0_i32 = arith.constant 0 : i32
    %c0_i32_0 = arith.constant 0 : i32
    %c0_i32_1 = arith.constant 0 : i32
    return %arg0, %c0_i32, %c0_i32_0 : i32, i32, i32
  }
}

module attributes {stable_mosaic.version = 11 : i64} {
  func.func @_feature_loss_kernel(%arg0: i32, %arg1: memref<2x32x4xbf16, #tpu.memory_space<vmem>>, %arg2: memref<2x32x4xbf16, #tpu.memory_space<vmem>>, %arg3: memref<2x32x4xbf16, #tpu.memory_space<vmem>>, %arg4: memref<1x4xf32, #tpu.memory_space<smem>>, %arg5: memref<2xf32, #tpu.memory_space<smem>>, %arg6: memref<2x32x32xf32, #tpu.memory_space<vmem>>, %arg7: memref<2x32x32xf32, #tpu.memory_space<vmem>>, %arg8: memref<2x32x32xf32, #tpu.memory_space<vmem>>) attributes {dimension_semantics = [#tpu.dimension_semantics<arbitrary>], iteration_bounds = array<i64: 1>, scalar_prefetch = 0 : i64, scratch_operands = 4 : i64, tpu.core_type = #tpu.core_type<tc>, window_params = [{transform_indices = @transform_0, window_bounds = array<i64: 2, 32, 4>}, {transform_indices = @transform_1, window_bounds = array<i64: 2, 32, 4>}, {transform_indices = @transform_2, window_bounds = array<i64: 2, 32, 4>}, {transform_indices = @transform_3, window_bounds = array<i64: 1, 4>}]} {
    %c0_i32 = arith.constant 0 : i32
    %0 = arith.cmpi eq, %arg0, %c0_i32 : i32
    %1 = arith.extui %0 : i1 to i32
    %c0_i32_0 = arith.constant 0 : i32
    %2 = arith.cmpi ne, %1, %c0_i32_0 : i32
    scf.if %2 {
      %cst_36 = arith.constant 0.000000e+00 : f32
      %c0_37 = arith.constant 0 : index
      %42 = memref.load %arg5[%c0_37] : memref<2xf32, #tpu.memory_space<smem>>
      memref.store %cst_36, %arg5[%c0_37] : memref<2xf32, #tpu.memory_space<smem>>
      %cst_38 = arith.constant 0.000000e+00 : f32
      %c1_39 = arith.constant 1 : index
      %43 = memref.load %arg5[%c1_39] : memref<2xf32, #tpu.memory_space<smem>>
      memref.store %cst_38, %arg5[%c1_39] : memref<2xf32, #tpu.memory_space<smem>>
      %cst_40 = arith.constant 0.000000e+00 : f32
      %44 = vector.broadcast %cst_40 : f32 to vector<2x32x32xf32>
      %c0_41 = arith.constant 0 : index
      %c0_42 = arith.constant 0 : index
      %c0_43 = arith.constant 0 : index
      %45 = vector.load %arg6[%c0_41, %c0_42, %c0_43] : memref<2x32x32xf32, #tpu.memory_space<vmem>>, vector<2x32x32xf32>
      tpu.vector_store %arg6[%c0_41, %c0_42, %c0_43], %44 {strides = array<i32>} : memref<2x32x32xf32, #tpu.memory_space<vmem>>, vector<2x32x32xf32>,
      %cst_44 = arith.constant 0.000000e+00 : f32
      %46 = vector.broadcast %cst_44 : f32 to vector<2x32x32xf32>
      %c0_45 = arith.constant 0 : index
      %c0_46 = arith.constant 0 : index
      %c0_47 = arith.constant 0 : index
      %47 = vector.load %arg7[%c0_45, %c0_46, %c0_47] : memref<2x32x32xf32, #tpu.memory_space<vmem>>, vector<2x32x32xf32>
      tpu.vector_store %arg7[%c0_45, %c0_46, %c0_47], %46 {strides = array<i32>} : memref<2x32x32xf32, #tpu.memory_space<vmem>>, vector<2x32x32xf32>,
      %cst_48 = arith.constant 0.000000e+00 : f32
      %48 = vector.broadcast %cst_48 : f32 to vector<2x32x32xf32>
      %c0_49 = arith.constant 0 : index
      %c0_50 = arith.constant 0 : index
      %c0_51 = arith.constant 0 : index
      %49 = vector.load %arg8[%c0_49, %c0_50, %c0_51] : memref<2x32x32xf32, #tpu.memory_space<vmem>>, vector<2x32x32xf32>
      tpu.vector_store %arg8[%c0_49, %c0_50, %c0_51], %48 {strides = array<i32>} : memref<2x32x32xf32, #tpu.memory_space<vmem>>, vector<2x32x32xf32>,
    } else {
    }
    %c0 = arith.constant 0 : index
    %c0_1 = arith.constant 0 : index
    %c0_2 = arith.constant 0 : index
    %3 = vector.load %arg1[%c0, %c0_1, %c0_2] : memref<2x32x4xbf16, #tpu.memory_space<vmem>>, vector<2x32x4xbf16>
    %c0_3 = arith.constant 0 : index
    %c0_4 = arith.constant 0 : index
    %c0_5 = arith.constant 0 : index
    %4 = vector.load %arg2[%c0_3, %c0_4, %c0_5] : memref<2x32x4xbf16, #tpu.memory_space<vmem>>, vector<2x32x4xbf16>
    %c0_6 = arith.constant 0 : index
    %c0_7 = arith.constant 0 : index
    %c0_8 = arith.constant 0 : index
    %5 = vector.load %arg3[%c0_6, %c0_7, %c0_8] : memref<2x32x4xbf16, #tpu.memory_space<vmem>>, vector<2x32x4xbf16>
    %6 = arith.extf %3 : vector<2x32x4xbf16> to vector<2x32x4xf32>
    %7 = arith.extf %4 : vector<2x32x4xbf16> to vector<2x32x4xf32>
    %8 = arith.extf %5 : vector<2x32x4xbf16> to vector<2x32x4xf32>
    %c0_9 = arith.constant 0 : index
    %9 = memref.load %arg5[%c0_9] : memref<2xf32, #tpu.memory_space<smem>>
    %10 = arith.subf %6, %8 : vector<2x32x4xf32>
    %11 = math.absf %10 : vector<2x32x4xf32>
    %12 = vector.shape_cast %11 : vector<2x32x4xf32> to vector<1x2x32x4xf32>
    %cst = arith.constant dense<0.000000e+00> : vector<1xf32>
    %13 = vector.multi_reduction <add>, %12, %cst [1, 2, 3] : vector<1x2x32x4xf32> to vector<1xf32>
    %14 = vector.shape_cast %13 : vector<1xf32> to vector<1x1x1x1xf32>
    %15 = vector.extract %14[0, 0, 0, 0] : f32 from vector<1x1x1x1xf32>
    %16 = arith.addf %9, %15 : f32
    %c0_10 = arith.constant 0 : index
    %17 = memref.load %arg5[%c0_10] : memref<2xf32, #tpu.memory_space<smem>>
    memref.store %16, %arg5[%c0_10] : memref<2xf32, #tpu.memory_space<smem>>
    %c1 = arith.constant 1 : index
    %18 = memref.load %arg5[%c1] : memref<2xf32, #tpu.memory_space<smem>>
    %19 = arith.subf %7, %8 : vector<2x32x4xf32>
    %20 = math.absf %19 : vector<2x32x4xf32>
    %21 = vector.shape_cast %20 : vector<2x32x4xf32> to vector<1x2x32x4xf32>
    %cst_11 = arith.constant dense<0.000000e+00> : vector<1xf32>
    %22 = vector.multi_reduction <add>, %21, %cst_11 [1, 2, 3] : vector<1x2x32x4xf32> to vector<1xf32>
    %23 = vector.shape_cast %22 : vector<1xf32> to vector<1x1x1x1xf32>
    %24 = vector.extract %23[0, 0, 0, 0] : f32 from vector<1x1x1x1xf32>
    %25 = arith.addf %18, %24 : f32
    %c1_12 = arith.constant 1 : index
    %26 = memref.load %arg5[%c1_12] : memref<2xf32, #tpu.memory_space<smem>>
    memref.store %25, %arg5[%c1_12] : memref<2xf32, #tpu.memory_space<smem>>
    %c0_13 = arith.constant 0 : index
    %c0_14 = arith.constant 0 : index
    %c0_15 = arith.constant 0 : index
    %27 = vector.load %arg6[%c0_13, %c0_14, %c0_15] : memref<2x32x32xf32, #tpu.memory_space<vmem>>, vector<2x32x32xf32>
    %cst_16 = arith.constant dense<0.000000e+00> : vector<2x32x32xf32>
    %28 = tpu.matmul %3, %3, %cst_16 {dimension_numbers = #tpu.dot_dimension_numbers<[2], [2], [1], [1], [0, 0, 0, 1, 1, 1], [0], [0]>} : vector<2x32x4xbf16>, vector<2x32x4xbf16>, vector<2x32x32xf32> -> vector<2x32x32xf32>
    %29 = arith.addf %27, %28 : vector<2x32x32xf32>
    %c0_17 = arith.constant 0 : index
    %c0_18 = arith.constant 0 : index
    %c0_19 = arith.constant 0 : index
    %30 = vector.load %arg6[%c0_17, %c0_18, %c0_19] : memref<2x32x32xf32, #tpu.memory_space<vmem>>, vector<2x32x32xf32>
    tpu.vector_store %arg6[%c0_17, %c0_18, %c0_19], %29 {strides = array<i32>} : memref<2x32x32xf32, #tpu.memory_space<vmem>>, vector<2x32x32xf32>,
    %c0_20 = arith.constant 0 : index
    %c0_21 = arith.constant 0 : index
    %c0_22 = arith.constant 0 : index
    %31 = vector.load %arg7[%c0_20, %c0_21, %c0_22] : memref<2x32x32xf32, #tpu.memory_space<vmem>>, vector<2x32x32xf32>
    %cst_23 = arith.constant dense<0.000000e+00> : vector<2x32x32xf32>
    %32 = tpu.matmul %4, %4, %cst_23 {dimension_numbers = #tpu.dot_dimension_numbers<[2], [2], [1], [1], [0, 0, 0, 1, 1, 1], [0], [0]>} : vector<2x32x4xbf16>, vector<2x32x4xbf16>, vector<2x32x32xf32> -> vector<2x32x32xf32>
    %33 = arith.addf %31, %32 : vector<2x32x32xf32>
    %c0_24 = arith.constant 0 : index
    %c0_25 = arith.constant 0 : index
    %c0_26 = arith.constant 0 : index
    %34 = vector.load %arg7[%c0_24, %c0_25, %c0_26] : memref<2x32x32xf32, #tpu.memory_space<vmem>>, vector<2x32x32xf32>
    tpu.vector_store %arg7[%c0_24, %c0_25, %c0_26], %33 {strides = array<i32>} : memref<2x32x32xf32, #tpu.memory_space<vmem>>, vector<2x32x32xf32>,
    %c0_27 = arith.constant 0 : index
    %c0_28 = arith.constant 0 : index
    %c0_29 = arith.constant 0 : index
    %35 = vector.load %arg8[%c0_27, %c0_28, %c0_29] : memref<2x32x32xf32, #tpu.memory_space<vmem>>, vector<2x32x32xf32>
    %cst_30 = arith.constant dense<0.000000e+00> : vector<2x32x32xf32>
    %36 = tpu.matmul %5, %5, %cst_30 {dimension_numbers = #tpu.dot_dimension_numbers<[2], [2], [1], [1], [0, 0, 0, 1, 1, 1], [0], [0]>} : vector<2x32x4xbf16>, vector<2x32x4xbf16>, vector<2x32x32xf32> -> vector<2x32x32xf32>
    %37 = arith.addf %35, %36 : vector<2x32x32xf32>
    %c0_31 = arith.constant 0 : index
    %c0_32 = arith.constant 0 : index
    %c0_33 = arith.constant 0 : index
    %38 = vector.load %arg8[%c0_31, %c0_32, %c0_33] : memref<2x32x32xf32, #tpu.memory_space<vmem>>, vector<2x32x32xf32>
    tpu.vector_store %arg8[%c0_31, %c0_32, %c0_33], %37 {strides = array<i32>} : memref<2x32x32xf32, #tpu.memory_space<vmem>>, vector<2x32x32xf32>,
    %c0_i32_34 = arith.constant 0 : i32
    %39 = arith.cmpi eq, %arg0, %c0_i32_34 : i32
    %40 = arith.extui %39 : i1 to i32
    %c0_i32_35 = arith.constant 0 : i32
    %41 = arith.cmpi ne, %40, %c0_i32_35 : i32
    scf.if %41 {
      %c0_36 = arith.constant 0 : index
      %42 = memref.load %arg5[%c0_36] : memref<2xf32, #tpu.memory_space<smem>>
      %c0_37 = arith.constant 0 : index
      %c0_38 = arith.constant 0 : index
      %43 = memref.load %arg4[%c0_37, %c0_38] : memref<1x4xf32, #tpu.memory_space<smem>>
      memref.store %42, %arg4[%c0_37, %c0_38] : memref<1x4xf32, #tpu.memory_space<smem>>
      %c1_39 = arith.constant 1 : index
      %44 = memref.load %arg5[%c1_39] : memref<2xf32, #tpu.memory_space<smem>>
      %c0_40 = arith.constant 0 : index
      %c1_41 = arith.constant 1 : index
      %45 = memref.load %arg4[%c0_40, %c1_41] : memref<1x4xf32, #tpu.memory_space<smem>>
      memref.store %44, %arg4[%c0_40, %c1_41] : memref<1x4xf32, #tpu.memory_space<smem>>
      %c0_42 = arith.constant 0 : index
      %c0_43 = arith.constant 0 : index
      %c0_44 = arith.constant 0 : index
      %46 = vector.load %arg6[%c0_42, %c0_43, %c0_44] : memref<2x32x32xf32, #tpu.memory_space<vmem>>, vector<2x32x32xf32>
      %c0_45 = arith.constant 0 : index
      %c0_46 = arith.constant 0 : index
      %c0_47 = arith.constant 0 : index
      %47 = vector.load %arg8[%c0_45, %c0_46, %c0_47] : memref<2x32x32xf32, #tpu.memory_space<vmem>>, vector<2x32x32xf32>
      %48 = arith.subf %46, %47 : vector<2x32x32xf32>
      %49 = math.absf %48 : vector<2x32x32xf32>
      %50 = vector.shape_cast %49 : vector<2x32x32xf32> to vector<1x2x32x32xf32>
      %cst_48 = arith.constant dense<0.000000e+00> : vector<1xf32>
      %51 = vector.multi_reduction <add>, %50, %cst_48 [1, 2, 3] : vector<1x2x32x32xf32> to vector<1xf32>
      %52 = vector.shape_cast %51 : vector<1xf32> to vector<1x1x1x1xf32>
      %53 = vector.extract %52[0, 0, 0, 0] : f32 from vector<1x1x1x1xf32>
      %c0_49 = arith.constant 0 : index
      %c2 = arith.constant 2 : index
      %54 = memref.load %arg4[%c0_49, %c2] : memref<1x4xf32, #tpu.memory_space<smem>>
      memref.store %53, %arg4[%c0_49, %c2] : memref<1x4xf32, #tpu.memory_space<smem>>
      %c0_50 = arith.constant 0 : index
      %c0_51 = arith.constant 0 : index
      %c0_52 = arith.constant 0 : index
      %55 = vector.load %arg7[%c0_50, %c0_51, %c0_52] : memref<2x32x32xf32, #tpu.memory_space<vmem>>, vector<2x32x32xf32>
      %c0_53 = arith.constant 0 : index
      %c0_54 = arith.constant 0 : index
      %c0_55 = arith.constant 0 : index
      %56 = vector.load %arg8[%c0_53, %c0_54, %c0_55] : memref<2x32x32xf32, #tpu.memory_space<vmem>>, vector<2x32x32xf32>
      %57 = arith.subf %55, %56 : vector<2x32x32xf32>
      %58 = math.absf %57 : vector<2x32x32xf32>
      %59 = vector.shape_cast %58 : vector<2x32x32xf32> to vector<1x2x32x32xf32>
      %cst_56 = arith.constant dense<0.000000e+00> : vector<1xf32>
      %60 = vector.multi_reduction <add>, %59, %cst_56 [1, 2, 3] : vector<1x2x32x32xf32> to vector<1xf32>
      %61 = vector.shape_cast %60 : vector<1xf32> to vector<1x1x1x1xf32>
      %62 = vector.extract %61[0, 0, 0, 0] : f32 from vector<1x1x1x1xf32>
      %c0_57 = arith.constant 0 : index
      %c3 = arith.constant 3 : index
      %63 = memref.load %arg4[%c0_57, %c3] : memref<1x4xf32, #tpu.memory_space<smem>>
      memref.store %62, %arg4[%c0_57, %c3] : memref<1x4xf32, #tpu.memory_space<smem>>
    } else {
    }
    return
  }
  func.func @transform_0(%arg0: i32) -> (i32, i32, i32) {
    %c0_i32 = arith.constant 0 : i32
    %c0_i32_0 = arith.constant 0 : i32
    %c0_i32_1 = arith.constant 0 : i32
    return %c0_i32, %c0_i32_0, %arg0 : i32, i32, i32
  }
  func.func @transform_1(%arg0: i32) -> (i32, i32, i32) {
    %c1_i32 = arith.constant 1 : i32
    %c0_i32 = arith.constant 0 : i32
    %c0_i32_0 = arith.constant 0 : i32
    return %c1_i32, %c0_i32, %arg0 : i32, i32, i32
  }
  func.func @transform_2(%arg0: i32) -> (i32, i32, i32) {
    %c2_i32 = arith.constant 2 : i32
    %c0_i32 = arith.constant 0 : i32
    %c0_i32_0 = arith.constant 0 : i32
    return %c2_i32, %c0_i32, %arg0 : i32, i32, i32
  }
  func.func @transform_3(%arg0: i32) -> (i32, i32) {
    %c0_i32 = arith.constant 0 : i32
    %c0_i32_0 = arith.constant 0 : i32
    %c0_i32_1 = arith.constant 0 : i32
    return %c0_i32, %c0_i32_0 : i32, i32
  }
}

</mosaic_0001>

<llo_original>
// kernel: inpainting_loss.7
$region0: #{inpainting_loss.7}
  #allocation0 [shape = 'u32[]', space=smem, size = 0x4, offset = 0x4, fixed_abs, tag = 'smem constant byte address 0x4 - core index']
  #allocation1 [shape = 'u32[144,128]{1,0:T(1,128)}', space=vmem, size = 0x12000, scoped, tag = 'internal scratch']
  %s0 = inlined_call_operand.vmem [shape: f32[6,256], index: 0, kind: input, shape index: {}]
  %s1 = inlined_call_operand.vmem [shape: f32[6,256], index: 1, kind: input, shape index: {}]
  %s2 = inlined_call_operand.vmem [shape: f32[6,256], index: 2, kind: input, shape index: {}]
  %s3 = inlined_call_operand.vmem [shape: f32[6,256], index: 3, kind: input, shape index: {}]
  %s4 = inlined_call_operand.vmem [shape: f32[2,256], index: 4, kind: input, shape index: {}]
  %s5 = inlined_call_operand.vmem [shape: bf16[6,256], index: 5, kind: output, shape index: {0}]
  %s6 = inlined_call_operand.vmem [shape: f32[1,4], index: 6, kind: output, shape index: {1}]
  %7 = xla_tuple %s5, %s6
  %s8 = sld [smem:[#allocation0]]
  $region38: #{inpainting_loss.7} parent=0
    _
  %s10 = ssub.s32 1, %s8
  %s11 = scalar_select 0, %s10, %s8
  $region1: #{inpainting_loss.7} parent=0
    #allocation2 [shape = 'u8[512]{0}', space=smem, size = 0x200, scoped, tag = 'output window, operand 1, single buffered']
    #allocation3 [shape = 's32[1]{0}', space=sflag, size = 0x4, scoped, tag = 'scoped memory for inpainting_loss.7']
    %12 = vsyncpa [#allocation3], 0
    // Predicated region
    $region2: #{inpainting_loss.7} parent=1 // pred_check
      _
    $region3: #{inpainting_loss.7} parent=1 // pred_check_branch
      %14 = sbr.rel (0) target = $region5
    $region4: #{inpainting_loss.7} parent=1 // pred_region
      _
    $region5: #{inpainting_loss.7} parent=1 // pred_fallthru
      _
    // Predicated region
    $region6: #{inpainting_loss.7} parent=1 // pred_check
      _
    $region7: #{inpainting_loss.7} parent=1 // pred_check_branch
      %16 = sbr.rel (0) target = $region9
    $region8: #{inpainting_loss.7} parent=1 // pred_region
      _
    $region9: #{inpainting_loss.7} parent=1 // pred_fallthru
      _
    // Predicated region
    $region10: #{inpainting_loss.7} parent=1 // pred_check
      _
    $region11: #{inpainting_loss.7} parent=1 // pred_check_branch
      %18 = sbr.rel (0) target = $region13
    $region12: #{inpainting_loss.7} parent=1 // pred_region
      _
    $region13: #{inpainting_loss.7} parent=1 // pred_fallthru
      _
    // Predicated region
    $region14: #{inpainting_loss.7} parent=1 // pred_check
      _
    $region15: #{inpainting_loss.7} parent=1 // pred_check_branch
      %20 = sbr.rel (0) target = $region17
    $region16: #{inpainting_loss.7} parent=1 // pred_region
      _
    $region17: #{inpainting_loss.7} parent=1 // pred_fallthru
      _
    // Predicated region
    $region18: #{inpainting_loss.7} parent=1 // pred_check
      _
    $region19: #{inpainting_loss.7} parent=1 // pred_check_branch
      %22 = sbr.rel (0) target = $region21
    $region20: #{inpainting_loss.7} parent=1 // pred_region
      _
    $region21: #{inpainting_loss.7} parent=1 // pred_fallthru
      _
    %v23 = vld [vmem:[%s1] sm:$0x3f]
    %v24 = vld [vmem:[%s1 + $0x8] sm:$0x3f]
    %v25 = vld [vmem:[%s0] sm:$0x3f]
    %v26 = vld [vmem:[%s0 + $0x8] sm:$0x3f]
    %v27 = vld [vmem:[%s2] sm:$0x3f]
    %v28 = vld [vmem:[%s2 + $0x8] sm:$0x3f]
    %v29 = vld [vmem:[%s3] sm:$0x3f]
    %v30 = vld [vmem:[%s3 + $0x8] sm:$0x3f]
    %v31 = vsub.f32 1.0, %v23
    %v32 = vsub.f32 1.0, %v24
    %v33 = vmul.f32 %v23, %v25
    %v34 = vmul.f32 %v24, %v26
    %v35 = vmul.f32 %v31, %v27
    %v36 = vmul.f32 %v32, %v28
    %v37 = vadd.f32 %v33, %v35
    %v38 = vadd.f32 %v34, %v36
    %v39 = vpack.c.bf16 %v37, %v37
    %v40 = vpack.c.bf16 %v38, %v38
    %v43 = vunpack.c.l.b16 %v39
    %v44 = vunpack.c.l.b16 %v40
    %v45 = vpack.c.b16 %v44, %v43
    %47 = vst [vmem:[%s5] sm:$0x77] %v45
    %v48 = vsub.f32 %v27, %v29
    %v49 = vsub.f32 %v28, %v30
    %v50 = vmul.f32 %v31, %v48
    %v51 = vmul.f32 %v32, %v49
    %v52 = vand.u32 2147483647, %v50
    %v53 = vand.u32 2147483647, %v51
    %vm54 = vcmask 1045504
    %v55 = vsel %vm54, %v52, 0.0
    %v56 = vsel %vm54, %v53, 0.0
    %v57 = vadd.f32 %v55, %v56
    %58 = vadd.xlane.f32.xlu0 %v57
    %v59 = vpop.xlane.xlu0 %58
    %v60 = vrot.slane %v59, 4
    %v61 = vadd.f32 %v59, %v60
    %v62 = vrot.slane %v61, 2
    %v63 = vadd.f32 %v61, %v62
    %v64 = vrot.slane %v63, 1
    %v65 = vadd.f32 %v63, %v64
    %s66 = vtos %v65
    %s67 = scalar_lea.smem [#allocation2], 0
    %68 = sst [smem:[%s67]] %s66
    %v69 = vmul.f32 %v23, %v48
    %v70 = vmul.f32 %v24, %v49
    %v71 = vand.u32 2147483647, %v69
    %v72 = vand.u32 2147483647, %v70
    %v73 = vsel %vm54, %v71, 0.0
    %v74 = vsel %vm54, %v72, 0.0
    %v75 = vadd.f32 %v73, %v74
    %76 = vadd.xlane.f32.xlu0 %v75
    %v77 = vpop.xlane.xlu0 %76
    %v78 = vrot.slane %v77, 4
    %v79 = vadd.f32 %v77, %v78
    %v80 = vrot.slane %v79, 2
    %v81 = vadd.f32 %v79, %v80
    %v82 = vrot.slane %v81, 1
    %v83 = vadd.f32 %v81, %v82
    %s84 = vtos %v83
    %s85 = scalar_lea.smem [#allocation2], 1
    %86 = sst [smem:[%s85]] %s84
    %87 = vrot.lane.b32.xlu0 %v37, 127
    %v88 = vpop.permute.xlu0 %87
    %89 = vrot.lane.b32.xlu0 %v38, 127
    %v90 = vpop.permute.xlu0 %89
    %v91 = vlaneseq
    %v92 = vand.u32 %v91, 127
    %vm93 = vcmp.lt.s32.totalorder %v92, 127
    %v94 = vsel %vm93, %v88, %v90
    %v95 = vsel %vm93, %v90, %v88
    %96 = vrot.lane.b32.xlu0 %v37, 112
    %v97 = vpop.permute.xlu0 %96
    %98 = vrot.lane.b32.xlu0 %v38, 112
    %v99 = vpop.permute.xlu0 %98
    %vm100 = vcmp.lt.s32.totalorder %v92, 112
    %v101 = vsel %vm100, %v97, %v99
    %v102 = vsel %vm100, %v99, %v97
    %v103 = vsub.f32 %v37, %v94
    %v104 = vsub.f32 %v38, %v95
    %v105 = vand.u32 2147483647, %v103
    %v106 = vand.u32 2147483647, %v104
    %v107 = vld [vmem:[%s4] ss:$2 sm:$0x3]
    %v109 = vlaneseq
    %v110 = vshrl.u32 %v109, 7
    %v111 = vsub.s32 0, %v110
    %v112 = vrot.slane %v107, %v111
    %v113 = vlaneseq
    %v114 = vshrl.u32 %v113, 7
    %v115 = vsub.s32 1, %v114
    %v116 = vrot.slane %v107, %v115
    %v119 = vmul.f32 %v105, %v112
    %v120 = vmul.f32 %v106, %v116
    %v121 = vsel %vm54, %v119, 0.0
    %v122 = vsel %vm54, %v120, 0.0
    %v123 = vadd.f32 %v121, %v122
    %124 = vadd.xlane.f32.xlu0 %v123
    %v125 = vpop.xlane.xlu0 %124
    %v126 = vrot.slane %v125, 4
    %v127 = vadd.f32 %v125, %v126
    %v128 = vrot.slane %v127, 2
    %v129 = vadd.f32 %v127, %v128
    %v130 = vrot.slane %v129, 1
    %v131 = vadd.f32 %v129, %v130
    %s132 = vtos %v131
    %s133 = scalar_lea.smem [#allocation2], 2
    %134 = sst [smem:[%s133]] %s132
    %v135 = vsub.f32 %v37, %v101
    %v136 = vsub.f32 %v38, %v102
    %v137 = vand.u32 2147483647, %v135
    %v138 = vand.u32 2147483647, %v136
    %s139 = scalar_lea.vmem %s4, 1
    %v140 = vld [vmem:[%s139] ss:$2 sm:$0x3]
    %v142 = vlaneseq
    %v143 = vshrl.u32 %v142, 7
    %v144 = vsub.s32 0, %v143
    %v145 = vrot.slane %v140, %v144
    %v146 = vlaneseq
    %v147 = vshrl.u32 %v146, 7
    %v148 = vsub.s32 1, %v147
    %v149 = vrot.slane %v140, %v148
    %v152 = vmul.f32 %v137, %v145
    %v153 = vmul.f32 %v138, %v149
    %v154 = vsel %vm54, %v152, 0.0
    %v155 = vsel %vm54, %v153, 0.0
    %v156 = vadd.f32 %v154, %v155
    %157 = vadd.xlane.f32.xlu0 %v156
    %v158 = vpop.xlane.xlu0 %157
    %v159 = vrot.slane %v158, 4
    %v160 = vadd.f32 %v158, %v159
    %v161 = vrot.slane %v160, 2
    %v162 = vadd.f32 %v160, %v161
    %v163 = vrot.slane %v162, 1
    %v164 = vadd.f32 %v162, %v163
    %s165 = vtos %v164
    %s166 = scalar_lea.smem [#allocation2], 3
    %167 = sst [smem:[%s166]] %s165
    // Predicated region
    $region22: #{inpainting_loss.7} parent=1 // pred_check
      _
    $region23: #{inpainting_loss.7} parent=1 // pred_check_branch
      %169 = sbr.rel (0) target = $region25
    $region24: #{inpainting_loss.7} parent=1 // pred_region
      _
    $region25: #{inpainting_loss.7} parent=1 // pred_fallthru
      _
    // Predicated region
    $region26: #{inpainting_loss.7} parent=1 // pred_check
      _
    $region27: #{inpainting_loss.7} parent=1 // pred_check_branch
      %171 = sbr.rel (0) target = $region29
    $region28: #{inpainting_loss.7} parent=1 // pred_region
      %s173 = ssub.s32 16, 16
      %174 = vsyncadd [#allocation3], %s173
      %s176 = sshll.u32 %s6, 4
      %s177 = int_to_ptr.vmem [resolvable:$true] %s176
      %179 = dma.smem_to_vmem [#allocation2], 16, %s177, [#allocation3]
    $region29: #{inpainting_loss.7} parent=1 // pred_fallthru
      _
    // Predicated region
    $region30: #{inpainting_loss.7} parent=1 // pred_check
      _
    $region31: #{inpainting_loss.7} parent=1 // pred_check_branch
      %181 = sbr.rel (0) target = $region33
    $region32: #{inpainting_loss.7} parent=1 // pred_region
      _
    $region33: #{inpainting_loss.7} parent=1 // pred_fallthru
      _
    // Predicated region
    $region34: #{inpainting_loss.7} parent=1 // pred_check
      _
    $region35: #{inpainting_loss.7} parent=1 // pred_check_branch
      %183 = sbr.rel (0) target = $region37
    $region36: #{inpainting_loss.7} parent=1 // pred_region
      %184 = dma.done [#allocation3], 16
    $region37: #{inpainting_loss.7} parent=1 // pred_fallthru
      _
    %185 = sfence
    %186 = vsyncpa [#allocation3], 1

// kernel: inpainting_loss.8
$region0: #{inpainting_loss.8}
  #allocation0 [shape = 'u32[]', space=smem, size = 0x4, offset = 0x4, fixed_abs, tag = 'smem constant byte address 0x4 - core index']
  #allocation1 [shape = 'u32[144,128]{1,0:T(1,128)}', space=vmem, size = 0x12000, scoped, tag = 'internal scratch']
  %s0 = inlined_call_operand.vmem [shape: bf16[6,3,326], index: 0, kind: input, shape index: {}]
  %s1 = inlined_call_operand.vmem [shape: bf16[9,8,3], index: 1, kind: input, shape index: {}]
  %s2 = inlined_call_operand.vmem [shape: f32[8,1], index: 2, kind: input, shape index: {}]
  %s3 = inlined_call_operand.vmem [shape: bf16[6,8,288], index: 3, kind: output, shape index: {}]
  %s4 = sld [smem:[#allocation0]]
  $region45: #{inpainting_loss.8} parent=0
    _
  %s6 = ssub.s32 1, %s4
  %s7 = scalar_select 0, %s6, %s4
  loop: start=0, step=1, limit=8
  $region2: #{inpainting_loss.8} parent=0 // loop_pre_header
    _
  $region3: #{inpainting_loss.8} parent=0 // loop_header
    %s9 = sphi 0, %s13
    %p10 = scmp.ge.s32.totalorder %s9, 8
    %s19 = sphi 0, %s21
    %s22 = sphi 0, %s19
    %s23 = sphi 0, %s22
    %s39 = sphi 0, %s23
    %s43 = sphi 0, %s43
    %s45 = sphi 0, %s43
    %s46 = sphi 0, %s45
    %s60 = sphi 0, %s46
    %s64 = sphi 0, %s64
    %s66 = sphi 0, %s64
    %s67 = sphi 0, %s66
    %s81 = sphi 0, %s67
    %s87 = sphi 0, %s89
    %s90 = sphi 0, %s87
    %s91 = sphi 0, %s90
    %s107 = sphi 0, %s91
  $region4: #{inpainting_loss.8} parent=0 // loop_header_branch
    %12 = sbr.rel (%p10) target = $region8
  $region5: #{inpainting_loss.8} parent=0 // loop_body
    %s14 = ssub.s32 %s9, 1
    %s15 = ssub.s32 %s9, 2
    %s16 = sadd.s32 %s9, 1
    %s17 = ssub.s32 %s9, %s16
    %p18 = scmp.eq.s32.totalorder %s17, 0
    %s20 = sadd.s32 %s19, 1
    %s21 = scalar_select %p18, %s19, %s20
    %p24 = pneg %p18
    %p25 = scmp.eq.s32.totalorder %s9, 5
    %p26 = por %p24, %p25
    %p27 = scmp.ne.s32.totalorder %s19, %s22
    %p28 = scmp.eq.s32.totalorder %s9, 0
    %p29 = por %p27, %p28
    %p30 = scmp.ne.s32.totalorder %s19, %s22
    %p31 = scmp.eq.s32.totalorder %s14, 5
    %p32 = por %p30, %p31
    %p33 = scmp.ne.s32.totalorder %s22, %s23
    %p34 = scmp.eq.s32.totalorder %s14, 0
    %p35 = por %p33, %p34
    %p36 = scmp.ne.s32.totalorder %s22, %s23
    %p37 = scmp.eq.s32.totalorder %s15, 5
    %p38 = por %p36, %p37
    %p40 = scmp.ne.s32.totalorder %s23, %s39
    %p41 = scmp.eq.s32.totalorder %s15, 0
    %p42 = por %p40, %p41
    %s44 = sadd.s32 %s43, 1
    %p47 = scmp.eq.s32.totalorder %s9, 5
    %p48 = scmp.ne.s32.totalorder %s43, %s45
    %p49 = scmp.eq.s32.totalorder %s9, 0
    %p50 = por %p48, %p49
    %p51 = scmp.ne.s32.totalorder %s43, %s45
    %p52 = scmp.eq.s32.totalorder %s14, 5
    %p53 = por %p51, %p52
    %p54 = scmp.ne.s32.totalorder %s45, %s46
    %p55 = scmp.eq.s32.totalorder %s14, 0
    %p56 = por %p54, %p55
    %p57 = scmp.ne.s32.totalorder %s45, %s46
    %p58 = scmp.eq.s32.totalorder %s15, 5
    %p59 = por %p57, %p58
    %p61 = scmp.ne.s32.totalorder %s46, %s60
    %p62 = scmp.eq.s32.totalorder %s15, 0
    %p63 = por %p61, %p62
    %s65 = sadd.s32 %s64, 1
    %p68 = scmp.eq.s32.totalorder %s9, 5
    %p69 = scmp.ne.s32.totalorder %s64, %s66
    %p70 = scmp.eq.s32.totalorder %s9, 0
    %p71 = por %p69, %p70
    %p72 = scmp.ne.s32.totalorder %s64, %s66
    %p73 = scmp.eq.s32.totalorder %s14, 5
    %p74 = por %p72, %p73
    %p75 = scmp.ne.s32.totalorder %s66, %s67
    %p76 = scmp.eq.s32.totalorder %s14, 0
    %p77 = por %p75, %p76
    %p78 = scmp.ne.s32.totalorder %s66, %s67
    %p79 = scmp.eq.s32.totalorder %s15, 5
    %p80 = por %p78, %p79
    %p82 = scmp.ne.s32.totalorder %s67, %s81
    %p83 = scmp.eq.s32.totalorder %s15, 0
    %p84 = por %p82, %p83
    %s85 = ssub.s32 %s9, %s16
    %p86 = scmp.eq.s32.totalorder %s85, 0
    %s88 = sadd.s32 %s87, 1
    %s89 = scalar_select %p86, %s87, %s88
    %p92 = pneg %p86
    %p93 = scmp.eq.s32.totalorder %s9, 5
    %p94 = por %p92, %p93
    %p95 = scmp.ne.s32.totalorder %s87, %s90
    %p96 = scmp.eq.s32.totalorder %s9, 0
    %p97 = por %p95, %p96
    %p98 = scmp.ne.s32.totalorder %s87, %s90
    %p99 = scmp.eq.s32.totalorder %s14, 5
    %p100 = por %p98, %p99
    %p101 = scmp.ne.s32.totalorder %s90, %s91
    %p102 = scmp.eq.s32.totalorder %s14, 0
    %p103 = por %p101, %p102
    %p104 = scmp.ne.s32.totalorder %s90, %s91
    %p105 = scmp.eq.s32.totalorder %s15, 5
    %p106 = por %p104, %p105
    %p108 = scmp.ne.s32.totalorder %s91, %s107
    %p109 = scmp.eq.s32.totalorder %s15, 0
    %p110 = por %p108, %p109
    %p111 = scmp.le.s32.totalorder 1, %s9
    %p112 = scmp.lt.s32.totalorder %s9, 7
    %p113 = pnand %p111, %p112
    %p114 = pneg %p113
    // Predicated region
    $region9: #{inpainting_loss.8} parent=5 // pred_check
      _
    $region10: #{inpainting_loss.8} parent=5 // pred_check_branch
      %116 = sbr.rel (%p113) target = $region12
    $region11: #{inpainting_loss.8} parent=5 // pred_region
      %s117 = ssub.s32 %s9, 1
      // Predicated region
      $region13: #{inpainting_loss.8} parent=11 // pred_check
        %p118 = pneg %p56
      $region14: #{inpainting_loss.8} parent=11 // pred_check_branch
        %120 = sbr.rel (%p118) target = $region16
      $region15: #{inpainting_loss.8} parent=11 // pred_region
        _
      $region16: #{inpainting_loss.8} parent=11 // pred_fallthru
        _
      // Predicated region
      $region17: #{inpainting_loss.8} parent=11 // pred_check
        %p121 = pneg %p77
      $region18: #{inpainting_loss.8} parent=11 // pred_check_branch
        %123 = sbr.rel (%p121) target = $region20
      $region19: #{inpainting_loss.8} parent=11 // pred_region
        _
      $region20: #{inpainting_loss.8} parent=11 // pred_fallthru
        _
    $region12: #{inpainting_loss.8} parent=5 // pred_fallthru
      _
    %p124 = scmp.lt.s32.totalorder %s9, 6
    // Predicated region
    $region21: #{inpainting_loss.8} parent=5 // pred_check
      %p125 = pneg %p124
    $region22: #{inpainting_loss.8} parent=5 // pred_check_branch
      %127 = sbr.rel (%p125) target = $region24
    $region23: #{inpainting_loss.8} parent=5 // pred_region
      // Predicated region
      $region25: #{inpainting_loss.8} parent=23 // pred_check
        %p128 = pneg %p29
      $region26: #{inpainting_loss.8} parent=23 // pred_check_branch
        %130 = sbr.rel (%p128) target = $region28
      $region27: #{inpainting_loss.8} parent=23 // pred_region
        %p131 = scmp.lt.s32.totalorder %s9, 5
        %s132 = scalar_select %p131, %s9, 5
        %s133 = smul.addr %s132, 3
        %s134 = smul.addr %s133, 2
        %s135 = scalar_lea.vmem %s0, %s134
      $region28: #{inpainting_loss.8} parent=23 // pred_fallthru
        _
    $region24: #{inpainting_loss.8} parent=5 // pred_fallthru
      _
    %p136 = scmp.le.s32.totalorder 1, %s9
    %p137 = scmp.lt.s32.totalorder %s9, 7
    %p138 = pnand %p136, %p137
    %p139 = pneg %p138
    // Predicated region
    $region29: #{inpainting_loss.8} parent=5 // pred_check
      _
    $region30: #{inpainting_loss.8} parent=5 // pred_check_branch
      %141 = sbr.rel (%p138) target = $region32
    $region31: #{inpainting_loss.8} parent=5 // pred_region
      %s142 = ssub.s32 %s9, 1
      %p143 = scmp.lt.s32.totalorder %s14, 5
      %s144 = scalar_select %p143, %s14, 5
      %s145 = smul.addr %s144, 3
      %s146 = smul.addr %s145, 2
      %s147 = scalar_lea.vmem %s0, %s146
      %p148 = pneg %p35
      %p149 = pneg %p32
      %p150 = pneg %p56
      %p151 = pneg %p53
      %p152 = pneg %p77
      %p153 = pneg %p74
      %p154 = pneg %p103
      %p155 = pneg %p100
      %p156 = scmp.lt.s32.totalorder %s14, 5
      %s157 = scalar_select %p156, %s14, 5
      %s158 = smul.addr %s157, 3
      %s159 = smul.addr %s158, 4
      %s160 = scalar_lea.vmem %s3, %s159
      %p161 = scmp.lt.s32.totalorder %s14, 5
      %s162 = scalar_select %p161, %s14, 5
      %s163 = smul.addr %s162, 3
      %s164 = smul.addr %s163, 2
      %s165 = scalar_lea.vmem %s0, %s164
      %p166 = scmp.lt.s32.totalorder %s14, 5
      %s167 = scalar_select %p166, %s14, 5
      %s168 = smul.addr %s167, 3
      %s169 = smul.addr %s168, 4
      %s170 = scalar_lea.vmem %s3, %s169
      %v172 = vld [vmem:[%s165] sm:$0x3f]
      %v173 = vld [vmem:[%s1] sm:$0xf]
      %s174 = scalar_lea.vmem %s1, 4
      %v175 = vld [vmem:[%s174] sm:$0xf]
      %v177 = vcombine.high %v172, %v172
      %v179 = vunpack.c.l.s4 1983009808
      %v180 = vunpack.c.0.s8 %v179
      %v181 = vlaneseq
      %v182 = vshrl.u32 %v181, 7
      %v183 = vsub.s32 %v180, %v182
      %v184 = vrot.slane %v172, %v183
      %v186 = vunpack.c.l.s4 1983009808
      %v187 = vunpack.c.0.s8 %v186
      %v188 = vlaneseq
      %v189 = vshrl.u32 %v188, 7
      %v190 = vsub.s32 %v187, %v189
      %v191 = vrot.slane %v177, %v190
      %v192 = vcombine.high %v184, %v184
      %193 = vrot.lane.b32.xlu0 %v184, 127
      %v194 = vpop.permute.xlu0 %193
      %195 = vrot.lane.b32.xlu0 %v192, 127
      %v196 = vpop.permute.xlu0 %195
      %197 = vrot.lane.b32.xlu0 %v191, 127
      %v198 = vpop.permute.xlu0 %197
      %vm199 = vcmask 1039360
      %v200 = vsel %vm199, %v194, %v196
      %v201 = vsel %vm199, %v196, %v198
      %vm202 = vcmask 23552
      %v204 = vsel %vm202, %v175, 0
      %vm206 = vcmask 1040384
      %vm207 = vcmask 1041408
      %v208 = vsel %vm206, 4294967295, 65535
      %v209 = vsel %vm207, %v208, 0
      %v211 = vand.u32 %v200, %v209
      %v214 = vand.u32 %v201, %v209
      %v217 = vand.u32 %v198, %v209
      %219 = vmatprep.subr.bf16.mxu0 0
      %220 = vmatpush1.bf16.msra.mxu0 0
      %221 = vmatprep.subr.bf16.mxu0 0
      %222 = vmatpush1.bf16.msra.mxu0 0
      %223 = vmatprep.subr.bf16.mxu0 0
      %224 = vmatpush1.bf16.msra.mxu0 0
      %225 = vmatprep.subr.bf16.mxu0 0
      %226 = vmatpush1.bf16.msra.mxu0 0
      %227 = vmatprep.subr.bf16.mxu0 0
      %228 = vmatpush1.bf16.msra.mxu0 0
      %229 = vmatprep.subr.bf16.mxu0 0
      %230 = vmatpush1.bf16.msra.mxu0 0
      %231 = vmatprep.subr.bf16.mxu0 0
      %232 = vmatpush1.bf16.msra.mxu0 0
      %233 = vmatprep.subr.bf16.mxu0 %v214
      %234 = vmatpush1.bf16.msra.mxu0 %v211
      %235 = vmatprep.subr.bf16.mxu0 0
      %236 = vmatpush2.bf16.msra.mxu0 0
      %237 = vmatprep.subr.bf16.mxu0 0
      %238 = vmatpush2.bf16.msra.mxu0 0
      %239 = vmatprep.subr.bf16.mxu0 0
      %240 = vmatpush2.bf16.msra.mxu0 0
      %241 = vmatprep.subr.bf16.mxu0 0
      %242 = vmatpush2.bf16.msra.mxu0 0
      %243 = vmatprep.subr.bf16.mxu0 0
      %244 = vmatpush2.bf16.msra.mxu0 0
      %245 = vmatprep.subr.bf16.mxu0 0
      %246 = vmatpush2.bf16.msra.mxu0 0
      %247 = vmatprep.subr.bf16.mxu0 0
      %248 = vmatpush2.bf16.msra.mxu0 0
      %249 = vmatprep.subr.bf16.mxu0 0
      %250 = vmatpush2.bf16.msra.mxu0 0
      %251 = vmatprep.mubr.bf16.mxu0 0
      %252 = vmatmul.mubr.bf16.gmra.mxu0 %v204
      %v253 = vpop.f32.mrf.mxu0
      %v254 = vadd.f32 0.0, %v253
      %v255 = vpop.f32.mrf.mxu0
      %v256 = vadd.f32 0.0, %v255
      %v257 = vpop.f32.mrf.mxu0
      %v258 = vpop.f32.mrf.mxu0
      %259 = vdwg.mxu0
      %260 = vmatprep.subr.bf16.mxu0 0
      %261 = vmatpush1.bf16.msra.mxu0 0
      %262 = vmatprep.subr.bf16.mxu0 0
      %263 = vmatpush1.bf16.msra.mxu0 0
      %264 = vmatprep.subr.bf16.mxu0 0
      %265 = vmatpush1.bf16.msra.mxu0 0
      %266 = vmatprep.subr.bf16.mxu0 0
      %267 = vmatpush1.bf16.msra.mxu0 0
      %268 = vmatprep.subr.bf16.mxu0 0
      %269 = vmatpush1.bf16.msra.mxu0 0
      %270 = vmatprep.subr.bf16.mxu0 0
      %271 = vmatpush1.bf16.msra.mxu0 0
      %272 = vmatprep.subr.bf16.mxu0 0
      %273 = vmatpush1.bf16.msra.mxu0 0
      %274 = vmatprep.subr.bf16.mxu0 0
      %275 = vmatpush1.bf16.msra.mxu0 %v217
      %276 = vmatprep.subr.bf16.mxu0 0
      %277 = vmatpush2.bf16.msra.mxu0 0
      %278 = vmatprep.subr.bf16.mxu0 0
      %279 = vmatpush2.bf16.msra.mxu0 0
      %280 = vmatprep.subr.bf16.mxu0 0
      %281 = vmatpush2.bf16.msra.mxu0 0
      %282 = vmatprep.subr.bf16.mxu0 0
      %283 = vmatpush2.bf16.msra.mxu0 0
      %284 = vmatprep.subr.bf16.mxu0 0
      %285 = vmatpush2.bf16.msra.mxu0 0
      %286 = vmatprep.subr.bf16.mxu0 0
      %287 = vmatpush2.bf16.msra.mxu0 0
      %288 = vmatprep.subr.bf16.mxu0 0
      %289 = vmatpush2.bf16.msra.mxu0 0
      %290 = vmatprep.subr.bf16.mxu0 0
      %291 = vmatpush2.bf16.msra.mxu0 0
      %292 = vmatprep.mubr.bf16.mxu0 0
      %293 = vmatmul.mubr.bf16.gmra.mxu0 %v204
      %v294 = vpop.f32.mrf.mxu0
      %v295 = vadd.f32 0.0, %v294
      %v296 = vpop.f32.mrf.mxu0
      %v297 = vpop.f32.mrf.mxu0
      %v298 = vpop.f32.mrf.mxu0
      %299 = vdwg.mxu0
      %v301 = vsel %vm202, %v173, 0
      %v304 = vand.u32 %v184, %v209
      %v307 = vand.u32 %v192, %v209
      %v310 = vand.u32 %v191, %v209
      %312 = vmatprep.subr.bf16.mxu0 0
      %313 = vmatpush1.bf16.msra.mxu0 0
      %314 = vmatprep.subr.bf16.mxu0 0
      %315 = vmatpush1.bf16.msra.mxu0 0
      %316 = vmatprep.subr.bf16.mxu0 0
      %317 = vmatpush1.bf16.msra.mxu0 0
      %318 = vmatprep.subr.bf16.mxu0 0
      %319 = vmatpush1.bf16.msra.mxu0 0
      %320 = vmatprep.subr.bf16.mxu0 0
      %321 = vmatpush1.bf16.msra.mxu0 0
      %322 = vmatprep.subr.bf16.mxu0 0
      %323 = vmatpush1.bf16.msra.mxu0 0
      %324 = vmatprep.subr.bf16.mxu0 0
      %325 = vmatpush1.bf16.msra.mxu0 0
      %326 = vmatprep.subr.bf16.mxu0 %v307
      %327 = vmatpush1.bf16.msra.mxu0 %v304
      %328 = vmatprep.subr.bf16.mxu0 0
      %329 = vmatpush2.bf16.msra.mxu0 0
      %330 = vmatprep.subr.bf16.mxu0 0
      %331 = vmatpush2.bf16.msra.mxu0 0
      %332 = vmatprep.subr.bf16.mxu0 0
      %333 = vmatpush2.bf16.msra.mxu0 0
      %334 = vmatprep.subr.bf16.mxu0 0
      %335 = vmatpush2.bf16.msra.mxu0 0
      %336 = vmatprep.subr.bf16.mxu0 0
      %337 = vmatpush2.bf16.msra.mxu0 0
      %338 = vmatprep.subr.bf16.mxu0 0
      %339 = vmatpush2.bf16.msra.mxu0 0
      %340 = vmatprep.subr.bf16.mxu0 0
      %341 = vmatpush2.bf16.msra.mxu0 0
      %342 = vmatprep.subr.bf16.mxu0 0
      %343 = vmatpush2.bf16.msra.mxu0 0
      %344 = vmatprep.mubr.bf16.mxu0 0
      %345 = vmatmul.mubr.bf16.gmra.mxu0 %v301
      %v346 = vpop.f32.mrf.mxu0
      %v347 = vadd.f32 %v254, %v346
      %v348 = vpop.f32.mrf.mxu0
      %v349 = vadd.f32 %v256, %v348
      %v350 = vpop.f32.mrf.mxu0
      %v351 = vpop.f32.mrf.mxu0
      %352 = vdwg.mxu0
      %353 = vmatprep.subr.bf16.mxu0 0
      %354 = vmatpush1.bf16.msra.mxu0 0
      %355 = vmatprep.subr.bf16.mxu0 0
      %356 = vmatpush1.bf16.msra.mxu0 0
      %357 = vmatprep.subr.bf16.mxu0 0
      %358 = vmatpush1.bf16.msra.mxu0 0
      %359 = vmatprep.subr.bf16.mxu0 0
      %360 = vmatpush1.bf16.msra.mxu0 0
      %361 = vmatprep.subr.bf16.mxu0 0
      %362 = vmatpush1.bf16.msra.mxu0 0
      %363 = vmatprep.subr.bf16.mxu0 0
      %364 = vmatpush1.bf16.msra.mxu0 0
      %365 = vmatprep.subr.bf16.mxu0 0
      %366 = vmatpush1.bf16.msra.mxu0 0
      %367 = vmatprep.subr.bf16.mxu0 0
      %368 = vmatpush1.bf16.msra.mxu0 %v310
      %369 = vmatprep.subr.bf16.mxu0 0
      %370 = vmatpush2.bf16.msra.mxu0 0
      %371 = vmatprep.subr.bf16.mxu0 0
      %372 = vmatpush2.bf16.msra.mxu0 0
      %373 = vmatprep.subr.bf16.mxu0 0
      %374 = vmatpush2.bf16.msra.mxu0 0
      %375 = vmatprep.subr.bf16.mxu0 0
      %376 = vmatpush2.bf16.msra.mxu0 0
      %377 = vmatprep.subr.bf16.mxu0 0
      %378 = vmatpush2.bf16.msra.mxu0 0
      %379 = vmatprep.subr.bf16.mxu0 0
      %380 = vmatpush2.bf16.msra.mxu0 0
      %381 = vmatprep.subr.bf16.mxu0 0
      %382 = vmatpush2.bf16.msra.mxu0 0
      %383 = vmatprep.subr.bf16.mxu0 0
      %384 = vmatpush2.bf16.msra.mxu0 0
      %385 = vmatprep.mubr.bf16.mxu0 0
      %386 = vmatmul.mubr.bf16.gmra.mxu0 %v301
      %v387 = vpop.f32.mrf.mxu0
      %v388 = vadd.f32 %v295, %v387
      %v389 = vpop.f32.mrf.mxu0
      %v390 = vpop.f32.mrf.mxu0
      %v391 = vpop.f32.mrf.mxu0
      %392 = vdwg.mxu0
      %v393 = vld [vmem:[%s165] sm:$0x3f]
      %s394 = scalar_lea.vmem %s1, 8
      %v395 = vld [vmem:[%s394] sm:$0xf]
      %v397 = vcombine.high %v393, %v393
      %v399 = vunpack.c.l.s4 1983009808
      %v400 = vunpack.c.0.s8 %v399
      %v401 = vlaneseq
      %v402 = vshrl.u32 %v401, 7
      %v403 = vsub.s32 %v400, %v402
      %v404 = vrot.slane %v393, %v403
      %v406 = vunpack.c.l.s4 1983009808
      %v407 = vunpack.c.0.s8 %v406
      %v408 = vlaneseq
      %v409 = vshrl.u32 %v408, 7
      %v410 = vsub.s32 %v407, %v409
      %v411 = vrot.slane %v397, %v410
      %v412 = vcombine.high %v404, %v404
      %413 = vrot.lane.b32.xlu0 %v404, 126
      %v414 = vpop.permute.xlu0 %413
      %415 = vrot.lane.b32.xlu0 %v412, 126
      %v416 = vpop.permute.xlu0 %415
      %417 = vrot.lane.b32.xlu0 %v411, 126
      %v418 = vpop.permute.xlu0 %417
      %vm419 = vcmask 1031168
      %v420 = vsel %vm419, %v414, %v416
      %v421 = vsel %vm419, %v416, %v418
      %v423 = vsel %vm202, %v395, 0
      %v426 = vand.u32 %v420, %v209
      %v429 = vand.u32 %v421, %v209
      %v432 = vand.u32 %v418, %v209
      %434 = vmatprep.subr.bf16.mxu0 0
      %435 = vmatpush1.bf16.msra.mxu0 0
      %436 = vmatprep.subr.bf16.mxu0 0
      %437 = vmatpush1.bf16.msra.mxu0 0
      %438 = vmatprep.subr.bf16.mxu0 0
      %439 = vmatpush1.bf16.msra.mxu0 0
      %440 = vmatprep.subr.bf16.mxu0 0
      %441 = vmatpush1.bf16.msra.mxu0 0
      %442 = vmatprep.subr.bf16.mxu0 0
      %443 = vmatpush1.bf16.msra.mxu0 0
      %444 = vmatprep.subr.bf16.mxu0 0
      %445 = vmatpush1.bf16.msra.mxu0 0
      %446 = vmatprep.subr.bf16.mxu0 0
      %447 = vmatpush1.bf16.msra.mxu0 0
      %448 = vmatprep.subr.bf16.mxu0 %v429
      %449 = vmatpush1.bf16.msra.mxu0 %v426
      %450 = vmatprep.subr.bf16.mxu0 0
      %451 = vmatpush2.bf16.msra.mxu0 0
      %452 = vmatprep.subr.bf16.mxu0 0
      %453 = vmatpush2.bf16.msra.mxu0 0
      %454 = vmatprep.subr.bf16.mxu0 0
      %455 = vmatpush2.bf16.msra.mxu0 0
      %456 = vmatprep.subr.bf16.mxu0 0
      %457 = vmatpush2.bf16.msra.mxu0 0
      %458 = vmatprep.subr.bf16.mxu0 0
      %459 = vmatpush2.bf16.msra.mxu0 0
      %460 = vmatprep.subr.bf16.mxu0 0
      %461 = vmatpush2.bf16.msra.mxu0 0
      %462 = vmatprep.subr.bf16.mxu0 0
      %463 = vmatpush2.bf16.msra.mxu0 0
      %464 = vmatprep.subr.bf16.mxu0 0
      %465 = vmatpush2.bf16.msra.mxu0 0
      %466 = vmatprep.mubr.bf16.mxu0 0
      %467 = vmatmul.mubr.bf16.gmra.mxu0 %v423
      %v468 = vpop.f32.mrf.mxu0
      %v469 = vadd.f32 0.0, %v468
      %v470 = vpop.f32.mrf.mxu0
      %v471 = vadd.f32 0.0, %v470
      %v472 = vpop.f32.mrf.mxu0
      %v473 = vpop.f32.mrf.mxu0
      %474 = vdwg.mxu0
      %475 = vmatprep.subr.bf16.mxu0 0
      %476 = vmatpush1.bf16.msra.mxu0 0
      %477 = vmatprep.subr.bf16.mxu0 0
      %478 = vmatpush1.bf16.msra.mxu0 0
      %479 = vmatprep.subr.bf16.mxu0 0
      %480 = vmatpush1.bf16.msra.mxu0 0
      %481 = vmatprep.subr.bf16.mxu0 0
      %482 = vmatpush1.bf16.msra.mxu0 0
      %483 = vmatprep.subr.bf16.mxu0 0
      %484 = vmatpush1.bf16.msra.mxu0 0
      %485 = vmatprep.subr.bf16.mxu0 0
      %486 = vmatpush1.bf16.msra.mxu0 0
      %487 = vmatprep.subr.bf16.mxu0 0
      %488 = vmatpush1.bf16.msra.mxu0 0
      %489 = vmatprep.subr.bf16.mxu0 0
      %490 = vmatpush1.bf16.msra.mxu0 %v432
      %491 = vmatprep.subr.bf16.mxu0 0
      %492 = vmatpush2.bf16.msra.mxu0 0
      %493 = vmatprep.subr.bf16.mxu0 0
      %494 = vmatpush2.bf16.msra.mxu0 0
      %495 = vmatprep.subr.bf16.mxu0 0
      %496 = vmatpush2.bf16.msra.mxu0 0
      %497 = vmatprep.subr.bf16.mxu0 0
      %498 = vmatpush2.bf16.msra.mxu0 0
      %499 = vmatprep.subr.bf16.mxu0 0
      %500 = vmatpush2.bf16.msra.mxu0 0
      %501 = vmatprep.subr.bf16.mxu0 0
      %502 = vmatpush2.bf16.msra.mxu0 0
      %503 = vmatprep.subr.bf16.mxu0 0
      %504 = vmatpush2.bf16.msra.mxu0 0
      %505 = vmatprep.subr.bf16.mxu0 0
      %506 = vmatpush2.bf16.msra.mxu0 0
      %507 = vmatprep.mubr.bf16.mxu0 0
      %508 = vmatmul.mubr.bf16.gmra.mxu0 %v423
      %v509 = vpop.f32.mrf.mxu0
      %v510 = vadd.f32 0.0, %v509
      %v511 = vpop.f32.mrf.mxu0
      %v512 = vpop.f32.mrf.mxu0
      %v513 = vpop.f32.mrf.mxu0
      %514 = vdwg.mxu0
      %v515 = vadd.f32 %v347, %v469
      %v516 = vadd.f32 %v349, %v471
      %v517 = vadd.f32 %v388, %v510
      %v518 = vld [vmem:[%s165] sm:$0x3f]
      %s519 = scalar_lea.vmem %s1, 12
      %v520 = vld [vmem:[%s519] sm:$0xf]
      %v522 = vcombine.high %v518, %v518
      %v524 = vunpack.c.l.s4 1983009808
      %v525 = vunpack.c.0.s8 %v524
      %v526 = vlaneseq
      %v527 = vshrl.u32 %v526, 7
      %v528 = vsub.s32 %v525, %v527
      %v529 = vrot.slane %v518, %v528
      %v531 = vunpack.c.l.s4 1983009808
      %v532 = vunpack.c.0.s8 %v531
      %v533 = vlaneseq
      %v534 = vshrl.u32 %v533, 7
      %v535 = vsub.s32 %v532, %v534
      %v536 = vrot.slane %v522, %v535
      %v537 = vcombine.high %v529, %v529
      %538 = vrot.lane.b32.xlu0 %v529, 110
      %v539 = vpop.permute.xlu0 %538
      %540 = vrot.lane.b32.xlu0 %v537, 110
      %v541 = vpop.permute.xlu0 %540
      %542 = vrot.lane.b32.xlu0 %v536, 110
      %v543 = vpop.permute.xlu0 %542
      %vm544 = vcmask 900096
      %v545 = vsel %vm544, %v539, %v541
      %v546 = vsel %vm544, %v541, %v543
      %v548 = vsel %vm202, %v520, 0
      %v551 = vand.u32 %v545, %v209
      %v554 = vand.u32 %v546, %v209
      %v557 = vand.u32 %v543, %v209
      %559 = vmatprep.subr.bf16.mxu0 0
      %560 = vmatpush1.bf16.msra.mxu0 0
      %561 = vmatprep.subr.bf16.mxu0 0
      %562 = vmatpush1.bf16.msra.mxu0 0
      %563 = vmatprep.subr.bf16.mxu0 0
      %564 = vmatpush1.bf16.msra.mxu0 0
      %565 = vmatprep.subr.bf16.mxu0 0
      %566 = vmatpush1.bf16.msra.mxu0 0
      %567 = vmatprep.subr.bf16.mxu0 0
      %568 = vmatpush1.bf16.msra.mxu0 0
      %569 = vmatprep.subr.bf16.mxu0 0
      %570 = vmatpush1.bf16.msra.mxu0 0
      %571 = vmatprep.subr.bf16.mxu0 0
      %572 = vmatpush1.bf16.msra.mxu0 0
      %573 = vmatprep.subr.bf16.mxu0 %v554
      %574 = vmatpush1.bf16.msra.mxu0 %v551
      %575 = vmatprep.subr.bf16.mxu0 0
      %576 = vmatpush2.bf16.msra.mxu0 0
      %577 = vmatprep.subr.bf16.mxu0 0
      %578 = vmatpush2.bf16.msra.mxu0 0
      %579 = vmatprep.subr.bf16.mxu0 0
      %580 = vmatpush2.bf16.msra.mxu0 0
      %581 = vmatprep.subr.bf16.mxu0 0
      %582 = vmatpush2.bf16.msra.mxu0 0
      %583 = vmatprep.subr.bf16.mxu0 0
      %584 = vmatpush2.bf16.msra.mxu0 0
      %585 = vmatprep.subr.bf16.mxu0 0
      %586 = vmatpush2.bf16.msra.mxu0 0
      %587 = vmatprep.subr.bf16.mxu0 0
      %588 = vmatpush2.bf16.msra.mxu0 0
      %589 = vmatprep.subr.bf16.mxu0 0
      %590 = vmatpush2.bf16.msra.mxu0 0
      %591 = vmatprep.mubr.bf16.mxu0 0
      %592 = vmatmul.mubr.bf16.gmra.mxu0 %v548
      %v593 = vpop.f32.mrf.mxu0
      %v594 = vadd.f32 0.0, %v593
      %v595 = vpop.f32.mrf.mxu0
      %v596 = vadd.f32 0.0, %v595
      %v597 = vpop.f32.mrf.mxu0
      %v598 = vpop.f32.mrf.mxu0
      %599 = vdwg.mxu0
      %600 = vmatprep.subr.bf16.mxu0 0
      %601 = vmatpush1.bf16.msra.mxu0 0
      %602 = vmatprep.subr.bf16.mxu0 0
      %603 = vmatpush1.bf16.msra.mxu0 0
      %604 = vmatprep.subr.bf16.mxu0 0
      %605 = vmatpush1.bf16.msra.mxu0 0
      %606 = vmatprep.subr.bf16.mxu0 0
      %607 = vmatpush1.bf16.msra.mxu0 0
      %608 = vmatprep.subr.bf16.mxu0 0
      %609 = vmatpush1.bf16.msra.mxu0 0
      %610 = vmatprep.subr.bf16.mxu0 0
      %611 = vmatpush1.bf16.msra.mxu0 0
      %612 = vmatprep.subr.bf16.mxu0 0
      %613 = vmatpush1.bf16.msra.mxu0 0
      %614 = vmatprep.subr.bf16.mxu0 0
      %615 = vmatpush1.bf16.msra.mxu0 %v557
      %616 = vmatprep.subr.bf16.mxu0 0
      %617 = vmatpush2.bf16.msra.mxu0 0
      %618 = vmatprep.subr.bf16.mxu0 0
      %619 = vmatpush2.bf16.msra.mxu0 0
      %620 = vmatprep.subr.bf16.mxu0 0
      %621 = vmatpush2.bf16.msra.mxu0 0
      %622 = vmatprep.subr.bf16.mxu0 0
      %623 = vmatpush2.bf16.msra.mxu0 0
      %624 = vmatprep.subr.bf16.mxu0 0
      %625 = vmatpush2.bf16.msra.mxu0 0
      %626 = vmatprep.subr.bf16.mxu0 0
      %627 = vmatpush2.bf16.msra.mxu0 0
      %628 = vmatprep.subr.bf16.mxu0 0
      %629 = vmatpush2.bf16.msra.mxu0 0
      %630 = vmatprep.subr.bf16.mxu0 0
      %631 = vmatpush2.bf16.msra.mxu0 0
      %632 = vmatprep.mubr.bf16.mxu0 0
      %633 = vmatmul.mubr.bf16.gmra.mxu0 %v548
      %v634 = vpop.f32.mrf.mxu0
      %v635 = vadd.f32 0.0, %v634
      %v636 = vpop.f32.mrf.mxu0
      %v637 = vpop.f32.mrf.mxu0
      %v638 = vpop.f32.mrf.mxu0
      %639 = vdwg.mxu0
      %v640 = vadd.f32 %v515, %v594
      %v641 = vadd.f32 %v516, %v596
      %v642 = vadd.f32 %v517, %v635
      %v643 = vld [vmem:[%s165] sm:$0x3f]
      %s644 = scalar_lea.vmem %s1, 16
      %v645 = vld [vmem:[%s644] sm:$0xf]
      %v647 = vcombine.high %v643, %v643
      %v649 = vunpack.c.l.s4 1983009808
      %v650 = vunpack.c.0.s8 %v649
      %v651 = vlaneseq
      %v652 = vshrl.u32 %v651, 7
      %v653 = vsub.s32 %v650, %v652
      %v654 = vrot.slane %v643, %v653
      %v656 = vunpack.c.l.s4 1983009808
      %v657 = vunpack.c.0.s8 %v656
      %v658 = vlaneseq
      %v659 = vshrl.u32 %v658, 7
      %v660 = vsub.s32 %v657, %v659
      %v661 = vrot.slane %v647, %v660
      %v662 = vcombine.high %v654, %v654
      %663 = vrot.lane.b32.xlu0 %v654, 109
      %v664 = vpop.permute.xlu0 %663
      %665 = vrot.lane.b32.xlu0 %v662, 109
      %v666 = vpop.permute.xlu0 %665
      %667 = vrot.lane.b32.xlu0 %v661, 109
      %v668 = vpop.permute.xlu0 %667
      %vm669 = vcmask 891904
      %v670 = vsel %vm669, %v664, %v666
      %v671 = vsel %vm669, %v666, %v668
      %v673 = vsel %vm202, %v645, 0
      %v676 = vand.u32 %v670, %v209
      %v679 = vand.u32 %v671, %v209
      %v682 = vand.u32 %v668, %v209
      %684 = vmatprep.subr.bf16.mxu0 0
      %685 = vmatpush1.bf16.msra.mxu0 0
      %686 = vmatprep.subr.bf16.mxu0 0
      %687 = vmatpush1.bf16.msra.mxu0 0
      %688 = vmatprep.subr.bf16.mxu0 0
      %689 = vmatpush1.bf16.msra.mxu0 0
      %690 = vmatprep.subr.bf16.mxu0 0
      %691 = vmatpush1.bf16.msra.mxu0 0
      %692 = vmatprep.subr.bf16.mxu0 0
      %693 = vmatpush1.bf16.msra.mxu0 0
      %694 = vmatprep.subr.bf16.mxu0 0
      %695 = vmatpush1.bf16.msra.mxu0 0
      %696 = vmatprep.subr.bf16.mxu0 0
      %697 = vmatpush1.bf16.msra.mxu0 0
      %698 = vmatprep.subr.bf16.mxu0 %v679
      %699 = vmatpush1.bf16.msra.mxu0 %v676
      %700 = vmatprep.subr.bf16.mxu0 0
      %701 = vmatpush2.bf16.msra.mxu0 0
      %702 = vmatprep.subr.bf16.mxu0 0
      %703 = vmatpush2.bf16.msra.mxu0 0
      %704 = vmatprep.subr.bf16.mxu0 0
      %705 = vmatpush2.bf16.msra.mxu0 0
      %706 = vmatprep.subr.bf16.mxu0 0
      %707 = vmatpush2.bf16.msra.mxu0 0
      %708 = vmatprep.subr.bf16.mxu0 0
      %709 = vmatpush2.bf16.msra.mxu0 0
      %710 = vmatprep.subr.bf16.mxu0 0
      %711 = vmatpush2.bf16.msra.mxu0 0
      %712 = vmatprep.subr.bf16.mxu0 0
      %713 = vmatpush2.bf16.msra.mxu0 0
      %714 = vmatprep.subr.bf16.mxu0 0
      %715 = vmatpush2.bf16.msra.mxu0 0
      %716 = vmatprep.mubr.bf16.mxu0 0
      %717 = vmatmul.mubr.bf16.gmra.mxu0 %v673
      %v718 = vpop.f32.mrf.mxu0
      %v719 = vadd.f32 0.0, %v718
      %v720 = vpop.f32.mrf.mxu0
      %v721 = vadd.f32 0.0, %v720
      %v722 = vpop.f32.mrf.mxu0
      %v723 = vpop.f32.mrf.mxu0
      %724 = vdwg.mxu0
      %725 = vmatprep.subr.bf16.mxu0 0
      %726 = vmatpush1.bf16.msra.mxu0 0
      %727 = vmatprep.subr.bf16.mxu0 0
      %728 = vmatpush1.bf16.msra.mxu0 0
      %729 = vmatprep.subr.bf16.mxu0 0
      %730 = vmatpush1.bf16.msra.mxu0 0
      %731 = vmatprep.subr.bf16.mxu0 0
      %732 = vmatpush1.bf16.msra.mxu0 0
      %733 = vmatprep.subr.bf16.mxu0 0
      %734 = vmatpush1.bf16.msra.mxu0 0
      %735 = vmatprep.subr.bf16.mxu0 0
      %736 = vmatpush1.bf16.msra.mxu0 0
      %737 = vmatprep.subr.bf16.mxu0 0
      %738 = vmatpush1.bf16.msra.mxu0 0
      %739 = vmatprep.subr.bf16.mxu0 0
      %740 = vmatpush1.bf16.msra.mxu0 %v682
      %741 = vmatprep.subr.bf16.mxu0 0
      %742 = vmatpush2.bf16.msra.mxu0 0
      %743 = vmatprep.subr.bf16.mxu0 0
      %744 = vmatpush2.bf16.msra.mxu0 0
      %745 = vmatprep.subr.bf16.mxu0 0
      %746 = vmatpush2.bf16.msra.mxu0 0
      %747 = vmatprep.subr.bf16.mxu0 0
      %748 = vmatpush2.bf16.msra.mxu0 0
      %749 = vmatprep.subr.bf16.mxu0 0
      %750 = vmatpush2.bf16.msra.mxu0 0
      %751 = vmatprep.subr.bf16.mxu0 0
      %752 = vmatpush2.bf16.msra.mxu0 0
      %753 = vmatprep.subr.bf16.mxu0 0
      %754 = vmatpush2.bf16.msra.mxu0 0
      %755 = vmatprep.subr.bf16.mxu0 0
      %756 = vmatpush2.bf16.msra.mxu0 0
      %757 = vmatprep.mubr.bf16.mxu0 0
      %758 = vmatmul.mubr.bf16.gmra.mxu0 %v673
      %v759 = vpop.f32.mrf.mxu0
      %v760 = vadd.f32 0.0, %v759
      %v761 = vpop.f32.mrf.mxu0
      %v762 = vpop.f32.mrf.mxu0
      %v763 = vpop.f32.mrf.mxu0
      %764 = vdwg.mxu0
      %v765 = vadd.f32 %v640, %v719
      %v766 = vadd.f32 %v641, %v721
      %v767 = vadd.f32 %v642, %v760
      %v768 = vld [vmem:[%s165] sm:$0x3f]
      %s769 = scalar_lea.vmem %s1, 20
      %v770 = vld [vmem:[%s769] sm:$0xf]
      %v772 = vcombine.high %v768, %v768
      %v774 = vunpack.c.l.s4 1983009808
      %v775 = vunpack.c.0.s8 %v774
      %v776 = vlaneseq
      %v777 = vshrl.u32 %v776, 7
      %v778 = vsub.s32 %v775, %v777
      %v779 = vrot.slane %v768, %v778
      %v781 = vunpack.c.l.s4 1983009808
      %v782 = vunpack.c.0.s8 %v781
      %v783 = vlaneseq
      %v784 = vshrl.u32 %v783, 7
      %v785 = vsub.s32 %v782, %v784
      %v786 = vrot.slane %v772, %v785
      %v787 = vcombine.high %v779, %v779
      %788 = vrot.lane.b32.xlu0 %v779, 108
      %v789 = vpop.permute.xlu0 %788
      %790 = vrot.lane.b32.xlu0 %v787, 108
      %v791 = vpop.permute.xlu0 %790
      %792 = vrot.lane.b32.xlu0 %v786, 108
      %v793 = vpop.permute.xlu0 %792
      %vm794 = vcmask 883712
      %v795 = vsel %vm794, %v789, %v791
      %v796 = vsel %vm794, %v791, %v793
      %v798 = vsel %vm202, %v770, 0
      %v801 = vand.u32 %v795, %v209
      %v804 = vand.u32 %v796, %v209
      %v807 = vand.u32 %v793, %v209
      %809 = vmatprep.subr.bf16.mxu0 0
      %810 = vmatpush1.bf16.msra.mxu0 0
      %811 = vmatprep.subr.bf16.mxu0 0
      %812 = vmatpush1.bf16.msra.mxu0 0
      %813 = vmatprep.subr.bf16.mxu0 0
      %814 = vmatpush1.bf16.msra.mxu0 0
      %815 = vmatprep.subr.bf16.mxu0 0
      %816 = vmatpush1.bf16.msra.mxu0 0
      %817 = vmatprep.subr.bf16.mxu0 0
      %818 = vmatpush1.bf16.msra.mxu0 0
      %819 = vmatprep.subr.bf16.mxu0 0
      %820 = vmatpush1.bf16.msra.mxu0 0
      %821 = vmatprep.subr.bf16.mxu0 0
      %822 = vmatpush1.bf16.msra.mxu0 0
      %823 = vmatprep.subr.bf16.mxu0 %v804
      %824 = vmatpush1.bf16.msra.mxu0 %v801
      %825 = vmatprep.subr.bf16.mxu0 0
      %826 = vmatpush2.bf16.msra.mxu0 0
      %827 = vmatprep.subr.bf16.mxu0 0
      %828 = vmatpush2.bf16.msra.mxu0 0
      %829 = vmatprep.subr.bf16.mxu0 0
      %830 = vmatpush2.bf16.msra.mxu0 0
      %831 = vmatprep.subr.bf16.mxu0 0
      %832 = vmatpush2.bf16.msra.mxu0 0
      %833 = vmatprep.subr.bf16.mxu0 0
      %834 = vmatpush2.bf16.msra.mxu0 0
      %835 = vmatprep.subr.bf16.mxu0 0
      %836 = vmatpush2.bf16.msra.mxu0 0
      %837 = vmatprep.subr.bf16.mxu0 0
      %838 = vmatpush2.bf16.msra.mxu0 0
      %839 = vmatprep.subr.bf16.mxu0 0
      %840 = vmatpush2.bf16.msra.mxu0 0
      %841 = vmatprep.mubr.bf16.mxu0 0
      %842 = vmatmul.mubr.bf16.gmra.mxu0 %v798
      %v843 = vpop.f32.mrf.mxu0
      %v844 = vadd.f32 0.0, %v843
      %v845 = vpop.f32.mrf.mxu0
      %v846 = vadd.f32 0.0, %v845
      %v847 = vpop.f32.mrf.mxu0
      %v848 = vpop.f32.mrf.mxu0
      %849 = vdwg.mxu0
      %850 = vmatprep.subr.bf16.mxu0 0
      %851 = vmatpush1.bf16.msra.mxu0 0
      %852 = vmatprep.subr.bf16.mxu0 0
      %853 = vmatpush1.bf16.msra.mxu0 0
      %854 = vmatprep.subr.bf16.mxu0 0
      %855 = vmatpush1.bf16.msra.mxu0 0
      %856 = vmatprep.subr.bf16.mxu0 0
      %857 = vmatpush1.bf16.msra.mxu0 0
      %858 = vmatprep.subr.bf16.mxu0 0
      %859 = vmatpush1.bf16.msra.mxu0 0
      %860 = vmatprep.subr.bf16.mxu0 0
      %861 = vmatpush1.bf16.msra.mxu0 0
      %862 = vmatprep.subr.bf16.mxu0 0
      %863 = vmatpush1.bf16.msra.mxu0 0
      %864 = vmatprep.subr.bf16.mxu0 0
      %865 = vmatpush1.bf16.msra.mxu0 %v807
      %866 = vmatprep.subr.bf16.mxu0 0
      %867 = vmatpush2.bf16.msra.mxu0 0
      %868 = vmatprep.subr.bf16.mxu0 0
      %869 = vmatpush2.bf16.msra.mxu0 0
      %870 = vmatprep.subr.bf16.mxu0 0
      %871 = vmatpush2.bf16.msra.mxu0 0
      %872 = vmatprep.subr.bf16.mxu0 0
      %873 = vmatpush2.bf16.msra.mxu0 0
      %874 = vmatprep.subr.bf16.mxu0 0
      %875 = vmatpush2.bf16.msra.mxu0 0
      %876 = vmatprep.subr.bf16.mxu0 0
      %877 = vmatpush2.bf16.msra.mxu0 0
      %878 = vmatprep.subr.bf16.mxu0 0
      %879 = vmatpush2.bf16.msra.mxu0 0
      %880 = vmatprep.subr.bf16.mxu0 0
      %881 = vmatpush2.bf16.msra.mxu0 0
      %882 = vmatprep.mubr.bf16.mxu0 0
      %883 = vmatmul.mubr.bf16.gmra.mxu0 %v798
      %v884 = vpop.f32.mrf.mxu0
      %v885 = vadd.f32 0.0, %v884
      %v886 = vpop.f32.mrf.mxu0
      %v887 = vpop.f32.mrf.mxu0
      %v888 = vpop.f32.mrf.mxu0
      %889 = vdwg.mxu0
      %v890 = vadd.f32 %v765, %v844
      %v891 = vadd.f32 %v766, %v846
      %v892 = vadd.f32 %v767, %v885
      %v893 = vld [vmem:[%s165] sm:$0x3f]
      %s894 = scalar_lea.vmem %s1, 24
      %v895 = vld [vmem:[%s894] sm:$0xf]
      %v897 = vcombine.high %v893, %v893
      %v899 = vunpack.c.l.s4 1983009808
      %v900 = vunpack.c.0.s8 %v899
      %v901 = vlaneseq
      %v902 = vshrl.u32 %v901, 7
      %v903 = vsub.s32 %v900, %v902
      %v904 = vrot.slane %v893, %v903
      %v906 = vunpack.c.l.s4 1983009808
      %v907 = vunpack.c.0.s8 %v906
      %v908 = vlaneseq
      %v909 = vshrl.u32 %v908, 7
      %v910 = vsub.s32 %v907, %v909
      %v911 = vrot.slane %v897, %v910
      %v912 = vcombine.high %v904, %v904
      %913 = vrot.lane.b32.xlu0 %v904, 92
      %v914 = vpop.permute.xlu0 %913
      %915 = vrot.lane.b32.xlu0 %v912, 92
      %v916 = vpop.permute.xlu0 %915
      %917 = vrot.lane.b32.xlu0 %v911, 92
      %v918 = vpop.permute.xlu0 %917
      %vm919 = vcmask 752640
      %v920 = vsel %vm919, %v914, %v916
      %v921 = vsel %vm919, %v916, %v918
      %v923 = vsel %vm202, %v895, 0
      %v926 = vand.u32 %v920, %v209
      %v929 = vand.u32 %v921, %v209
      %v932 = vand.u32 %v918, %v209
      %934 = vmatprep.subr.bf16.mxu0 0
      %935 = vmatpush1.bf16.msra.mxu0 0
      %936 = vmatprep.subr.bf16.mxu0 0
      %937 = vmatpush1.bf16.msra.mxu0 0
      %938 = vmatprep.subr.bf16.mxu0 0
      %939 = vmatpush1.bf16.msra.mxu0 0
      %940 = vmatprep.subr.bf16.mxu0 0
      %941 = vmatpush1.bf16.msra.mxu0 0
      %942 = vmatprep.subr.bf16.mxu0 0
      %943 = vmatpush1.bf16.msra.mxu0 0
      %944 = vmatprep.subr.bf16.mxu0 0
      %945 = vmatpush1.bf16.msra.mxu0 0
      %946 = vmatprep.subr.bf16.mxu0 0
      %947 = vmatpush1.bf16.msra.mxu0 0
      %948 = vmatprep.subr.bf16.mxu0 %v929
      %949 = vmatpush1.bf16.msra.mxu0 %v926
      %950 = vmatprep.subr.bf16.mxu0 0
      %951 = vmatpush2.bf16.msra.mxu0 0
      %952 = vmatprep.subr.bf16.mxu0 0
      %953 = vmatpush2.bf16.msra.mxu0 0
      %954 = vmatprep.subr.bf16.mxu0 0
      %955 = vmatpush2.bf16.msra.mxu0 0
      %956 = vmatprep.subr.bf16.mxu0 0
      %957 = vmatpush2.bf16.msra.mxu0 0
      %958 = vmatprep.subr.bf16.mxu0 0
      %959 = vmatpush2.bf16.msra.mxu0 0
      %960 = vmatprep.subr.bf16.mxu0 0
      %961 = vmatpush2.bf16.msra.mxu0 0
      %962 = vmatprep.subr.bf16.mxu0 0
      %963 = vmatpush2.bf16.msra.mxu0 0
      %964 = vmatprep.subr.bf16.mxu0 0
      %965 = vmatpush2.bf16.msra.mxu0 0
      %966 = vmatprep.mubr.bf16.mxu0 0
      %967 = vmatmul.mubr.bf16.gmra.mxu0 %v923
      %v968 = vpop.f32.mrf.mxu0
      %v969 = vadd.f32 0.0, %v968
      %v970 = vpop.f32.mrf.mxu0
      %v971 = vadd.f32 0.0, %v970
      %v972 = vpop.f32.mrf.mxu0
      %v973 = vpop.f32.mrf.mxu0
      %974 = vdwg.mxu0
      %975 = vmatprep.subr.bf16.mxu0 0
      %976 = vmatpush1.bf16.msra.mxu0 0
      %977 = vmatprep.subr.bf16.mxu0 0
      %978 = vmatpush1.bf16.msra.mxu0 0
      %979 = vmatprep.subr.bf16.mxu0 0
      %980 = vmatpush1.bf16.msra.mxu0 0
      %981 = vmatprep.subr.bf16.mxu0 0
      %982 = vmatpush1.bf16.msra.mxu0 0
      %983 = vmatprep.subr.bf16.mxu0 0
      %984 = vmatpush1.bf16.msra.mxu0 0
      %985 = vmatprep.subr.bf16.mxu0 0
      %986 = vmatpush1.bf16.msra.mxu0 0
      %987 = vmatprep.subr.bf16.mxu0 0
      %988 = vmatpush1.bf16.msra.mxu0 0
      %989 = vmatprep.subr.bf16.mxu0 0
      %990 = vmatpush1.bf16.msra.mxu0 %v932
      %991 = vmatprep.subr.bf16.mxu0 0
      %992 = vmatpush2.bf16.msra.mxu0 0
      %993 = vmatprep.subr.bf16.mxu0 0
      %994 = vmatpush2.bf16.msra.mxu0 0
      %995 = vmatprep.subr.bf16.mxu0 0
      %996 = vmatpush2.bf16.msra.mxu0 0
      %997 = vmatprep.subr.bf16.mxu0 0
      %998 = vmatpush2.bf16.msra.mxu0 0
      %999 = vmatprep.subr.bf16.mxu0 0
      %1000 = vmatpush2.bf16.msra.mxu0 0
      %1001 = vmatprep.subr.bf16.mxu0 0
      %1002 = vmatpush2.bf16.msra.mxu0 0
      %1003 = vmatprep.subr.bf16.mxu0 0
      %1004 = vmatpush2.bf16.msra.mxu0 0
      %1005 = vmatprep.subr.bf16.mxu0 0
      %1006 = vmatpush2.bf16.msra.mxu0 0
      %1007 = vmatprep.mubr.bf16.mxu0 0
      %1008 = vmatmul.mubr.bf16.gmra.mxu0 %v923
      %v1009 = vpop.f32.mrf.mxu0
      %v1010 = vadd.f32 0.0, %v1009
      %v1011 = vpop.f32.mrf.mxu0
      %v1012 = vpop.f32.mrf.mxu0
      %v1013 = vpop.f32.mrf.mxu0
      %1014 = vdwg.mxu0
      %v1015 = vadd.f32 %v890, %v969
      %v1016 = vadd.f32 %v891, %v971
      %v1017 = vadd.f32 %v892, %v1010
      %v1018 = vld [vmem:[%s165] sm:$0x3f]
      %s1019 = scalar_lea.vmem %s1, 28
      %v1020 = vld [vmem:[%s1019] sm:$0xf]
      %v1022 = vcombine.high %v1018, %v1018
      %v1024 = vunpack.c.l.s4 1983009808
      %v1025 = vunpack.c.0.s8 %v1024
      %v1026 = vlaneseq
      %v1027 = vshrl.u32 %v1026, 7
      %v1028 = vsub.s32 %v1025, %v1027
      %v1029 = vrot.slane %v1018, %v1028
      %v1031 = vunpack.c.l.s4 1983009808
      %v1032 = vunpack.c.0.s8 %v1031
      %v1033 = vlaneseq
      %v1034 = vshrl.u32 %v1033, 7
      %v1035 = vsub.s32 %v1032, %v1034
      %v1036 = vrot.slane %v1022, %v1035
      %v1037 = vcombine.high %v1029, %v1029
      %1038 = vrot.lane.b32.xlu0 %v1029, 91
      %v1039 = vpop.permute.xlu0 %1038
      %1040 = vrot.lane.b32.xlu0 %v1037, 91
      %v1041 = vpop.permute.xlu0 %1040
      %1042 = vrot.lane.b32.xlu0 %v1036, 91
      %v1043 = vpop.permute.xlu0 %1042
      %vm1044 = vcmask 744448
      %v1045 = vsel %vm1044, %v1039, %v1041
      %v1046 = vsel %vm1044, %v1041, %v1043
      %v1048 = vsel %vm202, %v1020, 0
      %v1051 = vand.u32 %v1045, %v209
      %v1054 = vand.u32 %v1046, %v209
      %v1057 = vand.u32 %v1043, %v209
      %1059 = vmatprep.subr.bf16.mxu0 0
      %1060 = vmatpush1.bf16.msra.mxu0 0
      %1061 = vmatprep.subr.bf16.mxu0 0
      %1062 = vmatpush1.bf16.msra.mxu0 0
      %1063 = vmatprep.subr.bf16.mxu0 0
      %1064 = vmatpush1.bf16.msra.mxu0 0
      %1065 = vmatprep.subr.bf16.mxu0 0
      %1066 = vmatpush1.bf16.msra.mxu0 0
      %1067 = vmatprep.subr.bf16.mxu0 0
      %1068 = vmatpush1.bf16.msra.mxu0 0
      %1069 = vmatprep.subr.bf16.mxu0 0
      %1070 = vmatpush1.bf16.msra.mxu0 0
      %1071 = vmatprep.subr.bf16.mxu0 0
      %1072 = vmatpush1.bf16.msra.mxu0 0
      %1073 = vmatprep.subr.bf16.mxu0 %v1054
      %1074 = vmatpush1.bf16.msra.mxu0 %v1051
      %1075 = vmatprep.subr.bf16.mxu0 0
      %1076 = vmatpush2.bf16.msra.mxu0 0
      %1077 = vmatprep.subr.bf16.mxu0 0
      %1078 = vmatpush2.bf16.msra.mxu0 0
      %1079 = vmatprep.subr.bf16.mxu0 0
      %1080 = vmatpush2.bf16.msra.mxu0 0
      %1081 = vmatprep.subr.bf16.mxu0 0
      %1082 = vmatpush2.bf16.msra.mxu0 0
      %1083 = vmatprep.subr.bf16.mxu0 0
      %1084 = vmatpush2.bf16.msra.mxu0 0
      %1085 = vmatprep.subr.bf16.mxu0 0
      %1086 = vmatpush2.bf16.msra.mxu0 0
      %1087 = vmatprep.subr.bf16.mxu0 0
      %1088 = vmatpush2.bf16.msra.mxu0 0
      %1089 = vmatprep.subr.bf16.mxu0 0
      %1090 = vmatpush2.bf16.msra.mxu0 0
      %1091 = vmatprep.mubr.bf16.mxu0 0
      %1092 = vmatmul.mubr.bf16.gmra.mxu0 %v1048
      %v1093 = vpop.f32.mrf.mxu0
      %v1094 = vadd.f32 0.0, %v1093
      %v1095 = vpop.f32.mrf.mxu0
      %v1096 = vadd.f32 0.0, %v1095
      %v1097 = vpop.f32.mrf.mxu0
      %v1098 = vpop.f32.mrf.mxu0
      %1099 = vdwg.mxu0
      %1100 = vmatprep.subr.bf16.mxu0 0
      %1101 = vmatpush1.bf16.msra.mxu0 0
      %1102 = vmatprep.subr.bf16.mxu0 0
      %1103 = vmatpush1.bf16.msra.mxu0 0
      %1104 = vmatprep.subr.bf16.mxu0 0
      %1105 = vmatpush1.bf16.msra.mxu0 0
      %1106 = vmatprep.subr.bf16.mxu0 0
      %1107 = vmatpush1.bf16.msra.mxu0 0
      %1108 = vmatprep.subr.bf16.mxu0 0
      %1109 = vmatpush1.bf16.msra.mxu0 0
      %1110 = vmatprep.subr.bf16.mxu0 0
      %1111 = vmatpush1.bf16.msra.mxu0 0
      %1112 = vmatprep.subr.bf16.mxu0 0
      %1113 = vmatpush1.bf16.msra.mxu0 0
      %1114 = vmatprep.subr.bf16.mxu0 0
      %1115 = vmatpush1.bf16.msra.mxu0 %v1057
      %1116 = vmatprep.subr.bf16.mxu0 0
      %1117 = vmatpush2.bf16.msra.mxu0 0
      %1118 = vmatprep.subr.bf16.mxu0 0
      %1119 = vmatpush2.bf16.msra.mxu0 0
      %1120 = vmatprep.subr.bf16.mxu0 0
      %1121 = vmatpush2.bf16.msra.mxu0 0
      %1122 = vmatprep.subr.bf16.mxu0 0
      %1123 = vmatpush2.bf16.msra.mxu0 0
      %1124 = vmatprep.subr.bf16.mxu0 0
      %1125 = vmatpush2.bf16.msra.mxu0 0
      %1126 = vmatprep.subr.bf16.mxu0 0
      %1127 = vmatpush2.bf16.msra.mxu0 0
      %1128 = vmatprep.subr.bf16.mxu0 0
      %1129 = vmatpush2.bf16.msra.mxu0 0
      %1130 = vmatprep.subr.bf16.mxu0 0
      %1131 = vmatpush2.bf16.msra.mxu0 0
      %1132 = vmatprep.mubr.bf16.mxu0 0
      %1133 = vmatmul.mubr.bf16.gmra.mxu0 %v1048
      %v1134 = vpop.f32.mrf.mxu0
      %v1135 = vadd.f32 0.0, %v1134
      %v1136 = vpop.f32.mrf.mxu0
      %v1137 = vpop.f32.mrf.mxu0
      %v1138 = vpop.f32.mrf.mxu0
      %1139 = vdwg.mxu0
      %v1140 = vadd.f32 %v1015, %v1094
      %v1141 = vadd.f32 %v1016, %v1096
      %v1142 = vadd.f32 %v1017, %v1135
      %v1143 = vld [vmem:[%s165] sm:$0x3f]
      %s1144 = scalar_lea.vmem %s1, 32
      %v1145 = vld [vmem:[%s1144] sm:$0xf]
      %v1147 = vcombine.high %v1143, %v1143
      %v1149 = vunpack.c.l.s4 1983009808
      %v1150 = vunpack.c.0.s8 %v1149
      %v1151 = vlaneseq
      %v1152 = vshrl.u32 %v1151, 7
      %v1153 = vsub.s32 %v1150, %v1152
      %v1154 = vrot.slane %v1143, %v1153
      %v1156 = vunpack.c.l.s4 1983009808
      %v1157 = vunpack.c.0.s8 %v1156
      %v1158 = vlaneseq
      %v1159 = vshrl.u32 %v1158, 7
      %v1160 = vsub.s32 %v1157, %v1159
      %v1161 = vrot.slane %v1147, %v1160
      %v1162 = vcombine.high %v1154, %v1154
      %1163 = vrot.lane.b32.xlu0 %v1154, 90
      %v1164 = vpop.permute.xlu0 %1163
      %1165 = vrot.lane.b32.xlu0 %v1162, 90
      %v1166 = vpop.permute.xlu0 %1165
      %1167 = vrot.lane.b32.xlu0 %v1161, 90
      %v1168 = vpop.permute.xlu0 %1167
      %vm1169 = vcmask 736256
      %v1170 = vsel %vm1169, %v1164, %v1166
      %v1171 = vsel %vm1169, %v1166, %v1168
      %v1173 = vsel %vm202, %v1145, 0
      %v1176 = vand.u32 %v1170, %v209
      %v1179 = vand.u32 %v1171, %v209
      %v1182 = vand.u32 %v1168, %v209
      %1184 = vmatprep.subr.bf16.mxu0 0
      %1185 = vmatpush1.bf16.msra.mxu0 0
      %1186 = vmatprep.subr.bf16.mxu0 0
      %1187 = vmatpush1.bf16.msra.mxu0 0
      %1188 = vmatprep.subr.bf16.mxu0 0
      %1189 = vmatpush1.bf16.msra.mxu0 0
      %1190 = vmatprep.subr.bf16.mxu0 0
      %1191 = vmatpush1.bf16.msra.mxu0 0
      %1192 = vmatprep.subr.bf16.mxu0 0
      %1193 = vmatpush1.bf16.msra.mxu0 0
      %1194 = vmatprep.subr.bf16.mxu0 0
      %1195 = vmatpush1.bf16.msra.mxu0 0
      %1196 = vmatprep.subr.bf16.mxu0 0
      %1197 = vmatpush1.bf16.msra.mxu0 0
      %1198 = vmatprep.subr.bf16.mxu0 %v1179
      %1199 = vmatpush1.bf16.msra.mxu0 %v1176
      %1200 = vmatprep.subr.bf16.mxu0 0
      %1201 = vmatpush2.bf16.msra.mxu0 0
      %1202 = vmatprep.subr.bf16.mxu0 0
      %1203 = vmatpush2.bf16.msra.mxu0 0
      %1204 = vmatprep.subr.bf16.mxu0 0
      %1205 = vmatpush2.bf16.msra.mxu0 0
      %1206 = vmatprep.subr.bf16.mxu0 0
      %1207 = vmatpush2.bf16.msra.mxu0 0
      %1208 = vmatprep.subr.bf16.mxu0 0
      %1209 = vmatpush2.bf16.msra.mxu0 0
      %1210 = vmatprep.subr.bf16.mxu0 0
      %1211 = vmatpush2.bf16.msra.mxu0 0
      %1212 = vmatprep.subr.bf16.mxu0 0
      %1213 = vmatpush2.bf16.msra.mxu0 0
      %1214 = vmatprep.subr.bf16.mxu0 0
      %1215 = vmatpush2.bf16.msra.mxu0 0
      %1216 = vmatprep.mubr.bf16.mxu0 0
      %1217 = vmatmul.mubr.bf16.gmra.mxu0 %v1173
      %v1218 = vpop.f32.mrf.mxu0
      %v1219 = vadd.f32 0.0, %v1218
      %v1220 = vpop.f32.mrf.mxu0
      %v1221 = vadd.f32 0.0, %v1220
      %v1222 = vpop.f32.mrf.mxu0
      %v1223 = vpop.f32.mrf.mxu0
      %1224 = vdwg.mxu0
      %1225 = vmatprep.subr.bf16.mxu0 0
      %1226 = vmatpush1.bf16.msra.mxu0 0
      %1227 = vmatprep.subr.bf16.mxu0 0
      %1228 = vmatpush1.bf16.msra.mxu0 0
      %1229 = vmatprep.subr.bf16.mxu0 0
      %1230 = vmatpush1.bf16.msra.mxu0 0
      %1231 = vmatprep.subr.bf16.mxu0 0
      %1232 = vmatpush1.bf16.msra.mxu0 0
      %1233 = vmatprep.subr.bf16.mxu0 0
      %1234 = vmatpush1.bf16.msra.mxu0 0
      %1235 = vmatprep.subr.bf16.mxu0 0
      %1236 = vmatpush1.bf16.msra.mxu0 0
      %1237 = vmatprep.subr.bf16.mxu0 0
      %1238 = vmatpush1.bf16.msra.mxu0 0
      %1239 = vmatprep.subr.bf16.mxu0 0
      %1240 = vmatpush1.bf16.msra.mxu0 %v1182
      %1241 = vmatprep.subr.bf16.mxu0 0
      %1242 = vmatpush2.bf16.msra.mxu0 0
      %1243 = vmatprep.subr.bf16.mxu0 0
      %1244 = vmatpush2.bf16.msra.mxu0 0
      %1245 = vmatprep.subr.bf16.mxu0 0
      %1246 = vmatpush2.bf16.msra.mxu0 0
      %1247 = vmatprep.subr.bf16.mxu0 0
      %1248 = vmatpush2.bf16.msra.mxu0 0
      %1249 = vmatprep.subr.bf16.mxu0 0
      %1250 = vmatpush2.bf16.msra.mxu0 0
      %1251 = vmatprep.subr.bf16.mxu0 0
      %1252 = vmatpush2.bf16.msra.mxu0 0
      %1253 = vmatprep.subr.bf16.mxu0 0
      %1254 = vmatpush2.bf16.msra.mxu0 0
      %1255 = vmatprep.subr.bf16.mxu0 0
      %1256 = vmatpush2.bf16.msra.mxu0 0
      %1257 = vmatprep.mubr.bf16.mxu0 0
      %1258 = vmatmul.mubr.bf16.gmra.mxu0 %v1173
      %v1259 = vpop.f32.mrf.mxu0
      %v1260 = vadd.f32 0.0, %v1259
      %v1261 = vpop.f32.mrf.mxu0
      %v1262 = vpop.f32.mrf.mxu0
      %v1263 = vpop.f32.mrf.mxu0
      %1264 = vdwg.mxu0
      %v1265 = vadd.f32 %v1140, %v1219
      %v1266 = vadd.f32 %v1141, %v1221
      %v1267 = vadd.f32 %v1142, %v1260
      %v1268 = vld [vmem:[%s2] sm:$0xff]
      %1270 = vset.pattern.permute.xlu0 0
      %1271 = vperm.xlu0 %1270, %v1268
      %v1272 = vpop.permute.xlu0 %1271
      %v1274 = vadd.f32 %v1265, %v1272
      %v1275 = vadd.f32 %v1266, %v1272
      %v1276 = vadd.f32 %v1267, %v1272
      %v1277 = vmax.f32 %v1274, 0.0
      %v1278 = vmax.f32 %v1275, 0.0
      %v1279 = vmax.f32 %v1276, 0.0
      %v1280 = vpack.c.bf16 %v1277, %v1277
      %v1281 = vpack.c.bf16 %v1278, %v1278
      %v1282 = vpack.c.bf16 %v1279, %v1279
      %v1286 = vunpack.c.l.b16 %v1280
      %v1287 = vunpack.c.l.b16 %v1281
      %v1288 = vunpack.c.l.b16 %v1282
      %v1289 = vpack.c.b16 %v1287, %v1286
      %v1290 = vpack.c.b16 %v1288, %v1288
      %1293 = vst [vmem:[%s170] sm:$0xff] %v1289
      %vm1294 = vcmask 257024
      %1295 = vst.msk [vmem:[%s170 + $0x8] sm:$0xf] %vm1294, %v1290
      %p1296 = scmp.lt.s32.totalorder %s14, 5
      %s1297 = scalar_select %p1296, %s14, 5
      %s1298 = smul.addr %s1297, 3
      %s1299 = smul.addr %s1298, 4
      %s1300 = scalar_lea.vmem %s3, %s1299
      // Predicated region
      $region33: #{inpainting_loss.8} parent=31 // pred_check
        %p1301 = pneg %p100
      $region34: #{inpainting_loss.8} parent=31 // pred_check_branch
        %1303 = sbr.rel (%p1301) target = $region36
      $region35: #{inpainting_loss.8} parent=31 // pred_region
        _
      $region36: #{inpainting_loss.8} parent=31 // pred_fallthru
        _
    $region32: #{inpainting_loss.8} parent=5 // pred_fallthru
      _
    %p1304 = scmp.le.s32.totalorder 2, %s9
    // Predicated region
    $region37: #{inpainting_loss.8} parent=5 // pred_check
      %p1305 = pneg %p1304
    $region38: #{inpainting_loss.8} parent=5 // pred_check_branch
      %1307 = sbr.rel (%p1305) target = $region40
    $region39: #{inpainting_loss.8} parent=5 // pred_region
      %s1308 = ssub.s32 %s9, 2
      // Predicated region
      $region41: #{inpainting_loss.8} parent=39 // pred_check
        %p1309 = pneg %p106
      $region42: #{inpainting_loss.8} parent=39 // pred_check_branch
        %1311 = sbr.rel (%p1309) target = $region44
      $region43: #{inpainting_loss.8} parent=39 // pred_region
        %p1312 = scmp.lt.s32.totalorder %s15, 5
        %s1313 = scalar_select %p1312, %s15, 5
        %s1314 = smul.addr %s1313, 3
        %s1315 = smul.addr %s1314, 4
        %s1316 = scalar_lea.vmem %s3, %s1315
      $region44: #{inpainting_loss.8} parent=39 // pred_fallthru
        _
    $region40: #{inpainting_loss.8} parent=5 // pred_fallthru
      _
  $region6: #{inpainting_loss.8} parent=0 // loop_footer
    %s13 = sadd.s32 1, %s9
  $region7: #{inpainting_loss.8} parent=0 // loop_footer_branch
    %8 = sbr.rel target = $region3
  $region8: #{inpainting_loss.8} parent=0 // loop_exit
    _

// kernel: inpainting_loss.9
$region0: #{inpainting_loss.9}
  #allocation0 [shape = 'u32[]', space=smem, size = 0x4, offset = 0x4, fixed_abs, tag = 'smem constant byte address 0x4 - core index']
  #allocation1 [shape = 'u32[144,128]{1,0:T(1,128)}', space=vmem, size = 0x12000, scoped, tag = 'internal scratch']
  %s0 = inlined_call_operand.vmem [shape: bf16[6,8,102], index: 0, kind: input, shape index: {}]
  %s1 = inlined_call_operand.vmem [shape: bf16[9,16,8], index: 1, kind: input, shape index: {}]
  %s2 = inlined_call_operand.vmem [shape: f32[16,1], index: 2, kind: input, shape index: {}]
  %s3 = inlined_call_operand.vmem [shape: bf16[6,16,80], index: 3, kind: output, shape index: {}]
  %s4 = sld [smem:[#allocation0]]
  $region45: #{inpainting_loss.9} parent=0
    _
  %s6 = ssub.s32 1, %s4
  %s7 = scalar_select 0, %s6, %s4
  loop: start=0, step=1, limit=8
  $region2: #{inpainting_loss.9} parent=0 // loop_pre_header
    _
  $region3: #{inpainting_loss.9} parent=0 // loop_header
    %s9 = sphi 0, %s13
    %p10 = scmp.ge.s32.totalorder %s9, 8
    %s19 = sphi 0, %s21
    %s22 = sphi 0, %s19
    %s23 = sphi 0, %s22
    %s39 = sphi 0, %s23
    %s43 = sphi 0, %s43
    %s45 = sphi 0, %s43
    %s46 = sphi 0, %s45
    %s60 = sphi 0, %s46
    %s64 = sphi 0, %s64
    %s66 = sphi 0, %s64
    %s67 = sphi 0, %s66
    %s81 = sphi 0, %s67
    %s87 = sphi 0, %s89
    %s90 = sphi 0, %s87
    %s91 = sphi 0, %s90
    %s107 = sphi 0, %s91
  $region4: #{inpainting_loss.9} parent=0 // loop_header_branch
    %12 = sbr.rel (%p10) target = $region8
  $region5: #{inpainting_loss.9} parent=0 // loop_body
    %s14 = ssub.s32 %s9, 1
    %s15 = ssub.s32 %s9, 2
    %s16 = sadd.s32 %s9, 1
    %s17 = ssub.s32 %s9, %s16
    %p18 = scmp.eq.s32.totalorder %s17, 0
    %s20 = sadd.s32 %s19, 1
    %s21 = scalar_select %p18, %s19, %s20
    %p24 = pneg %p18
    %p25 = scmp.eq.s32.totalorder %s9, 5
    %p26 = por %p24, %p25
    %p27 = scmp.ne.s32.totalorder %s19, %s22
    %p28 = scmp.eq.s32.totalorder %s9, 0
    %p29 = por %p27, %p28
    %p30 = scmp.ne.s32.totalorder %s19, %s22
    %p31 = scmp.eq.s32.totalorder %s14, 5
    %p32 = por %p30, %p31
    %p33 = scmp.ne.s32.totalorder %s22, %s23
    %p34 = scmp.eq.s32.totalorder %s14, 0
    %p35 = por %p33, %p34
    %p36 = scmp.ne.s32.totalorder %s22, %s23
    %p37 = scmp.eq.s32.totalorder %s15, 5
    %p38 = por %p36, %p37
    %p40 = scmp.ne.s32.totalorder %s23, %s39
    %p41 = scmp.eq.s32.totalorder %s15, 0
    %p42 = por %p40, %p41
    %s44 = sadd.s32 %s43, 1
    %p47 = scmp.eq.s32.totalorder %s9, 5
    %p48 = scmp.ne.s32.totalorder %s43, %s45
    %p49 = scmp.eq.s32.totalorder %s9, 0
    %p50 = por %p48, %p49
    %p51 = scmp.ne.s32.totalorder %s43, %s45
    %p52 = scmp.eq.s32.totalorder %s14, 5
    %p53 = por %p51, %p52
    %p54 = scmp.ne.s32.totalorder %s45, %s46
    %p55 = scmp.eq.s32.totalorder %s14, 0
    %p56 = por %p54, %p55
    %p57 = scmp.ne.s32.totalorder %s45, %s46
    %p58 = scmp.eq.s32.totalorder %s15, 5
    %p59 = por %p57, %p58
    %p61 = scmp.ne.s32.totalorder %s46, %s60
    %p62 = scmp.eq.s32.totalorder %s15, 0
    %p63 = por %p61, %p62
    %s65 = sadd.s32 %s64, 1
    %p68 = scmp.eq.s32.totalorder %s9, 5
    %p69 = scmp.ne.s32.totalorder %s64, %s66
    %p70 = scmp.eq.s32.totalorder %s9, 0
    %p71 = por %p69, %p70
    %p72 = scmp.ne.s32.totalorder %s64, %s66
    %p73 = scmp.eq.s32.totalorder %s14, 5
    %p74 = por %p72, %p73
    %p75 = scmp.ne.s32.totalorder %s66, %s67
    %p76 = scmp.eq.s32.totalorder %s14, 0
    %p77 = por %p75, %p76
    %p78 = scmp.ne.s32.totalorder %s66, %s67
    %p79 = scmp.eq.s32.totalorder %s15, 5
    %p80 = por %p78, %p79
    %p82 = scmp.ne.s32.totalorder %s67, %s81
    %p83 = scmp.eq.s32.totalorder %s15, 0
    %p84 = por %p82, %p83
    %s85 = ssub.s32 %s9, %s16
    %p86 = scmp.eq.s32.totalorder %s85, 0
    %s88 = sadd.s32 %s87, 1
    %s89 = scalar_select %p86, %s87, %s88
    %p92 = pneg %p86
    %p93 = scmp.eq.s32.totalorder %s9, 5
    %p94 = por %p92, %p93
    %p95 = scmp.ne.s32.totalorder %s87, %s90
    %p96 = scmp.eq.s32.totalorder %s9, 0
    %p97 = por %p95, %p96
    %p98 = scmp.ne.s32.totalorder %s87, %s90
    %p99 = scmp.eq.s32.totalorder %s14, 5
    %p100 = por %p98, %p99
    %p101 = scmp.ne.s32.totalorder %s90, %s91
    %p102 = scmp.eq.s32.totalorder %s14, 0
    %p103 = por %p101, %p102
    %p104 = scmp.ne.s32.totalorder %s90, %s91
    %p105 = scmp.eq.s32.totalorder %s15, 5
    %p106 = por %p104, %p105
    %p108 = scmp.ne.s32.totalorder %s91, %s107
    %p109 = scmp.eq.s32.totalorder %s15, 0
    %p110 = por %p108, %p109
    %p111 = scmp.le.s32.totalorder 1, %s9
    %p112 = scmp.lt.s32.totalorder %s9, 7
    %p113 = pnand %p111, %p112
    %p114 = pneg %p113
    // Predicated region
    $region9: #{inpainting_loss.9} parent=5 // pred_check
      _
    $region10: #{inpainting_loss.9} parent=5 // pred_check_branch
      %116 = sbr.rel (%p113) target = $region12
    $region11: #{inpainting_loss.9} parent=5 // pred_region
      %s117 = ssub.s32 %s9, 1
      // Predicated region
      $region13: #{inpainting_loss.9} parent=11 // pred_check
        %p118 = pneg %p56
      $region14: #{inpainting_loss.9} parent=11 // pred_check_branch
        %120 = sbr.rel (%p118) target = $region16
      $region15: #{inpainting_loss.9} parent=11 // pred_region
        _
      $region16: #{inpainting_loss.9} parent=11 // pred_fallthru
        _
      // Predicated region
      $region17: #{inpainting_loss.9} parent=11 // pred_check
        %p121 = pneg %p77
      $region18: #{inpainting_loss.9} parent=11 // pred_check_branch
        %123 = sbr.rel (%p121) target = $region20
      $region19: #{inpainting_loss.9} parent=11 // pred_region
        _
      $region20: #{inpainting_loss.9} parent=11 // pred_fallthru
        _
    $region12: #{inpainting_loss.9} parent=5 // pred_fallthru
      _
    %p124 = scmp.lt.s32.totalorder %s9, 6
    // Predicated region
    $region21: #{inpainting_loss.9} parent=5 // pred_check
      %p125 = pneg %p124
    $region22: #{inpainting_loss.9} parent=5 // pred_check_branch
      %127 = sbr.rel (%p125) target = $region24
    $region23: #{inpainting_loss.9} parent=5 // pred_region
      // Predicated region
      $region25: #{inpainting_loss.9} parent=23 // pred_check
        %p128 = pneg %p29
      $region26: #{inpainting_loss.9} parent=23 // pred_check_branch
        %130 = sbr.rel (%p128) target = $region28
      $region27: #{inpainting_loss.9} parent=23 // pred_region
        %p131 = scmp.lt.s32.totalorder %s9, 5
        %s132 = scalar_select %p131, %s9, 5
        %s133 = smul.addr %s132, 4
        %s134 = scalar_lea.vmem %s0, %s133
      $region28: #{inpainting_loss.9} parent=23 // pred_fallthru
        _
    $region24: #{inpainting_loss.9} parent=5 // pred_fallthru
      _
    %p135 = scmp.le.s32.totalorder 1, %s9
    %p136 = scmp.lt.s32.totalorder %s9, 7
    %p137 = pnand %p135, %p136
    %p138 = pneg %p137
    // Predicated region
    $region29: #{inpainting_loss.9} parent=5 // pred_check
      _
    $region30: #{inpainting_loss.9} parent=5 // pred_check_branch
      %140 = sbr.rel (%p137) target = $region32
    $region31: #{inpainting_loss.9} parent=5 // pred_region
      %s141 = ssub.s32 %s9, 1
      %p142 = scmp.lt.s32.totalorder %s14, 5
      %s143 = scalar_select %p142, %s14, 5
      %s144 = smul.addr %s143, 4
      %s145 = scalar_lea.vmem %s0, %s144
      %p146 = pneg %p35
      %p147 = pneg %p32
      %p148 = pneg %p56
      %p149 = pneg %p53
      %p150 = pneg %p77
      %p151 = pneg %p74
      %p152 = pneg %p103
      %p153 = pneg %p100
      %p154 = scmp.lt.s32.totalorder %s14, 5
      %s155 = scalar_select %p154, %s14, 5
      %s156 = smul.addr %s155, 2
      %s157 = smul.addr %s156, 4
      %s158 = scalar_lea.vmem %s3, %s157
      %p159 = scmp.lt.s32.totalorder %s14, 5
      %s160 = scalar_select %p159, %s14, 5
      %s161 = smul.addr %s160, 4
      %s162 = scalar_lea.vmem %s0, %s161
      %p163 = scmp.lt.s32.totalorder %s14, 5
      %s164 = scalar_select %p163, %s14, 5
      %s165 = smul.addr %s164, 2
      %s166 = smul.addr %s165, 4
      %s167 = scalar_lea.vmem %s3, %s166
      %v169 = vld [vmem:[%s162] sm:$0xf]
      %v170 = vld [vmem:[%s1] sm:$0xf]
      %v171 = vld [vmem:[%s1 + $0x4] sm:$0xf]
      %s172 = scalar_lea.vmem %s1, 8
      %v173 = vld [vmem:[%s172] sm:$0xf]
      %v174 = vld [vmem:[%s172 + $0x4] sm:$0xf]
      %v177 = vunpack.c.l.b16 %v173
      %v178 = vunpack.c.l.b16 %v174
      %v179 = vpack.c.b16 %v178, %v177
      %v181 = vunpack.c.l.b16 %v169
      %v182 = vpack.c.b16 %v181, %v181
      %183 = vrot.lane.b32.xlu0 %v182, 127
      %v184 = vpop.permute.xlu0 %183
      %vm185 = vcmask 64512
      %v187 = vsel %vm185, %v179, 0
      %vm189 = vcmask 1043456
      %v191 = vsel %vm189, %v184, 0
      %193 = vmatprep.subr.bf16.mxu0 0
      %194 = vmatpush1.bf16.msra.mxu0 0
      %195 = vmatprep.subr.bf16.mxu0 0
      %196 = vmatpush1.bf16.msra.mxu0 0
      %197 = vmatprep.subr.bf16.mxu0 0
      %198 = vmatpush1.bf16.msra.mxu0 0
      %199 = vmatprep.subr.bf16.mxu0 0
      %200 = vmatpush1.bf16.msra.mxu0 0
      %201 = vmatprep.subr.bf16.mxu0 0
      %202 = vmatpush1.bf16.msra.mxu0 0
      %203 = vmatprep.subr.bf16.mxu0 0
      %204 = vmatpush1.bf16.msra.mxu0 0
      %205 = vmatprep.subr.bf16.mxu0 0
      %206 = vmatpush1.bf16.msra.mxu0 0
      %207 = vmatprep.subr.bf16.mxu0 0
      %208 = vmatpush1.bf16.msra.mxu0 %v191
      %209 = vmatprep.subr.bf16.mxu0 0
      %210 = vmatpush2.bf16.msra.mxu0 0
      %211 = vmatprep.subr.bf16.mxu0 0
      %212 = vmatpush2.bf16.msra.mxu0 0
      %213 = vmatprep.subr.bf16.mxu0 0
      %214 = vmatpush2.bf16.msra.mxu0 0
      %215 = vmatprep.subr.bf16.mxu0 0
      %216 = vmatpush2.bf16.msra.mxu0 0
      %217 = vmatprep.subr.bf16.mxu0 0
      %218 = vmatpush2.bf16.msra.mxu0 0
      %219 = vmatprep.subr.bf16.mxu0 0
      %220 = vmatpush2.bf16.msra.mxu0 0
      %221 = vmatprep.subr.bf16.mxu0 0
      %222 = vmatpush2.bf16.msra.mxu0 0
      %223 = vmatprep.subr.bf16.mxu0 0
      %224 = vmatpush2.bf16.msra.mxu0 0
      %225 = vmatprep.mubr.bf16.mxu0 0
      %226 = vmatmul.mubr.bf16.gmra.mxu0 %v187
      %v227 = vpop.f32.mrf.mxu0
      %v228 = vadd.f32 0.0, %v227
      %v229 = vpop.f32.mrf.mxu0
      %v230 = vpop.f32.mrf.mxu0
      %v231 = vadd.f32 0.0, %v230
      %v232 = vpop.f32.mrf.mxu0
      %233 = vdwg.mxu0
      %v236 = vunpack.c.l.b16 %v170
      %v237 = vunpack.c.l.b16 %v171
      %v238 = vpack.c.b16 %v237, %v236
      %v240 = vsel %vm185, %v238, 0
      %v243 = vsel %vm189, %v169, 0
      %245 = vmatprep.subr.bf16.mxu0 0
      %246 = vmatpush1.bf16.msra.mxu0 0
      %247 = vmatprep.subr.bf16.mxu0 0
      %248 = vmatpush1.bf16.msra.mxu0 0
      %249 = vmatprep.subr.bf16.mxu0 0
      %250 = vmatpush1.bf16.msra.mxu0 0
      %251 = vmatprep.subr.bf16.mxu0 0
      %252 = vmatpush1.bf16.msra.mxu0 0
      %253 = vmatprep.subr.bf16.mxu0 0
      %254 = vmatpush1.bf16.msra.mxu0 0
      %255 = vmatprep.subr.bf16.mxu0 0
      %256 = vmatpush1.bf16.msra.mxu0 0
      %257 = vmatprep.subr.bf16.mxu0 0
      %258 = vmatpush1.bf16.msra.mxu0 0
      %259 = vmatprep.subr.bf16.mxu0 0
      %260 = vmatpush1.bf16.msra.mxu0 %v243
      %261 = vmatprep.subr.bf16.mxu0 0
      %262 = vmatpush2.bf16.msra.mxu0 0
      %263 = vmatprep.subr.bf16.mxu0 0
      %264 = vmatpush2.bf16.msra.mxu0 0
      %265 = vmatprep.subr.bf16.mxu0 0
      %266 = vmatpush2.bf16.msra.mxu0 0
      %267 = vmatprep.subr.bf16.mxu0 0
      %268 = vmatpush2.bf16.msra.mxu0 0
      %269 = vmatprep.subr.bf16.mxu0 0
      %270 = vmatpush2.bf16.msra.mxu0 0
      %271 = vmatprep.subr.bf16.mxu0 0
      %272 = vmatpush2.bf16.msra.mxu0 0
      %273 = vmatprep.subr.bf16.mxu0 0
      %274 = vmatpush2.bf16.msra.mxu0 0
      %275 = vmatprep.subr.bf16.mxu0 0
      %276 = vmatpush2.bf16.msra.mxu0 0
      %277 = vmatprep.mubr.bf16.mxu0 0
      %278 = vmatmul.mubr.bf16.gmra.mxu0 %v240
      %v279 = vpop.f32.mrf.mxu0
      %v280 = vadd.f32 %v228, %v279
      %v281 = vpop.f32.mrf.mxu0
      %v282 = vpop.f32.mrf.mxu0
      %v283 = vadd.f32 %v231, %v282
      %v284 = vpop.f32.mrf.mxu0
      %285 = vdwg.mxu0
      %s286 = scalar_lea.vmem %s1, 16
      %v287 = vld [vmem:[%s286] sm:$0xf]
      %v288 = vld [vmem:[%s286 + $0x4] sm:$0xf]
      %v291 = vunpack.c.l.b16 %v287
      %v292 = vunpack.c.l.b16 %v288
      %v293 = vpack.c.b16 %v292, %v291
      %294 = vrot.lane.b32.xlu0 %v182, 126
      %v295 = vpop.permute.xlu0 %294
      %v297 = vsel %vm185, %v293, 0
      %v300 = vsel %vm189, %v295, 0
      %302 = vmatprep.subr.bf16.mxu0 0
      %303 = vmatpush1.bf16.msra.mxu0 0
      %304 = vmatprep.subr.bf16.mxu0 0
      %305 = vmatpush1.bf16.msra.mxu0 0
      %306 = vmatprep.subr.bf16.mxu0 0
      %307 = vmatpush1.bf16.msra.mxu0 0
      %308 = vmatprep.subr.bf16.mxu0 0
      %309 = vmatpush1.bf16.msra.mxu0 0
      %310 = vmatprep.subr.bf16.mxu0 0
      %311 = vmatpush1.bf16.msra.mxu0 0
      %312 = vmatprep.subr.bf16.mxu0 0
      %313 = vmatpush1.bf16.msra.mxu0 0
      %314 = vmatprep.subr.bf16.mxu0 0
      %315 = vmatpush1.bf16.msra.mxu0 0
      %316 = vmatprep.subr.bf16.mxu0 0
      %317 = vmatpush1.bf16.msra.mxu0 %v300
      %318 = vmatprep.subr.bf16.mxu0 0
      %319 = vmatpush2.bf16.msra.mxu0 0
      %320 = vmatprep.subr.bf16.mxu0 0
      %321 = vmatpush2.bf16.msra.mxu0 0
      %322 = vmatprep.subr.bf16.mxu0 0
      %323 = vmatpush2.bf16.msra.mxu0 0
      %324 = vmatprep.subr.bf16.mxu0 0
      %325 = vmatpush2.bf16.msra.mxu0 0
      %326 = vmatprep.subr.bf16.mxu0 0
      %327 = vmatpush2.bf16.msra.mxu0 0
      %328 = vmatprep.subr.bf16.mxu0 0
      %329 = vmatpush2.bf16.msra.mxu0 0
      %330 = vmatprep.subr.bf16.mxu0 0
      %331 = vmatpush2.bf16.msra.mxu0 0
      %332 = vmatprep.subr.bf16.mxu0 0
      %333 = vmatpush2.bf16.msra.mxu0 0
      %334 = vmatprep.mubr.bf16.mxu0 0
      %335 = vmatmul.mubr.bf16.gmra.mxu0 %v297
      %v336 = vpop.f32.mrf.mxu0
      %v337 = vadd.f32 0.0, %v336
      %v338 = vpop.f32.mrf.mxu0
      %v339 = vpop.f32.mrf.mxu0
      %v340 = vadd.f32 0.0, %v339
      %v341 = vpop.f32.mrf.mxu0
      %342 = vdwg.mxu0
      %v343 = vadd.f32 %v280, %v337
      %v344 = vadd.f32 %v283, %v340
      %s345 = scalar_lea.vmem %s1, 24
      %v346 = vld [vmem:[%s345] sm:$0xf]
      %v347 = vld [vmem:[%s345 + $0x4] sm:$0xf]
      %v350 = vunpack.c.l.b16 %v346
      %v351 = vunpack.c.l.b16 %v347
      %v352 = vpack.c.b16 %v351, %v350
      %353 = vrot.lane.b32.xlu0 %v182, 118
      %v354 = vpop.permute.xlu0 %353
      %v356 = vsel %vm185, %v352, 0
      %v359 = vsel %vm189, %v354, 0
      %361 = vmatprep.subr.bf16.mxu0 0
      %362 = vmatpush1.bf16.msra.mxu0 0
      %363 = vmatprep.subr.bf16.mxu0 0
      %364 = vmatpush1.bf16.msra.mxu0 0
      %365 = vmatprep.subr.bf16.mxu0 0
      %366 = vmatpush1.bf16.msra.mxu0 0
      %367 = vmatprep.subr.bf16.mxu0 0
      %368 = vmatpush1.bf16.msra.mxu0 0
      %369 = vmatprep.subr.bf16.mxu0 0
      %370 = vmatpush1.bf16.msra.mxu0 0
      %371 = vmatprep.subr.bf16.mxu0 0
      %372 = vmatpush1.bf16.msra.mxu0 0
      %373 = vmatprep.subr.bf16.mxu0 0
      %374 = vmatpush1.bf16.msra.mxu0 0
      %375 = vmatprep.subr.bf16.mxu0 0
      %376 = vmatpush1.bf16.msra.mxu0 %v359
      %377 = vmatprep.subr.bf16.mxu0 0
      %378 = vmatpush2.bf16.msra.mxu0 0
      %379 = vmatprep.subr.bf16.mxu0 0
      %380 = vmatpush2.bf16.msra.mxu0 0
      %381 = vmatprep.subr.bf16.mxu0 0
      %382 = vmatpush2.bf16.msra.mxu0 0
      %383 = vmatprep.subr.bf16.mxu0 0
      %384 = vmatpush2.bf16.msra.mxu0 0
      %385 = vmatprep.subr.bf16.mxu0 0
      %386 = vmatpush2.bf16.msra.mxu0 0
      %387 = vmatprep.subr.bf16.mxu0 0
      %388 = vmatpush2.bf16.msra.mxu0 0
      %389 = vmatprep.subr.bf16.mxu0 0
      %390 = vmatpush2.bf16.msra.mxu0 0
      %391 = vmatprep.subr.bf16.mxu0 0
      %392 = vmatpush2.bf16.msra.mxu0 0
      %393 = vmatprep.mubr.bf16.mxu0 0
      %394 = vmatmul.mubr.bf16.gmra.mxu0 %v356
      %v395 = vpop.f32.mrf.mxu0
      %v396 = vadd.f32 0.0, %v395
      %v397 = vpop.f32.mrf.mxu0
      %v398 = vpop.f32.mrf.mxu0
      %v399 = vadd.f32 0.0, %v398
      %v400 = vpop.f32.mrf.mxu0
      %401 = vdwg.mxu0
      %v402 = vadd.f32 %v343, %v396
      %v403 = vadd.f32 %v344, %v399
      %s404 = scalar_lea.vmem %s1, 32
      %v405 = vld [vmem:[%s404] sm:$0xf]
      %v406 = vld [vmem:[%s404 + $0x4] sm:$0xf]
      %v409 = vunpack.c.l.b16 %v405
      %v410 = vunpack.c.l.b16 %v406
      %v411 = vpack.c.b16 %v410, %v409
      %412 = vrot.lane.b32.xlu0 %v182, 117
      %v413 = vpop.permute.xlu0 %412
      %v415 = vsel %vm185, %v411, 0
      %v418 = vsel %vm189, %v413, 0
      %420 = vmatprep.subr.bf16.mxu0 0
      %421 = vmatpush1.bf16.msra.mxu0 0
      %422 = vmatprep.subr.bf16.mxu0 0
      %423 = vmatpush1.bf16.msra.mxu0 0
      %424 = vmatprep.subr.bf16.mxu0 0
      %425 = vmatpush1.bf16.msra.mxu0 0
      %426 = vmatprep.subr.bf16.mxu0 0
      %427 = vmatpush1.bf16.msra.mxu0 0
      %428 = vmatprep.subr.bf16.mxu0 0
      %429 = vmatpush1.bf16.msra.mxu0 0
      %430 = vmatprep.subr.bf16.mxu0 0
      %431 = vmatpush1.bf16.msra.mxu0 0
      %432 = vmatprep.subr.bf16.mxu0 0
      %433 = vmatpush1.bf16.msra.mxu0 0
      %434 = vmatprep.subr.bf16.mxu0 0
      %435 = vmatpush1.bf16.msra.mxu0 %v418
      %436 = vmatprep.subr.bf16.mxu0 0
      %437 = vmatpush2.bf16.msra.mxu0 0
      %438 = vmatprep.subr.bf16.mxu0 0
      %439 = vmatpush2.bf16.msra.mxu0 0
      %440 = vmatprep.subr.bf16.mxu0 0
      %441 = vmatpush2.bf16.msra.mxu0 0
      %442 = vmatprep.subr.bf16.mxu0 0
      %443 = vmatpush2.bf16.msra.mxu0 0
      %444 = vmatprep.subr.bf16.mxu0 0
      %445 = vmatpush2.bf16.msra.mxu0 0
      %446 = vmatprep.subr.bf16.mxu0 0
      %447 = vmatpush2.bf16.msra.mxu0 0
      %448 = vmatprep.subr.bf16.mxu0 0
      %449 = vmatpush2.bf16.msra.mxu0 0
      %450 = vmatprep.subr.bf16.mxu0 0
      %451 = vmatpush2.bf16.msra.mxu0 0
      %452 = vmatprep.mubr.bf16.mxu0 0
      %453 = vmatmul.mubr.bf16.gmra.mxu0 %v415
      %v454 = vpop.f32.mrf.mxu0
      %v455 = vadd.f32 0.0, %v454
      %v456 = vpop.f32.mrf.mxu0
      %v457 = vpop.f32.mrf.mxu0
      %v458 = vadd.f32 0.0, %v457
      %v459 = vpop.f32.mrf.mxu0
      %460 = vdwg.mxu0
      %v461 = vadd.f32 %v402, %v455
      %v462 = vadd.f32 %v403, %v458
      %s463 = scalar_lea.vmem %s1, 40
      %v464 = vld [vmem:[%s463] sm:$0xf]
      %v465 = vld [vmem:[%s463 + $0x4] sm:$0xf]
      %v468 = vunpack.c.l.b16 %v464
      %v469 = vunpack.c.l.b16 %v465
      %v470 = vpack.c.b16 %v469, %v468
      %471 = vrot.lane.b32.xlu0 %v182, 116
      %v472 = vpop.permute.xlu0 %471
      %v474 = vsel %vm185, %v470, 0
      %v477 = vsel %vm189, %v472, 0
      %479 = vmatprep.subr.bf16.mxu0 0
      %480 = vmatpush1.bf16.msra.mxu0 0
      %481 = vmatprep.subr.bf16.mxu0 0
      %482 = vmatpush1.bf16.msra.mxu0 0
      %483 = vmatprep.subr.bf16.mxu0 0
      %484 = vmatpush1.bf16.msra.mxu0 0
      %485 = vmatprep.subr.bf16.mxu0 0
      %486 = vmatpush1.bf16.msra.mxu0 0
      %487 = vmatprep.subr.bf16.mxu0 0
      %488 = vmatpush1.bf16.msra.mxu0 0
      %489 = vmatprep.subr.bf16.mxu0 0
      %490 = vmatpush1.bf16.msra.mxu0 0
      %491 = vmatprep.subr.bf16.mxu0 0
      %492 = vmatpush1.bf16.msra.mxu0 0
      %493 = vmatprep.subr.bf16.mxu0 0
      %494 = vmatpush1.bf16.msra.mxu0 %v477
      %495 = vmatprep.subr.bf16.mxu0 0
      %496 = vmatpush2.bf16.msra.mxu0 0
      %497 = vmatprep.subr.bf16.mxu0 0
      %498 = vmatpush2.bf16.msra.mxu0 0
      %499 = vmatprep.subr.bf16.mxu0 0
      %500 = vmatpush2.bf16.msra.mxu0 0
      %501 = vmatprep.subr.bf16.mxu0 0
      %502 = vmatpush2.bf16.msra.mxu0 0
      %503 = vmatprep.subr.bf16.mxu0 0
      %504 = vmatpush2.bf16.msra.mxu0 0
      %505 = vmatprep.subr.bf16.mxu0 0
      %506 = vmatpush2.bf16.msra.mxu0 0
      %507 = vmatprep.subr.bf16.mxu0 0
      %508 = vmatpush2.bf16.msra.mxu0 0
      %509 = vmatprep.subr.bf16.mxu0 0
      %510 = vmatpush2.bf16.msra.mxu0 0
      %511 = vmatprep.mubr.bf16.mxu0 0
      %512 = vmatmul.mubr.bf16.gmra.mxu0 %v474
      %v513 = vpop.f32.mrf.mxu0
      %v514 = vadd.f32 0.0, %v513
      %v515 = vpop.f32.mrf.mxu0
      %v516 = vpop.f32.mrf.mxu0
      %v517 = vadd.f32 0.0, %v516
      %v518 = vpop.f32.mrf.mxu0
      %519 = vdwg.mxu0
      %v520 = vadd.f32 %v461, %v514
      %v521 = vadd.f32 %v462, %v517
      %s522 = scalar_lea.vmem %s1, 48
      %v523 = vld [vmem:[%s522] sm:$0xf]
      %v524 = vld [vmem:[%s522 + $0x4] sm:$0xf]
      %v527 = vunpack.c.l.b16 %v523
      %v528 = vunpack.c.l.b16 %v524
      %v529 = vpack.c.b16 %v528, %v527
      %530 = vrot.lane.b32.xlu0 %v182, 108
      %v531 = vpop.permute.xlu0 %530
      %v533 = vsel %vm185, %v529, 0
      %v536 = vsel %vm189, %v531, 0
      %538 = vmatprep.subr.bf16.mxu0 0
      %539 = vmatpush1.bf16.msra.mxu0 0
      %540 = vmatprep.subr.bf16.mxu0 0
      %541 = vmatpush1.bf16.msra.mxu0 0
      %542 = vmatprep.subr.bf16.mxu0 0
      %543 = vmatpush1.bf16.msra.mxu0 0
      %544 = vmatprep.subr.bf16.mxu0 0
      %545 = vmatpush1.bf16.msra.mxu0 0
      %546 = vmatprep.subr.bf16.mxu0 0
      %547 = vmatpush1.bf16.msra.mxu0 0
      %548 = vmatprep.subr.bf16.mxu0 0
      %549 = vmatpush1.bf16.msra.mxu0 0
      %550 = vmatprep.subr.bf16.mxu0 0
      %551 = vmatpush1.bf16.msra.mxu0 0
      %552 = vmatprep.subr.bf16.mxu0 0
      %553 = vmatpush1.bf16.msra.mxu0 %v536
      %554 = vmatprep.subr.bf16.mxu0 0
      %555 = vmatpush2.bf16.msra.mxu0 0
      %556 = vmatprep.subr.bf16.mxu0 0
      %557 = vmatpush2.bf16.msra.mxu0 0
      %558 = vmatprep.subr.bf16.mxu0 0
      %559 = vmatpush2.bf16.msra.mxu0 0
      %560 = vmatprep.subr.bf16.mxu0 0
      %561 = vmatpush2.bf16.msra.mxu0 0
      %562 = vmatprep.subr.bf16.mxu0 0
      %563 = vmatpush2.bf16.msra.mxu0 0
      %564 = vmatprep.subr.bf16.mxu0 0
      %565 = vmatpush2.bf16.msra.mxu0 0
      %566 = vmatprep.subr.bf16.mxu0 0
      %567 = vmatpush2.bf16.msra.mxu0 0
      %568 = vmatprep.subr.bf16.mxu0 0
      %569 = vmatpush2.bf16.msra.mxu0 0
      %570 = vmatprep.mubr.bf16.mxu0 0
      %571 = vmatmul.mubr.bf16.gmra.mxu0 %v533
      %v572 = vpop.f32.mrf.mxu0
      %v573 = vadd.f32 0.0, %v572
      %v574 = vpop.f32.mrf.mxu0
      %v575 = vpop.f32.mrf.mxu0
      %v576 = vadd.f32 0.0, %v575
      %v577 = vpop.f32.mrf.mxu0
      %578 = vdwg.mxu0
      %v579 = vadd.f32 %v520, %v573
      %v580 = vadd.f32 %v521, %v576
      %s581 = scalar_lea.vmem %s1, 56
      %v582 = vld [vmem:[%s581] sm:$0xf]
      %v583 = vld [vmem:[%s581 + $0x4] sm:$0xf]
      %v586 = vunpack.c.l.b16 %v582
      %v587 = vunpack.c.l.b16 %v583
      %v588 = vpack.c.b16 %v587, %v586
      %589 = vrot.lane.b32.xlu0 %v182, 107
      %v590 = vpop.permute.xlu0 %589
      %v592 = vsel %vm185, %v588, 0
      %v595 = vsel %vm189, %v590, 0
      %597 = vmatprep.subr.bf16.mxu0 0
      %598 = vmatpush1.bf16.msra.mxu0 0
      %599 = vmatprep.subr.bf16.mxu0 0
      %600 = vmatpush1.bf16.msra.mxu0 0
      %601 = vmatprep.subr.bf16.mxu0 0
      %602 = vmatpush1.bf16.msra.mxu0 0
      %603 = vmatprep.subr.bf16.mxu0 0
      %604 = vmatpush1.bf16.msra.mxu0 0
      %605 = vmatprep.subr.bf16.mxu0 0
      %606 = vmatpush1.bf16.msra.mxu0 0
      %607 = vmatprep.subr.bf16.mxu0 0
      %608 = vmatpush1.bf16.msra.mxu0 0
      %609 = vmatprep.subr.bf16.mxu0 0
      %610 = vmatpush1.bf16.msra.mxu0 0
      %611 = vmatprep.subr.bf16.mxu0 0
      %612 = vmatpush1.bf16.msra.mxu0 %v595
      %613 = vmatprep.subr.bf16.mxu0 0
      %614 = vmatpush2.bf16.msra.mxu0 0
      %615 = vmatprep.subr.bf16.mxu0 0
      %616 = vmatpush2.bf16.msra.mxu0 0
      %617 = vmatprep.subr.bf16.mxu0 0
      %618 = vmatpush2.bf16.msra.mxu0 0
      %619 = vmatprep.subr.bf16.mxu0 0
      %620 = vmatpush2.bf16.msra.mxu0 0
      %621 = vmatprep.subr.bf16.mxu0 0
      %622 = vmatpush2.bf16.msra.mxu0 0
      %623 = vmatprep.subr.bf16.mxu0 0
      %624 = vmatpush2.bf16.msra.mxu0 0
      %625 = vmatprep.subr.bf16.mxu0 0
      %626 = vmatpush2.bf16.msra.mxu0 0
      %627 = vmatprep.subr.bf16.mxu0 0
      %628 = vmatpush2.bf16.msra.mxu0 0
      %629 = vmatprep.mubr.bf16.mxu0 0
      %630 = vmatmul.mubr.bf16.gmra.mxu0 %v592
      %v631 = vpop.f32.mrf.mxu0
      %v632 = vadd.f32 0.0, %v631
      %v633 = vpop.f32.mrf.mxu0
      %v634 = vpop.f32.mrf.mxu0
      %v635 = vadd.f32 0.0, %v634
      %v636 = vpop.f32.mrf.mxu0
      %637 = vdwg.mxu0
      %v638 = vadd.f32 %v579, %v632
      %v639 = vadd.f32 %v580, %v635
      %s640 = scalar_lea.vmem %s1, 64
      %v641 = vld [vmem:[%s640] sm:$0xf]
      %v642 = vld [vmem:[%s640 + $0x4] sm:$0xf]
      %v645 = vunpack.c.l.b16 %v641
      %v646 = vunpack.c.l.b16 %v642
      %v647 = vpack.c.b16 %v646, %v645
      %648 = vrot.lane.b32.xlu0 %v182, 106
      %v649 = vpop.permute.xlu0 %648
      %v651 = vsel %vm185, %v647, 0
      %v654 = vsel %vm189, %v649, 0
      %656 = vmatprep.subr.bf16.mxu0 0
      %657 = vmatpush1.bf16.msra.mxu0 0
      %658 = vmatprep.subr.bf16.mxu0 0
      %659 = vmatpush1.bf16.msra.mxu0 0
      %660 = vmatprep.subr.bf16.mxu0 0
      %661 = vmatpush1.bf16.msra.mxu0 0
      %662 = vmatprep.subr.bf16.mxu0 0
      %663 = vmatpush1.bf16.msra.mxu0 0
      %664 = vmatprep.subr.bf16.mxu0 0
      %665 = vmatpush1.bf16.msra.mxu0 0
      %666 = vmatprep.subr.bf16.mxu0 0
      %667 = vmatpush1.bf16.msra.mxu0 0
      %668 = vmatprep.subr.bf16.mxu0 0
      %669 = vmatpush1.bf16.msra.mxu0 0
      %670 = vmatprep.subr.bf16.mxu0 0
      %671 = vmatpush1.bf16.msra.mxu0 %v654
      %672 = vmatprep.subr.bf16.mxu0 0
      %673 = vmatpush2.bf16.msra.mxu0 0
      %674 = vmatprep.subr.bf16.mxu0 0
      %675 = vmatpush2.bf16.msra.mxu0 0
      %676 = vmatprep.subr.bf16.mxu0 0
      %677 = vmatpush2.bf16.msra.mxu0 0
      %678 = vmatprep.subr.bf16.mxu0 0
      %679 = vmatpush2.bf16.msra.mxu0 0
      %680 = vmatprep.subr.bf16.mxu0 0
      %681 = vmatpush2.bf16.msra.mxu0 0
      %682 = vmatprep.subr.bf16.mxu0 0
      %683 = vmatpush2.bf16.msra.mxu0 0
      %684 = vmatprep.subr.bf16.mxu0 0
      %685 = vmatpush2.bf16.msra.mxu0 0
      %686 = vmatprep.subr.bf16.mxu0 0
      %687 = vmatpush2.bf16.msra.mxu0 0
      %688 = vmatprep.mubr.bf16.mxu0 0
      %689 = vmatmul.mubr.bf16.gmra.mxu0 %v651
      %v690 = vpop.f32.mrf.mxu0
      %v691 = vadd.f32 0.0, %v690
      %v692 = vpop.f32.mrf.mxu0
      %v693 = vpop.f32.mrf.mxu0
      %v694 = vadd.f32 0.0, %v693
      %v695 = vpop.f32.mrf.mxu0
      %696 = vdwg.mxu0
      %v697 = vadd.f32 %v638, %v691
      %v698 = vadd.f32 %v639, %v694
      %v699 = vld [vmem:[%s2] sm:$0xff]
      %v700 = vld [vmem:[%s2 + $0x8] sm:$0xff]
      %702 = vset.pattern.permute.xlu0 0
      %703 = vperm.xlu0 %702, %v699
      %v704 = vpop.permute.xlu0 %703
      %707 = vset.pattern.permute.xlu0 0
      %708 = vperm.xlu0 %707, %v700
      %v709 = vpop.permute.xlu0 %708
      %v711 = vadd.f32 %v697, %v704
      %v712 = vadd.f32 %v698, %v709
      %v713 = vmax.f32 %v711, 0.0
      %v714 = vmax.f32 %v712, 0.0
      %v715 = vpack.c.bf16 %v714, %v713
      %v717 = vunpack.c.l.b16 %v715
      %v718 = vunpack.c.h.b16 %v715
      %v719 = vpack.c.b16 %v717, %v717
      %v720 = vpack.c.b16 %v718, %v718
      %vm723 = vcmask 650240
      %724 = vst.msk [vmem:[%s167] sm:$0xf] %vm723, %v719
      %725 = vst.msk [vmem:[%s167 + $0x4] sm:$0xf] %vm723, %v720
      %p726 = scmp.lt.s32.totalorder %s14, 5
      %s727 = scalar_select %p726, %s14, 5
      %s728 = smul.addr %s727, 2
      %s729 = smul.addr %s728, 4
      %s730 = scalar_lea.vmem %s3, %s729
      // Predicated region
      $region33: #{inpainting_loss.9} parent=31 // pred_check
        %p731 = pneg %p100
      $region34: #{inpainting_loss.9} parent=31 // pred_check_branch
        %733 = sbr.rel (%p731) target = $region36
      $region35: #{inpainting_loss.9} parent=31 // pred_region
        _
      $region36: #{inpainting_loss.9} parent=31 // pred_fallthru
        _
    $region32: #{inpainting_loss.9} parent=5 // pred_fallthru
      _
    %p734 = scmp.le.s32.totalorder 2, %s9
    // Predicated region
    $region37: #{inpainting_loss.9} parent=5 // pred_check
      %p735 = pneg %p734
    $region38: #{inpainting_loss.9} parent=5 // pred_check_branch
      %737 = sbr.rel (%p735) target = $region40
    $region39: #{inpainting_loss.9} parent=5 // pred_region
      %s738 = ssub.s32 %s9, 2
      // Predicated region
      $region41: #{inpainting_loss.9} parent=39 // pred_check
        %p739 = pneg %p106
      $region42: #{inpainting_loss.9} parent=39 // pred_check_branch
        %741 = sbr.rel (%p739) target = $region44
      $region43: #{inpainting_loss.9} parent=39 // pred_region
        %p742 = scmp.lt.s32.totalorder %s15, 5
        %s743 = scalar_select %p742, %s15, 5
        %s744 = smul.addr %s743, 2
        %s745 = smul.addr %s744, 4
        %s746 = scalar_lea.vmem %s3, %s745
      $region44: #{inpainting_loss.9} parent=39 // pred_fallthru
        _
    $region40: #{inpainting_loss.9} parent=5 // pred_fallthru
      _
  $region6: #{inpainting_loss.9} parent=0 // loop_footer
    %s13 = sadd.s32 1, %s9
  $region7: #{inpainting_loss.9} parent=0 // loop_footer_branch
    %8 = sbr.rel target = $region3
  $region8: #{inpainting_loss.9} parent=0 // loop_exit
    _

// kernel: inpainting_loss.12
$region0: #{inpainting_loss.12}
  #allocation0 [shape = 'u32[]', space=smem, size = 0x4, offset = 0x4, fixed_abs, tag = 'smem constant byte address 0x4 - core index']
  #allocation1 [shape = 'u32[144,128]{1,0:T(1,128)}', space=vmem, size = 0x12000, scoped, tag = 'internal scratch']
  #allocation2 [shape = 'f32[2]{0:T(128)}', space=smem, size = 0x200, scoped, tag = 'scratch operand']
  #allocation3 [shape = 'f32[2,16,16]{2,1,0:T(8,128)}', space=vmem, size = 0x4000, scoped, tag = 'scratch operand']
  #allocation4 [shape = 'f32[2,16,16]{2,1,0:T(8,128)}', space=vmem, size = 0x4000, scoped, tag = 'scratch operand']
  #allocation5 [shape = 'f32[2,16,16]{2,1,0:T(8,128)}', space=vmem, size = 0x4000, scoped, tag = 'scratch operand']
  %s0 = inlined_call_operand.vmem [shape: bf16[6,16,16], index: 0, kind: input, shape index: {}, may-alias: {0,1,2}]
  %s1 = inlined_call_operand.vmem [shape: bf16[6,16,16], index: 1, kind: input, shape index: {}, may-alias: {0,1,2}]
  %s2 = inlined_call_operand.vmem [shape: bf16[6,16,16], index: 2, kind: input, shape index: {}, may-alias: {0,1,2}]
  %s3 = inlined_call_operand.vmem [shape: f32[1,4], index: 3, kind: output, shape index: {}]
  %s4 = sld [smem:[#allocation0]]
  $region30: #{inpainting_loss.12} parent=0
    _
  %s6 = ssub.s32 1, %s4
  %s7 = scalar_select 0, %s6, %s4
  $region1: #{inpainting_loss.12} parent=0
    #allocation6 [shape = 'u8[512]{0}', space=smem, size = 0x200, scoped, tag = 'output window, operand 0, single buffered']
    #allocation7 [shape = 's32[1]{0}', space=sflag, size = 0x4, scoped, tag = 'scoped memory for inpainting_loss.12']
    %8 = vsyncpa [#allocation7], 0
    // Predicated region
    $region2: #{inpainting_loss.12} parent=1 // pred_check
      _
    $region3: #{inpainting_loss.12} parent=1 // pred_check_branch
      %10 = sbr.rel (0) target = $region5
    $region4: #{inpainting_loss.12} parent=1 // pred_region
      _
    $region5: #{inpainting_loss.12} parent=1 // pred_fallthru
      _
    // Predicated region
    $region6: #{inpainting_loss.12} parent=1 // pred_check
      _
    $region7: #{inpainting_loss.12} parent=1 // pred_check_branch
      %12 = sbr.rel (0) target = $region9
    $region8: #{inpainting_loss.12} parent=1 // pred_region
      %s13 = scalar_lea.vmem %s1, 16
    $region9: #{inpainting_loss.12} parent=1 // pred_fallthru
      _
    // Predicated region
    $region10: #{inpainting_loss.12} parent=1 // pred_check
      _
    $region11: #{inpainting_loss.12} parent=1 // pred_check_branch
      %15 = sbr.rel (0) target = $region13
    $region12: #{inpainting_loss.12} parent=1 // pred_region
      %s16 = scalar_lea.vmem %s2, 32
    $region13: #{inpainting_loss.12} parent=1 // pred_fallthru
      _
    %s17 = scalar_lea.vmem %s1, 16
    %s18 = scalar_lea.vmem %s2, 32
    %s19 = scalar_lea.vmem %s1, 16
    %s20 = scalar_lea.vmem %s2, 32
    %p22 = scmp.eq.s32.totalorder 0, 0
    // Predicated region
    $region14: #{inpainting_loss.12} parent=1 // pred_check
      %p23 = pneg %p22
    $region15: #{inpainting_loss.12} parent=1 // pred_check_branch
      %25 = sbr.rel (%p23) target = $region17
    $region16: #{inpainting_loss.12} parent=1 // pred_region
      %s26 = scalar_lea.smem [#allocation2], 0
      %27 = sst [smem:[%s26]] 0.0
      %s28 = scalar_lea.smem [#allocation2], 1
      %29 = sst [smem:[%s28]] 0.0
      %vm30 = vcmask 130048
      %31 = vst.msk [vmem:[#allocation3] sm:$0xff] %vm30, 0.0
      %32 = vst.msk [vmem:[#allocation3 + $0x8] sm:$0xff] %vm30, 0.0
      %33 = vst.msk [vmem:[#allocation3 + $0x10] sm:$0xff] %vm30, 0.0
      %34 = vst.msk [vmem:[#allocation3 + $0x18] sm:$0xff] %vm30, 0.0
      %35 = vst.msk [vmem:[#allocation4] sm:$0xff] %vm30, 0.0
      %36 = vst.msk [vmem:[#allocation4 + $0x8] sm:$0xff] %vm30, 0.0
      %37 = vst.msk [vmem:[#allocation4 + $0x10] sm:$0xff] %vm30, 0.0
      %38 = vst.msk [vmem:[#allocation4 + $0x18] sm:$0xff] %vm30, 0.0
      %39 = vst.msk [vmem:[#allocation5] sm:$0xff] %vm30, 0.0
      %40 = vst.msk [vmem:[#allocation5 + $0x8] sm:$0xff] %vm30, 0.0
      %41 = vst.msk [vmem:[#allocation5 + $0x10] sm:$0xff] %vm30, 0.0
      %42 = vst.msk [vmem:[#allocation5 + $0x18] sm:$0xff] %vm30, 0.0
    $region17: #{inpainting_loss.12} parent=1 // pred_fallthru
      _
    %v43 = vld [vmem:[%s0] sm:$0xf]
    %v44 = vld [vmem:[%s0 + $0x4] sm:$0xf]
    %v45 = vld [vmem:[%s0 + $0x8] sm:$0xf]
    %v46 = vld [vmem:[%s0 + $0xc] sm:$0xf]
    %v47 = vld [vmem:[%s19] sm:$0xf]
    %v48 = vld [vmem:[%s19 + $0x4] sm:$0xf]
    %v49 = vld [vmem:[%s19 + $0x8] sm:$0xf]
    %v50 = vld [vmem:[%s19 + $0xc] sm:$0xf]
    %v51 = vld [vmem:[%s20] sm:$0xf]
    %v52 = vld [vmem:[%s20 + $0x4] sm:$0xf]
    %v53 = vld [vmem:[%s20 + $0x8] sm:$0xf]
    %v54 = vld [vmem:[%s20 + $0xc] sm:$0xf]
    %v55 = vunpack.c.l.bf16 %v43
    %v56 = vunpack.c.l.bf16 %v44
    %v57 = vunpack.c.l.bf16 %v45
    %v58 = vunpack.c.l.bf16 %v46
    %v59 = vunpack.c.l.bf16 %v47
    %v60 = vunpack.c.l.bf16 %v48
    %v61 = vunpack.c.l.bf16 %v49
    %v62 = vunpack.c.l.bf16 %v50
    %v63 = vunpack.c.l.bf16 %v51
    %v64 = vunpack.c.l.bf16 %v52
    %v65 = vunpack.c.l.bf16 %v53
    %v66 = vunpack.c.l.bf16 %v54
    %s67 = sld [smem:[#allocation2]]
    %v68 = vsub.f32 %v55, %v63
    %v69 = vsub.f32 %v56, %v64
    %v70 = vsub.f32 %v57, %v65
    %v71 = vsub.f32 %v58, %v66
    %v72 = vand.u32 2147483647, %v68
    %v73 = vand.u32 2147483647, %v69
    %v74 = vand.u32 2147483647, %v70
    %v75 = vand.u32 2147483647, %v71
    %vm76 = vcmask 130048
    %v77 = vsel %vm76, %v72, 0.0
    %v78 = vsel %vm76, %v73, 0.0
    %v79 = vadd.f32 %v77, %v78
    %v80 = vsel %vm76, %v74, 0.0
    %v81 = vadd.f32 %v79, %v80
    %v82 = vsel %vm76, %v75, 0.0
    %v83 = vadd.f32 %v81, %v82
    %84 = vadd.xlane.f32.xlu0 %v83
    %v85 = vpop.xlane.xlu0 %84
    %v86 = vrot.slane %v85, 4
    %v87 = vadd.f32 %v85, %v86
    %v88 = vrot.slane %v87, 2
    %v89 = vadd.f32 %v87, %v88
    %v90 = vrot.slane %v89, 1
    %v91 = vadd.f32 %v89, %v90
    %s92 = vtos %v91
    %s93 = sadd.f32 %s67, %s92
    %s94 = scalar_lea.smem [#allocation2], 0
    %95 = sst [smem:[%s94]] %s93
    %s96 = sld [smem:[#allocation2 + $0x1]]
    %v97 = vsub.f32 %v59, %v63
    %v98 = vsub.f32 %v60, %v64
    %v99 = vsub.f32 %v61, %v65
    %v100 = vsub.f32 %v62, %v66
    %v101 = vand.u32 2147483647, %v97
    %v102 = vand.u32 2147483647, %v98
    %v103 = vand.u32 2147483647, %v99
    %v104 = vand.u32 2147483647, %v100
    %v105 = vsel %vm76, %v101, 0.0
    %v106 = vsel %vm76, %v102, 0.0
    %v107 = vadd.f32 %v105, %v106
    %v108 = vsel %vm76, %v103, 0.0
    %v109 = vadd.f32 %v107, %v108
    %v110 = vsel %vm76, %v104, 0.0
    %v111 = vadd.f32 %v109, %v110
    %112 = vadd.xlane.f32.xlu0 %v111
    %v113 = vpop.xlane.xlu0 %112
    %v114 = vrot.slane %v113, 4
    %v115 = vadd.f32 %v113, %v114
    %v116 = vrot.slane %v115, 2
    %v117 = vadd.f32 %v115, %v116
    %v118 = vrot.slane %v117, 1
    %v119 = vadd.f32 %v117, %v118
    %s120 = vtos %v119
    %s121 = sadd.f32 %s96, %s120
    %s122 = scalar_lea.smem [#allocation2], 1
    %123 = sst [smem:[%s122]] %s121
    %v124 = vld [vmem:[#allocation3] sm:$0xff]
    %v125 = vld [vmem:[#allocation3 + $0x8] sm:$0xff]
    %v126 = vld [vmem:[#allocation3 + $0x10] sm:$0xff]
    %v127 = vld [vmem:[#allocation3 + $0x18] sm:$0xff]
    %v130 = vunpack.c.l.b16 %v43
    %v131 = vunpack.c.l.b16 %v44
    %v132 = vpack.c.b16 %v131, %v130
    %v134 = vsel %vm76, %v132, 0
    %136 = vmatprep.subr.bf16.mxu0 0
    %137 = vmatpush1.bf16.xpose.msra.mxu0 0
    %138 = vmatprep.subr.bf16.mxu0 0
    %139 = vmatpush1.bf16.xpose.msra.mxu0 0
    %140 = vmatprep.subr.bf16.mxu0 0
    %141 = vmatpush1.bf16.xpose.msra.mxu0 0
    %142 = vmatprep.subr.bf16.mxu0 0
    %143 = vmatpush1.bf16.xpose.msra.mxu0 0
    %144 = vmatprep.subr.bf16.mxu0 0
    %145 = vmatpush1.bf16.xpose.msra.mxu0 0
    %146 = vmatprep.subr.bf16.mxu0 0
    %147 = vmatpush1.bf16.xpose.msra.mxu0 0
    %148 = vmatprep.subr.bf16.mxu0 0
    %149 = vmatpush1.bf16.xpose.msra.mxu0 0
    %150 = vmatprep.subr.bf16.mxu0 0
    %151 = vmatpush1.bf16.xpose.msra.mxu0 %v134
    %152 = vmatprep.subr.bf16.mxu0 0
    %153 = vmatpush2.bf16.xpose.msra.mxu0 0
    %154 = vmatprep.subr.bf16.mxu0 0
    %155 = vmatpush2.bf16.xpose.msra.mxu0 0
    %156 = vmatprep.subr.bf16.mxu0 0
    %157 = vmatpush2.bf16.xpose.msra.mxu0 0
    %158 = vmatprep.subr.bf16.mxu0 0
    %159 = vmatpush2.bf16.xpose.msra.mxu0 0
    %160 = vmatprep.subr.bf16.mxu0 0
    %161 = vmatpush2.bf16.xpose.msra.mxu0 0
    %162 = vmatprep.subr.bf16.mxu0 0
    %163 = vmatpush2.bf16.xpose.msra.mxu0 0
    %164 = vmatprep.subr.bf16.mxu0 0
    %165 = vmatpush2.bf16.xpose.msra.mxu0 0
    %166 = vmatprep.subr.bf16.mxu0 0
    %167 = vmatpush2.bf16.xpose.msra.mxu0 0
    %168 = vmatprep.mubr.bf16.mxu0 0
    %169 = vmatmul.mubr.bf16.gmra.mxu0 %v134
    %v170 = vpop.f32.mrf.mxu0
    %v171 = vadd.f32 0.0, %v170
    %v172 = vpop.f32.mrf.mxu0
    %v173 = vpop.f32.mrf.mxu0
    %v174 = vadd.f32 0.0, %v173
    %v175 = vpop.f32.mrf.mxu0
    %176 = vdwg.mxu0
    %v179 = vunpack.c.l.b16 %v45
    %v180 = vunpack.c.l.b16 %v46
    %v181 = vpack.c.b16 %v180, %v179
    %v183 = vsel %vm76, %v181, 0
    %185 = vmatprep.subr.bf16.mxu0 0
    %186 = vmatpush1.bf16.xpose.msra.mxu0 0
    %187 = vmatprep.subr.bf16.mxu0 0
    %188 = vmatpush1.bf16.xpose.msra.mxu0 0
    %189 = vmatprep.subr.bf16.mxu0 0
    %190 = vmatpush1.bf16.xpose.msra.mxu0 0
    %191 = vmatprep.subr.bf16.mxu0 0
    %192 = vmatpush1.bf16.xpose.msra.mxu0 0
    %193 = vmatprep.subr.bf16.mxu0 0
    %194 = vmatpush1.bf16.xpose.msra.mxu0 0
    %195 = vmatprep.subr.bf16.mxu0 0
    %196 = vmatpush1.bf16.xpose.msra.mxu0 0
    %197 = vmatprep.subr.bf16.mxu0 0
    %198 = vmatpush1.bf16.xpose.msra.mxu0 0
    %199 = vmatprep.subr.bf16.mxu0 0
    %200 = vmatpush1.bf16.xpose.msra.mxu0 %v183
    %201 = vmatprep.subr.bf16.mxu0 0
    %202 = vmatpush2.bf16.xpose.msra.mxu0 0
    %203 = vmatprep.subr.bf16.mxu0 0
    %204 = vmatpush2.bf16.xpose.msra.mxu0 0
    %205 = vmatprep.subr.bf16.mxu0 0
    %206 = vmatpush2.bf16.xpose.msra.mxu0 0
    %207 = vmatprep.subr.bf16.mxu0 0
    %208 = vmatpush2.bf16.xpose.msra.mxu0 0
    %209 = vmatprep.subr.bf16.mxu0 0
    %210 = vmatpush2.bf16.xpose.msra.mxu0 0
    %211 = vmatprep.subr.bf16.mxu0 0
    %212 = vmatpush2.bf16.xpose.msra.mxu0 0
    %213 = vmatprep.subr.bf16.mxu0 0
    %214 = vmatpush2.bf16.xpose.msra.mxu0 0
    %215 = vmatprep.subr.bf16.mxu0 0
    %216 = vmatpush2.bf16.xpose.msra.mxu0 0
    %217 = vmatprep.mubr.bf16.mxu0 0
    %218 = vmatmul.mubr.bf16.gmra.mxu0 %v183
    %v219 = vpop.f32.mrf.mxu0
    %v220 = vadd.f32 0.0, %v219
    %v221 = vpop.f32.mrf.mxu0
    %v222 = vpop.f32.mrf.mxu0
    %v223 = vadd.f32 0.0, %v222
    %v224 = vpop.f32.mrf.mxu0
    %225 = vdwg.mxu0
    %v226 = vadd.f32 %v124, %v171
    %v227 = vadd.f32 %v125, %v174
    %v228 = vadd.f32 %v126, %v220
    %v229 = vadd.f32 %v127, %v223
    %230 = vst.msk [vmem:[#allocation3] sm:$0xff] %vm76, %v226
    %231 = vst.msk [vmem:[#allocation3 + $0x8] sm:$0xff] %vm76, %v227
    %232 = vst.msk [vmem:[#allocation3 + $0x10] sm:$0xff] %vm76, %v228
    %233 = vst.msk [vmem:[#allocation3 + $0x18] sm:$0xff] %vm76, %v229
    %v234 = vld [vmem:[#allocation4] sm:$0xff]
    %v235 = vld [vmem:[#allocation4 + $0x8] sm:$0xff]
    %v236 = vld [vmem:[#allocation4 + $0x10] sm:$0xff]
    %v237 = vld [vmem:[#allocation4 + $0x18] sm:$0xff]
    %v240 = vunpack.c.l.b16 %v47
    %v241 = vunpack.c.l.b16 %v48
    %v242 = vpack.c.b16 %v241, %v240
    %v244 = vsel %vm76, %v242, 0
    %246 = vmatprep.subr.bf16.mxu0 0
    %247 = vmatpush1.bf16.xpose.msra.mxu0 0
    %248 = vmatprep.subr.bf16.mxu0 0
    %249 = vmatpush1.bf16.xpose.msra.mxu0 0
    %250 = vmatprep.subr.bf16.mxu0 0
    %251 = vmatpush1.bf16.xpose.msra.mxu0 0
    %252 = vmatprep.subr.bf16.mxu0 0
    %253 = vmatpush1.bf16.xpose.msra.mxu0 0
    %254 = vmatprep.subr.bf16.mxu0 0
    %255 = vmatpush1.bf16.xpose.msra.mxu0 0
    %256 = vmatprep.subr.bf16.mxu0 0
    %257 = vmatpush1.bf16.xpose.msra.mxu0 0
    %258 = vmatprep.subr.bf16.mxu0 0
    %259 = vmatpush1.bf16.xpose.msra.mxu0 0
    %260 = vmatprep.subr.bf16.mxu0 0
    %261 = vmatpush1.bf16.xpose.msra.mxu0 %v244
    %262 = vmatprep.subr.bf16.mxu0 0
    %263 = vmatpush2.bf16.xpose.msra.mxu0 0
    %264 = vmatprep.subr.bf16.mxu0 0
    %265 = vmatpush2.bf16.xpose.msra.mxu0 0
    %266 = vmatprep.subr.bf16.mxu0 0
    %267 = vmatpush2.bf16.xpose.msra.mxu0 0
    %268 = vmatprep.subr.bf16.mxu0 0
    %269 = vmatpush2.bf16.xpose.msra.mxu0 0
    %270 = vmatprep.subr.bf16.mxu0 0
    %271 = vmatpush2.bf16.xpose.msra.mxu0 0
    %272 = vmatprep.subr.bf16.mxu0 0
    %273 = vmatpush2.bf16.xpose.msra.mxu0 0
    %274 = vmatprep.subr.bf16.mxu0 0
    %275 = vmatpush2.bf16.xpose.msra.mxu0 0
    %276 = vmatprep.subr.bf16.mxu0 0
    %277 = vmatpush2.bf16.xpose.msra.mxu0 0
    %278 = vmatprep.mubr.bf16.mxu0 0
    %279 = vmatmul.mubr.bf16.gmra.mxu0 %v244
    %v280 = vpop.f32.mrf.mxu0
    %v281 = vadd.f32 0.0, %v280
    %v282 = vpop.f32.mrf.mxu0
    %v283 = vpop.f32.mrf.mxu0
    %v284 = vadd.f32 0.0, %v283
    %v285 = vpop.f32.mrf.mxu0
    %286 = vdwg.mxu0
    %v289 = vunpack.c.l.b16 %v49
    %v290 = vunpack.c.l.b16 %v50
    %v291 = vpack.c.b16 %v290, %v289
    %v293 = vsel %vm76, %v291, 0
    %295 = vmatprep.subr.bf16.mxu0 0
    %296 = vmatpush1.bf16.xpose.msra.mxu0 0
    %297 = vmatprep.subr.bf16.mxu0 0
    %298 = vmatpush1.bf16.xpose.msra.mxu0 0
    %299 = vmatprep.subr.bf16.mxu0 0
    %300 = vmatpush1.bf16.xpose.msra.mxu0 0
    %301 = vmatprep.subr.bf16.mxu0 0
    %302 = vmatpush1.bf16.xpose.msra.mxu0 0
    %303 = vmatprep.subr.bf16.mxu0 0
    %304 = vmatpush1.bf16.xpose.msra.mxu0 0
    %305 = vmatprep.subr.bf16.mxu0 0
    %306 = vmatpush1.bf16.xpose.msra.mxu0 0
    %307 = vmatprep.subr.bf16.mxu0 0
    %308 = vmatpush1.bf16.xpose.msra.mxu0 0
    %309 = vmatprep.subr.bf16.mxu0 0
    %310 = vmatpush1.bf16.xpose.msra.mxu0 %v293
    %311 = vmatprep.subr.bf16.mxu0 0
    %312 = vmatpush2.bf16.xpose.msra.mxu0 0
    %313 = vmatprep.subr.bf16.mxu0 0
    %314 = vmatpush2.bf16.xpose.msra.mxu0 0
    %315 = vmatprep.subr.bf16.mxu0 0
    %316 = vmatpush2.bf16.xpose.msra.mxu0 0
    %317 = vmatprep.subr.bf16.mxu0 0
    %318 = vmatpush2.bf16.xpose.msra.mxu0 0
    %319 = vmatprep.subr.bf16.mxu0 0
    %320 = vmatpush2.bf16.xpose.msra.mxu0 0
    %321 = vmatprep.subr.bf16.mxu0 0
    %322 = vmatpush2.bf16.xpose.msra.mxu0 0
    %323 = vmatprep.subr.bf16.mxu0 0
    %324 = vmatpush2.bf16.xpose.msra.mxu0 0
    %325 = vmatprep.subr.bf16.mxu0 0
    %326 = vmatpush2.bf16.xpose.msra.mxu0 0
    %327 = vmatprep.mubr.bf16.mxu0 0
    %328 = vmatmul.mubr.bf16.gmra.mxu0 %v293
    %v329 = vpop.f32.mrf.mxu0
    %v330 = vadd.f32 0.0, %v329
    %v331 = vpop.f32.mrf.mxu0
    %v332 = vpop.f32.mrf.mxu0
    %v333 = vadd.f32 0.0, %v332
    %v334 = vpop.f32.mrf.mxu0
    %335 = vdwg.mxu0
    %v336 = vadd.f32 %v234, %v281
    %v337 = vadd.f32 %v235, %v284
    %v338 = vadd.f32 %v236, %v330
    %v339 = vadd.f32 %v237, %v333
    %340 = vst.msk [vmem:[#allocation4] sm:$0xff] %vm76, %v336
    %341 = vst.msk [vmem:[#allocation4 + $0x8] sm:$0xff] %vm76, %v337
    %342 = vst.msk [vmem:[#allocation4 + $0x10] sm:$0xff] %vm76, %v338
    %343 = vst.msk [vmem:[#allocation4 + $0x18] sm:$0xff] %vm76, %v339
    %v344 = vld [vmem:[#allocation5] sm:$0xff]
    %v345 = vld [vmem:[#allocation5 + $0x8] sm:$0xff]
    %v346 = vld [vmem:[#allocation5 + $0x10] sm:$0xff]
    %v347 = vld [vmem:[#allocation5 + $0x18] sm:$0xff]
    %v350 = vunpack.c.l.b16 %v51
    %v351 = vunpack.c.l.b16 %v52
    %v352 = vpack.c.b16 %v351, %v350
    %v354 = vsel %vm76, %v352, 0
    %356 = vmatprep.subr.bf16.mxu0 0
    %357 = vmatpush1.bf16.xpose.msra.mxu0 0
    %358 = vmatprep.subr.bf16.mxu0 0
    %359 = vmatpush1.bf16.xpose.msra.mxu0 0
    %360 = vmatprep.subr.bf16.mxu0 0
    %361 = vmatpush1.bf16.xpose.msra.mxu0 0
    %362 = vmatprep.subr.bf16.mxu0 0
    %363 = vmatpush1.bf16.xpose.msra.mxu0 0
    %364 = vmatprep.subr.bf16.mxu0 0
    %365 = vmatpush1.bf16.xpose.msra.mxu0 0
    %366 = vmatprep.subr.bf16.mxu0 0
    %367 = vmatpush1.bf16.xpose.msra.mxu0 0
    %368 = vmatprep.subr.bf16.mxu0 0
    %369 = vmatpush1.bf16.xpose.msra.mxu0 0
    %370 = vmatprep.subr.bf16.mxu0 0
    %371 = vmatpush1.bf16.xpose.msra.mxu0 %v354
    %372 = vmatprep.subr.bf16.mxu0 0
    %373 = vmatpush2.bf16.xpose.msra.mxu0 0
    %374 = vmatprep.subr.bf16.mxu0 0
    %375 = vmatpush2.bf16.xpose.msra.mxu0 0
    %376 = vmatprep.subr.bf16.mxu0 0
    %377 = vmatpush2.bf16.xpose.msra.mxu0 0
    %378 = vmatprep.subr.bf16.mxu0 0
    %379 = vmatpush2.bf16.xpose.msra.mxu0 0
    %380 = vmatprep.subr.bf16.mxu0 0
    %381 = vmatpush2.bf16.xpose.msra.mxu0 0
    %382 = vmatprep.subr.bf16.mxu0 0
    %383 = vmatpush2.bf16.xpose.msra.mxu0 0
    %384 = vmatprep.subr.bf16.mxu0 0
    %385 = vmatpush2.bf16.xpose.msra.mxu0 0
    %386 = vmatprep.subr.bf16.mxu0 0
    %387 = vmatpush2.bf16.xpose.msra.mxu0 0
    %388 = vmatprep.mubr.bf16.mxu0 0
    %389 = vmatmul.mubr.bf16.gmra.mxu0 %v354
    %v390 = vpop.f32.mrf.mxu0
    %v391 = vadd.f32 0.0, %v390
    %v392 = vpop.f32.mrf.mxu0
    %v393 = vpop.f32.mrf.mxu0
    %v394 = vadd.f32 0.0, %v393
    %v395 = vpop.f32.mrf.mxu0
    %396 = vdwg.mxu0
    %v399 = vunpack.c.l.b16 %v53
    %v400 = vunpack.c.l.b16 %v54
    %v401 = vpack.c.b16 %v400, %v399
    %v403 = vsel %vm76, %v401, 0
    %405 = vmatprep.subr.bf16.mxu0 0
    %406 = vmatpush1.bf16.xpose.msra.mxu0 0
    %407 = vmatprep.subr.bf16.mxu0 0
    %408 = vmatpush1.bf16.xpose.msra.mxu0 0
    %409 = vmatprep.subr.bf16.mxu0 0
    %410 = vmatpush1.bf16.xpose.msra.mxu0 0
    %411 = vmatprep.subr.bf16.mxu0 0
    %412 = vmatpush1.bf16.xpose.msra.mxu0 0
    %413 = vmatprep.subr.bf16.mxu0 0
    %414 = vmatpush1.bf16.xpose.msra.mxu0 0
    %415 = vmatprep.subr.bf16.mxu0 0
    %416 = vmatpush1.bf16.xpose.msra.mxu0 0
    %417 = vmatprep.subr.bf16.mxu0 0
    %418 = vmatpush1.bf16.xpose.msra.mxu0 0
    %419 = vmatprep.subr.bf16.mxu0 0
    %420 = vmatpush1.bf16.xpose.msra.mxu0 %v403
    %421 = vmatprep.subr.bf16.mxu0 0
    %422 = vmatpush2.bf16.xpose.msra.mxu0 0
    %423 = vmatprep.subr.bf16.mxu0 0
    %424 = vmatpush2.bf16.xpose.msra.mxu0 0
    %425 = vmatprep.subr.bf16.mxu0 0
    %426 = vmatpush2.bf16.xpose.msra.mxu0 0
    %427 = vmatprep.subr.bf16.mxu0 0
    %428 = vmatpush2.bf16.xpose.msra.mxu0 0
    %429 = vmatprep.subr.bf16.mxu0 0
    %430 = vmatpush2.bf16.xpose.msra.mxu0 0
    %431 = vmatprep.subr.bf16.mxu0 0
    %432 = vmatpush2.bf16.xpose.msra.mxu0 0
    %433 = vmatprep.subr.bf16.mxu0 0
    %434 = vmatpush2.bf16.xpose.msra.mxu0 0
    %435 = vmatprep.subr.bf16.mxu0 0
    %436 = vmatpush2.bf16.xpose.msra.mxu0 0
    %437 = vmatprep.mubr.bf16.mxu0 0
    %438 = vmatmul.mubr.bf16.gmra.mxu0 %v403
    %v439 = vpop.f32.mrf.mxu0
    %v440 = vadd.f32 0.0, %v439
    %v441 = vpop.f32.mrf.mxu0
    %v442 = vpop.f32.mrf.mxu0
    %v443 = vadd.f32 0.0, %v442
    %v444 = vpop.f32.mrf.mxu0
    %445 = vdwg.mxu0
    %v446 = vadd.f32 %v344, %v391
    %v447 = vadd.f32 %v345, %v394
    %v448 = vadd.f32 %v346, %v440
    %v449 = vadd.f32 %v347, %v443
    %450 = vst.msk [vmem:[#allocation5] sm:$0xff] %vm76, %v446
    %451 = vst.msk [vmem:[#allocation5 + $0x8] sm:$0xff] %vm76, %v447
    %452 = vst.msk [vmem:[#allocation5 + $0x10] sm:$0xff] %vm76, %v448
    %453 = vst.msk [vmem:[#allocation5 + $0x18] sm:$0xff] %vm76, %v449
    // Predicated region
    $region18: #{inpainting_loss.12} parent=1 // pred_check
      %p454 = pneg %p22
    $region19: #{inpainting_loss.12} parent=1 // pred_check_branch
      %456 = sbr.rel (%p454) target = $region21
    $region20: #{inpainting_loss.12} parent=1 // pred_region
      %s457 = sld [smem:[#allocation2]]
      %s458 = scalar_lea.smem [#allocation6], 0
      %459 = sst [smem:[%s458]] %s457
      %s460 = sld [smem:[#allocation2 + $0x1]]
      %s461 = scalar_lea.smem [#allocation6], 1
      %462 = sst [smem:[%s461]] %s460
      %v463 = vld [vmem:[#allocation3] sm:$0xff]
      %v464 = vld [vmem:[#allocation3 + $0x8] sm:$0xff]
      %v465 = vld [vmem:[#allocation3 + $0x10] sm:$0xff]
      %v466 = vld [vmem:[#allocation3 + $0x18] sm:$0xff]
      %v467 = vld [vmem:[#allocation5] sm:$0xff]
      %v468 = vld [vmem:[#allocation5 + $0x8] sm:$0xff]
      %v469 = vld [vmem:[#allocation5 + $0x10] sm:$0xff]
      %v470 = vld [vmem:[#allocation5 + $0x18] sm:$0xff]
      %v471 = vsub.f32 %v463, %v467
      %v472 = vsub.f32 %v464, %v468
      %v473 = vsub.f32 %v465, %v469
      %v474 = vsub.f32 %v466, %v470
      %v475 = vand.u32 2147483647, %v471
      %v476 = vand.u32 2147483647, %v472
      %v477 = vand.u32 2147483647, %v473
      %v478 = vand.u32 2147483647, %v474
      %v479 = vsel %vm76, %v475, 0.0
      %v480 = vsel %vm76, %v476, 0.0
      %v481 = vadd.f32 %v479, %v480
      %v482 = vsel %vm76, %v477, 0.0
      %v483 = vadd.f32 %v481, %v482
      %v484 = vsel %vm76, %v478, 0.0
      %v485 = vadd.f32 %v483, %v484
      %486 = vadd.xlane.f32.xlu0 %v485
      %v487 = vpop.xlane.xlu0 %486
      %v488 = vrot.slane %v487, 4
      %v489 = vadd.f32 %v487, %v488
      %v490 = vrot.slane %v489, 2
      %v491 = vadd.f32 %v489, %v490
      %v492 = vrot.slane %v491, 1
      %v493 = vadd.f32 %v491, %v492
      %s494 = vtos %v493
      %s495 = scalar_lea.smem [#allocation6], 2
      %496 = sst [smem:[%s495]] %s494
      %v497 = vld [vmem:[#allocation4] sm:$0xff]
      %v498 = vld [vmem:[#allocation4 + $0x8] sm:$0xff]
      %v499 = vld [vmem:[#allocation4 + $0x10] sm:$0xff]
      %v500 = vld [vmem:[#allocation4 + $0x18] sm:$0xff]
      %v501 = vld [vmem:[#allocation5] sm:$0xff]
      %v502 = vld [vmem:[#allocation5 + $0x8] sm:$0xff]
      %v503 = vld [vmem:[#allocation5 + $0x10] sm:$0xff]
      %v504 = vld [vmem:[#allocation5 + $0x18] sm:$0xff]
      %v505 = vsub.f32 %v497, %v501
      %v506 = vsub.f32 %v498, %v502
      %v507 = vsub.f32 %v499, %v503
      %v508 = vsub.f32 %v500, %v504
      %v509 = vand.u32 2147483647, %v505
      %v510 = vand.u32 2147483647, %v506
      %v511 = vand.u32 2147483647, %v507
      %v512 = vand.u32 2147483647, %v508
      %v513 = vsel %vm76, %v509, 0.0
      %v514 = vsel %vm76, %v510, 0.0
      %v515 = vadd.f32 %v513, %v514
      %v516 = vsel %vm76, %v511, 0.0
      %v517 = vadd.f32 %v515, %v516
      %v518 = vsel %vm76, %v512, 0.0
      %v519 = vadd.f32 %v517, %v518
      %520 = vadd.xlane.f32.xlu0 %v519
      %v521 = vpop.xlane.xlu0 %520
      %v522 = vrot.slane %v521, 4
      %v523 = vadd.f32 %v521, %v522
      %v524 = vrot.slane %v523, 2
      %v525 = vadd.f32 %v523, %v524
      %v526 = vrot.slane %v525, 1
      %v527 = vadd.f32 %v525, %v526
      %s528 = vtos %v527
      %s529 = scalar_lea.smem [#allocation6], 3
      %530 = sst [smem:[%s529]] %s528
    $region21: #{inpainting_loss.12} parent=1 // pred_fallthru
      _
    // Predicated region
    $region22: #{inpainting_loss.12} parent=1 // pred_check
      _
    $region23: #{inpainting_loss.12} parent=1 // pred_check_branch
      %532 = sbr.rel (0) target = $region25
    $region24: #{inpainting_loss.12} parent=1 // pred_region
      %s534 = ssub.s32 16, 16
      %535 = vsyncadd [#allocation7], %s534
      %s537 = sshll.u32 %s3, 4
      %s538 = int_to_ptr.vmem [resolvable:$true] %s537
      %540 = dma.smem_to_vmem [#allocation6], 16, %s538, [#allocation7]
    $region25: #{inpainting_loss.12} parent=1 // pred_fallthru
      _
    // Predicated region
    $region26: #{inpainting_loss.12} parent=1 // pred_check
      _
    $region27: #{inpainting_loss.12} parent=1 // pred_check_branch
      %542 = sbr.rel (0) target = $region29
    $region28: #{inpainting_loss.12} parent=1 // pred_region
      %543 = dma.done [#allocation7], 16
    $region29: #{inpainting_loss.12} parent=1 // pred_fallthru
      _
    %544 = sfence
    %545 = vsyncpa [#allocation7], 1

// kernel: inpainting_loss.11
$region0: #{inpainting_loss.11}
  #allocation0 [shape = 'u32[]', space=smem, size = 0x4, offset = 0x4, fixed_abs, tag = 'smem constant byte address 0x4 - core index']
  #allocation1 [shape = 'u32[144,128]{1,0:T(1,128)}', space=vmem, size = 0x12000, scoped, tag = 'internal scratch']
  #allocation2 [shape = 'f32[2]{0:T(128)}', space=smem, size = 0x200, scoped, tag = 'scratch operand']
  #allocation3 [shape = 'f32[2,8,8]{2,1,0:T(8,128)}', space=vmem, size = 0x2000, scoped, tag = 'scratch operand']
  #allocation4 [shape = 'f32[2,8,8]{2,1,0:T(8,128)}', space=vmem, size = 0x2000, scoped, tag = 'scratch operand']
  #allocation5 [shape = 'f32[2,8,8]{2,1,0:T(8,128)}', space=vmem, size = 0x2000, scoped, tag = 'scratch operand']
  %s0 = inlined_call_operand.vmem [shape: bf16[6,8,64], index: 0, kind: input, shape index: {}, may-alias: {0,1,2}]
  %s1 = inlined_call_operand.vmem [shape: bf16[6,8,64], index: 1, kind: input, shape index: {}, may-alias: {0,1,2}]
  %s2 = inlined_call_operand.vmem [shape: bf16[6,8,64], index: 2, kind: input, shape index: {}, may-alias: {0,1,2}]
  %s3 = inlined_call_operand.vmem [shape: f32[1,4], index: 3, kind: output, shape index: {}]
  %s4 = sld [smem:[#allocation0]]
  $region30: #{inpainting_loss.11} parent=0
    _
  %s6 = ssub.s32 1, %s4
  %s7 = scalar_select 0, %s6, %s4
  $region1: #{inpainting_loss.11} parent=0
    #allocation6 [shape = 'u8[512]{0}', space=smem, size = 0x200, scoped, tag = 'output window, operand 0, single buffered']
    #allocation7 [shape = 's32[1]{0}', space=sflag, size = 0x4, scoped, tag = 'scoped memory for inpainting_loss.11']
    %8 = vsyncpa [#allocation7], 0
    // Predicated region
    $region2: #{inpainting_loss.11} parent=1 // pred_check
      _
    $region3: #{inpainting_loss.11} parent=1 // pred_check_branch
      %10 = sbr.rel (0) target = $region5
    $region4: #{inpainting_loss.11} parent=1 // pred_region
      _
    $region5: #{inpainting_loss.11} parent=1 // pred_fallthru
      _
    // Predicated region
    $region6: #{inpainting_loss.11} parent=1 // pred_check
      _
    $region7: #{inpainting_loss.11} parent=1 // pred_check_branch
      %12 = sbr.rel (0) target = $region9
    $region8: #{inpainting_loss.11} parent=1 // pred_region
      %s13 = scalar_lea.vmem %s1, 8
    $region9: #{inpainting_loss.11} parent=1 // pred_fallthru
      _
    // Predicated region
    $region10: #{inpainting_loss.11} parent=1 // pred_check
      _
    $region11: #{inpainting_loss.11} parent=1 // pred_check_branch
      %15 = sbr.rel (0) target = $region13
    $region12: #{inpainting_loss.11} parent=1 // pred_region
      %s16 = scalar_lea.vmem %s2, 16
    $region13: #{inpainting_loss.11} parent=1 // pred_fallthru
      _
    %s17 = scalar_lea.vmem %s1, 8
    %s18 = scalar_lea.vmem %s2, 16
    %s19 = scalar_lea.vmem %s1, 8
    %s20 = scalar_lea.vmem %s2, 16
    %p22 = scmp.eq.s32.totalorder 0, 0
    // Predicated region
    $region14: #{inpainting_loss.11} parent=1 // pred_check
      %p23 = pneg %p22
    $region15: #{inpainting_loss.11} parent=1 // pred_check_branch
      %25 = sbr.rel (%p23) target = $region17
    $region16: #{inpainting_loss.11} parent=1 // pred_region
      %s26 = scalar_lea.smem [#allocation2], 0
      %27 = sst [smem:[%s26]] 0.0
      %s28 = scalar_lea.smem [#allocation2], 1
      %29 = sst [smem:[%s28]] 0.0
      %vm30 = vcmask 64512
      %31 = vst.msk [vmem:[#allocation3] sm:$0xff] %vm30, 0.0
      %32 = vst.msk [vmem:[#allocation3 + $0x8] sm:$0xff] %vm30, 0.0
      %33 = vst.msk [vmem:[#allocation4] sm:$0xff] %vm30, 0.0
      %34 = vst.msk [vmem:[#allocation4 + $0x8] sm:$0xff] %vm30, 0.0
      %35 = vst.msk [vmem:[#allocation5] sm:$0xff] %vm30, 0.0
      %36 = vst.msk [vmem:[#allocation5 + $0x8] sm:$0xff] %vm30, 0.0
    $region17: #{inpainting_loss.11} parent=1 // pred_fallthru
      _
    %v37 = vld [vmem:[%s0] sm:$0xf]
    %v38 = vld [vmem:[%s0 + $0x4] sm:$0xf]
    %v39 = vld [vmem:[%s19] sm:$0xf]
    %v40 = vld [vmem:[%s19 + $0x4] sm:$0xf]
    %v41 = vld [vmem:[%s20] sm:$0xf]
    %v42 = vld [vmem:[%s20 + $0x4] sm:$0xf]
    %v43 = vunpack.c.l.bf16 %v37
    %v44 = vunpack.c.l.bf16 %v38
    %v45 = vunpack.c.l.bf16 %v39
    %v46 = vunpack.c.l.bf16 %v40
    %v47 = vunpack.c.l.bf16 %v41
    %v48 = vunpack.c.l.bf16 %v42
    %s49 = sld [smem:[#allocation2]]
    %v50 = vsub.f32 %v43, %v47
    %v51 = vsub.f32 %v44, %v48
    %v52 = vand.u32 2147483647, %v50
    %v53 = vand.u32 2147483647, %v51
    %vm54 = vcmask 523264
    %v55 = vsel %vm54, %v52, 0.0
    %v56 = vsel %vm54, %v53, 0.0
    %v57 = vadd.f32 %v55, %v56
    %58 = vadd.xlane.f32.xlu0 %v57
    %v59 = vpop.xlane.xlu0 %58
    %v60 = vrot.slane %v59, 4
    %v61 = vadd.f32 %v59, %v60
    %v62 = vrot.slane %v61, 2
    %v63 = vadd.f32 %v61, %v62
    %v64 = vrot.slane %v63, 1
    %v65 = vadd.f32 %v63, %v64
    %s66 = vtos %v65
    %s67 = sadd.f32 %s49, %s66
    %s68 = scalar_lea.smem [#allocation2], 0
    %69 = sst [smem:[%s68]] %s67
    %s70 = sld [smem:[#allocation2 + $0x1]]
    %v71 = vsub.f32 %v45, %v47
    %v72 = vsub.f32 %v46, %v48
    %v73 = vand.u32 2147483647, %v71
    %v74 = vand.u32 2147483647, %v72
    %v75 = vsel %vm54, %v73, 0.0
    %v76 = vsel %vm54, %v74, 0.0
    %v77 = vadd.f32 %v75, %v76
    %78 = vadd.xlane.f32.xlu0 %v77
    %v79 = vpop.xlane.xlu0 %78
    %v80 = vrot.slane %v79, 4
    %v81 = vadd.f32 %v79, %v80
    %v82 = vrot.slane %v81, 2
    %v83 = vadd.f32 %v81, %v82
    %v84 = vrot.slane %v83, 1
    %v85 = vadd.f32 %v83, %v84
    %s86 = vtos %v85
    %s87 = sadd.f32 %s70, %s86
    %s88 = scalar_lea.smem [#allocation2], 1
    %89 = sst [smem:[%s88]] %s87
    %v90 = vld [vmem:[#allocation3] sm:$0xff]
    %v91 = vld [vmem:[#allocation3 + $0x8] sm:$0xff]
    %v93 = vsel %vm54, %v37, 0
    %95 = vmatprep.subr.bf16.mxu0 0
    %96 = vmatpush1.bf16.xpose.msra.mxu0 0
    %97 = vmatprep.subr.bf16.mxu0 0
    %98 = vmatpush1.bf16.xpose.msra.mxu0 0
    %99 = vmatprep.subr.bf16.mxu0 0
    %100 = vmatpush1.bf16.xpose.msra.mxu0 0
    %101 = vmatprep.subr.bf16.mxu0 0
    %102 = vmatpush1.bf16.xpose.msra.mxu0 0
    %103 = vmatprep.subr.bf16.mxu0 0
    %104 = vmatpush1.bf16.xpose.msra.mxu0 0
    %105 = vmatprep.subr.bf16.mxu0 0
    %106 = vmatpush1.bf16.xpose.msra.mxu0 0
    %107 = vmatprep.subr.bf16.mxu0 0
    %108 = vmatpush1.bf16.xpose.msra.mxu0 0
    %109 = vmatprep.subr.bf16.mxu0 0
    %110 = vmatpush1.bf16.xpose.msra.mxu0 %v93
    %111 = vmatprep.subr.bf16.mxu0 0
    %112 = vmatpush2.bf16.xpose.msra.mxu0 0
    %113 = vmatprep.subr.bf16.mxu0 0
    %114 = vmatpush2.bf16.xpose.msra.mxu0 0
    %115 = vmatprep.subr.bf16.mxu0 0
    %116 = vmatpush2.bf16.xpose.msra.mxu0 0
    %117 = vmatprep.subr.bf16.mxu0 0
    %118 = vmatpush2.bf16.xpose.msra.mxu0 0
    %119 = vmatprep.subr.bf16.mxu0 0
    %120 = vmatpush2.bf16.xpose.msra.mxu0 0
    %121 = vmatprep.subr.bf16.mxu0 0
    %122 = vmatpush2.bf16.xpose.msra.mxu0 0
    %123 = vmatprep.subr.bf16.mxu0 0
    %124 = vmatpush2.bf16.xpose.msra.mxu0 0
    %125 = vmatprep.subr.bf16.mxu0 0
    %126 = vmatpush2.bf16.xpose.msra.mxu0 0
    %127 = vmatprep.mubr.bf16.mxu0 0
    %128 = vmatmul.mubr.bf16.gmra.mxu0 %v93
    %v129 = vpop.f32.mrf.mxu0
    %v130 = vadd.f32 0.0, %v129
    %v131 = vpop.f32.mrf.mxu0
    %v132 = vpop.f32.mrf.mxu0
    %v133 = vpop.f32.mrf.mxu0
    %134 = vdwg.mxu0
    %v136 = vsel %vm54, %v38, 0
    %138 = vmatprep.subr.bf16.mxu0 0
    %139 = vmatpush1.bf16.xpose.msra.mxu0 0
    %140 = vmatprep.subr.bf16.mxu0 0
    %141 = vmatpush1.bf16.xpose.msra.mxu0 0
    %142 = vmatprep.subr.bf16.mxu0 0
    %143 = vmatpush1.bf16.xpose.msra.mxu0 0
    %144 = vmatprep.subr.bf16.mxu0 0
    %145 = vmatpush1.bf16.xpose.msra.mxu0 0
    %146 = vmatprep.subr.bf16.mxu0 0
    %147 = vmatpush1.bf16.xpose.msra.mxu0 0
    %148 = vmatprep.subr.bf16.mxu0 0
    %149 = vmatpush1.bf16.xpose.msra.mxu0 0
    %150 = vmatprep.subr.bf16.mxu0 0
    %151 = vmatpush1.bf16.xpose.msra.mxu0 0
    %152 = vmatprep.subr.bf16.mxu0 0
    %153 = vmatpush1.bf16.xpose.msra.mxu0 %v136
    %154 = vmatprep.subr.bf16.mxu0 0
    %155 = vmatpush2.bf16.xpose.msra.mxu0 0
    %156 = vmatprep.subr.bf16.mxu0 0
    %157 = vmatpush2.bf16.xpose.msra.mxu0 0
    %158 = vmatprep.subr.bf16.mxu0 0
    %159 = vmatpush2.bf16.xpose.msra.mxu0 0
    %160 = vmatprep.subr.bf16.mxu0 0
    %161 = vmatpush2.bf16.xpose.msra.mxu0 0
    %162 = vmatprep.subr.bf16.mxu0 0
    %163 = vmatpush2.bf16.xpose.msra.mxu0 0
    %164 = vmatprep.subr.bf16.mxu0 0
    %165 = vmatpush2.bf16.xpose.msra.mxu0 0
    %166 = vmatprep.subr.bf16.mxu0 0
    %167 = vmatpush2.bf16.xpose.msra.mxu0 0
    %168 = vmatprep.subr.bf16.mxu0 0
    %169 = vmatpush2.bf16.xpose.msra.mxu0 0
    %170 = vmatprep.mubr.bf16.mxu0 0
    %171 = vmatmul.mubr.bf16.gmra.mxu0 %v136
    %v172 = vpop.f32.mrf.mxu0
    %v173 = vadd.f32 0.0, %v172
    %v174 = vpop.f32.mrf.mxu0
    %v175 = vpop.f32.mrf.mxu0
    %v176 = vpop.f32.mrf.mxu0
    %177 = vdwg.mxu0
    %v178 = vadd.f32 %v90, %v130
    %v179 = vadd.f32 %v91, %v173
    %vm180 = vcmask 64512
    %181 = vst.msk [vmem:[#allocation3] sm:$0xff] %vm180, %v178
    %182 = vst.msk [vmem:[#allocation3 + $0x8] sm:$0xff] %vm180, %v179
    %v183 = vld [vmem:[#allocation4] sm:$0xff]
    %v184 = vld [vmem:[#allocation4 + $0x8] sm:$0xff]
    %v186 = vsel %vm54, %v39, 0
    %188 = vmatprep.subr.bf16.mxu0 0
    %189 = vmatpush1.bf16.xpose.msra.mxu0 0
    %190 = vmatprep.subr.bf16.mxu0 0
    %191 = vmatpush1.bf16.xpose.msra.mxu0 0
    %192 = vmatprep.subr.bf16.mxu0 0
    %193 = vmatpush1.bf16.xpose.msra.mxu0 0
    %194 = vmatprep.subr.bf16.mxu0 0
    %195 = vmatpush1.bf16.xpose.msra.mxu0 0
    %196 = vmatprep.subr.bf16.mxu0 0
    %197 = vmatpush1.bf16.xpose.msra.mxu0 0
    %198 = vmatprep.subr.bf16.mxu0 0
    %199 = vmatpush1.bf16.xpose.msra.mxu0 0
    %200 = vmatprep.subr.bf16.mxu0 0
    %201 = vmatpush1.bf16.xpose.msra.mxu0 0
    %202 = vmatprep.subr.bf16.mxu0 0
    %203 = vmatpush1.bf16.xpose.msra.mxu0 %v186
    %204 = vmatprep.subr.bf16.mxu0 0
    %205 = vmatpush2.bf16.xpose.msra.mxu0 0
    %206 = vmatprep.subr.bf16.mxu0 0
    %207 = vmatpush2.bf16.xpose.msra.mxu0 0
    %208 = vmatprep.subr.bf16.mxu0 0
    %209 = vmatpush2.bf16.xpose.msra.mxu0 0
    %210 = vmatprep.subr.bf16.mxu0 0
    %211 = vmatpush2.bf16.xpose.msra.mxu0 0
    %212 = vmatprep.subr.bf16.mxu0 0
    %213 = vmatpush2.bf16.xpose.msra.mxu0 0
    %214 = vmatprep.subr.bf16.mxu0 0
    %215 = vmatpush2.bf16.xpose.msra.mxu0 0
    %216 = vmatprep.subr.bf16.mxu0 0
    %217 = vmatpush2.bf16.xpose.msra.mxu0 0
    %218 = vmatprep.subr.bf16.mxu0 0
    %219 = vmatpush2.bf16.xpose.msra.mxu0 0
    %220 = vmatprep.mubr.bf16.mxu0 0
    %221 = vmatmul.mubr.bf16.gmra.mxu0 %v186
    %v222 = vpop.f32.mrf.mxu0
    %v223 = vadd.f32 0.0, %v222
    %v224 = vpop.f32.mrf.mxu0
    %v225 = vpop.f32.mrf.mxu0
    %v226 = vpop.f32.mrf.mxu0
    %227 = vdwg.mxu0
    %v229 = vsel %vm54, %v40, 0
    %231 = vmatprep.subr.bf16.mxu0 0
    %232 = vmatpush1.bf16.xpose.msra.mxu0 0
    %233 = vmatprep.subr.bf16.mxu0 0
    %234 = vmatpush1.bf16.xpose.msra.mxu0 0
    %235 = vmatprep.subr.bf16.mxu0 0
    %236 = vmatpush1.bf16.xpose.msra.mxu0 0
    %237 = vmatprep.subr.bf16.mxu0 0
    %238 = vmatpush1.bf16.xpose.msra.mxu0 0
    %239 = vmatprep.subr.bf16.mxu0 0
    %240 = vmatpush1.bf16.xpose.msra.mxu0 0
    %241 = vmatprep.subr.bf16.mxu0 0
    %242 = vmatpush1.bf16.xpose.msra.mxu0 0
    %243 = vmatprep.subr.bf16.mxu0 0
    %244 = vmatpush1.bf16.xpose.msra.mxu0 0
    %245 = vmatprep.subr.bf16.mxu0 0
    %246 = vmatpush1.bf16.xpose.msra.mxu0 %v229
    %247 = vmatprep.subr.bf16.mxu0 0
    %248 = vmatpush2.bf16.xpose.msra.mxu0 0
    %249 = vmatprep.subr.bf16.mxu0 0
    %250 = vmatpush2.bf16.xpose.msra.mxu0 0
    %251 = vmatprep.subr.bf16.mxu0 0
    %252 = vmatpush2.bf16.xpose.msra.mxu0 0
    %253 = vmatprep.subr.bf16.mxu0 0
    %254 = vmatpush2.bf16.xpose.msra.mxu0 0
    %255 = vmatprep.subr.bf16.mxu0 0
    %256 = vmatpush2.bf16.xpose.msra.mxu0 0
    %257 = vmatprep.subr.bf16.mxu0 0
    %258 = vmatpush2.bf16.xpose.msra.mxu0 0
    %259 = vmatprep.subr.bf16.mxu0 0
    %260 = vmatpush2.bf16.xpose.msra.mxu0 0
    %261 = vmatprep.subr.bf16.mxu0 0
    %262 = vmatpush2.bf16.xpose.msra.mxu0 0
    %263 = vmatprep.mubr.bf16.mxu0 0
    %264 = vmatmul.mubr.bf16.gmra.mxu0 %v229
    %v265 = vpop.f32.mrf.mxu0
    %v266 = vadd.f32 0.0, %v265
    %v267 = vpop.f32.mrf.mxu0
    %v268 = vpop.f32.mrf.mxu0
    %v269 = vpop.f32.mrf.mxu0
    %270 = vdwg.mxu0
    %v271 = vadd.f32 %v183, %v223
    %v272 = vadd.f32 %v184, %v266
    %273 = vst.msk [vmem:[#allocation4] sm:$0xff] %vm180, %v271
    %274 = vst.msk [vmem:[#allocation4 + $0x8] sm:$0xff] %vm180, %v272
    %v275 = vld [vmem:[#allocation5] sm:$0xff]
    %v276 = vld [vmem:[#allocation5 + $0x8] sm:$0xff]
    %v278 = vsel %vm54, %v41, 0
    %280 = vmatprep.subr.bf16.mxu0 0
    %281 = vmatpush1.bf16.xpose.msra.mxu0 0
    %282 = vmatprep.subr.bf16.mxu0 0
    %283 = vmatpush1.bf16.xpose.msra.mxu0 0
    %284 = vmatprep.subr.bf16.mxu0 0
    %285 = vmatpush1.bf16.xpose.msra.mxu0 0
    %286 = vmatprep.subr.bf16.mxu0 0
    %287 = vmatpush1.bf16.xpose.msra.mxu0 0
    %288 = vmatprep.subr.bf16.mxu0 0
    %289 = vmatpush1.bf16.xpose.msra.mxu0 0
    %290 = vmatprep.subr.bf16.mxu0 0
    %291 = vmatpush1.bf16.xpose.msra.mxu0 0
    %292 = vmatprep.subr.bf16.mxu0 0
    %293 = vmatpush1.bf16.xpose.msra.mxu0 0
    %294 = vmatprep.subr.bf16.mxu0 0
    %295 = vmatpush1.bf16.xpose.msra.mxu0 %v278
    %296 = vmatprep.subr.bf16.mxu0 0
    %297 = vmatpush2.bf16.xpose.msra.mxu0 0
    %298 = vmatprep.subr.bf16.mxu0 0
    %299 = vmatpush2.bf16.xpose.msra.mxu0 0
    %300 = vmatprep.subr.bf16.mxu0 0
    %301 = vmatpush2.bf16.xpose.msra.mxu0 0
    %302 = vmatprep.subr.bf16.mxu0 0
    %303 = vmatpush2.bf16.xpose.msra.mxu0 0
    %304 = vmatprep.subr.bf16.mxu0 0
    %305 = vmatpush2.bf16.xpose.msra.mxu0 0
    %306 = vmatprep.subr.bf16.mxu0 0
    %307 = vmatpush2.bf16.xpose.msra.mxu0 0
    %308 = vmatprep.subr.bf16.mxu0 0
    %309 = vmatpush2.bf16.xpose.msra.mxu0 0
    %310 = vmatprep.subr.bf16.mxu0 0
    %311 = vmatpush2.bf16.xpose.msra.mxu0 0
    %312 = vmatprep.mubr.bf16.mxu0 0
    %313 = vmatmul.mubr.bf16.gmra.mxu0 %v278
    %v314 = vpop.f32.mrf.mxu0
    %v315 = vadd.f32 0.0, %v314
    %v316 = vpop.f32.mrf.mxu0
    %v317 = vpop.f32.mrf.mxu0
    %v318 = vpop.f32.mrf.mxu0
    %319 = vdwg.mxu0
    %v321 = vsel %vm54, %v42, 0
    %323 = vmatprep.subr.bf16.mxu0 0
    %324 = vmatpush1.bf16.xpose.msra.mxu0 0
    %325 = vmatprep.subr.bf16.mxu0 0
    %326 = vmatpush1.bf16.xpose.msra.mxu0 0
    %327 = vmatprep.subr.bf16.mxu0 0
    %328 = vmatpush1.bf16.xpose.msra.mxu0 0
    %329 = vmatprep.subr.bf16.mxu0 0
    %330 = vmatpush1.bf16.xpose.msra.mxu0 0
    %331 = vmatprep.subr.bf16.mxu0 0
    %332 = vmatpush1.bf16.xpose.msra.mxu0 0
    %333 = vmatprep.subr.bf16.mxu0 0
    %334 = vmatpush1.bf16.xpose.msra.mxu0 0
    %335 = vmatprep.subr.bf16.mxu0 0
    %336 = vmatpush1.bf16.xpose.msra.mxu0 0
    %337 = vmatprep.subr.bf16.mxu0 0
    %338 = vmatpush1.bf16.xpose.msra.mxu0 %v321
    %339 = vmatprep.subr.bf16.mxu0 0
    %340 = vmatpush2.bf16.xpose.msra.mxu0 0
    %341 = vmatprep.subr.bf16.mxu0 0
    %342 = vmatpush2.bf16.xpose.msra.mxu0 0
    %343 = vmatprep.subr.bf16.mxu0 0
    %344 = vmatpush2.bf16.xpose.msra.mxu0 0
    %345 = vmatprep.subr.bf16.mxu0 0
    %346 = vmatpush2.bf16.xpose.msra.mxu0 0
    %347 = vmatprep.subr.bf16.mxu0 0
    %348 = vmatpush2.bf16.xpose.msra.mxu0 0
    %349 = vmatprep.subr.bf16.mxu0 0
    %350 = vmatpush2.bf16.xpose.msra.mxu0 0
    %351 = vmatprep.subr.bf16.mxu0 0
    %352 = vmatpush2.bf16.xpose.msra.mxu0 0
    %353 = vmatprep.subr.bf16.mxu0 0
    %354 = vmatpush2.bf16.xpose.msra.mxu0 0
    %355 = vmatprep.mubr.bf16.mxu0 0
    %356 = vmatmul.mubr.bf16.gmra.mxu0 %v321
    %v357 = vpop.f32.mrf.mxu0
    %v358 = vadd.f32 0.0, %v357
    %v359 = vpop.f32.mrf.mxu0
    %v360 = vpop.f32.mrf.mxu0
    %v361 = vpop.f32.mrf.mxu0
    %362 = vdwg.mxu0
    %v363 = vadd.f32 %v275, %v315
    %v364 = vadd.f32 %v276, %v358
    %365 = vst.msk [vmem:[#allocation5] sm:$0xff] %vm180, %v363
    %366 = vst.msk [vmem:[#allocation5 + $0x8] sm:$0xff] %vm180, %v364
    // Predicated region
    $region18: #{inpainting_loss.11} parent=1 // pred_check
      %p367 = pneg %p22
    $region19: #{inpainting_loss.11} parent=1 // pred_check_branch
      %369 = sbr.rel (%p367) target = $region21
    $region20: #{inpainting_loss.11} parent=1 // pred_region
      %s370 = sld [smem:[#allocation2]]
      %s371 = scalar_lea.smem [#allocation6], 0
      %372 = sst [smem:[%s371]] %s370
      %s373 = sld [smem:[#allocation2 + $0x1]]
      %s374 = scalar_lea.smem [#allocation6], 1
      %375 = sst [smem:[%s374]] %s373
      %v376 = vld [vmem:[#allocation3] sm:$0xff]
      %v377 = vld [vmem:[#allocation3 + $0x8] sm:$0xff]
      %v378 = vld [vmem:[#allocation5] sm:$0xff]
      %v379 = vld [vmem:[#allocation5 + $0x8] sm:$0xff]
      %v380 = vsub.f32 %v376, %v378
      %v381 = vsub.f32 %v377, %v379
      %v382 = vand.u32 2147483647, %v380
      %v383 = vand.u32 2147483647, %v381
      %v384 = vsel %vm180, %v382, 0.0
      %v385 = vsel %vm180, %v383, 0.0
      %v386 = vadd.f32 %v384, %v385
      %387 = vadd.xlane.f32.xlu0 %v386
      %v388 = vpop.xlane.xlu0 %387
      %v389 = vrot.slane %v388, 4
      %v390 = vadd.f32 %v388, %v389
      %v391 = vrot.slane %v390, 2
      %v392 = vadd.f32 %v390, %v391
      %v393 = vrot.slane %v392, 1
      %v394 = vadd.f32 %v392, %v393
      %s395 = vtos %v394
      %s396 = scalar_lea.smem [#allocation6], 2
      %397 = sst [smem:[%s396]] %s395
      %v398 = vld [vmem:[#allocation4] sm:$0xff]
      %v399 = vld [vmem:[#allocation4 + $0x8] sm:$0xff]
      %v400 = vld [vmem:[#allocation5] sm:$0xff]
      %v401 = vld [vmem:[#allocation5 + $0x8] sm:$0xff]
      %v402 = vsub.f32 %v398, %v400
      %v403 = vsub.f32 %v399, %v401
      %v404 = vand.u32 2147483647, %v402
      %v405 = vand.u32 2147483647, %v403
      %v406 = vsel %vm180, %v404, 0.0
      %v407 = vsel %vm180, %v405, 0.0
      %v408 = vadd.f32 %v406, %v407
      %409 = vadd.xlane.f32.xlu0 %v408
      %v410 = vpop.xlane.xlu0 %409
      %v411 = vrot.slane %v410, 4
      %v412 = vadd.f32 %v410, %v411
      %v413 = vrot.slane %v412, 2
      %v414 = vadd.f32 %v412, %v413
      %v415 = vrot.slane %v414, 1
      %v416 = vadd.f32 %v414, %v415
      %s417 = vtos %v416
      %s418 = scalar_lea.smem [#allocation6], 3
      %419 = sst [smem:[%s418]] %s417
    $region21: #{inpainting_loss.11} parent=1 // pred_fallthru
      _
    // Predicated region
    $region22: #{inpainting_loss.11} parent=1 // pred_check
      _
    $region23: #{inpainting_loss.11} parent=1 // pred_check_branch
      %421 = sbr.rel (0) target = $region25
    $region24: #{inpainting_loss.11} parent=1 // pred_region
      %s423 = ssub.s32 16, 16
      %424 = vsyncadd [#allocation7], %s423
      %s426 = sshll.u32 %s3, 4
      %s427 = int_to_ptr.vmem [resolvable:$true] %s426
      %429 = dma.smem_to_vmem [#allocation6], 16, %s427, [#allocation7]
    $region25: #{inpainting_loss.11} parent=1 // pred_fallthru
      _
    // Predicated region
    $region26: #{inpainting_loss.11} parent=1 // pred_check
      _
    $region27: #{inpainting_loss.11} parent=1 // pred_check_branch
      %431 = sbr.rel (0) target = $region29
    $region28: #{inpainting_loss.11} parent=1 // pred_region
      %432 = dma.done [#allocation7], 16
    $region29: #{inpainting_loss.11} parent=1 // pred_fallthru
      _
    %433 = sfence
    %434 = vsyncpa [#allocation7], 1

// kernel: inpainting_loss.10
$region0: #{inpainting_loss.10}
  #allocation0 [shape = 'u32[]', space=smem, size = 0x4, offset = 0x4, fixed_abs, tag = 'smem constant byte address 0x4 - core index']
  #allocation1 [shape = 'u32[144,128]{1,0:T(1,128)}', space=vmem, size = 0x12000, scoped, tag = 'internal scratch']
  %s0 = inlined_call_operand.vmem [shape: bf16[6,16,38], index: 0, kind: input, shape index: {}]
  %s1 = inlined_call_operand.vmem [shape: bf16[9,32,16], index: 1, kind: input, shape index: {}]
  %s2 = inlined_call_operand.vmem [shape: f32[32,1], index: 2, kind: input, shape index: {}]
  %s3 = inlined_call_operand.vmem [shape: bf16[6,32,24], index: 3, kind: output, shape index: {}]
  %s4 = sld [smem:[#allocation0]]
  $region45: #{inpainting_loss.10} parent=0
    _
  %s6 = ssub.s32 1, %s4
  %s7 = scalar_select 0, %s6, %s4
  loop: start=0, step=1, limit=8
  $region2: #{inpainting_loss.10} parent=0 // loop_pre_header
    _
  $region3: #{inpainting_loss.10} parent=0 // loop_header
    %s9 = sphi 0, %s13
    %p10 = scmp.ge.s32.totalorder %s9, 8
    %s19 = sphi 0, %s21
    %s22 = sphi 0, %s19
    %s23 = sphi 0, %s22
    %s39 = sphi 0, %s23
    %s43 = sphi 0, %s43
    %s45 = sphi 0, %s43
    %s46 = sphi 0, %s45
    %s60 = sphi 0, %s46
    %s64 = sphi 0, %s64
    %s66 = sphi 0, %s64
    %s67 = sphi 0, %s66
    %s81 = sphi 0, %s67
    %s87 = sphi 0, %s89
    %s90 = sphi 0, %s87
    %s91 = sphi 0, %s90
    %s107 = sphi 0, %s91
  $region4: #{inpainting_loss.10} parent=0 // loop_header_branch
    %12 = sbr.rel (%p10) target = $region8
  $region5: #{inpainting_loss.10} parent=0 // loop_body
    %s14 = ssub.s32 %s9, 1
    %s15 = ssub.s32 %s9, 2
    %s16 = sadd.s32 %s9, 1
    %s17 = ssub.s32 %s9, %s16
    %p18 = scmp.eq.s32.totalorder %s17, 0
    %s20 = sadd.s32 %s19, 1
    %s21 = scalar_select %p18, %s19, %s20
    %p24 = pneg %p18
    %p25 = scmp.eq.s32.totalorder %s9, 5
    %p26 = por %p24, %p25
    %p27 = scmp.ne.s32.totalorder %s19, %s22
    %p28 = scmp.eq.s32.totalorder %s9, 0
    %p29 = por %p27, %p28
    %p30 = scmp.ne.s32.totalorder %s19, %s22
    %p31 = scmp.eq.s32.totalorder %s14, 5
    %p32 = por %p30, %p31
    %p33 = scmp.ne.s32.totalorder %s22, %s23
    %p34 = scmp.eq.s32.totalorder %s14, 0
    %p35 = por %p33, %p34
    %p36 = scmp.ne.s32.totalorder %s22, %s23
    %p37 = scmp.eq.s32.totalorder %s15, 5
    %p38 = por %p36, %p37
    %p40 = scmp.ne.s32.totalorder %s23, %s39
    %p41 = scmp.eq.s32.totalorder %s15, 0
    %p42 = por %p40, %p41
    %s44 = sadd.s32 %s43, 1
    %p47 = scmp.eq.s32.totalorder %s9, 5
    %p48 = scmp.ne.s32.totalorder %s43, %s45
    %p49 = scmp.eq.s32.totalorder %s9, 0
    %p50 = por %p48, %p49
    %p51 = scmp.ne.s32.totalorder %s43, %s45
    %p52 = scmp.eq.s32.totalorder %s14, 5
    %p53 = por %p51, %p52
    %p54 = scmp.ne.s32.totalorder %s45, %s46
    %p55 = scmp.eq.s32.totalorder %s14, 0
    %p56 = por %p54, %p55
    %p57 = scmp.ne.s32.totalorder %s45, %s46
    %p58 = scmp.eq.s32.totalorder %s15, 5
    %p59 = por %p57, %p58
    %p61 = scmp.ne.s32.totalorder %s46, %s60
    %p62 = scmp.eq.s32.totalorder %s15, 0
    %p63 = por %p61, %p62
    %s65 = sadd.s32 %s64, 1
    %p68 = scmp.eq.s32.totalorder %s9, 5
    %p69 = scmp.ne.s32.totalorder %s64, %s66
    %p70 = scmp.eq.s32.totalorder %s9, 0
    %p71 = por %p69, %p70
    %p72 = scmp.ne.s32.totalorder %s64, %s66
    %p73 = scmp.eq.s32.totalorder %s14, 5
    %p74 = por %p72, %p73
    %p75 = scmp.ne.s32.totalorder %s66, %s67
    %p76 = scmp.eq.s32.totalorder %s14, 0
    %p77 = por %p75, %p76
    %p78 = scmp.ne.s32.totalorder %s66, %s67
    %p79 = scmp.eq.s32.totalorder %s15, 5
    %p80 = por %p78, %p79
    %p82 = scmp.ne.s32.totalorder %s67, %s81
    %p83 = scmp.eq.s32.totalorder %s15, 0
    %p84 = por %p82, %p83
    %s85 = ssub.s32 %s9, %s16
    %p86 = scmp.eq.s32.totalorder %s85, 0
    %s88 = sadd.s32 %s87, 1
    %s89 = scalar_select %p86, %s87, %s88
    %p92 = pneg %p86
    %p93 = scmp.eq.s32.totalorder %s9, 5
    %p94 = por %p92, %p93
    %p95 = scmp.ne.s32.totalorder %s87, %s90
    %p96 = scmp.eq.s32.totalorder %s9, 0
    %p97 = por %p95, %p96
    %p98 = scmp.ne.s32.totalorder %s87, %s90
    %p99 = scmp.eq.s32.totalorder %s14, 5
    %p100 = por %p98, %p99
    %p101 = scmp.ne.s32.totalorder %s90, %s91
    %p102 = scmp.eq.s32.totalorder %s14, 0
    %p103 = por %p101, %p102
    %p104 = scmp.ne.s32.totalorder %s90, %s91
    %p105 = scmp.eq.s32.totalorder %s15, 5
    %p106 = por %p104, %p105
    %p108 = scmp.ne.s32.totalorder %s91, %s107
    %p109 = scmp.eq.s32.totalorder %s15, 0
    %p110 = por %p108, %p109
    %p111 = scmp.le.s32.totalorder 1, %s9
    %p112 = scmp.lt.s32.totalorder %s9, 7
    %p113 = pnand %p111, %p112
    %p114 = pneg %p113
    // Predicated region
    $region9: #{inpainting_loss.10} parent=5 // pred_check
      _
    $region10: #{inpainting_loss.10} parent=5 // pred_check_branch
      %116 = sbr.rel (%p113) target = $region12
    $region11: #{inpainting_loss.10} parent=5 // pred_region
      %s117 = ssub.s32 %s9, 1
      // Predicated region
      $region13: #{inpainting_loss.10} parent=11 // pred_check
        %p118 = pneg %p56
      $region14: #{inpainting_loss.10} parent=11 // pred_check_branch
        %120 = sbr.rel (%p118) target = $region16
      $region15: #{inpainting_loss.10} parent=11 // pred_region
        _
      $region16: #{inpainting_loss.10} parent=11 // pred_fallthru
        _
      // Predicated region
      $region17: #{inpainting_loss.10} parent=11 // pred_check
        %p121 = pneg %p77
      $region18: #{inpainting_loss.10} parent=11 // pred_check_branch
        %123 = sbr.rel (%p121) target = $region20
      $region19: #{inpainting_loss.10} parent=11 // pred_region
        _
      $region20: #{inpainting_loss.10} parent=11 // pred_fallthru
        _
    $region12: #{inpainting_loss.10} parent=5 // pred_fallthru
      _
    %p124 = scmp.lt.s32.totalorder %s9, 6
    // Predicated region
    $region21: #{inpainting_loss.10} parent=5 // pred_check
      %p125 = pneg %p124
    $region22: #{inpainting_loss.10} parent=5 // pred_check_branch
      %127 = sbr.rel (%p125) target = $region24
    $region23: #{inpainting_loss.10} parent=5 // pred_region
      // Predicated region
      $region25: #{inpainting_loss.10} parent=23 // pred_check
        %p128 = pneg %p29
      $region26: #{inpainting_loss.10} parent=23 // pred_check_branch
        %130 = sbr.rel (%p128) target = $region28
      $region27: #{inpainting_loss.10} parent=23 // pred_region
        %p131 = scmp.lt.s32.totalorder %s9, 5
        %s132 = scalar_select %p131, %s9, 5
        %s133 = smul.addr %s132, 2
        %s134 = smul.addr %s133, 4
        %s135 = scalar_lea.vmem %s0, %s134
      $region28: #{inpainting_loss.10} parent=23 // pred_fallthru
        _
    $region24: #{inpainting_loss.10} parent=5 // pred_fallthru
      _
    %p136 = scmp.le.s32.totalorder 1, %s9
    %p137 = scmp.lt.s32.totalorder %s9, 7
    %p138 = pnand %p136, %p137
    %p139 = pneg %p138
    // Predicated region
    $region29: #{inpainting_loss.10} parent=5 // pred_check
      _
    $region30: #{inpainting_loss.10} parent=5 // pred_check_branch
      %141 = sbr.rel (%p138) target = $region32
    $region31: #{inpainting_loss.10} parent=5 // pred_region
      %s142 = ssub.s32 %s9, 1
      %p143 = scmp.lt.s32.totalorder %s14, 5
      %s144 = scalar_select %p143, %s14, 5
      %s145 = smul.addr %s144, 2
      %s146 = smul.addr %s145, 4
      %s147 = scalar_lea.vmem %s0, %s146
      %p148 = pneg %p35
      %p149 = pneg %p32
      %p150 = pneg %p56
      %p151 = pneg %p53
      %p152 = pneg %p77
      %p153 = pneg %p74
      %p154 = pneg %p103
      %p155 = pneg %p100
      %p156 = scmp.lt.s32.totalorder %s14, 5
      %s157 = scalar_select %p156, %s14, 5
      %s158 = smul.addr %s157, 4
      %s159 = smul.addr %s158, 4
      %s160 = scalar_lea.vmem %s3, %s159
      %p161 = scmp.lt.s32.totalorder %s14, 5
      %s162 = scalar_select %p161, %s14, 5
      %s163 = smul.addr %s162, 2
      %s164 = smul.addr %s163, 4
      %s165 = scalar_lea.vmem %s0, %s164
      %p166 = scmp.lt.s32.totalorder %s14, 5
      %s167 = scalar_select %p166, %s14, 5
      %s168 = smul.addr %s167, 4
      %s169 = smul.addr %s168, 4
      %s170 = scalar_lea.vmem %s3, %s169
      %v172 = vld [vmem:[%s165] sm:$0xf]
      %v173 = vld [vmem:[%s165 + $0x4] sm:$0xf]
      %v174 = vld [vmem:[%s1] sm:$0xf]
      %v175 = vld [vmem:[%s1 + $0x4] sm:$0xf]
      %v176 = vld [vmem:[%s1 + $0x8] sm:$0xf]
      %v177 = vld [vmem:[%s1 + $0xc] sm:$0xf]
      %s178 = scalar_lea.vmem %s1, 16
      %v179 = vld [vmem:[%s178] sm:$0xf]
      %v180 = vld [vmem:[%s178 + $0x4] sm:$0xf]
      %v181 = vld [vmem:[%s178 + $0x8] sm:$0xf]
      %v182 = vld [vmem:[%s178 + $0xc] sm:$0xf]
      %v187 = vunpack.c.l.b16 %v179
      %v188 = vunpack.c.l.b16 %v180
      %v189 = vunpack.c.l.b16 %v181
      %v190 = vunpack.c.l.b16 %v182
      %v191 = vpack.c.b16 %v188, %v187
      %v192 = vpack.c.b16 %v190, %v189
      %v195 = vunpack.c.l.b16 %v172
      %v196 = vunpack.c.l.b16 %v173
      %v197 = vpack.c.b16 %v196, %v195
      %198 = vrot.lane.b32.xlu0 %v197, 127
      %v199 = vpop.permute.xlu0 %198
      %vm201 = vcmask 130048
      %v203 = vsel %vm201, %v191, 0
      %v206 = vsel %vm201, %v192, 0
      %208 = vmatprep.subr.bf16.mxu0 0
      %209 = vmatpush1.bf16.msra.mxu0 0
      %210 = vmatprep.subr.bf16.mxu0 0
      %211 = vmatpush1.bf16.msra.mxu0 0
      %212 = vmatprep.subr.bf16.mxu0 0
      %213 = vmatpush1.bf16.msra.mxu0 0
      %214 = vmatprep.subr.bf16.mxu0 0
      %215 = vmatpush1.bf16.msra.mxu0 0
      %216 = vmatprep.subr.bf16.mxu0 0
      %217 = vmatpush1.bf16.msra.mxu0 0
      %218 = vmatprep.subr.bf16.mxu0 0
      %219 = vmatpush1.bf16.msra.mxu0 0
      %220 = vmatprep.subr.bf16.mxu0 0
      %221 = vmatpush1.bf16.msra.mxu0 0
      %222 = vmatprep.subr.bf16.mxu0 0
      %223 = vmatpush1.bf16.msra.mxu0 %v199
      %224 = vmatprep.subr.bf16.mxu0 0
      %225 = vmatpush2.bf16.msra.mxu0 0
      %226 = vmatprep.subr.bf16.mxu0 0
      %227 = vmatpush2.bf16.msra.mxu0 0
      %228 = vmatprep.subr.bf16.mxu0 0
      %229 = vmatpush2.bf16.msra.mxu0 0
      %230 = vmatprep.subr.bf16.mxu0 0
      %231 = vmatpush2.bf16.msra.mxu0 0
      %232 = vmatprep.subr.bf16.mxu0 0
      %233 = vmatpush2.bf16.msra.mxu0 0
      %234 = vmatprep.subr.bf16.mxu0 0
      %235 = vmatpush2.bf16.msra.mxu0 0
      %236 = vmatprep.subr.bf16.mxu0 0
      %237 = vmatpush2.bf16.msra.mxu0 0
      %238 = vmatprep.subr.bf16.mxu0 0
      %239 = vmatpush2.bf16.msra.mxu0 0
      %240 = vmatprep.mubr.bf16.mxu0 0
      %241 = vmatmul.mubr.bf16.gmra.mxu0 %v203
      %v242 = vpop.f32.mrf.mxu0
      %v243 = vadd.f32 0.0, %v242
      %v244 = vpop.f32.mrf.mxu0
      %v245 = vpop.f32.mrf.mxu0
      %v246 = vadd.f32 0.0, %v245
      %v247 = vpop.f32.mrf.mxu0
      %248 = vmatprep.mubr.bf16.mxu0 0
      %249 = vmatmul.mubr.bf16.gmra.mxu0 %v206
      %v250 = vpop.f32.mrf.mxu0
      %v251 = vadd.f32 0.0, %v250
      %v252 = vpop.f32.mrf.mxu0
      %v253 = vpop.f32.mrf.mxu0
      %v254 = vadd.f32 0.0, %v253
      %v255 = vpop.f32.mrf.mxu0
      %256 = vdwg.mxu0
      %v261 = vunpack.c.l.b16 %v174
      %v262 = vunpack.c.l.b16 %v175
      %v263 = vunpack.c.l.b16 %v176
      %v264 = vunpack.c.l.b16 %v177
      %v265 = vpack.c.b16 %v262, %v261
      %v266 = vpack.c.b16 %v264, %v263
      %v269 = vsel %vm201, %v265, 0
      %v272 = vsel %vm201, %v266, 0
      %274 = vmatprep.subr.bf16.mxu0 0
      %275 = vmatpush1.bf16.msra.mxu0 0
      %276 = vmatprep.subr.bf16.mxu0 0
      %277 = vmatpush1.bf16.msra.mxu0 0
      %278 = vmatprep.subr.bf16.mxu0 0
      %279 = vmatpush1.bf16.msra.mxu0 0
      %280 = vmatprep.subr.bf16.mxu0 0
      %281 = vmatpush1.bf16.msra.mxu0 0
      %282 = vmatprep.subr.bf16.mxu0 0
      %283 = vmatpush1.bf16.msra.mxu0 0
      %284 = vmatprep.subr.bf16.mxu0 0
      %285 = vmatpush1.bf16.msra.mxu0 0
      %286 = vmatprep.subr.bf16.mxu0 0
      %287 = vmatpush1.bf16.msra.mxu0 0
      %288 = vmatprep.subr.bf16.mxu0 0
      %289 = vmatpush1.bf16.msra.mxu0 %v197
      %290 = vmatprep.subr.bf16.mxu0 0
      %291 = vmatpush2.bf16.msra.mxu0 0
      %292 = vmatprep.subr.bf16.mxu0 0
      %293 = vmatpush2.bf16.msra.mxu0 0
      %294 = vmatprep.subr.bf16.mxu0 0
      %295 = vmatpush2.bf16.msra.mxu0 0
      %296 = vmatprep.subr.bf16.mxu0 0
      %297 = vmatpush2.bf16.msra.mxu0 0
      %298 = vmatprep.subr.bf16.mxu0 0
      %299 = vmatpush2.bf16.msra.mxu0 0
      %300 = vmatprep.subr.bf16.mxu0 0
      %301 = vmatpush2.bf16.msra.mxu0 0
      %302 = vmatprep.subr.bf16.mxu0 0
      %303 = vmatpush2.bf16.msra.mxu0 0
      %304 = vmatprep.subr.bf16.mxu0 0
      %305 = vmatpush2.bf16.msra.mxu0 0
      %306 = vmatprep.mubr.bf16.mxu0 0
      %307 = vmatmul.mubr.bf16.gmra.mxu0 %v269
      %v308 = vpop.f32.mrf.mxu0
      %v309 = vadd.f32 %v243, %v308
      %v310 = vpop.f32.mrf.mxu0
      %v311 = vpop.f32.mrf.mxu0
      %v312 = vadd.f32 %v246, %v311
      %v313 = vpop.f32.mrf.mxu0
      %314 = vmatprep.mubr.bf16.mxu0 0
      %315 = vmatmul.mubr.bf16.gmra.mxu0 %v272
      %v316 = vpop.f32.mrf.mxu0
      %v317 = vadd.f32 %v251, %v316
      %v318 = vpop.f32.mrf.mxu0
      %v319 = vpop.f32.mrf.mxu0
      %v320 = vadd.f32 %v254, %v319
      %v321 = vpop.f32.mrf.mxu0
      %322 = vdwg.mxu0
      %s323 = scalar_lea.vmem %s1, 32
      %v324 = vld [vmem:[%s323] sm:$0xf]
      %v325 = vld [vmem:[%s323 + $0x4] sm:$0xf]
      %v326 = vld [vmem:[%s323 + $0x8] sm:$0xf]
      %v327 = vld [vmem:[%s323 + $0xc] sm:$0xf]
      %v332 = vunpack.c.l.b16 %v324
      %v333 = vunpack.c.l.b16 %v325
      %v334 = vunpack.c.l.b16 %v326
      %v335 = vunpack.c.l.b16 %v327
      %v336 = vpack.c.b16 %v333, %v332
      %v337 = vpack.c.b16 %v335, %v334
      %338 = vrot.lane.b32.xlu0 %v197, 126
      %v339 = vpop.permute.xlu0 %338
      %v342 = vsel %vm201, %v336, 0
      %v345 = vsel %vm201, %v337, 0
      %347 = vmatprep.subr.bf16.mxu0 0
      %348 = vmatpush1.bf16.msra.mxu0 0
      %349 = vmatprep.subr.bf16.mxu0 0
      %350 = vmatpush1.bf16.msra.mxu0 0
      %351 = vmatprep.subr.bf16.mxu0 0
      %352 = vmatpush1.bf16.msra.mxu0 0
      %353 = vmatprep.subr.bf16.mxu0 0
      %354 = vmatpush1.bf16.msra.mxu0 0
      %355 = vmatprep.subr.bf16.mxu0 0
      %356 = vmatpush1.bf16.msra.mxu0 0
      %357 = vmatprep.subr.bf16.mxu0 0
      %358 = vmatpush1.bf16.msra.mxu0 0
      %359 = vmatprep.subr.bf16.mxu0 0
      %360 = vmatpush1.bf16.msra.mxu0 0
      %361 = vmatprep.subr.bf16.mxu0 0
      %362 = vmatpush1.bf16.msra.mxu0 %v339
      %363 = vmatprep.subr.bf16.mxu0 0
      %364 = vmatpush2.bf16.msra.mxu0 0
      %365 = vmatprep.subr.bf16.mxu0 0
      %366 = vmatpush2.bf16.msra.mxu0 0
      %367 = vmatprep.subr.bf16.mxu0 0
      %368 = vmatpush2.bf16.msra.mxu0 0
      %369 = vmatprep.subr.bf16.mxu0 0
      %370 = vmatpush2.bf16.msra.mxu0 0
      %371 = vmatprep.subr.bf16.mxu0 0
      %372 = vmatpush2.bf16.msra.mxu0 0
      %373 = vmatprep.subr.bf16.mxu0 0
      %374 = vmatpush2.bf16.msra.mxu0 0
      %375 = vmatprep.subr.bf16.mxu0 0
      %376 = vmatpush2.bf16.msra.mxu0 0
      %377 = vmatprep.subr.bf16.mxu0 0
      %378 = vmatpush2.bf16.msra.mxu0 0
      %379 = vmatprep.mubr.bf16.mxu0 0
      %380 = vmatmul.mubr.bf16.gmra.mxu0 %v342
      %v381 = vpop.f32.mrf.mxu0
      %v382 = vadd.f32 0.0, %v381
      %v383 = vpop.f32.mrf.mxu0
      %v384 = vpop.f32.mrf.mxu0
      %v385 = vadd.f32 0.0, %v384
      %v386 = vpop.f32.mrf.mxu0
      %387 = vmatprep.mubr.bf16.mxu0 0
      %388 = vmatmul.mubr.bf16.gmra.mxu0 %v345
      %v389 = vpop.f32.mrf.mxu0
      %v390 = vadd.f32 0.0, %v389
      %v391 = vpop.f32.mrf.mxu0
      %v392 = vpop.f32.mrf.mxu0
      %v393 = vadd.f32 0.0, %v392
      %v394 = vpop.f32.mrf.mxu0
      %395 = vdwg.mxu0
      %v396 = vadd.f32 %v309, %v382
      %v397 = vadd.f32 %v312, %v385
      %v398 = vadd.f32 %v317, %v390
      %v399 = vadd.f32 %v320, %v393
      %s400 = scalar_lea.vmem %s1, 48
      %v401 = vld [vmem:[%s400] sm:$0xf]
      %v402 = vld [vmem:[%s400 + $0x4] sm:$0xf]
      %v403 = vld [vmem:[%s400 + $0x8] sm:$0xf]
      %v404 = vld [vmem:[%s400 + $0xc] sm:$0xf]
      %v409 = vunpack.c.l.b16 %v401
      %v410 = vunpack.c.l.b16 %v402
      %v411 = vunpack.c.l.b16 %v403
      %v412 = vunpack.c.l.b16 %v404
      %v413 = vpack.c.b16 %v410, %v409
      %v414 = vpack.c.b16 %v412, %v411
      %415 = vrot.lane.b32.xlu0 %v197, 122
      %v416 = vpop.permute.xlu0 %415
      %v419 = vsel %vm201, %v413, 0
      %v422 = vsel %vm201, %v414, 0
      %424 = vmatprep.subr.bf16.mxu0 0
      %425 = vmatpush1.bf16.msra.mxu0 0
      %426 = vmatprep.subr.bf16.mxu0 0
      %427 = vmatpush1.bf16.msra.mxu0 0
      %428 = vmatprep.subr.bf16.mxu0 0
      %429 = vmatpush1.bf16.msra.mxu0 0
      %430 = vmatprep.subr.bf16.mxu0 0
      %431 = vmatpush1.bf16.msra.mxu0 0
      %432 = vmatprep.subr.bf16.mxu0 0
      %433 = vmatpush1.bf16.msra.mxu0 0
      %434 = vmatprep.subr.bf16.mxu0 0
      %435 = vmatpush1.bf16.msra.mxu0 0
      %436 = vmatprep.subr.bf16.mxu0 0
      %437 = vmatpush1.bf16.msra.mxu0 0
      %438 = vmatprep.subr.bf16.mxu0 0
      %439 = vmatpush1.bf16.msra.mxu0 %v416
      %440 = vmatprep.subr.bf16.mxu0 0
      %441 = vmatpush2.bf16.msra.mxu0 0
      %442 = vmatprep.subr.bf16.mxu0 0
      %443 = vmatpush2.bf16.msra.mxu0 0
      %444 = vmatprep.subr.bf16.mxu0 0
      %445 = vmatpush2.bf16.msra.mxu0 0
      %446 = vmatprep.subr.bf16.mxu0 0
      %447 = vmatpush2.bf16.msra.mxu0 0
      %448 = vmatprep.subr.bf16.mxu0 0
      %449 = vmatpush2.bf16.msra.mxu0 0
      %450 = vmatprep.subr.bf16.mxu0 0
      %451 = vmatpush2.bf16.msra.mxu0 0
      %452 = vmatprep.subr.bf16.mxu0 0
      %453 = vmatpush2.bf16.msra.mxu0 0
      %454 = vmatprep.subr.bf16.mxu0 0
      %455 = vmatpush2.bf16.msra.mxu0 0
      %456 = vmatprep.mubr.bf16.mxu0 0
      %457 = vmatmul.mubr.bf16.gmra.mxu0 %v419
      %v458 = vpop.f32.mrf.mxu0
      %v459 = vadd.f32 0.0, %v458
      %v460 = vpop.f32.mrf.mxu0
      %v461 = vpop.f32.mrf.mxu0
      %v462 = vadd.f32 0.0, %v461
      %v463 = vpop.f32.mrf.mxu0
      %464 = vmatprep.mubr.bf16.mxu0 0
      %465 = vmatmul.mubr.bf16.gmra.mxu0 %v422
      %v466 = vpop.f32.mrf.mxu0
      %v467 = vadd.f32 0.0, %v466
      %v468 = vpop.f32.mrf.mxu0
      %v469 = vpop.f32.mrf.mxu0
      %v470 = vadd.f32 0.0, %v469
      %v471 = vpop.f32.mrf.mxu0
      %472 = vdwg.mxu0
      %v473 = vadd.f32 %v396, %v459
      %v474 = vadd.f32 %v397, %v462
      %v475 = vadd.f32 %v398, %v467
      %v476 = vadd.f32 %v399, %v470
      %s477 = scalar_lea.vmem %s1, 64
      %v478 = vld [vmem:[%s477] sm:$0xf]
      %v479 = vld [vmem:[%s477 + $0x4] sm:$0xf]
      %v480 = vld [vmem:[%s477 + $0x8] sm:$0xf]
      %v481 = vld [vmem:[%s477 + $0xc] sm:$0xf]
      %v486 = vunpack.c.l.b16 %v478
      %v487 = vunpack.c.l.b16 %v479
      %v488 = vunpack.c.l.b16 %v480
      %v489 = vunpack.c.l.b16 %v481
      %v490 = vpack.c.b16 %v487, %v486
      %v491 = vpack.c.b16 %v489, %v488
      %492 = vrot.lane.b32.xlu0 %v197, 121
      %v493 = vpop.permute.xlu0 %492
      %v496 = vsel %vm201, %v490, 0
      %v499 = vsel %vm201, %v491, 0
      %501 = vmatprep.subr.bf16.mxu0 0
      %502 = vmatpush1.bf16.msra.mxu0 0
      %503 = vmatprep.subr.bf16.mxu0 0
      %504 = vmatpush1.bf16.msra.mxu0 0
      %505 = vmatprep.subr.bf16.mxu0 0
      %506 = vmatpush1.bf16.msra.mxu0 0
      %507 = vmatprep.subr.bf16.mxu0 0
      %508 = vmatpush1.bf16.msra.mxu0 0
      %509 = vmatprep.subr.bf16.mxu0 0
      %510 = vmatpush1.bf16.msra.mxu0 0
      %511 = vmatprep.subr.bf16.mxu0 0
      %512 = vmatpush1.bf16.msra.mxu0 0
      %513 = vmatprep.subr.bf16.mxu0 0
      %514 = vmatpush1.bf16.msra.mxu0 0
      %515 = vmatprep.subr.bf16.mxu0 0
      %516 = vmatpush1.bf16.msra.mxu0 %v493
      %517 = vmatprep.subr.bf16.mxu0 0
      %518 = vmatpush2.bf16.msra.mxu0 0
      %519 = vmatprep.subr.bf16.mxu0 0
      %520 = vmatpush2.bf16.msra.mxu0 0
      %521 = vmatprep.subr.bf16.mxu0 0
      %522 = vmatpush2.bf16.msra.mxu0 0
      %523 = vmatprep.subr.bf16.mxu0 0
      %524 = vmatpush2.bf16.msra.mxu0 0
      %525 = vmatprep.subr.bf16.mxu0 0
      %526 = vmatpush2.bf16.msra.mxu0 0
      %527 = vmatprep.subr.bf16.mxu0 0
      %528 = vmatpush2.bf16.msra.mxu0 0
      %529 = vmatprep.subr.bf16.mxu0 0
      %530 = vmatpush2.bf16.msra.mxu0 0
      %531 = vmatprep.subr.bf16.mxu0 0
      %532 = vmatpush2.bf16.msra.mxu0 0
      %533 = vmatprep.mubr.bf16.mxu0 0
      %534 = vmatmul.mubr.bf16.gmra.mxu0 %v496
      %v535 = vpop.f32.mrf.mxu0
      %v536 = vadd.f32 0.0, %v535
      %v537 = vpop.f32.mrf.mxu0
      %v538 = vpop.f32.mrf.mxu0
      %v539 = vadd.f32 0.0, %v538
      %v540 = vpop.f32.mrf.mxu0
      %541 = vmatprep.mubr.bf16.mxu0 0
      %542 = vmatmul.mubr.bf16.gmra.mxu0 %v499
      %v543 = vpop.f32.mrf.mxu0
      %v544 = vadd.f32 0.0, %v543
      %v545 = vpop.f32.mrf.mxu0
      %v546 = vpop.f32.mrf.mxu0
      %v547 = vadd.f32 0.0, %v546
      %v548 = vpop.f32.mrf.mxu0
      %549 = vdwg.mxu0
      %v550 = vadd.f32 %v473, %v536
      %v551 = vadd.f32 %v474, %v539
      %v552 = vadd.f32 %v475, %v544
      %v553 = vadd.f32 %v476, %v547
      %s554 = scalar_lea.vmem %s1, 80
      %v555 = vld [vmem:[%s554] sm:$0xf]
      %v556 = vld [vmem:[%s554 + $0x4] sm:$0xf]
      %v557 = vld [vmem:[%s554 + $0x8] sm:$0xf]
      %v558 = vld [vmem:[%s554 + $0xc] sm:$0xf]
      %v563 = vunpack.c.l.b16 %v555
      %v564 = vunpack.c.l.b16 %v556
      %v565 = vunpack.c.l.b16 %v557
      %v566 = vunpack.c.l.b16 %v558
      %v567 = vpack.c.b16 %v564, %v563
      %v568 = vpack.c.b16 %v566, %v565
      %569 = vrot.lane.b32.xlu0 %v197, 120
      %v570 = vpop.permute.xlu0 %569
      %v573 = vsel %vm201, %v567, 0
      %v576 = vsel %vm201, %v568, 0
      %578 = vmatprep.subr.bf16.mxu0 0
      %579 = vmatpush1.bf16.msra.mxu0 0
      %580 = vmatprep.subr.bf16.mxu0 0
      %581 = vmatpush1.bf16.msra.mxu0 0
      %582 = vmatprep.subr.bf16.mxu0 0
      %583 = vmatpush1.bf16.msra.mxu0 0
      %584 = vmatprep.subr.bf16.mxu0 0
      %585 = vmatpush1.bf16.msra.mxu0 0
      %586 = vmatprep.subr.bf16.mxu0 0
      %587 = vmatpush1.bf16.msra.mxu0 0
      %588 = vmatprep.subr.bf16.mxu0 0
      %589 = vmatpush1.bf16.msra.mxu0 0
      %590 = vmatprep.subr.bf16.mxu0 0
      %591 = vmatpush1.bf16.msra.mxu0 0
      %592 = vmatprep.subr.bf16.mxu0 0
      %593 = vmatpush1.bf16.msra.mxu0 %v570
      %594 = vmatprep.subr.bf16.mxu0 0
      %595 = vmatpush2.bf16.msra.mxu0 0
      %596 = vmatprep.subr.bf16.mxu0 0
      %597 = vmatpush2.bf16.msra.mxu0 0
      %598 = vmatprep.subr.bf16.mxu0 0
      %599 = vmatpush2.bf16.msra.mxu0 0
      %600 = vmatprep.subr.bf16.mxu0 0
      %601 = vmatpush2.bf16.msra.mxu0 0
      %602 = vmatprep.subr.bf16.mxu0 0
      %603 = vmatpush2.bf16.msra.mxu0 0
      %604 = vmatprep.subr.bf16.mxu0 0
      %605 = vmatpush2.bf16.msra.mxu0 0
      %606 = vmatprep.subr.bf16.mxu0 0
      %607 = vmatpush2.bf16.msra.mxu0 0
      %608 = vmatprep.subr.bf16.mxu0 0
      %609 = vmatpush2.bf16.msra.mxu0 0
      %610 = vmatprep.mubr.bf16.mxu0 0
      %611 = vmatmul.mubr.bf16.gmra.mxu0 %v573
      %v612 = vpop.f32.mrf.mxu0
      %v613 = vadd.f32 0.0, %v612
      %v614 = vpop.f32.mrf.mxu0
      %v615 = vpop.f32.mrf.mxu0
      %v616 = vadd.f32 0.0, %v615
      %v617 = vpop.f32.mrf.mxu0
      %618 = vmatprep.mubr.bf16.mxu0 0
      %619 = vmatmul.mubr.bf16.gmra.mxu0 %v576
      %v620 = vpop.f32.mrf.mxu0
      %v621 = vadd.f32 0.0, %v620
      %v622 = vpop.f32.mrf.mxu0
      %v623 = vpop.f32.mrf.mxu0
      %v624 = vadd.f32 0.0, %v623
      %v625 = vpop.f32.mrf.mxu0
      %626 = vdwg.mxu0
      %v627 = vadd.f32 %v550, %v613
      %v628 = vadd.f32 %v551, %v616
      %v629 = vadd.f32 %v552, %v621
      %v630 = vadd.f32 %v553, %v624
      %s631 = scalar_lea.vmem %s1, 96
      %v632 = vld [vmem:[%s631] sm:$0xf]
      %v633 = vld [vmem:[%s631 + $0x4] sm:$0xf]
      %v634 = vld [vmem:[%s631 + $0x8] sm:$0xf]
      %v635 = vld [vmem:[%s631 + $0xc] sm:$0xf]
      %v640 = vunpack.c.l.b16 %v632
      %v641 = vunpack.c.l.b16 %v633
      %v642 = vunpack.c.l.b16 %v634
      %v643 = vunpack.c.l.b16 %v635
      %v644 = vpack.c.b16 %v641, %v640
      %v645 = vpack.c.b16 %v643, %v642
      %646 = vrot.lane.b32.xlu0 %v197, 116
      %v647 = vpop.permute.xlu0 %646
      %v650 = vsel %vm201, %v644, 0
      %v653 = vsel %vm201, %v645, 0
      %655 = vmatprep.subr.bf16.mxu0 0
      %656 = vmatpush1.bf16.msra.mxu0 0
      %657 = vmatprep.subr.bf16.mxu0 0
      %658 = vmatpush1.bf16.msra.mxu0 0
      %659 = vmatprep.subr.bf16.mxu0 0
      %660 = vmatpush1.bf16.msra.mxu0 0
      %661 = vmatprep.subr.bf16.mxu0 0
      %662 = vmatpush1.bf16.msra.mxu0 0
      %663 = vmatprep.subr.bf16.mxu0 0
      %664 = vmatpush1.bf16.msra.mxu0 0
      %665 = vmatprep.subr.bf16.mxu0 0
      %666 = vmatpush1.bf16.msra.mxu0 0
      %667 = vmatprep.subr.bf16.mxu0 0
      %668 = vmatpush1.bf16.msra.mxu0 0
      %669 = vmatprep.subr.bf16.mxu0 0
      %670 = vmatpush1.bf16.msra.mxu0 %v647
      %671 = vmatprep.subr.bf16.mxu0 0
      %672 = vmatpush2.bf16.msra.mxu0 0
      %673 = vmatprep.subr.bf16.mxu0 0
      %674 = vmatpush2.bf16.msra.mxu0 0
      %675 = vmatprep.subr.bf16.mxu0 0
      %676 = vmatpush2.bf16.msra.mxu0 0
      %677 = vmatprep.subr.bf16.mxu0 0
      %678 = vmatpush2.bf16.msra.mxu0 0
      %679 = vmatprep.subr.bf16.mxu0 0
      %680 = vmatpush2.bf16.msra.mxu0 0
      %681 = vmatprep.subr.bf16.mxu0 0
      %682 = vmatpush2.bf16.msra.mxu0 0
      %683 = vmatprep.subr.bf16.mxu0 0
      %684 = vmatpush2.bf16.msra.mxu0 0
      %685 = vmatprep.subr.bf16.mxu0 0
      %686 = vmatpush2.bf16.msra.mxu0 0
      %687 = vmatprep.mubr.bf16.mxu0 0
      %688 = vmatmul.mubr.bf16.gmra.mxu0 %v650
      %v689 = vpop.f32.mrf.mxu0
      %v690 = vadd.f32 0.0, %v689
      %v691 = vpop.f32.mrf.mxu0
      %v692 = vpop.f32.mrf.mxu0
      %v693 = vadd.f32 0.0, %v692
      %v694 = vpop.f32.mrf.mxu0
      %695 = vmatprep.mubr.bf16.mxu0 0
      %696 = vmatmul.mubr.bf16.gmra.mxu0 %v653
      %v697 = vpop.f32.mrf.mxu0
      %v698 = vadd.f32 0.0, %v697
      %v699 = vpop.f32.mrf.mxu0
      %v700 = vpop.f32.mrf.mxu0
      %v701 = vadd.f32 0.0, %v700
      %v702 = vpop.f32.mrf.mxu0
      %703 = vdwg.mxu0
      %v704 = vadd.f32 %v627, %v690
      %v705 = vadd.f32 %v628, %v693
      %v706 = vadd.f32 %v629, %v698
      %v707 = vadd.f32 %v630, %v701
      %s708 = scalar_lea.vmem %s1, 112
      %v709 = vld [vmem:[%s708] sm:$0xf]
      %v710 = vld [vmem:[%s708 + $0x4] sm:$0xf]
      %v711 = vld [vmem:[%s708 + $0x8] sm:$0xf]
      %v712 = vld [vmem:[%s708 + $0xc] sm:$0xf]
      %v717 = vunpack.c.l.b16 %v709
      %v718 = vunpack.c.l.b16 %v710
      %v719 = vunpack.c.l.b16 %v711
      %v720 = vunpack.c.l.b16 %v712
      %v721 = vpack.c.b16 %v718, %v717
      %v722 = vpack.c.b16 %v720, %v719
      %723 = vrot.lane.b32.xlu0 %v197, 115
      %v724 = vpop.permute.xlu0 %723
      %v727 = vsel %vm201, %v721, 0
      %v730 = vsel %vm201, %v722, 0
      %732 = vmatprep.subr.bf16.mxu0 0
      %733 = vmatpush1.bf16.msra.mxu0 0
      %734 = vmatprep.subr.bf16.mxu0 0
      %735 = vmatpush1.bf16.msra.mxu0 0
      %736 = vmatprep.subr.bf16.mxu0 0
      %737 = vmatpush1.bf16.msra.mxu0 0
      %738 = vmatprep.subr.bf16.mxu0 0
      %739 = vmatpush1.bf16.msra.mxu0 0
      %740 = vmatprep.subr.bf16.mxu0 0
      %741 = vmatpush1.bf16.msra.mxu0 0
      %742 = vmatprep.subr.bf16.mxu0 0
      %743 = vmatpush1.bf16.msra.mxu0 0
      %744 = vmatprep.subr.bf16.mxu0 0
      %745 = vmatpush1.bf16.msra.mxu0 0
      %746 = vmatprep.subr.bf16.mxu0 0
      %747 = vmatpush1.bf16.msra.mxu0 %v724
      %748 = vmatprep.subr.bf16.mxu0 0
      %749 = vmatpush2.bf16.msra.mxu0 0
      %750 = vmatprep.subr.bf16.mxu0 0
      %751 = vmatpush2.bf16.msra.mxu0 0
      %752 = vmatprep.subr.bf16.mxu0 0
      %753 = vmatpush2.bf16.msra.mxu0 0
      %754 = vmatprep.subr.bf16.mxu0 0
      %755 = vmatpush2.bf16.msra.mxu0 0
      %756 = vmatprep.subr.bf16.mxu0 0
      %757 = vmatpush2.bf16.msra.mxu0 0
      %758 = vmatprep.subr.bf16.mxu0 0
      %759 = vmatpush2.bf16.msra.mxu0 0
      %760 = vmatprep.subr.bf16.mxu0 0
      %761 = vmatpush2.bf16.msra.mxu0 0
      %762 = vmatprep.subr.bf16.mxu0 0
      %763 = vmatpush2.bf16.msra.mxu0 0
      %764 = vmatprep.mubr.bf16.mxu0 0
      %765 = vmatmul.mubr.bf16.gmra.mxu0 %v727
      %v766 = vpop.f32.mrf.mxu0
      %v767 = vadd.f32 0.0, %v766
      %v768 = vpop.f32.mrf.mxu0
      %v769 = vpop.f32.mrf.mxu0
      %v770 = vadd.f32 0.0, %v769
      %v771 = vpop.f32.mrf.mxu0
      %772 = vmatprep.mubr.bf16.mxu0 0
      %773 = vmatmul.mubr.bf16.gmra.mxu0 %v730
      %v774 = vpop.f32.mrf.mxu0
      %v775 = vadd.f32 0.0, %v774
      %v776 = vpop.f32.mrf.mxu0
      %v777 = vpop.f32.mrf.mxu0
      %v778 = vadd.f32 0.0, %v777
      %v779 = vpop.f32.mrf.mxu0
      %780 = vdwg.mxu0
      %v781 = vadd.f32 %v704, %v767
      %v782 = vadd.f32 %v705, %v770
      %v783 = vadd.f32 %v706, %v775
      %v784 = vadd.f32 %v707, %v778
      %s785 = scalar_lea.vmem %s1, 128
      %v786 = vld [vmem:[%s785] sm:$0xf]
      %v787 = vld [vmem:[%s785 + $0x4] sm:$0xf]
      %v788 = vld [vmem:[%s785 + $0x8] sm:$0xf]
      %v789 = vld [vmem:[%s785 + $0xc] sm:$0xf]
      %v794 = vunpack.c.l.b16 %v786
      %v795 = vunpack.c.l.b16 %v787
      %v796 = vunpack.c.l.b16 %v788
      %v797 = vunpack.c.l.b16 %v789
      %v798 = vpack.c.b16 %v795, %v794
      %v799 = vpack.c.b16 %v797, %v796
      %800 = vrot.lane.b32.xlu0 %v197, 114
      %v801 = vpop.permute.xlu0 %800
      %v804 = vsel %vm201, %v798, 0
      %v807 = vsel %vm201, %v799, 0
      %809 = vmatprep.subr.bf16.mxu0 0
      %810 = vmatpush1.bf16.msra.mxu0 0
      %811 = vmatprep.subr.bf16.mxu0 0
      %812 = vmatpush1.bf16.msra.mxu0 0
      %813 = vmatprep.subr.bf16.mxu0 0
      %814 = vmatpush1.bf16.msra.mxu0 0
      %815 = vmatprep.subr.bf16.mxu0 0
      %816 = vmatpush1.bf16.msra.mxu0 0
      %817 = vmatprep.subr.bf16.mxu0 0
      %818 = vmatpush1.bf16.msra.mxu0 0
      %819 = vmatprep.subr.bf16.mxu0 0
      %820 = vmatpush1.bf16.msra.mxu0 0
      %821 = vmatprep.subr.bf16.mxu0 0
      %822 = vmatpush1.bf16.msra.mxu0 0
      %823 = vmatprep.subr.bf16.mxu0 0
      %824 = vmatpush1.bf16.msra.mxu0 %v801
      %825 = vmatprep.subr.bf16.mxu0 0
      %826 = vmatpush2.bf16.msra.mxu0 0
      %827 = vmatprep.subr.bf16.mxu0 0
      %828 = vmatpush2.bf16.msra.mxu0 0
      %829 = vmatprep.subr.bf16.mxu0 0
      %830 = vmatpush2.bf16.msra.mxu0 0
      %831 = vmatprep.subr.bf16.mxu0 0
      %832 = vmatpush2.bf16.msra.mxu0 0
      %833 = vmatprep.subr.bf16.mxu0 0
      %834 = vmatpush2.bf16.msra.mxu0 0
      %835 = vmatprep.subr.bf16.mxu0 0
      %836 = vmatpush2.bf16.msra.mxu0 0
      %837 = vmatprep.subr.bf16.mxu0 0
      %838 = vmatpush2.bf16.msra.mxu0 0
      %839 = vmatprep.subr.bf16.mxu0 0
      %840 = vmatpush2.bf16.msra.mxu0 0
      %841 = vmatprep.mubr.bf16.mxu0 0
      %842 = vmatmul.mubr.bf16.gmra.mxu0 %v804
      %v843 = vpop.f32.mrf.mxu0
      %v844 = vadd.f32 0.0, %v843
      %v845 = vpop.f32.mrf.mxu0
      %v846 = vpop.f32.mrf.mxu0
      %v847 = vadd.f32 0.0, %v846
      %v848 = vpop.f32.mrf.mxu0
      %849 = vmatprep.mubr.bf16.mxu0 0
      %850 = vmatmul.mubr.bf16.gmra.mxu0 %v807
      %v851 = vpop.f32.mrf.mxu0
      %v852 = vadd.f32 0.0, %v851
      %v853 = vpop.f32.mrf.mxu0
      %v854 = vpop.f32.mrf.mxu0
      %v855 = vadd.f32 0.0, %v854
      %v856 = vpop.f32.mrf.mxu0
      %857 = vdwg.mxu0
      %v858 = vadd.f32 %v781, %v844
      %v859 = vadd.f32 %v782, %v847
      %v860 = vadd.f32 %v783, %v852
      %v861 = vadd.f32 %v784, %v855
      %v862 = vld [vmem:[%s2] sm:$0xff]
      %v863 = vld [vmem:[%s2 + $0x8] sm:$0xff]
      %v864 = vld [vmem:[%s2 + $0x10] sm:$0xff]
      %v865 = vld [vmem:[%s2 + $0x18] sm:$0xff]
      %867 = vset.pattern.permute.xlu0 0
      %868 = vperm.xlu0 %867, %v862
      %v869 = vpop.permute.xlu0 %868
      %872 = vset.pattern.permute.xlu0 0
      %873 = vperm.xlu0 %872, %v863
      %v874 = vpop.permute.xlu0 %873
      %877 = vset.pattern.permute.xlu0 0
      %878 = vperm.xlu0 %877, %v864
      %v879 = vpop.permute.xlu0 %878
      %882 = vset.pattern.permute.xlu0 0
      %883 = vperm.xlu0 %882, %v865
      %v884 = vpop.permute.xlu0 %883
      %v886 = vadd.f32 %v858, %v869
      %v887 = vadd.f32 %v859, %v874
      %v888 = vadd.f32 %v860, %v879
      %v889 = vadd.f32 %v861, %v884
      %v890 = vmax.f32 %v886, 0.0
      %v891 = vmax.f32 %v887, 0.0
      %v892 = vmax.f32 %v888, 0.0
      %v893 = vmax.f32 %v889, 0.0
      %v894 = vpack.c.bf16 %v891, %v890
      %v895 = vpack.c.bf16 %v893, %v892
      %v898 = vunpack.c.l.b16 %v894
      %v899 = vunpack.c.h.b16 %v894
      %v900 = vunpack.c.l.b16 %v895
      %v901 = vunpack.c.h.b16 %v895
      %v902 = vpack.c.b16 %v898, %v898
      %v903 = vpack.c.b16 %v899, %v899
      %v904 = vpack.c.b16 %v900, %v900
      %v905 = vpack.c.b16 %v901, %v901
      %vm910 = vcmask 191488
      %911 = vst.msk [vmem:[%s170] sm:$0xf] %vm910, %v902
      %912 = vst.msk [vmem:[%s170 + $0x4] sm:$0xf] %vm910, %v903
      %913 = vst.msk [vmem:[%s170 + $0x8] sm:$0xf] %vm910, %v904
      %914 = vst.msk [vmem:[%s170 + $0xc] sm:$0xf] %vm910, %v905
      %p915 = scmp.lt.s32.totalorder %s14, 5
      %s916 = scalar_select %p915, %s14, 5
      %s917 = smul.addr %s916, 4
      %s918 = smul.addr %s917, 4
      %s919 = scalar_lea.vmem %s3, %s918
      // Predicated region
      $region33: #{inpainting_loss.10} parent=31 // pred_check
        %p920 = pneg %p100
      $region34: #{inpainting_loss.10} parent=31 // pred_check_branch
        %922 = sbr.rel (%p920) target = $region36
      $region35: #{inpainting_loss.10} parent=31 // pred_region
        _
      $region36: #{inpainting_loss.10} parent=31 // pred_fallthru
        _
    $region32: #{inpainting_loss.10} parent=5 // pred_fallthru
      _
    %p923 = scmp.le.s32.totalorder 2, %s9
    // Predicated region
    $region37: #{inpainting_loss.10} parent=5 // pred_check
      %p924 = pneg %p923
    $region38: #{inpainting_loss.10} parent=5 // pred_check_branch
      %926 = sbr.rel (%p924) target = $region40
    $region39: #{inpainting_loss.10} parent=5 // pred_region
      %s927 = ssub.s32 %s9, 2
      // Predicated region
      $region41: #{inpainting_loss.10} parent=39 // pred_check
        %p928 = pneg %p106
      $region42: #{inpainting_loss.10} parent=39 // pred_check_branch
        %930 = sbr.rel (%p928) target = $region44
      $region43: #{inpainting_loss.10} parent=39 // pred_region
        %p931 = scmp.lt.s32.totalorder %s15, 5
        %s932 = scalar_select %p931, %s15, 5
        %s933 = smul.addr %s932, 4
        %s934 = smul.addr %s933, 4
        %s935 = scalar_lea.vmem %s3, %s934
      $region44: #{inpainting_loss.10} parent=39 // pred_fallthru
        _
    $region40: #{inpainting_loss.10} parent=5 // pred_fallthru
      _
  $region6: #{inpainting_loss.10} parent=0 // loop_footer
    %s13 = sadd.s32 1, %s9
  $region7: #{inpainting_loss.10} parent=0 // loop_footer_branch
    %8 = sbr.rel target = $region3
  $region8: #{inpainting_loss.10} parent=0 // loop_exit
    _

// kernel: inpainting_loss.13
$region0: #{inpainting_loss.13}
  #allocation0 [shape = 'u32[]', space=smem, size = 0x4, offset = 0x4, fixed_abs, tag = 'smem constant byte address 0x4 - core index']
  #allocation1 [shape = 'u32[144,128]{1,0:T(1,128)}', space=vmem, size = 0x12000, scoped, tag = 'internal scratch']
  #allocation2 [shape = 'f32[2]{0:T(128)}', space=smem, size = 0x200, scoped, tag = 'scratch operand']
  #allocation3 [shape = 'f32[2,32,32]{2,1,0:T(8,128)}', space=vmem, size = 0x8000, scoped, tag = 'scratch operand']
  #allocation4 [shape = 'f32[2,32,32]{2,1,0:T(8,128)}', space=vmem, size = 0x8000, scoped, tag = 'scratch operand']
  #allocation5 [shape = 'f32[2,32,32]{2,1,0:T(8,128)}', space=vmem, size = 0x8000, scoped, tag = 'scratch operand']
  %s0 = inlined_call_operand.vmem [shape: bf16[6,32,4], index: 0, kind: input, shape index: {}, may-alias: {0,1,2}]
  %s1 = inlined_call_operand.vmem [shape: bf16[6,32,4], index: 1, kind: input, shape index: {}, may-alias: {0,1,2}]
  %s2 = inlined_call_operand.vmem [shape: bf16[6,32,4], index: 2, kind: input, shape index: {}, may-alias: {0,1,2}]
  %s3 = inlined_call_operand.vmem [shape: f32[1,4], index: 3, kind: output, shape index: {}]
  %s4 = sld [smem:[#allocation0]]
  $region30: #{inpainting_loss.13} parent=0
    _
  %s6 = ssub.s32 1, %s4
  %s7 = scalar_select 0, %s6, %s4
  $region1: #{inpainting_loss.13} parent=0
    #allocation6 [shape = 'u8[512]{0}', space=smem, size = 0x200, scoped, tag = 'output window, operand 0, single buffered']
    #allocation7 [shape = 's32[1]{0}', space=sflag, size = 0x4, scoped, tag = 'scoped memory for inpainting_loss.13']
    %8 = vsyncpa [#allocation7], 0
    // Predicated region
    $region2: #{inpainting_loss.13} parent=1 // pred_check
      _
    $region3: #{inpainting_loss.13} parent=1 // pred_check_branch
      %10 = sbr.rel (0) target = $region5
    $region4: #{inpainting_loss.13} parent=1 // pred_region
      _
    $region5: #{inpainting_loss.13} parent=1 // pred_fallthru
      _
    // Predicated region
    $region6: #{inpainting_loss.13} parent=1 // pred_check
      _
    $region7: #{inpainting_loss.13} parent=1 // pred_check_branch
      %12 = sbr.rel (0) target = $region9
    $region8: #{inpainting_loss.13} parent=1 // pred_region
      %s13 = scalar_lea.vmem %s1, 32
    $region9: #{inpainting_loss.13} parent=1 // pred_fallthru
      _
    // Predicated region
    $region10: #{inpainting_loss.13} parent=1 // pred_check
      _
    $region11: #{inpainting_loss.13} parent=1 // pred_check_branch
      %15 = sbr.rel (0) target = $region13
    $region12: #{inpainting_loss.13} parent=1 // pred_region
      %s16 = scalar_lea.vmem %s2, 64
    $region13: #{inpainting_loss.13} parent=1 // pred_fallthru
      _
    %s17 = scalar_lea.vmem %s1, 32
    %s18 = scalar_lea.vmem %s2, 64
    %s19 = scalar_lea.vmem %s1, 32
    %s20 = scalar_lea.vmem %s2, 64
    %p22 = scmp.eq.s32.totalorder 0, 0
    // Predicated region
    $region14: #{inpainting_loss.13} parent=1 // pred_check
      %p23 = pneg %p22
    $region15: #{inpainting_loss.13} parent=1 // pred_check_branch
      %25 = sbr.rel (%p23) target = $region17
    $region16: #{inpainting_loss.13} parent=1 // pred_region
      %s26 = scalar_lea.smem [#allocation2], 0
      %27 = sst [smem:[%s26]] 0.0
      %s28 = scalar_lea.smem [#allocation2], 1
      %29 = sst [smem:[%s28]] 0.0
      %vm30 = vcmask 261120
      %31 = vst.msk [vmem:[#allocation3] sm:$0xff] %vm30, 0.0
      %32 = vst.msk [vmem:[#allocation3 + $0x8] sm:$0xff] %vm30, 0.0
      %33 = vst.msk [vmem:[#allocation3 + $0x10] sm:$0xff] %vm30, 0.0
      %34 = vst.msk [vmem:[#allocation3 + $0x18] sm:$0xff] %vm30, 0.0
      %35 = vst.msk [vmem:[#allocation3 + $0x20] sm:$0xff] %vm30, 0.0
      %36 = vst.msk [vmem:[#allocation3 + $0x28] sm:$0xff] %vm30, 0.0
      %37 = vst.msk [vmem:[#allocation3 + $0x30] sm:$0xff] %vm30, 0.0
      %38 = vst.msk [vmem:[#allocation3 + $0x38] sm:$0xff] %vm30, 0.0
      %39 = vst.msk [vmem:[#allocation4] sm:$0xff] %vm30, 0.0
      %40 = vst.msk [vmem:[#allocation4 + $0x8] sm:$0xff] %vm30, 0.0
      %41 = vst.msk [vmem:[#allocation4 + $0x10] sm:$0xff] %vm30, 0.0
      %42 = vst.msk [vmem:[#allocation4 + $0x18] sm:$0xff] %vm30, 0.0
      %43 = vst.msk [vmem:[#allocation4 + $0x20] sm:$0xff] %vm30, 0.0
      %44 = vst.msk [vmem:[#allocation4 + $0x28] sm:$0xff] %vm30, 0.0
      %45 = vst.msk [vmem:[#allocation4 + $0x30] sm:$0xff] %vm30, 0.0
      %46 = vst.msk [vmem:[#allocation4 + $0x38] sm:$0xff] %vm30, 0.0
      %47 = vst.msk [vmem:[#allocation5] sm:$0xff] %vm30, 0.0
      %48 = vst.msk [vmem:[#allocation5 + $0x8] sm:$0xff] %vm30, 0.0
      %49 = vst.msk [vmem:[#allocation5 + $0x10] sm:$0xff] %vm30, 0.0
      %50 = vst.msk [vmem:[#allocation5 + $0x18] sm:$0xff] %vm30, 0.0
      %51 = vst.msk [vmem:[#allocation5 + $0x20] sm:$0xff] %vm30, 0.0
      %52 = vst.msk [vmem:[#allocation5 + $0x28] sm:$0xff] %vm30, 0.0
      %53 = vst.msk [vmem:[#allocation5 + $0x30] sm:$0xff] %vm30, 0.0
      %54 = vst.msk [vmem:[#allocation5 + $0x38] sm:$0xff] %vm30, 0.0
    $region17: #{inpainting_loss.13} parent=1 // pred_fallthru
      _
    %v55 = vld [vmem:[%s0] sm:$0xf]
    %v56 = vld [vmem:[%s0 + $0x4] sm:$0xf]
    %v57 = vld [vmem:[%s0 + $0x8] sm:$0xf]
    %v58 = vld [vmem:[%s0 + $0xc] sm:$0xf]
    %v59 = vld [vmem:[%s0 + $0x10] sm:$0xf]
    %v60 = vld [vmem:[%s0 + $0x14] sm:$0xf]
    %v61 = vld [vmem:[%s0 + $0x18] sm:$0xf]
    %v62 = vld [vmem:[%s0 + $0x1c] sm:$0xf]
    %v63 = vld [vmem:[%s19] sm:$0xf]
    %v64 = vld [vmem:[%s19 + $0x4] sm:$0xf]
    %v65 = vld [vmem:[%s19 + $0x8] sm:$0xf]
    %v66 = vld [vmem:[%s19 + $0xc] sm:$0xf]
    %v67 = vld [vmem:[%s19 + $0x10] sm:$0xf]
    %v68 = vld [vmem:[%s19 + $0x14] sm:$0xf]
    %v69 = vld [vmem:[%s19 + $0x18] sm:$0xf]
    %v70 = vld [vmem:[%s19 + $0x1c] sm:$0xf]
    %v71 = vld [vmem:[%s20] sm:$0xf]
    %v72 = vld [vmem:[%s20 + $0x4] sm:$0xf]
    %v73 = vld [vmem:[%s20 + $0x8] sm:$0xf]
    %v74 = vld [vmem:[%s20 + $0xc] sm:$0xf]
    %v75 = vld [vmem:[%s20 + $0x10] sm:$0xf]
    %v76 = vld [vmem:[%s20 + $0x14] sm:$0xf]
    %v77 = vld [vmem:[%s20 + $0x18] sm:$0xf]
    %v78 = vld [vmem:[%s20 + $0x1c] sm:$0xf]
    %v79 = vunpack.c.l.bf16 %v55
    %v80 = vunpack.c.l.bf16 %v56
    %v81 = vunpack.c.l.bf16 %v57
    %v82 = vunpack.c.l.bf16 %v58
    %v83 = vunpack.c.l.bf16 %v59
    %v84 = vunpack.c.l.bf16 %v60
    %v85 = vunpack.c.l.bf16 %v61
    %v86 = vunpack.c.l.bf16 %v62
    %v87 = vunpack.c.l.bf16 %v63
    %v88 = vunpack.c.l.bf16 %v64
    %v89 = vunpack.c.l.bf16 %v65
    %v90 = vunpack.c.l.bf16 %v66
    %v91 = vunpack.c.l.bf16 %v67
    %v92 = vunpack.c.l.bf16 %v68
    %v93 = vunpack.c.l.bf16 %v69
    %v94 = vunpack.c.l.bf16 %v70
    %v95 = vunpack.c.l.bf16 %v71
    %v96 = vunpack.c.l.bf16 %v72
    %v97 = vunpack.c.l.bf16 %v73
    %v98 = vunpack.c.l.bf16 %v74
    %v99 = vunpack.c.l.bf16 %v75
    %v100 = vunpack.c.l.bf16 %v76
    %v101 = vunpack.c.l.bf16 %v77
    %v102 = vunpack.c.l.bf16 %v78
    %s103 = sld [smem:[#allocation2]]
    %v104 = vsub.f32 %v79, %v95
    %v105 = vsub.f32 %v80, %v96
    %v106 = vsub.f32 %v81, %v97
    %v107 = vsub.f32 %v82, %v98
    %v108 = vsub.f32 %v83, %v99
    %v109 = vsub.f32 %v84, %v100
    %v110 = vsub.f32 %v85, %v101
    %v111 = vsub.f32 %v86, %v102
    %v112 = vand.u32 2147483647, %v104
    %v113 = vand.u32 2147483647, %v105
    %v114 = vand.u32 2147483647, %v106
    %v115 = vand.u32 2147483647, %v107
    %v116 = vand.u32 2147483647, %v108
    %v117 = vand.u32 2147483647, %v109
    %v118 = vand.u32 2147483647, %v110
    %v119 = vand.u32 2147483647, %v111
    %vm120 = vcmask 31744
    %v121 = vsel %vm120, %v112, 0.0
    %v122 = vsel %vm120, %v113, 0.0
    %v123 = vadd.f32 %v121, %v122
    %v124 = vsel %vm120, %v114, 0.0
    %v125 = vadd.f32 %v123, %v124
    %v126 = vsel %vm120, %v115, 0.0
    %v127 = vadd.f32 %v125, %v126
    %v128 = vsel %vm120, %v116, 0.0
    %v129 = vadd.f32 %v127, %v128
    %v130 = vsel %vm120, %v117, 0.0
    %v131 = vadd.f32 %v129, %v130
    %v132 = vsel %vm120, %v118, 0.0
    %v133 = vadd.f32 %v131, %v132
    %v134 = vsel %vm120, %v119, 0.0
    %v135 = vadd.f32 %v133, %v134
    %136 = vadd.xlane.f32.xlu0 %v135
    %v137 = vpop.xlane.xlu0 %136
    %v138 = vrot.slane %v137, 4
    %v139 = vadd.f32 %v137, %v138
    %v140 = vrot.slane %v139, 2
    %v141 = vadd.f32 %v139, %v140
    %v142 = vrot.slane %v141, 1
    %v143 = vadd.f32 %v141, %v142
    %s144 = vtos %v143
    %s145 = sadd.f32 %s103, %s144
    %s146 = scalar_lea.smem [#allocation2], 0
    %147 = sst [smem:[%s146]] %s145
    %s148 = sld [smem:[#allocation2 + $0x1]]
    %v149 = vsub.f32 %v87, %v95
    %v150 = vsub.f32 %v88, %v96
    %v151 = vsub.f32 %v89, %v97
    %v152 = vsub.f32 %v90, %v98
    %v153 = vsub.f32 %v91, %v99
    %v154 = vsub.f32 %v92, %v100
    %v155 = vsub.f32 %v93, %v101
    %v156 = vsub.f32 %v94, %v102
    %v157 = vand.u32 2147483647, %v149
    %v158 = vand.u32 2147483647, %v150
    %v159 = vand.u32 2147483647, %v151
    %v160 = vand.u32 2147483647, %v152
    %v161 = vand.u32 2147483647, %v153
    %v162 = vand.u32 2147483647, %v154
    %v163 = vand.u32 2147483647, %v155
    %v164 = vand.u32 2147483647, %v156
    %v165 = vsel %vm120, %v157, 0.0
    %v166 = vsel %vm120, %v158, 0.0
    %v167 = vadd.f32 %v165, %v166
    %v168 = vsel %vm120, %v159, 0.0
    %v169 = vadd.f32 %v167, %v168
    %v170 = vsel %vm120, %v160, 0.0
    %v171 = vadd.f32 %v169, %v170
    %v172 = vsel %vm120, %v161, 0.0
    %v173 = vadd.f32 %v171, %v172
    %v174 = vsel %vm120, %v162, 0.0
    %v175 = vadd.f32 %v173, %v174
    %v176 = vsel %vm120, %v163, 0.0
    %v177 = vadd.f32 %v175, %v176
    %v178 = vsel %vm120, %v164, 0.0
    %v179 = vadd.f32 %v177, %v178
    %180 = vadd.xlane.f32.xlu0 %v179
    %v181 = vpop.xlane.xlu0 %180
    %v182 = vrot.slane %v181, 4
    %v183 = vadd.f32 %v181, %v182
    %v184 = vrot.slane %v183, 2
    %v185 = vadd.f32 %v183, %v184
    %v186 = vrot.slane %v185, 1
    %v187 = vadd.f32 %v185, %v186
    %s188 = vtos %v187
    %s189 = sadd.f32 %s148, %s188
    %s190 = scalar_lea.smem [#allocation2], 1
    %191 = sst [smem:[%s190]] %s189
    %v192 = vld [vmem:[#allocation3] sm:$0xff]
    %v193 = vld [vmem:[#allocation3 + $0x8] sm:$0xff]
    %v194 = vld [vmem:[#allocation3 + $0x10] sm:$0xff]
    %v195 = vld [vmem:[#allocation3 + $0x18] sm:$0xff]
    %v196 = vld [vmem:[#allocation3 + $0x20] sm:$0xff]
    %v197 = vld [vmem:[#allocation3 + $0x28] sm:$0xff]
    %v198 = vld [vmem:[#allocation3 + $0x30] sm:$0xff]
    %v199 = vld [vmem:[#allocation3 + $0x38] sm:$0xff]
    %v204 = vunpack.c.l.b16 %v55
    %v205 = vunpack.c.l.b16 %v56
    %v206 = vunpack.c.l.b16 %v57
    %v207 = vunpack.c.l.b16 %v58
    %v208 = vpack.c.b16 %v205, %v204
    %v209 = vpack.c.b16 %v207, %v206
    %v211 = vsel %vm120, %v208, 0
    %v214 = vsel %vm120, %v209, 0
    %216 = vmatprep.subr.bf16.mxu0 0
    %217 = vmatpush1.bf16.xpose.msra.mxu0 0
    %218 = vmatprep.subr.bf16.mxu0 0
    %219 = vmatpush1.bf16.xpose.msra.mxu0 0
    %220 = vmatprep.subr.bf16.mxu0 0
    %221 = vmatpush1.bf16.xpose.msra.mxu0 0
    %222 = vmatprep.subr.bf16.mxu0 0
    %223 = vmatpush1.bf16.xpose.msra.mxu0 0
    %224 = vmatprep.subr.bf16.mxu0 0
    %225 = vmatpush1.bf16.xpose.msra.mxu0 0
    %226 = vmatprep.subr.bf16.mxu0 0
    %227 = vmatpush1.bf16.xpose.msra.mxu0 0
    %228 = vmatprep.subr.bf16.mxu0 0
    %229 = vmatpush1.bf16.xpose.msra.mxu0 %v214
    %230 = vmatprep.subr.bf16.mxu0 0
    %231 = vmatpush1.bf16.xpose.msra.mxu0 %v211
    %232 = vmatprep.subr.bf16.mxu0 0
    %233 = vmatpush2.bf16.xpose.msra.mxu0 0
    %234 = vmatprep.subr.bf16.mxu0 0
    %235 = vmatpush2.bf16.xpose.msra.mxu0 0
    %236 = vmatprep.subr.bf16.mxu0 0
    %237 = vmatpush2.bf16.xpose.msra.mxu0 0
    %238 = vmatprep.subr.bf16.mxu0 0
    %239 = vmatpush2.bf16.xpose.msra.mxu0 0
    %240 = vmatprep.subr.bf16.mxu0 0
    %241 = vmatpush2.bf16.xpose.msra.mxu0 0
    %242 = vmatprep.subr.bf16.mxu0 0
    %243 = vmatpush2.bf16.xpose.msra.mxu0 0
    %244 = vmatprep.subr.bf16.mxu0 0
    %245 = vmatpush2.bf16.xpose.msra.mxu0 0
    %246 = vmatprep.subr.bf16.mxu0 0
    %247 = vmatpush2.bf16.xpose.msra.mxu0 0
    %248 = vmatprep.mubr.bf16.mxu0 0
    %249 = vmatmul.mubr.bf16.gmra.mxu0 %v211
    %v250 = vpop.f32.mrf.mxu0
    %v251 = vadd.f32 0.0, %v250
    %v252 = vpop.f32.mrf.mxu0
    %v253 = vpop.f32.mrf.mxu0
    %v254 = vadd.f32 0.0, %v253
    %v255 = vpop.f32.mrf.mxu0
    %256 = vmatprep.mubr.bf16.mxu0 0
    %257 = vmatmul.mubr.bf16.gmra.mxu0 %v214
    %v258 = vpop.f32.mrf.mxu0
    %v259 = vadd.f32 0.0, %v258
    %v260 = vpop.f32.mrf.mxu0
    %v261 = vpop.f32.mrf.mxu0
    %v262 = vadd.f32 0.0, %v261
    %v263 = vpop.f32.mrf.mxu0
    %264 = vdwg.mxu0
    %v269 = vunpack.c.l.b16 %v59
    %v270 = vunpack.c.l.b16 %v60
    %v271 = vunpack.c.l.b16 %v61
    %v272 = vunpack.c.l.b16 %v62
    %v273 = vpack.c.b16 %v270, %v269
    %v274 = vpack.c.b16 %v272, %v271
    %v276 = vsel %vm120, %v273, 0
    %v279 = vsel %vm120, %v274, 0
    %281 = vmatprep.subr.bf16.mxu0 0
    %282 = vmatpush1.bf16.xpose.msra.mxu0 0
    %283 = vmatprep.subr.bf16.mxu0 0
    %284 = vmatpush1.bf16.xpose.msra.mxu0 0
    %285 = vmatprep.subr.bf16.mxu0 0
    %286 = vmatpush1.bf16.xpose.msra.mxu0 0
    %287 = vmatprep.subr.bf16.mxu0 0
    %288 = vmatpush1.bf16.xpose.msra.mxu0 0
    %289 = vmatprep.subr.bf16.mxu0 0
    %290 = vmatpush1.bf16.xpose.msra.mxu0 0
    %291 = vmatprep.subr.bf16.mxu0 0
    %292 = vmatpush1.bf16.xpose.msra.mxu0 0
    %293 = vmatprep.subr.bf16.mxu0 0
    %294 = vmatpush1.bf16.xpose.msra.mxu0 %v279
    %295 = vmatprep.subr.bf16.mxu0 0
    %296 = vmatpush1.bf16.xpose.msra.mxu0 %v276
    %297 = vmatprep.subr.bf16.mxu0 0
    %298 = vmatpush2.bf16.xpose.msra.mxu0 0
    %299 = vmatprep.subr.bf16.mxu0 0
    %300 = vmatpush2.bf16.xpose.msra.mxu0 0
    %301 = vmatprep.subr.bf16.mxu0 0
    %302 = vmatpush2.bf16.xpose.msra.mxu0 0
    %303 = vmatprep.subr.bf16.mxu0 0
    %304 = vmatpush2.bf16.xpose.msra.mxu0 0
    %305 = vmatprep.subr.bf16.mxu0 0
    %306 = vmatpush2.bf16.xpose.msra.mxu0 0
    %307 = vmatprep.subr.bf16.mxu0 0
    %308 = vmatpush2.bf16.xpose.msra.mxu0 0
    %309 = vmatprep.subr.bf16.mxu0 0
    %310 = vmatpush2.bf16.xpose.msra.mxu0 0
    %311 = vmatprep.subr.bf16.mxu0 0
    %312 = vmatpush2.bf16.xpose.msra.mxu0 0
    %313 = vmatprep.mubr.bf16.mxu0 0
    %314 = vmatmul.mubr.bf16.gmra.mxu0 %v276
    %v315 = vpop.f32.mrf.mxu0
    %v316 = vadd.f32 0.0, %v315
    %v317 = vpop.f32.mrf.mxu0
    %v318 = vpop.f32.mrf.mxu0
    %v319 = vadd.f32 0.0, %v318
    %v320 = vpop.f32.mrf.mxu0
    %321 = vmatprep.mubr.bf16.mxu0 0
    %322 = vmatmul.mubr.bf16.gmra.mxu0 %v279
    %v323 = vpop.f32.mrf.mxu0
    %v324 = vadd.f32 0.0, %v323
    %v325 = vpop.f32.mrf.mxu0
    %v326 = vpop.f32.mrf.mxu0
    %v327 = vadd.f32 0.0, %v326
    %v328 = vpop.f32.mrf.mxu0
    %329 = vdwg.mxu0
    %v330 = vadd.f32 %v192, %v251
    %v331 = vadd.f32 %v193, %v254
    %v332 = vadd.f32 %v194, %v259
    %v333 = vadd.f32 %v195, %v262
    %v334 = vadd.f32 %v196, %v316
    %v335 = vadd.f32 %v197, %v319
    %v336 = vadd.f32 %v198, %v324
    %v337 = vadd.f32 %v199, %v327
    %vm338 = vcmask 261120
    %339 = vst.msk [vmem:[#allocation3] sm:$0xff] %vm338, %v330
    %340 = vst.msk [vmem:[#allocation3 + $0x8] sm:$0xff] %vm338, %v331
    %341 = vst.msk [vmem:[#allocation3 + $0x10] sm:$0xff] %vm338, %v332
    %342 = vst.msk [vmem:[#allocation3 + $0x18] sm:$0xff] %vm338, %v333
    %343 = vst.msk [vmem:[#allocation3 + $0x20] sm:$0xff] %vm338, %v334
    %344 = vst.msk [vmem:[#allocation3 + $0x28] sm:$0xff] %vm338, %v335
    %345 = vst.msk [vmem:[#allocation3 + $0x30] sm:$0xff] %vm338, %v336
    %346 = vst.msk [vmem:[#allocation3 + $0x38] sm:$0xff] %vm338, %v337
    %v347 = vld [vmem:[#allocation4] sm:$0xff]
    %v348 = vld [vmem:[#allocation4 + $0x8] sm:$0xff]
    %v349 = vld [vmem:[#allocation4 + $0x10] sm:$0xff]
    %v350 = vld [vmem:[#allocation4 + $0x18] sm:$0xff]
    %v351 = vld [vmem:[#allocation4 + $0x20] sm:$0xff]
    %v352 = vld [vmem:[#allocation4 + $0x28] sm:$0xff]
    %v353 = vld [vmem:[#allocation4 + $0x30] sm:$0xff]
    %v354 = vld [vmem:[#allocation4 + $0x38] sm:$0xff]
    %v359 = vunpack.c.l.b16 %v63
    %v360 = vunpack.c.l.b16 %v64
    %v361 = vunpack.c.l.b16 %v65
    %v362 = vunpack.c.l.b16 %v66
    %v363 = vpack.c.b16 %v360, %v359
    %v364 = vpack.c.b16 %v362, %v361
    %v366 = vsel %vm120, %v363, 0
    %v369 = vsel %vm120, %v364, 0
    %371 = vmatprep.subr.bf16.mxu0 0
    %372 = vmatpush1.bf16.xpose.msra.mxu0 0
    %373 = vmatprep.subr.bf16.mxu0 0
    %374 = vmatpush1.bf16.xpose.msra.mxu0 0
    %375 = vmatprep.subr.bf16.mxu0 0
    %376 = vmatpush1.bf16.xpose.msra.mxu0 0
    %377 = vmatprep.subr.bf16.mxu0 0
    %378 = vmatpush1.bf16.xpose.msra.mxu0 0
    %379 = vmatprep.subr.bf16.mxu0 0
    %380 = vmatpush1.bf16.xpose.msra.mxu0 0
    %381 = vmatprep.subr.bf16.mxu0 0
    %382 = vmatpush1.bf16.xpose.msra.mxu0 0
    %383 = vmatprep.subr.bf16.mxu0 0
    %384 = vmatpush1.bf16.xpose.msra.mxu0 %v369
    %385 = vmatprep.subr.bf16.mxu0 0
    %386 = vmatpush1.bf16.xpose.msra.mxu0 %v366
    %387 = vmatprep.subr.bf16.mxu0 0
    %388 = vmatpush2.bf16.xpose.msra.mxu0 0
    %389 = vmatprep.subr.bf16.mxu0 0
    %390 = vmatpush2.bf16.xpose.msra.mxu0 0
    %391 = vmatprep.subr.bf16.mxu0 0
    %392 = vmatpush2.bf16.xpose.msra.mxu0 0
    %393 = vmatprep.subr.bf16.mxu0 0
    %394 = vmatpush2.bf16.xpose.msra.mxu0 0
    %395 = vmatprep.subr.bf16.mxu0 0
    %396 = vmatpush2.bf16.xpose.msra.mxu0 0
    %397 = vmatprep.subr.bf16.mxu0 0
    %398 = vmatpush2.bf16.xpose.msra.mxu0 0
    %399 = vmatprep.subr.bf16.mxu0 0
    %400 = vmatpush2.bf16.xpose.msra.mxu0 0
    %401 = vmatprep.subr.bf16.mxu0 0
    %402 = vmatpush2.bf16.xpose.msra.mxu0 0
    %403 = vmatprep.mubr.bf16.mxu0 0
    %404 = vmatmul.mubr.bf16.gmra.mxu0 %v366
    %v405 = vpop.f32.mrf.mxu0
    %v406 = vadd.f32 0.0, %v405
    %v407 = vpop.f32.mrf.mxu0
    %v408 = vpop.f32.mrf.mxu0
    %v409 = vadd.f32 0.0, %v408
    %v410 = vpop.f32.mrf.mxu0
    %411 = vmatprep.mubr.bf16.mxu0 0
    %412 = vmatmul.mubr.bf16.gmra.mxu0 %v369
    %v413 = vpop.f32.mrf.mxu0
    %v414 = vadd.f32 0.0, %v413
    %v415 = vpop.f32.mrf.mxu0
    %v416 = vpop.f32.mrf.mxu0
    %v417 = vadd.f32 0.0, %v416
    %v418 = vpop.f32.mrf.mxu0
    %419 = vdwg.mxu0
    %v424 = vunpack.c.l.b16 %v67
    %v425 = vunpack.c.l.b16 %v68
    %v426 = vunpack.c.l.b16 %v69
    %v427 = vunpack.c.l.b16 %v70
    %v428 = vpack.c.b16 %v425, %v424
    %v429 = vpack.c.b16 %v427, %v426
    %v431 = vsel %vm120, %v428, 0
    %v434 = vsel %vm120, %v429, 0
    %436 = vmatprep.subr.bf16.mxu0 0
    %437 = vmatpush1.bf16.xpose.msra.mxu0 0
    %438 = vmatprep.subr.bf16.mxu0 0
    %439 = vmatpush1.bf16.xpose.msra.mxu0 0
    %440 = vmatprep.subr.bf16.mxu0 0
    %441 = vmatpush1.bf16.xpose.msra.mxu0 0
    %442 = vmatprep.subr.bf16.mxu0 0
    %443 = vmatpush1.bf16.xpose.msra.mxu0 0
    %444 = vmatprep.subr.bf16.mxu0 0
    %445 = vmatpush1.bf16.xpose.msra.mxu0 0
    %446 = vmatprep.subr.bf16.mxu0 0
    %447 = vmatpush1.bf16.xpose.msra.mxu0 0
    %448 = vmatprep.subr.bf16.mxu0 0
    %449 = vmatpush1.bf16.xpose.msra.mxu0 %v434
    %450 = vmatprep.subr.bf16.mxu0 0
    %451 = vmatpush1.bf16.xpose.msra.mxu0 %v431
    %452 = vmatprep.subr.bf16.mxu0 0
    %453 = vmatpush2.bf16.xpose.msra.mxu0 0
    %454 = vmatprep.subr.bf16.mxu0 0
    %455 = vmatpush2.bf16.xpose.msra.mxu0 0
    %456 = vmatprep.subr.bf16.mxu0 0
    %457 = vmatpush2.bf16.xpose.msra.mxu0 0
    %458 = vmatprep.subr.bf16.mxu0 0
    %459 = vmatpush2.bf16.xpose.msra.mxu0 0
    %460 = vmatprep.subr.bf16.mxu0 0
    %461 = vmatpush2.bf16.xpose.msra.mxu0 0
    %462 = vmatprep.subr.bf16.mxu0 0
    %463 = vmatpush2.bf16.xpose.msra.mxu0 0
    %464 = vmatprep.subr.bf16.mxu0 0
    %465 = vmatpush2.bf16.xpose.msra.mxu0 0
    %466 = vmatprep.subr.bf16.mxu0 0
    %467 = vmatpush2.bf16.xpose.msra.mxu0 0
    %468 = vmatprep.mubr.bf16.mxu0 0
    %469 = vmatmul.mubr.bf16.gmra.mxu0 %v431
    %v470 = vpop.f32.mrf.mxu0
    %v471 = vadd.f32 0.0, %v470
    %v472 = vpop.f32.mrf.mxu0
    %v473 = vpop.f32.mrf.mxu0
    %v474 = vadd.f32 0.0, %v473
    %v475 = vpop.f32.mrf.mxu0
    %476 = vmatprep.mubr.bf16.mxu0 0
    %477 = vmatmul.mubr.bf16.gmra.mxu0 %v434
    %v478 = vpop.f32.mrf.mxu0
    %v479 = vadd.f32 0.0, %v478
    %v480 = vpop.f32.mrf.mxu0
    %v481 = vpop.f32.mrf.mxu0
    %v482 = vadd.f32 0.0, %v481
    %v483 = vpop.f32.mrf.mxu0
    %484 = vdwg.mxu0
    %v485 = vadd.f32 %v347, %v406
    %v486 = vadd.f32 %v348, %v409
    %v487 = vadd.f32 %v349, %v414
    %v488 = vadd.f32 %v350, %v417
    %v489 = vadd.f32 %v351, %v471
    %v490 = vadd.f32 %v352, %v474
    %v491 = vadd.f32 %v353, %v479
    %v492 = vadd.f32 %v354, %v482
    %493 = vst.msk [vmem:[#allocation4] sm:$0xff] %vm338, %v485
    %494 = vst.msk [vmem:[#allocation4 + $0x8] sm:$0xff] %vm338, %v486
    %495 = vst.msk [vmem:[#allocation4 + $0x10] sm:$0xff] %vm338, %v487
    %496 = vst.msk [vmem:[#allocation4 + $0x18] sm:$0xff] %vm338, %v488
    %497 = vst.msk [vmem:[#allocation4 + $0x20] sm:$0xff] %vm338, %v489
    %498 = vst.msk [vmem:[#allocation4 + $0x28] sm:$0xff] %vm338, %v490
    %499 = vst.msk [vmem:[#allocation4 + $0x30] sm:$0xff] %vm338, %v491
    %500 = vst.msk [vmem:[#allocation4 + $0x38] sm:$0xff] %vm338, %v492
    %v501 = vld [vmem:[#allocation5] sm:$0xff]
    %v502 = vld [vmem:[#allocation5 + $0x8] sm:$0xff]
    %v503 = vld [vmem:[#allocation5 + $0x10] sm:$0xff]
    %v504 = vld [vmem:[#allocation5 + $0x18] sm:$0xff]
    %v505 = vld [vmem:[#allocation5 + $0x20] sm:$0xff]
    %v506 = vld [vmem:[#allocation5 + $0x28] sm:$0xff]
    %v507 = vld [vmem:[#allocation5 + $0x30] sm:$0xff]
    %v508 = vld [vmem:[#allocation5 + $0x38] sm:$0xff]
    %v513 = vunpack.c.l.b16 %v71
    %v514 = vunpack.c.l.b16 %v72
    %v515 = vunpack.c.l.b16 %v73
    %v516 = vunpack.c.l.b16 %v74
    %v517 = vpack.c.b16 %v514, %v513
    %v518 = vpack.c.b16 %v516, %v515
    %v520 = vsel %vm120, %v517, 0
    %v523 = vsel %vm120, %v518, 0
    %525 = vmatprep.subr.bf16.mxu0 0
    %526 = vmatpush1.bf16.xpose.msra.mxu0 0
    %527 = vmatprep.subr.bf16.mxu0 0
    %528 = vmatpush1.bf16.xpose.msra.mxu0 0
    %529 = vmatprep.subr.bf16.mxu0 0
    %530 = vmatpush1.bf16.xpose.msra.mxu0 0
    %531 = vmatprep.subr.bf16.mxu0 0
    %532 = vmatpush1.bf16.xpose.msra.mxu0 0
    %533 = vmatprep.subr.bf16.mxu0 0
    %534 = vmatpush1.bf16.xpose.msra.mxu0 0
    %535 = vmatprep.subr.bf16.mxu0 0
    %536 = vmatpush1.bf16.xpose.msra.mxu0 0
    %537 = vmatprep.subr.bf16.mxu0 0
    %538 = vmatpush1.bf16.xpose.msra.mxu0 %v523
    %539 = vmatprep.subr.bf16.mxu0 0
    %540 = vmatpush1.bf16.xpose.msra.mxu0 %v520
    %541 = vmatprep.subr.bf16.mxu0 0
    %542 = vmatpush2.bf16.xpose.msra.mxu0 0
    %543 = vmatprep.subr.bf16.mxu0 0
    %544 = vmatpush2.bf16.xpose.msra.mxu0 0
    %545 = vmatprep.subr.bf16.mxu0 0
    %546 = vmatpush2.bf16.xpose.msra.mxu0 0
    %547 = vmatprep.subr.bf16.mxu0 0
    %548 = vmatpush2.bf16.xpose.msra.mxu0 0
    %549 = vmatprep.subr.bf16.mxu0 0
    %550 = vmatpush2.bf16.xpose.msra.mxu0 0
    %551 = vmatprep.subr.bf16.mxu0 0
    %552 = vmatpush2.bf16.xpose.msra.mxu0 0
    %553 = vmatprep.subr.bf16.mxu0 0
    %554 = vmatpush2.bf16.xpose.msra.mxu0 0
    %555 = vmatprep.subr.bf16.mxu0 0
    %556 = vmatpush2.bf16.xpose.msra.mxu0 0
    %557 = vmatprep.mubr.bf16.mxu0 0
    %558 = vmatmul.mubr.bf16.gmra.mxu0 %v520
    %v559 = vpop.f32.mrf.mxu0
    %v560 = vadd.f32 0.0, %v559
    %v561 = vpop.f32.mrf.mxu0
    %v562 = vpop.f32.mrf.mxu0
    %v563 = vadd.f32 0.0, %v562
    %v564 = vpop.f32.mrf.mxu0
    %565 = vmatprep.mubr.bf16.mxu0 0
    %566 = vmatmul.mubr.bf16.gmra.mxu0 %v523
    %v567 = vpop.f32.mrf.mxu0
    %v568 = vadd.f32 0.0, %v567
    %v569 = vpop.f32.mrf.mxu0
    %v570 = vpop.f32.mrf.mxu0
    %v571 = vadd.f32 0.0, %v570
    %v572 = vpop.f32.mrf.mxu0
    %573 = vdwg.mxu0
    %v578 = vunpack.c.l.b16 %v75
    %v579 = vunpack.c.l.b16 %v76
    %v580 = vunpack.c.l.b16 %v77
    %v581 = vunpack.c.l.b16 %v78
    %v582 = vpack.c.b16 %v579, %v578
    %v583 = vpack.c.b16 %v581, %v580
    %v585 = vsel %vm120, %v582, 0
    %v588 = vsel %vm120, %v583, 0
    %590 = vmatprep.subr.bf16.mxu0 0
    %591 = vmatpush1.bf16.xpose.msra.mxu0 0
    %592 = vmatprep.subr.bf16.mxu0 0
    %593 = vmatpush1.bf16.xpose.msra.mxu0 0
    %594 = vmatprep.subr.bf16.mxu0 0
    %595 = vmatpush1.bf16.xpose.msra.mxu0 0
    %596 = vmatprep.subr.bf16.mxu0 0
    %597 = vmatpush1.bf16.xpose.msra.mxu0 0
    %598 = vmatprep.subr.bf16.mxu0 0
    %599 = vmatpush1.bf16.xpose.msra.mxu0 0
    %600 = vmatprep.subr.bf16.mxu0 0
    %601 = vmatpush1.bf16.xpose.msra.mxu0 0
    %602 = vmatprep.subr.bf16.mxu0 0
    %603 = vmatpush1.bf16.xpose.msra.mxu0 %v588
    %604 = vmatprep.subr.bf16.mxu0 0
    %605 = vmatpush1.bf16.xpose.msra.mxu0 %v585
    %606 = vmatprep.subr.bf16.mxu0 0
    %607 = vmatpush2.bf16.xpose.msra.mxu0 0
    %608 = vmatprep.subr.bf16.mxu0 0
    %609 = vmatpush2.bf16.xpose.msra.mxu0 0
    %610 = vmatprep.subr.bf16.mxu0 0
    %611 = vmatpush2.bf16.xpose.msra.mxu0 0
    %612 = vmatprep.subr.bf16.mxu0 0
    %613 = vmatpush2.bf16.xpose.msra.mxu0 0
    %614 = vmatprep.subr.bf16.mxu0 0
    %615 = vmatpush2.bf16.xpose.msra.mxu0 0
    %616 = vmatprep.subr.bf16.mxu0 0
    %617 = vmatpush2.bf16.xpose.msra.mxu0 0
    %618 = vmatprep.subr.bf16.mxu0 0
    %619 = vmatpush2.bf16.xpose.msra.mxu0 0
    %620 = vmatprep.subr.bf16.mxu0 0
    %621 = vmatpush2.bf16.xpose.msra.mxu0 0
    %622 = vmatprep.mubr.bf16.mxu0 0
    %623 = vmatmul.mubr.bf16.gmra.mxu0 %v585
    %v624 = vpop.f32.mrf.mxu0
    %v625 = vadd.f32 0.0, %v624
    %v626 = vpop.f32.mrf.mxu0
    %v627 = vpop.f32.mrf.mxu0
    %v628 = vadd.f32 0.0, %v627
    %v629 = vpop.f32.mrf.mxu0
    %630 = vmatprep.mubr.bf16.mxu0 0
    %631 = vmatmul.mubr.bf16.gmra.mxu0 %v588
    %v632 = vpop.f32.mrf.mxu0
    %v633 = vadd.f32 0.0, %v632
    %v634 = vpop.f32.mrf.mxu0
    %v635 = vpop.f32.mrf.mxu0
    %v636 = vadd.f32 0.0, %v635
    %v637 = vpop.f32.mrf.mxu0
    %638 = vdwg.mxu0
    %v639 = vadd.f32 %v501, %v560
    %v640 = vadd.f32 %v502, %v563
    %v641 = vadd.f32 %v503, %v568
    %v642 = vadd.f32 %v504, %v571
    %v643 = vadd.f32 %v505, %v625
    %v644 = vadd.f32 %v506, %v628
    %v645 = vadd.f32 %v507, %v633
    %v646 = vadd.f32 %v508, %v636
    %647 = vst.msk [vmem:[#allocation5] sm:$0xff] %vm338, %v639
    %648 = vst.msk [vmem:[#allocation5 + $0x8] sm:$0xff] %vm338, %v640
    %649 = vst.msk [vmem:[#allocation5 + $0x10] sm:$0xff] %vm338, %v641
    %650 = vst.msk [vmem:[#allocation5 + $0x18] sm:$0xff] %vm338, %v642
    %651 = vst.msk [vmem:[#allocation5 + $0x20] sm:$0xff] %vm338, %v643
    %652 = vst.msk [vmem:[#allocation5 + $0x28] sm:$0xff] %vm338, %v644
    %653 = vst.msk [vmem:[#allocation5 + $0x30] sm:$0xff] %vm338, %v645
    %654 = vst.msk [vmem:[#allocation5 + $0x38] sm:$0xff] %vm338, %v646
    // Predicated region
    $region18: #{inpainting_loss.13} parent=1 // pred_check
      %p655 = pneg %p22
    $region19: #{inpainting_loss.13} parent=1 // pred_check_branch
      %657 = sbr.rel (%p655) target = $region21
    $region20: #{inpainting_loss.13} parent=1 // pred_region
      %s658 = sld [smem:[#allocation2]]
      %s659 = scalar_lea.smem [#allocation6], 0
      %660 = sst [smem:[%s659]] %s658
      %s661 = sld [smem:[#allocation2 + $0x1]]
      %s662 = scalar_lea.smem [#allocation6], 1
      %663 = sst [smem:[%s662]] %s661
      %v664 = vld [vmem:[#allocation3] sm:$0xff]
      %v665 = vld [vmem:[#allocation3 + $0x8] sm:$0xff]
      %v666 = vld [vmem:[#allocation3 + $0x10] sm:$0xff]
      %v667 = vld [vmem:[#allocation3 + $0x18] sm:$0xff]
      %v668 = vld [vmem:[#allocation3 + $0x20] sm:$0xff]
      %v669 = vld [vmem:[#allocation3 + $0x28] sm:$0xff]
      %v670 = vld [vmem:[#allocation3 + $0x30] sm:$0xff]
      %v671 = vld [vmem:[#allocation3 + $0x38] sm:$0xff]
      %v672 = vld [vmem:[#allocation5] sm:$0xff]
      %v673 = vld [vmem:[#allocation5 + $0x8] sm:$0xff]
      %v674 = vld [vmem:[#allocation5 + $0x10] sm:$0xff]
      %v675 = vld [vmem:[#allocation5 + $0x18] sm:$0xff]
      %v676 = vld [vmem:[#allocation5 + $0x20] sm:$0xff]
      %v677 = vld [vmem:[#allocation5 + $0x28] sm:$0xff]
      %v678 = vld [vmem:[#allocation5 + $0x30] sm:$0xff]
      %v679 = vld [vmem:[#allocation5 + $0x38] sm:$0xff]
      %v680 = vsub.f32 %v664, %v672
      %v681 = vsub.f32 %v665, %v673
      %v682 = vsub.f32 %v666, %v674
      %v683 = vsub.f32 %v667, %v675
      %v684 = vsub.f32 %v668, %v676
      %v685 = vsub.f32 %v669, %v677
      %v686 = vsub.f32 %v670, %v678
      %v687 = vsub.f32 %v671, %v679
      %v688 = vand.u32 2147483647, %v680
      %v689 = vand.u32 2147483647, %v681
      %v690 = vand.u32 2147483647, %v682
      %v691 = vand.u32 2147483647, %v683
      %v692 = vand.u32 2147483647, %v684
      %v693 = vand.u32 2147483647, %v685
      %v694 = vand.u32 2147483647, %v686
      %v695 = vand.u32 2147483647, %v687
      %v696 = vsel %vm338, %v688, 0.0
      %v697 = vsel %vm338, %v689, 0.0
      %v698 = vadd.f32 %v696, %v697
      %v699 = vsel %vm338, %v690, 0.0
      %v700 = vadd.f32 %v698, %v699
      %v701 = vsel %vm338, %v691, 0.0
      %v702 = vadd.f32 %v700, %v701
      %v703 = vsel %vm338, %v692, 0.0
      %v704 = vadd.f32 %v702, %v703
      %v705 = vsel %vm338, %v693, 0.0
      %v706 = vadd.f32 %v704, %v705
      %v707 = vsel %vm338, %v694, 0.0
      %v708 = vadd.f32 %v706, %v707
      %v709 = vsel %vm338, %v695, 0.0
      %v710 = vadd.f32 %v708, %v709
      %711 = vadd.xlane.f32.xlu0 %v710
      %v712 = vpop.xlane.xlu0 %711
      %v713 = vrot.slane %v712, 4
      %v714 = vadd.f32 %v712, %v713
      %v715 = vrot.slane %v714, 2
      %v716 = vadd.f32 %v714, %v715
      %v717 = vrot.slane %v716, 1
      %v718 = vadd.f32 %v716, %v717
      %s719 = vtos %v718
      %s720 = scalar_lea.smem [#allocation6], 2
      %721 = sst [smem:[%s720]] %s719
      %v722 = vld [vmem:[#allocation4] sm:$0xff]
      %v723 = vld [vmem:[#allocation4 + $0x8] sm:$0xff]
      %v724 = vld [vmem:[#allocation4 + $0x10] sm:$0xff]
      %v725 = vld [vmem:[#allocation4 + $0x18] sm:$0xff]
      %v726 = vld [vmem:[#allocation4 + $0x20] sm:$0xff]
      %v727 = vld [vmem:[#allocation4 + $0x28] sm:$0xff]
      %v728 = vld [vmem:[#allocation4 + $0x30] sm:$0xff]
      %v729 = vld [vmem:[#allocation4 + $0x38] sm:$0xff]
      %v730 = vld [vmem:[#allocation5] sm:$0xff]
      %v731 = vld [vmem:[#allocation5 + $0x8] sm:$0xff]
      %v732 = vld [vmem:[#allocation5 + $0x10] sm:$0xff]
      %v733 = vld [vmem:[#allocation5 + $0x18] sm:$0xff]
      %v734 = vld [vmem:[#allocation5 + $0x20] sm:$0xff]
      %v735 = vld [vmem:[#allocation5 + $0x28] sm:$0xff]
      %v736 = vld [vmem:[#allocation5 + $0x30] sm:$0xff]
      %v737 = vld [vmem:[#allocation5 + $0x38] sm:$0xff]
      %v738 = vsub.f32 %v722, %v730
      %v739 = vsub.f32 %v723, %v731
      %v740 = vsub.f32 %v724, %v732
      %v741 = vsub.f32 %v725, %v733
      %v742 = vsub.f32 %v726, %v734
      %v743 = vsub.f32 %v727, %v735
      %v744 = vsub.f32 %v728, %v736
      %v745 = vsub.f32 %v729, %v737
      %v746 = vand.u32 2147483647, %v738
      %v747 = vand.u32 2147483647, %v739
      %v748 = vand.u32 2147483647, %v740
      %v749 = vand.u32 2147483647, %v741
      %v750 = vand.u32 2147483647, %v742
      %v751 = vand.u32 2147483647, %v743
      %v752 = vand.u32 2147483647, %v744
      %v753 = vand.u32 2147483647, %v745
      %v754 = vsel %vm338, %v746, 0.0
      %v755 = vsel %vm338, %v747, 0.0
      %v756 = vadd.f32 %v754, %v755
      %v757 = vsel %vm338, %v748, 0.0
      %v758 = vadd.f32 %v756, %v757
      %v759 = vsel %vm338, %v749, 0.0
      %v760 = vadd.f32 %v758, %v759
      %v761 = vsel %vm338, %v750, 0.0
      %v762 = vadd.f32 %v760, %v761
      %v763 = vsel %vm338, %v751, 0.0
      %v764 = vadd.f32 %v762, %v763
      %v765 = vsel %vm338, %v752, 0.0
      %v766 = vadd.f32 %v764, %v765
      %v767 = vsel %vm338, %v753, 0.0
      %v768 = vadd.f32 %v766, %v767
      %769 = vadd.xlane.f32.xlu0 %v768
      %v770 = vpop.xlane.xlu0 %769
      %v771 = vrot.slane %v770, 4
      %v772 = vadd.f32 %v770, %v771
      %v773 = vrot.slane %v772, 2
      %v774 = vadd.f32 %v772, %v773
      %v775 = vrot.slane %v774, 1
      %v776 = vadd.f32 %v774, %v775
      %s777 = vtos %v776
      %s778 = scalar_lea.smem [#allocation6], 3
      %779 = sst [smem:[%s778]] %s777
    $region21: #{inpainting_loss.13} parent=1 // pred_fallthru
      _
    // Predicated region
    $region22: #{inpainting_loss.13} parent=1 // pred_check
      _
    $region23: #{inpainting_loss.13} parent=1 // pred_check_branch
      %781 = sbr.rel (0) target = $region25
    $region24: #{inpainting_loss.13} parent=1 // pred_region
      %s783 = ssub.s32 16, 16
      %784 = vsyncadd [#allocation7], %s783
      %s786 = sshll.u32 %s3, 4
      %s787 = int_to_ptr.vmem [resolvable:$true] %s786
      %789 = dma.smem_to_vmem [#allocation6], 16, %s787, [#allocation7]
    $region25: #{inpainting_loss.13} parent=1 // pred_fallthru
      _
    // Predicated region
    $region26: #{inpainting_loss.13} parent=1 // pred_check
      _
    $region27: #{inpainting_loss.13} parent=1 // pred_check_branch
      %791 = sbr.rel (0) target = $region29
    $region28: #{inpainting_loss.13} parent=1 // pred_region
      %792 = dma.done [#allocation7], 16
    $region29: #{inpainting_loss.13} parent=1 // pred_fallthru
      _
    %793 = sfence
    %794 = vsyncpa [#allocation7], 1

</llo_original>
